<compile_context>
chip_gen: v7x
topology: tpu7x:2x2x1
jax: 0.10.0
libtpu: 0.0.40
codegen_flags: <defaults>
</compile_context>

<pallas_src>
import functools

import jax
import jax.numpy as jnp
from jax.experimental import pallas as pl
from jax.experimental.pallas import tpu as pltpu

# ---------------- model configuration (small shapes) ----------------
VOCAB = 256
EMBED = 64         # embedding_dim (intentionally != HIDDEN, like the real module)
HIDDEN = 128       # hidden_dim
FC1_DIM = 256      # stands in for the module's 2048
FC2_DIM = 512      # stands in for the module's 4096
LSTM_LAYERS = 3
BATCH = 2
SEQ = 8
BP_PAD = 16        # pad batch (sublane dim) to 16: tile-aligned bf16 stores + more MXU rows


def _sigmoid(x):
    # tanh-based sigmoid: single EUP op per gate, no exp + divide.
    return 0.5 * jnp.tanh(0.5 * x) + 0.5


# ---------------- fused forward kernel ----------------
def fused_forward_kernel(x_ref, wih0_ref, wih_ref, whh_ref, b_ref, h0_ref, c0_ref,
                         w1_ref, b1_ref, b2_ref, b3_ref, w2_hbm, w3_hbm,
                         logits_ref, hN_ref, cN_ref,
                         y_sc, gx_sc, w2_sc, w3_sc, sem):
    """x_ref: (S*Bp, E) bf16 time-major embeddings.
    y_sc : (S*Bp, H)  bf16 inter-layer activations (VMEM scratch).
    gx_sc: (S*Bp, 4H) f32 hoisted input-gate projections (VMEM scratch).
    w2_sc/w3_sc: single-buffered VMEM copies of the big head weights."""
    L, Bp, H = h0_ref.shape
    SBp = x_ref.shape[0]
    S = SBp // Bp

    # Kick off HBM->VMEM copies of the big head weights NOW; they are only needed
    # after the serial recurrence, so the traffic hides behind it, and the weights
    # are single-buffered in scratch (no BlockSpec double-buffering).
    w2_cp = pltpu.make_async_copy(w2_hbm, w2_sc, sem.at[0])
    w3_cp = pltpu.make_async_copy(w3_hbm, w3_sc, sem.at[1])
    w2_cp.start()
    w3_cp.start()

    for layer in range(L):                       # static unroll over the 3 layers
        # ---- hoisted input projection for ALL timesteps: one big MXU matmul ----
        if layer == 0:
            x_in, w_in = x_ref[...], wih0_ref[...]           # (S*Bp, E) bf16
        else:
            x_in, w_in = y_sc[...], wih_ref[layer - 1]       # previous layer's y (bf16)
        gx_sc[...] = (jnp.dot(x_in, w_in, preferred_element_type=jnp.float32)
                      + b_ref[layer])                        # bias folded in once

        w_hh = whh_ref[layer]                                # (H, 4H) bf16, loop-invariant
        # TODO(synk): verify in the bundle dump that Mosaic hoists the W_hh weight
        #   push out of the time loop (v5e/v6e); otherwise drive the MXU explicitly
        #   with pltpu.matmul_push_rhs / matmul_acc_lhs / matmul_pop.

        def step(t, carry, w_hh=w_hh):
            h, c = carry                                     # (Bp, H) f32
            row = pl.multiple_of(t * Bp, Bp)
            gates = gx_sc[pl.ds(row, Bp), :] + jnp.dot(
                h.astype(jnp.bfloat16), w_hh,
                preferred_element_type=jnp.float32)          # (Bp, 4H)
            i_g = _sigmoid(gates[:, 0 * H:1 * H])
            f_g = _sigmoid(gates[:, 1 * H:2 * H])
            g_g = jnp.tanh(gates[:, 2 * H:3 * H])
            o_g = _sigmoid(gates[:, 3 * H:4 * H])
            c_new = f_g * c + i_g * g_g
            h_new = o_g * jnp.tanh(c_new)
            y_sc[pl.ds(row, Bp), :] = h_new.astype(jnp.bfloat16)  # tile-aligned (Bp=16)
            return h_new, c_new

        h_fin, c_fin = jax.lax.fori_loop(
            0, S, step, (h0_ref[layer], c0_ref[layer]), unroll=min(S, 8))
        hN_ref[layer] = h_fin                                # written straight from carry
        cN_ref[layer] = c_fin

    # ---- fused MLP head: tanh(fc1) -> tanh(fc2) -> fc3 on time-major rows ----
    h1 = jnp.tanh(jnp.dot(y_sc[...], w1_ref[...],
                          preferred_element_type=jnp.float32) + b1_ref[...])
    w2_cp.wait()                                             # fc2 weights arrived during recurrence
    h2 = jnp.tanh(jnp.dot(h1.astype(jnp.bfloat16), w2_sc[...],
                          preferred_element_type=jnp.float32) + b2_ref[...])
    w3_cp.wait()
    logits_ref[...] = (jnp.dot(h2.astype(jnp.bfloat16), w3_sc[...],
                               preferred_element_type=jnp.float32)
                       + b3_ref[...]).astype(logits_ref.dtype)


def _fused_forward(x_flat, wih0, wih_rest, whh, b, h0, c0,
                   w1, b1, w2, b2, w3, b3):
    SBp, E = x_flat.shape
    L, Bp, H = h0.shape
    D1 = w1.shape[1]
    D2 = w2.shape[1]
    V = w3.shape[1]

    grid_spec = pltpu.PrefetchScalarGridSpec(
        num_scalar_prefetch=0,
        grid=(1,),                               # single grid step; time loop is in-kernel
        in_specs=[
            pl.BlockSpec((SBp, E), lambda i: (0, 0)),            # x (time-major)
            pl.BlockSpec((E, 4 * H), lambda i: (0, 0)),          # W_ih layer 0 (E may != H)
            pl.BlockSpec((L - 1, H, 4 * H), lambda i: (0, 0, 0)),# W_ih layers 1..L-1
            pl.BlockSpec((L, H, 4 * H), lambda i: (0, 0, 0)),    # W_hh
            pl.BlockSpec((L, 1, 4 * H), lambda i: (0, 0, 0)),    # folded bias
            pl.BlockSpec((L, Bp, H), lambda i: (0, 0, 0)),       # h0
            pl.BlockSpec((L, Bp, H), lambda i: (0, 0, 0)),       # c0
            pl.BlockSpec((H, D1), lambda i: (0, 0)),             # fc1 weight (small)
            pl.BlockSpec((1, D1), lambda i: (0, 0)),             # fc1 bias
            pl.BlockSpec((1, D2), lambda i: (0, 0)),             # fc2 bias
            pl.BlockSpec((1, V), lambda i: (0, 0)),              # fc3 bias
            pl.BlockSpec(memory_space=pl.ANY),                   # fc2 weight (HBM, manual DMA)
            pl.BlockSpec(memory_space=pl.ANY),                   # fc3 weight (HBM, manual DMA)
        ],
        out_specs=(
            pl.BlockSpec((SBp, V), lambda i: (0, 0)),            # lane dim 256 = 2*128 -> unmasked vst
            pl.BlockSpec((L, Bp, H), lambda i: (0, 0, 0)),
            pl.BlockSpec((L, Bp, H), lambda i: (0, 0, 0)),
        ),
        scratch_shapes=[
            pltpu.VMEM((SBp, H), jnp.bfloat16),       # inter-layer activations y (bf16)
            pltpu.VMEM((SBp, 4 * H), jnp.float32),    # hoisted x @ W_ih + bias
            pltpu.VMEM((D1, D2), jnp.bfloat16),       # fc2 weight, single-buffered
            pltpu.VMEM((D2, V), jnp.bfloat16),        # fc3 weight, single-buffered
            pltpu.SemaphoreType.DMA((2,)),
        ],
    )
    return pl.pallas_call(
        fused_forward_kernel,
        out_shape=(jax.ShapeDtypeStruct((SBp, V), jnp.float32),
                   jax.ShapeDtypeStruct((L, Bp, H), jnp.float32),
                   jax.ShapeDtypeStruct((L, Bp, H), jnp.float32)),
        grid_spec=grid_spec,
        compiler_params=pltpu.CompilerParams(dimension_semantics=("arbitrary",)),
    )(x_flat, wih0, wih_rest, whh, b, h0, c0, w1, b1, b2, b3, w2, w3)


# ---------------- parameters ----------------
def init_params(key):
    keys = jax.random.split(key, 24)
    k = iter(keys)
    scale = 0.1
    params = {
        "emb": (scale * jax.random.normal(next(k), (VOCAB, EMBED), jnp.float32)
                ).astype(jnp.bfloat16)
    }

    wih_rest, whh, bias = [], [], []
    for layer in range(LSTM_LAYERS):
        in_dim = EMBED if layer == 0 else HIDDEN
        # PyTorch stores W_ih: (4H, in), W_hh: (4H, H); keep them transposed, bf16.
        w_ih = scale * jax.random.normal(next(k), (4 * HIDDEN, in_dim), jnp.float32)
        w_hh = scale * jax.random.normal(next(k), (4 * HIDDEN, HIDDEN), jnp.float32)
        b_ih = scale * jax.random.normal(next(k), (4 * HIDDEN,), jnp.float32)
        b_hh = scale * jax.random.normal(next(k), (4 * HIDDEN,), jnp.float32)
        if layer == 0:
            params["w_ih0_t"] = w_ih.T.astype(jnp.bfloat16)     # (E, 4H)
        else:
            wih_rest.append(w_ih.T.astype(jnp.bfloat16))        # (H, 4H)
        whh.append(w_hh.T.astype(jnp.bfloat16))                 # (H, 4H)
        bias.append((b_ih + b_hh).reshape(1, 4 * HIDDEN))
    params["w_ih_t"] = jnp.stack(wih_rest)                      # (L-1, H, 4H) bf16
    params["w_hh_t"] = jnp.stack(whh)                           # (L, H, 4H) bf16
    params["b"] = jnp.stack(bias)                               # (L, 1, 4H) f32

    params["fc1_w"] = (scale * jax.random.normal(next(k), (HIDDEN, FC1_DIM),
                                                 jnp.float32)).astype(jnp.bfloat16)
    params["fc1_b"] = scale * jax.random.normal(next(k), (1, FC1_DIM), jnp.float32)
    params["fc2_w"] = (scale * jax.random.normal(next(k), (FC1_DIM, FC2_DIM),
                                                 jnp.float32)).astype(jnp.bfloat16)
    params["fc2_b"] = scale * jax.random.normal(next(k), (1, FC2_DIM), jnp.float32)
    params["fc3_w"] = (scale * jax.random.normal(next(k), (FC2_DIM, VOCAB),
                                                 jnp.float32)).astype(jnp.bfloat16)
    params["fc3_b"] = scale * jax.random.normal(next(k), (1, VOCAB), jnp.float32)
    return params


# ---------------- forward pass ----------------
def forward(params, tokens, hidden=None):
    """tokens: (B, S) int32.  Returns (logits (B*S, VOCAB), (h_n, c_n))."""
    B, S = tokens.shape
    Bp = ((B + BP_PAD - 1) // BP_PAD) * BP_PAD    # pad batch (sublane dim) to 16

    # TODO(synk): embedding lookup (dynamic gather) stays in plain JAX glue.
    x_tm = params["emb"][tokens.T]                # (S, B, E) bf16, time-major gather
    if Bp != B:
        x_tm = jnp.pad(x_tm, ((0, 0), (0, Bp - B), (0, 0)))
    x_flat = x_tm.reshape(S * Bp, EMBED)          # contiguous, no transpose

    if hidden is None:
        h0 = jnp.zeros((LSTM_LAYERS, Bp, HIDDEN), jnp.float32)
        c0 = jnp.zeros((LSTM_LAYERS, Bp, HIDDEN), jnp.float32)
    else:
        h0, c0 = hidden
        if Bp != B:
            pad = ((0, 0), (0, Bp - B), (0, 0))
            h0 = jnp.pad(h0.astype(jnp.float32), pad)
            c0 = jnp.pad(c0.astype(jnp.float32), pad)

    logits_tm, h_n, c_n = _fused_forward(
        x_flat, params["w_ih0_t"], params["w_ih_t"], params["w_hh_t"], params["b"],
        h0, c0,
        params["fc1_w"], params["fc1_b"], params["fc2_w"], params["fc2_b"],
        params["fc3_w"], params["fc3_b"])

    # tiny post-kernel reorder to PyTorch's output.reshape(B*S, -1) row order
    logits = (logits_tm.reshape(S, Bp, VOCAB)[:, :B]
              .transpose(1, 0, 2).reshape(B * S, VOCAB))
    return logits, (h_n[:, :B], c_n[:, :B])


if __name__ == "__main__":
    key = jax.random.PRNGKey(0)
    pkey, tkey = jax.random.split(key)
    params = init_params(pkey)
    tokens = jax.random.randint(tkey, (BATCH, SEQ), 0, VOCAB, dtype=jnp.int32)

    fwd = jax.jit(functools.partial(forward, params))
    logits, (h_n, c_n) = fwd(tokens)
    jax.block_until_ready((logits, h_n, c_n))

    assert logits.shape == (BATCH * SEQ, VOCAB)
    assert h_n.shape == (LSTM_LAYERS, BATCH, HIDDEN)
    assert c_n.shape == (LSTM_LAYERS, BATCH, HIDDEN)
    assert bool(jnp.all(jnp.isfinite(logits)))
    print("KERNEL_OK")
</pallas_src>

<mosaic_0001>
module attributes {stable_mosaic.version = 11 : i64} {
  func.func @fused_forward_kernel(%arg0: i32, %arg1: memref<128x64xbf16, #tpu.memory_space<vmem>>, %arg2: memref<64x512xbf16, #tpu.memory_space<vmem>>, %arg3: memref<2x128x512xbf16, #tpu.memory_space<vmem>>, %arg4: memref<3x128x512xbf16, #tpu.memory_space<vmem>>, %arg5: memref<3x1x512xf32, #tpu.memory_space<vmem>>, %arg6: memref<3x16x128xf32, #tpu.memory_space<vmem>>, %arg7: memref<3x16x128xf32, #tpu.memory_space<vmem>>, %arg8: memref<128x256xbf16, #tpu.memory_space<vmem>>, %arg9: memref<1x256xf32, #tpu.memory_space<vmem>>, %arg10: memref<1x512xf32, #tpu.memory_space<vmem>>, %arg11: memref<1x256xf32, #tpu.memory_space<vmem>>, %arg12: memref<256x512xbf16, #tpu.memory_space<any>>, %arg13: memref<512x256xbf16, #tpu.memory_space<any>>, %arg14: memref<128x256xf32, #tpu.memory_space<vmem>>, %arg15: memref<3x16x128xf32, #tpu.memory_space<vmem>>, %arg16: memref<3x16x128xf32, #tpu.memory_space<vmem>>, %arg17: memref<128x128xbf16, #tpu.memory_space<vmem>>, %arg18: memref<128x512xf32, #tpu.memory_space<vmem>>, %arg19: memref<256x512xbf16, #tpu.memory_space<vmem>>, %arg20: memref<512x256xbf16, #tpu.memory_space<vmem>>, %arg21: memref<2x!tpu.dma_semaphore, #tpu.memory_space<semaphore_mem>>) attributes {dimension_semantics = [#tpu.dimension_semantics<arbitrary>], iteration_bounds = array<i64: 1>, scalar_prefetch = 0 : i64, scratch_operands = 5 : i64, tpu.core_type = #tpu.core_type<tc>, window_params = [{pipeline_mode = #tpu.pipeline_mode<synchronous>, transform_indices = @transform_0, window_bounds = array<i64: 128, 64>}, {pipeline_mode = #tpu.pipeline_mode<synchronous>, transform_indices = @transform_1, window_bounds = array<i64: 64, 512>}, {pipeline_mode = #tpu.pipeline_mode<synchronous>, transform_indices = @transform_2, window_bounds = array<i64: 2, 128, 512>}, {pipeline_mode = #tpu.pipeline_mode<synchronous>, transform_indices = @transform_3, window_bounds = array<i64: 3, 128, 512>}, {pipeline_mode = #tpu.pipeline_mode<synchronous>, transform_indices = @transform_4, window_bounds = array<i64: 3, 1, 512>}, {pipeline_mode = #tpu.pipeline_mode<synchronous>, transform_indices = @transform_5, window_bounds = array<i64: 3, 16, 128>}, {pipeline_mode = #tpu.pipeline_mode<synchronous>, transform_indices = @transform_6, window_bounds = array<i64: 3, 16, 128>}, {pipeline_mode = #tpu.pipeline_mode<synchronous>, transform_indices = @transform_7, window_bounds = array<i64: 128, 256>}, {pipeline_mode = #tpu.pipeline_mode<synchronous>, transform_indices = @transform_8, window_bounds = array<i64: 1, 256>}, {pipeline_mode = #tpu.pipeline_mode<synchronous>, transform_indices = @transform_9, window_bounds = array<i64: 1, 512>}, {pipeline_mode = #tpu.pipeline_mode<synchronous>, transform_indices = @transform_10, window_bounds = array<i64: 1, 256>}, {}, {}, {pipeline_mode = #tpu.pipeline_mode<synchronous>, transform_indices = @transform_13, window_bounds = array<i64: 128, 256>}, {pipeline_mode = #tpu.pipeline_mode<synchronous>, transform_indices = @transform_14, window_bounds = array<i64: 3, 16, 128>}, {pipeline_mode = #tpu.pipeline_mode<synchronous>, transform_indices = @transform_15, window_bounds = array<i64: 3, 16, 128>}]} {
    %c0_i32 = arith.constant 0 : i32
    %0 = tpu.memref_slice %arg21[%c0_i32] : memref<2x!tpu.dma_semaphore, #tpu.memory_space<semaphore_mem>> -> memref<1x!tpu.dma_semaphore, #tpu.memory_space<semaphore_mem>>
    %1 = tpu.memref_squeeze %0 : memref<1x!tpu.dma_semaphore, #tpu.memory_space<semaphore_mem>> -> memref<!tpu.dma_semaphore, #tpu.memory_space<semaphore_mem>>
    tpu.enqueue_dma source(%arg12 : memref<256x512xbf16, #tpu.memory_space<any>>) target(%arg19 : memref<256x512xbf16, #tpu.memory_space<vmem>>) target_semaphore(%1 : memref<!tpu.dma_semaphore, #tpu.memory_space<semaphore_mem>>)
    %c1_i32 = arith.constant 1 : i32
    %2 = tpu.memref_slice %arg21[%c1_i32] : memref<2x!tpu.dma_semaphore, #tpu.memory_space<semaphore_mem>> -> memref<1x!tpu.dma_semaphore, #tpu.memory_space<semaphore_mem>>
    %3 = tpu.memref_squeeze %2 : memref<1x!tpu.dma_semaphore, #tpu.memory_space<semaphore_mem>> -> memref<!tpu.dma_semaphore, #tpu.memory_space<semaphore_mem>>
    tpu.enqueue_dma source(%arg13 : memref<512x256xbf16, #tpu.memory_space<any>>) target(%arg20 : memref<512x256xbf16, #tpu.memory_space<vmem>>) target_semaphore(%3 : memref<!tpu.dma_semaphore, #tpu.memory_space<semaphore_mem>>)
    %c0 = arith.constant 0 : index
    %c0_0 = arith.constant 0 : index
    %4 = vector.load %arg1[%c0, %c0_0] : memref<128x64xbf16, #tpu.memory_space<vmem>>, vector<128x64xbf16>
    %c0_1 = arith.constant 0 : index
    %c0_2 = arith.constant 0 : index
    %5 = vector.load %arg2[%c0_1, %c0_2] : memref<64x512xbf16, #tpu.memory_space<vmem>>, vector<64x512xbf16>
    %cst = arith.constant dense<0.000000e+00> : vector<128x512xf32>
    %6 = tpu.matmul %4, %5, %cst {dimension_numbers = #tpu.dot_dimension_numbers<[1], [0], [0], [1], [0, 0, 1, 1], [], []>} : vector<128x64xbf16>, vector<64x512xbf16>, vector<128x512xf32> -> vector<128x512xf32>
    %c0_3 = arith.constant 0 : index
    %c0_4 = arith.constant 0 : index
    %c0_5 = arith.constant 0 : index
    %7 = vector.load %arg5[%c0_3, %c0_4, %c0_5] : memref<3x1x512xf32, #tpu.memory_space<vmem>>, vector<1x1x512xf32>
    %8 = vector.shape_cast %7 : vector<1x1x512xf32> to vector<1x512xf32>
    %9 = vector.broadcast %8 : vector<1x512xf32> to vector<128x512xf32>
    %10 = arith.addf %6, %9 : vector<128x512xf32>
    %c0_6 = arith.constant 0 : index
    %c0_7 = arith.constant 0 : index
    %11 = vector.load %arg18[%c0_6, %c0_7] : memref<128x512xf32, #tpu.memory_space<vmem>>, vector<128x512xf32>
    tpu.vector_store %arg18[%c0_6, %c0_7], %10 {strides = array<i32>} : memref<128x512xf32, #tpu.memory_space<vmem>>, vector<128x512xf32>,
    %c0_8 = arith.constant 0 : index
    %c0_9 = arith.constant 0 : index
    %c0_10 = arith.constant 0 : index
    %12 = vector.load %arg4[%c0_8, %c0_9, %c0_10] : memref<3x128x512xbf16, #tpu.memory_space<vmem>>, vector<1x128x512xbf16>
    %13 = vector.shape_cast %12 : vector<1x128x512xbf16> to vector<128x512xbf16>
    %c0_11 = arith.constant 0 : index
    %c0_12 = arith.constant 0 : index
    %c0_13 = arith.constant 0 : index
    %14 = vector.load %arg6[%c0_11, %c0_12, %c0_13] : memref<3x16x128xf32, #tpu.memory_space<vmem>>, vector<1x16x128xf32>
    %15 = vector.shape_cast %14 : vector<1x16x128xf32> to vector<16x128xf32>
    %c0_14 = arith.constant 0 : index
    %c0_15 = arith.constant 0 : index
    %c0_16 = arith.constant 0 : index
    %16 = vector.load %arg7[%c0_14, %c0_15, %c0_16] : memref<3x16x128xf32, #tpu.memory_space<vmem>>, vector<1x16x128xf32>
    %17 = vector.shape_cast %16 : vector<1x16x128xf32> to vector<16x128xf32>
    %c0_i32_17 = arith.constant 0 : i32
    %c16_i32 = arith.constant 16 : i32
    %18 = arith.muli %c0_i32_17, %c16_i32 : i32
    %19 = tpu.assume_multiple %18, 16 : i32
    %20 = arith.index_cast %19 : i32 to index
    %c0_18 = arith.constant 0 : index
    %21 = vector.load %arg18[%20, %c0_18] : memref<128x512xf32, #tpu.memory_space<vmem>>, vector<16x512xf32>
    %22 = arith.truncf %15 : vector<16x128xf32> to vector<16x128xbf16>
    %cst_19 = arith.constant dense<0.000000e+00> : vector<16x512xf32>
    %23 = tpu.matmul %22, %13, %cst_19 {dimension_numbers = #tpu.dot_dimension_numbers<[1], [0], [0], [1], [0, 0, 1, 1], [], []>} : vector<16x128xbf16>, vector<128x512xbf16>, vector<16x512xf32> -> vector<16x512xf32>
    %24 = arith.addf %21, %23 : vector<16x512xf32>
    %25 = vector.extract_strided_slice %24 {offsets = [0, 0], sizes = [16, 128], strides = [1, 1]} : vector<16x512xf32> to vector<16x128xf32>
    %cst_20 = arith.constant 5.000000e-01 : f32
    %26 = vector.broadcast %cst_20 : f32 to vector<16x128xf32>
    %27 = arith.mulf %26, %25 : vector<16x128xf32>
    %28 = math.tanh %27 : vector<16x128xf32>
    %cst_21 = arith.constant 5.000000e-01 : f32
    %29 = vector.broadcast %cst_21 : f32 to vector<16x128xf32>
    %30 = arith.mulf %29, %28 : vector<16x128xf32>
    %cst_22 = arith.constant 5.000000e-01 : f32
    %31 = vector.broadcast %cst_22 : f32 to vector<16x128xf32>
    %32 = arith.addf %30, %31 : vector<16x128xf32>
    %33 = vector.extract_strided_slice %24 {offsets = [0, 128], sizes = [16, 128], strides = [1, 1]} : vector<16x512xf32> to vector<16x128xf32>
    %cst_23 = arith.constant 5.000000e-01 : f32
    %34 = vector.broadcast %cst_23 : f32 to vector<16x128xf32>
    %35 = arith.mulf %34, %33 : vector<16x128xf32>
    %36 = math.tanh %35 : vector<16x128xf32>
    %cst_24 = arith.constant 5.000000e-01 : f32
    %37 = vector.broadcast %cst_24 : f32 to vector<16x128xf32>
    %38 = arith.mulf %37, %36 : vector<16x128xf32>
    %cst_25 = arith.constant 5.000000e-01 : f32
    %39 = vector.broadcast %cst_25 : f32 to vector<16x128xf32>
    %40 = arith.addf %38, %39 : vector<16x128xf32>
    %41 = vector.extract_strided_slice %24 {offsets = [0, 256], sizes = [16, 128], strides = [1, 1]} : vector<16x512xf32> to vector<16x128xf32>
    %42 = math.tanh %41 : vector<16x128xf32>
    %43 = vector.extract_strided_slice %24 {offsets = [0, 384], sizes = [16, 128], strides = [1, 1]} : vector<16x512xf32> to vector<16x128xf32>
    %cst_26 = arith.constant 5.000000e-01 : f32
    %44 = vector.broadcast %cst_26 : f32 to vector<16x128xf32>
    %45 = arith.mulf %44, %43 : vector<16x128xf32>
    %46 = math.tanh %45 : vector<16x128xf32>
    %cst_27 = arith.constant 5.000000e-01 : f32
    %47 = vector.broadcast %cst_27 : f32 to vector<16x128xf32>
    %48 = arith.mulf %47, %46 : vector<16x128xf32>
    %cst_28 = arith.constant 5.000000e-01 : f32
    %49 = vector.broadcast %cst_28 : f32 to vector<16x128xf32>
    %50 = arith.addf %48, %49 : vector<16x128xf32>
    %51 = arith.mulf %40, %17 : vector<16x128xf32>
    %52 = arith.mulf %32, %42 : vector<16x128xf32>
    %53 = arith.addf %51, %52 : vector<16x128xf32>
    %54 = math.tanh %53 : vector<16x128xf32>
    %55 = arith.mulf %50, %54 : vector<16x128xf32>
    %56 = arith.truncf %55 : vector<16x128xf32> to vector<16x128xbf16>
    %57 = arith.index_cast %19 : i32 to index
    %c0_29 = arith.constant 0 : index
    %58 = vector.load %arg17[%57, %c0_29] : memref<128x128xbf16, #tpu.memory_space<vmem>>, vector<16x128xbf16>
    tpu.vector_store %arg17[%57, %c0_29], %56 {strides = array<i32>} : memref<128x128xbf16, #tpu.memory_space<vmem>>, vector<16x128xbf16>,
    %c1_i32_30 = arith.constant 1 : i32
    %c16_i32_31 = arith.constant 16 : i32
    %59 = arith.muli %c1_i32_30, %c16_i32_31 : i32
    %60 = tpu.assume_multiple %59, 16 : i32
    %61 = arith.index_cast %60 : i32 to index
    %c0_32 = arith.constant 0 : index
    %62 = vector.load %arg18[%61, %c0_32] : memref<128x512xf32, #tpu.memory_space<vmem>>, vector<16x512xf32>
    %63 = arith.truncf %55 : vector<16x128xf32> to vector<16x128xbf16>
    %cst_33 = arith.constant dense<0.000000e+00> : vector<16x512xf32>
    %64 = tpu.matmul %63, %13, %cst_33 {dimension_numbers = #tpu.dot_dimension_numbers<[1], [0], [0], [1], [0, 0, 1, 1], [], []>} : vector<16x128xbf16>, vector<128x512xbf16>, vector<16x512xf32> -> vector<16x512xf32>
    %65 = arith.addf %62, %64 : vector<16x512xf32>
    %66 = vector.extract_strided_slice %65 {offsets = [0, 0], sizes = [16, 128], strides = [1, 1]} : vector<16x512xf32> to vector<16x128xf32>
    %cst_34 = arith.constant 5.000000e-01 : f32
    %67 = vector.broadcast %cst_34 : f32 to vector<16x128xf32>
    %68 = arith.mulf %67, %66 : vector<16x128xf32>
    %69 = math.tanh %68 : vector<16x128xf32>
    %cst_35 = arith.constant 5.000000e-01 : f32
    %70 = vector.broadcast %cst_35 : f32 to vector<16x128xf32>
    %71 = arith.mulf %70, %69 : vector<16x128xf32>
    %cst_36 = arith.constant 5.000000e-01 : f32
    %72 = vector.broadcast %cst_36 : f32 to vector<16x128xf32>
    %73 = arith.addf %71, %72 : vector<16x128xf32>
    %74 = vector.extract_strided_slice %65 {offsets = [0, 128], sizes = [16, 128], strides = [1, 1]} : vector<16x512xf32> to vector<16x128xf32>
    %cst_37 = arith.constant 5.000000e-01 : f32
    %75 = vector.broadcast %cst_37 : f32 to vector<16x128xf32>
    %76 = arith.mulf %75, %74 : vector<16x128xf32>
    %77 = math.tanh %76 : vector<16x128xf32>
    %cst_38 = arith.constant 5.000000e-01 : f32
    %78 = vector.broadcast %cst_38 : f32 to vector<16x128xf32>
    %79 = arith.mulf %78, %77 : vector<16x128xf32>
    %cst_39 = arith.constant 5.000000e-01 : f32
    %80 = vector.broadcast %cst_39 : f32 to vector<16x128xf32>
    %81 = arith.addf %79, %80 : vector<16x128xf32>
    %82 = vector.extract_strided_slice %65 {offsets = [0, 256], sizes = [16, 128], strides = [1, 1]} : vector<16x512xf32> to vector<16x128xf32>
    %83 = math.tanh %82 : vector<16x128xf32>
    %84 = vector.extract_strided_slice %65 {offsets = [0, 384], sizes = [16, 128], strides = [1, 1]} : vector<16x512xf32> to vector<16x128xf32>
    %cst_40 = arith.constant 5.000000e-01 : f32
    %85 = vector.broadcast %cst_40 : f32 to vector<16x128xf32>
    %86 = arith.mulf %85, %84 : vector<16x128xf32>
    %87 = math.tanh %86 : vector<16x128xf32>
    %cst_41 = arith.constant 5.000000e-01 : f32
    %88 = vector.broadcast %cst_41 : f32 to vector<16x128xf32>
    %89 = arith.mulf %88, %87 : vector<16x128xf32>
    %cst_42 = arith.constant 5.000000e-01 : f32
    %90 = vector.broadcast %cst_42 : f32 to vector<16x128xf32>
    %91 = arith.addf %89, %90 : vector<16x128xf32>
    %92 = arith.mulf %81, %53 : vector<16x128xf32>
    %93 = arith.mulf %73, %83 : vector<16x128xf32>
    %94 = arith.addf %92, %93 : vector<16x128xf32>
    %95 = math.tanh %94 : vector<16x128xf32>
    %96 = arith.mulf %91, %95 : vector<16x128xf32>
    %97 = arith.truncf %96 : vector<16x128xf32> to vector<16x128xbf16>
    %98 = arith.index_cast %60 : i32 to index
    %c0_43 = arith.constant 0 : index
    %99 = vector.load %arg17[%98, %c0_43] : memref<128x128xbf16, #tpu.memory_space<vmem>>, vector<16x128xbf16>
    tpu.vector_store %arg17[%98, %c0_43], %97 {strides = array<i32>} : memref<128x128xbf16, #tpu.memory_space<vmem>>, vector<16x128xbf16>,
    %c2_i32 = arith.constant 2 : i32
    %c16_i32_44 = arith.constant 16 : i32
    %100 = arith.muli %c2_i32, %c16_i32_44 : i32
    %101 = tpu.assume_multiple %100, 16 : i32
    %102 = arith.index_cast %101 : i32 to index
    %c0_45 = arith.constant 0 : index
    %103 = vector.load %arg18[%102, %c0_45] : memref<128x512xf32, #tpu.memory_space<vmem>>, vector<16x512xf32>
    %104 = arith.truncf %96 : vector<16x128xf32> to vector<16x128xbf16>
    %cst_46 = arith.constant dense<0.000000e+00> : vector<16x512xf32>
    %105 = tpu.matmul %104, %13, %cst_46 {dimension_numbers = #tpu.dot_dimension_numbers<[1], [0], [0], [1], [0, 0, 1, 1], [], []>} : vector<16x128xbf16>, vector<128x512xbf16>, vector<16x512xf32> -> vector<16x512xf32>
    %106 = arith.addf %103, %105 : vector<16x512xf32>
    %107 = vector.extract_strided_slice %106 {offsets = [0, 0], sizes = [16, 128], strides = [1, 1]} : vector<16x512xf32> to vector<16x128xf32>
    %cst_47 = arith.constant 5.000000e-01 : f32
    %108 = vector.broadcast %cst_47 : f32 to vector<16x128xf32>
    %109 = arith.mulf %108, %107 : vector<16x128xf32>
    %110 = math.tanh %109 : vector<16x128xf32>
    %cst_48 = arith.constant 5.000000e-01 : f32
    %111 = vector.broadcast %cst_48 : f32 to vector<16x128xf32>
    %112 = arith.mulf %111, %110 : vector<16x128xf32>
    %cst_49 = arith.constant 5.000000e-01 : f32
    %113 = vector.broadcast %cst_49 : f32 to vector<16x128xf32>
    %114 = arith.addf %112, %113 : vector<16x128xf32>
    %115 = vector.extract_strided_slice %106 {offsets = [0, 128], sizes = [16, 128], strides = [1, 1]} : vector<16x512xf32> to vector<16x128xf32>
    %cst_50 = arith.constant 5.000000e-01 : f32
    %116 = vector.broadcast %cst_50 : f32 to vector<16x128xf32>
    %117 = arith.mulf %116, %115 : vector<16x128xf32>
    %118 = math.tanh %117 : vector<16x128xf32>
    %cst_51 = arith.constant 5.000000e-01 : f32
    %119 = vector.broadcast %cst_51 : f32 to vector<16x128xf32>
    %120 = arith.mulf %119, %118 : vector<16x128xf32>
    %cst_52 = arith.constant 5.000000e-01 : f32
    %121 = vector.broadcast %cst_52 : f32 to vector<16x128xf32>
    %122 = arith.addf %120, %121 : vector<16x128xf32>
    %123 = vector.extract_strided_slice %106 {offsets = [0, 256], sizes = [16, 128], strides = [1, 1]} : vector<16x512xf32> to vector<16x128xf32>
    %124 = math.tanh %123 : vector<16x128xf32>
    %125 = vector.extract_strided_slice %106 {offsets = [0, 384], sizes = [16, 128], strides = [1, 1]} : vector<16x512xf32> to vector<16x128xf32>
    %cst_53 = arith.constant 5.000000e-01 : f32
    %126 = vector.broadcast %cst_53 : f32 to vector<16x128xf32>
    %127 = arith.mulf %126, %125 : vector<16x128xf32>
    %128 = math.tanh %127 : vector<16x128xf32>
    %cst_54 = arith.constant 5.000000e-01 : f32
    %129 = vector.broadcast %cst_54 : f32 to vector<16x128xf32>
    %130 = arith.mulf %129, %128 : vector<16x128xf32>
    %cst_55 = arith.constant 5.000000e-01 : f32
    %131 = vector.broadcast %cst_55 : f32 to vector<16x128xf32>
    %132 = arith.addf %130, %131 : vector<16x128xf32>
    %133 = arith.mulf %122, %94 : vector<16x128xf32>
    %134 = arith.mulf %114, %124 : vector<16x128xf32>
    %135 = arith.addf %133, %134 : vector<16x128xf32>
    %136 = math.tanh %135 : vector<16x128xf32>
    %137 = arith.mulf %132, %136 : vector<16x128xf32>
    %138 = arith.truncf %137 : vector<16x128xf32> to vector<16x128xbf16>
    %139 = arith.index_cast %101 : i32 to index
    %c0_56 = arith.constant 0 : index
    %140 = vector.load %arg17[%139, %c0_56] : memref<128x128xbf16, #tpu.memory_space<vmem>>, vector<16x128xbf16>
    tpu.vector_store %arg17[%139, %c0_56], %138 {strides = array<i32>} : memref<128x128xbf16, #tpu.memory_space<vmem>>, vector<16x128xbf16>,
    %c3_i32 = arith.constant 3 : i32
    %c16_i32_57 = arith.constant 16 : i32
    %141 = arith.muli %c3_i32, %c16_i32_57 : i32
    %142 = tpu.assume_multiple %141, 16 : i32
    %143 = arith.index_cast %142 : i32 to index
    %c0_58 = arith.constant 0 : index
    %144 = vector.load %arg18[%143, %c0_58] : memref<128x512xf32, #tpu.memory_space<vmem>>, vector<16x512xf32>
    %145 = arith.truncf %137 : vector<16x128xf32> to vector<16x128xbf16>
    %cst_59 = arith.constant dense<0.000000e+00> : vector<16x512xf32>
    %146 = tpu.matmul %145, %13, %cst_59 {dimension_numbers = #tpu.dot_dimension_numbers<[1], [0], [0], [1], [0, 0, 1, 1], [], []>} : vector<16x128xbf16>, vector<128x512xbf16>, vector<16x512xf32> -> vector<16x512xf32>
    %147 = arith.addf %144, %146 : vector<16x512xf32>
    %148 = vector.extract_strided_slice %147 {offsets = [0, 0], sizes = [16, 128], strides = [1, 1]} : vector<16x512xf32> to vector<16x128xf32>
    %cst_60 = arith.constant 5.000000e-01 : f32
    %149 = vector.broadcast %cst_60 : f32 to vector<16x128xf32>
    %150 = arith.mulf %149, %148 : vector<16x128xf32>
    %151 = math.tanh %150 : vector<16x128xf32>
    %cst_61 = arith.constant 5.000000e-01 : f32
    %152 = vector.broadcast %cst_61 : f32 to vector<16x128xf32>
    %153 = arith.mulf %152, %151 : vector<16x128xf32>
    %cst_62 = arith.constant 5.000000e-01 : f32
    %154 = vector.broadcast %cst_62 : f32 to vector<16x128xf32>
    %155 = arith.addf %153, %154 : vector<16x128xf32>
    %156 = vector.extract_strided_slice %147 {offsets = [0, 128], sizes = [16, 128], strides = [1, 1]} : vector<16x512xf32> to vector<16x128xf32>
    %cst_63 = arith.constant 5.000000e-01 : f32
    %157 = vector.broadcast %cst_63 : f32 to vector<16x128xf32>
    %158 = arith.mulf %157, %156 : vector<16x128xf32>
    %159 = math.tanh %158 : vector<16x128xf32>
    %cst_64 = arith.constant 5.000000e-01 : f32
    %160 = vector.broadcast %cst_64 : f32 to vector<16x128xf32>
    %161 = arith.mulf %160, %159 : vector<16x128xf32>
    %cst_65 = arith.constant 5.000000e-01 : f32
    %162 = vector.broadcast %cst_65 : f32 to vector<16x128xf32>
    %163 = arith.addf %161, %162 : vector<16x128xf32>
    %164 = vector.extract_strided_slice %147 {offsets = [0, 256], sizes = [16, 128], strides = [1, 1]} : vector<16x512xf32> to vector<16x128xf32>
    %165 = math.tanh %164 : vector<16x128xf32>
    %166 = vector.extract_strided_slice %147 {offsets = [0, 384], sizes = [16, 128], strides = [1, 1]} : vector<16x512xf32> to vector<16x128xf32>
    %cst_66 = arith.constant 5.000000e-01 : f32
    %167 = vector.broadcast %cst_66 : f32 to vector<16x128xf32>
    %168 = arith.mulf %167, %166 : vector<16x128xf32>
    %169 = math.tanh %168 : vector<16x128xf32>
    %cst_67 = arith.constant 5.000000e-01 : f32
    %170 = vector.broadcast %cst_67 : f32 to vector<16x128xf32>
    %171 = arith.mulf %170, %169 : vector<16x128xf32>
    %cst_68 = arith.constant 5.000000e-01 : f32
    %172 = vector.broadcast %cst_68 : f32 to vector<16x128xf32>
    %173 = arith.addf %171, %172 : vector<16x128xf32>
    %174 = arith.mulf %163, %135 : vector<16x128xf32>
    %175 = arith.mulf %155, %165 : vector<16x128xf32>
    %176 = arith.addf %174, %175 : vector<16x128xf32>
    %177 = math.tanh %176 : vector<16x128xf32>
    %178 = arith.mulf %173, %177 : vector<16x128xf32>
    %179 = arith.truncf %178 : vector<16x128xf32> to vector<16x128xbf16>
    %180 = arith.index_cast %142 : i32 to index
    %c0_69 = arith.constant 0 : index
    %181 = vector.load %arg17[%180, %c0_69] : memref<128x128xbf16, #tpu.memory_space<vmem>>, vector<16x128xbf16>
    tpu.vector_store %arg17[%180, %c0_69], %179 {strides = array<i32>} : memref<128x128xbf16, #tpu.memory_space<vmem>>, vector<16x128xbf16>,
    %c4_i32 = arith.constant 4 : i32
    %c16_i32_70 = arith.constant 16 : i32
    %182 = arith.muli %c4_i32, %c16_i32_70 : i32
    %183 = tpu.assume_multiple %182, 16 : i32
    %184 = arith.index_cast %183 : i32 to index
    %c0_71 = arith.constant 0 : index
    %185 = vector.load %arg18[%184, %c0_71] : memref<128x512xf32, #tpu.memory_space<vmem>>, vector<16x512xf32>
    %186 = arith.truncf %178 : vector<16x128xf32> to vector<16x128xbf16>
    %cst_72 = arith.constant dense<0.000000e+00> : vector<16x512xf32>
    %187 = tpu.matmul %186, %13, %cst_72 {dimension_numbers = #tpu.dot_dimension_numbers<[1], [0], [0], [1], [0, 0, 1, 1], [], []>} : vector<16x128xbf16>, vector<128x512xbf16>, vector<16x512xf32> -> vector<16x512xf32>
    %188 = arith.addf %185, %187 : vector<16x512xf32>
    %189 = vector.extract_strided_slice %188 {offsets = [0, 0], sizes = [16, 128], strides = [1, 1]} : vector<16x512xf32> to vector<16x128xf32>
    %cst_73 = arith.constant 5.000000e-01 : f32
    %190 = vector.broadcast %cst_73 : f32 to vector<16x128xf32>
    %191 = arith.mulf %190, %189 : vector<16x128xf32>
    %192 = math.tanh %191 : vector<16x128xf32>
    %cst_74 = arith.constant 5.000000e-01 : f32
    %193 = vector.broadcast %cst_74 : f32 to vector<16x128xf32>
    %194 = arith.mulf %193, %192 : vector<16x128xf32>
    %cst_75 = arith.constant 5.000000e-01 : f32
    %195 = vector.broadcast %cst_75 : f32 to vector<16x128xf32>
    %196 = arith.addf %194, %195 : vector<16x128xf32>
    %197 = vector.extract_strided_slice %188 {offsets = [0, 128], sizes = [16, 128], strides = [1, 1]} : vector<16x512xf32> to vector<16x128xf32>
    %cst_76 = arith.constant 5.000000e-01 : f32
    %198 = vector.broadcast %cst_76 : f32 to vector<16x128xf32>
    %199 = arith.mulf %198, %197 : vector<16x128xf32>
    %200 = math.tanh %199 : vector<16x128xf32>
    %cst_77 = arith.constant 5.000000e-01 : f32
    %201 = vector.broadcast %cst_77 : f32 to vector<16x128xf32>
    %202 = arith.mulf %201, %200 : vector<16x128xf32>
    %cst_78 = arith.constant 5.000000e-01 : f32
    %203 = vector.broadcast %cst_78 : f32 to vector<16x128xf32>
    %204 = arith.addf %202, %203 : vector<16x128xf32>
    %205 = vector.extract_strided_slice %188 {offsets = [0, 256], sizes = [16, 128], strides = [1, 1]} : vector<16x512xf32> to vector<16x128xf32>
    %206 = math.tanh %205 : vector<16x128xf32>
    %207 = vector.extract_strided_slice %188 {offsets = [0, 384], sizes = [16, 128], strides = [1, 1]} : vector<16x512xf32> to vector<16x128xf32>
    %cst_79 = arith.constant 5.000000e-01 : f32
    %208 = vector.broadcast %cst_79 : f32 to vector<16x128xf32>
    %209 = arith.mulf %208, %207 : vector<16x128xf32>
    %210 = math.tanh %209 : vector<16x128xf32>
    %cst_80 = arith.constant 5.000000e-01 : f32
    %211 = vector.broadcast %cst_80 : f32 to vector<16x128xf32>
    %212 = arith.mulf %211, %210 : vector<16x128xf32>
    %cst_81 = arith.constant 5.000000e-01 : f32
    %213 = vector.broadcast %cst_81 : f32 to vector<16x128xf32>
    %214 = arith.addf %212, %213 : vector<16x128xf32>
    %215 = arith.mulf %204, %176 : vector<16x128xf32>
    %216 = arith.mulf %196, %206 : vector<16x128xf32>
    %217 = arith.addf %215, %216 : vector<16x128xf32>
    %218 = math.tanh %217 : vector<16x128xf32>
    %219 = arith.mulf %214, %218 : vector<16x128xf32>
    %220 = arith.truncf %219 : vector<16x128xf32> to vector<16x128xbf16>
    %221 = arith.index_cast %183 : i32 to index
    %c0_82 = arith.constant 0 : index
    %222 = vector.load %arg17[%221, %c0_82] : memref<128x128xbf16, #tpu.memory_space<vmem>>, vector<16x128xbf16>
    tpu.vector_store %arg17[%221, %c0_82], %220 {strides = array<i32>} : memref<128x128xbf16, #tpu.memory_space<vmem>>, vector<16x128xbf16>,
    %c5_i32 = arith.constant 5 : i32
    %c16_i32_83 = arith.constant 16 : i32
    %223 = arith.muli %c5_i32, %c16_i32_83 : i32
    %224 = tpu.assume_multiple %223, 16 : i32
    %225 = arith.index_cast %224 : i32 to index
    %c0_84 = arith.constant 0 : index
    %226 = vector.load %arg18[%225, %c0_84] : memref<128x512xf32, #tpu.memory_space<vmem>>, vector<16x512xf32>
    %227 = arith.truncf %219 : vector<16x128xf32> to vector<16x128xbf16>
    %cst_85 = arith.constant dense<0.000000e+00> : vector<16x512xf32>
    %228 = tpu.matmul %227, %13, %cst_85 {dimension_numbers = #tpu.dot_dimension_numbers<[1], [0], [0], [1], [0, 0, 1, 1], [], []>} : vector<16x128xbf16>, vector<128x512xbf16>, vector<16x512xf32> -> vector<16x512xf32>
    %229 = arith.addf %226, %228 : vector<16x512xf32>
    %230 = vector.extract_strided_slice %229 {offsets = [0, 0], sizes = [16, 128], strides = [1, 1]} : vector<16x512xf32> to vector<16x128xf32>
    %cst_86 = arith.constant 5.000000e-01 : f32
    %231 = vector.broadcast %cst_86 : f32 to vector<16x128xf32>
    %232 = arith.mulf %231, %230 : vector<16x128xf32>
    %233 = math.tanh %232 : vector<16x128xf32>
    %cst_87 = arith.constant 5.000000e-01 : f32
    %234 = vector.broadcast %cst_87 : f32 to vector<16x128xf32>
    %235 = arith.mulf %234, %233 : vector<16x128xf32>
    %cst_88 = arith.constant 5.000000e-01 : f32
    %236 = vector.broadcast %cst_88 : f32 to vector<16x128xf32>
    %237 = arith.addf %235, %236 : vector<16x128xf32>
    %238 = vector.extract_strided_slice %229 {offsets = [0, 128], sizes = [16, 128], strides = [1, 1]} : vector<16x512xf32> to vector<16x128xf32>
    %cst_89 = arith.constant 5.000000e-01 : f32
    %239 = vector.broadcast %cst_89 : f32 to vector<16x128xf32>
    %240 = arith.mulf %239, %238 : vector<16x128xf32>
    %241 = math.tanh %240 : vector<16x128xf32>
    %cst_90 = arith.constant 5.000000e-01 : f32
    %242 = vector.broadcast %cst_90 : f32 to vector<16x128xf32>
    %243 = arith.mulf %242, %241 : vector<16x128xf32>
    %cst_91 = arith.constant 5.000000e-01 : f32
    %244 = vector.broadcast %cst_91 : f32 to vector<16x128xf32>
    %245 = arith.addf %243, %244 : vector<16x128xf32>
    %246 = vector.extract_strided_slice %229 {offsets = [0, 256], sizes = [16, 128], strides = [1, 1]} : vector<16x512xf32> to vector<16x128xf32>
    %247 = math.tanh %246 : vector<16x128xf32>
    %248 = vector.extract_strided_slice %229 {offsets = [0, 384], sizes = [16, 128], strides = [1, 1]} : vector<16x512xf32> to vector<16x128xf32>
    %cst_92 = arith.constant 5.000000e-01 : f32
    %249 = vector.broadcast %cst_92 : f32 to vector<16x128xf32>
    %250 = arith.mulf %249, %248 : vector<16x128xf32>
    %251 = math.tanh %250 : vector<16x128xf32>
    %cst_93 = arith.constant 5.000000e-01 : f32
    %252 = vector.broadcast %cst_93 : f32 to vector<16x128xf32>
    %253 = arith.mulf %252, %251 : vector<16x128xf32>
    %cst_94 = arith.constant 5.000000e-01 : f32
    %254 = vector.broadcast %cst_94 : f32 to vector<16x128xf32>
    %255 = arith.addf %253, %254 : vector<16x128xf32>
    %256 = arith.mulf %245, %217 : vector<16x128xf32>
    %257 = arith.mulf %237, %247 : vector<16x128xf32>
    %258 = arith.addf %256, %257 : vector<16x128xf32>
    %259 = math.tanh %258 : vector<16x128xf32>
    %260 = arith.mulf %255, %259 : vector<16x128xf32>
    %261 = arith.truncf %260 : vector<16x128xf32> to vector<16x128xbf16>
    %262 = arith.index_cast %224 : i32 to index
    %c0_95 = arith.constant 0 : index
    %263 = vector.load %arg17[%262, %c0_95] : memref<128x128xbf16, #tpu.memory_space<vmem>>, vector<16x128xbf16>
    tpu.vector_store %arg17[%262, %c0_95], %261 {strides = array<i32>} : memref<128x128xbf16, #tpu.memory_space<vmem>>, vector<16x128xbf16>,
    %c6_i32 = arith.constant 6 : i32
    %c16_i32_96 = arith.constant 16 : i32
    %264 = arith.muli %c6_i32, %c16_i32_96 : i32
    %265 = tpu.assume_multiple %264, 16 : i32
    %266 = arith.index_cast %265 : i32 to index
    %c0_97 = arith.constant 0 : index
    %267 = vector.load %arg18[%266, %c0_97] : memref<128x512xf32, #tpu.memory_space<vmem>>, vector<16x512xf32>
    %268 = arith.truncf %260 : vector<16x128xf32> to vector<16x128xbf16>
    %cst_98 = arith.constant dense<0.000000e+00> : vector<16x512xf32>
    %269 = tpu.matmul %268, %13, %cst_98 {dimension_numbers = #tpu.dot_dimension_numbers<[1], [0], [0], [1], [0, 0, 1, 1], [], []>} : vector<16x128xbf16>, vector<128x512xbf16>, vector<16x512xf32> -> vector<16x512xf32>
    %270 = arith.addf %267, %269 : vector<16x512xf32>
    %271 = vector.extract_strided_slice %270 {offsets = [0, 0], sizes = [16, 128], strides = [1, 1]} : vector<16x512xf32> to vector<16x128xf32>
    %cst_99 = arith.constant 5.000000e-01 : f32
    %272 = vector.broadcast %cst_99 : f32 to vector<16x128xf32>
    %273 = arith.mulf %272, %271 : vector<16x128xf32>
    %274 = math.tanh %273 : vector<16x128xf32>
    %cst_100 = arith.constant 5.000000e-01 : f32
    %275 = vector.broadcast %cst_100 : f32 to vector<16x128xf32>
    %276 = arith.mulf %275, %274 : vector<16x128xf32>
    %cst_101 = arith.constant 5.000000e-01 : f32
    %277 = vector.broadcast %cst_101 : f32 to vector<16x128xf32>
    %278 = arith.addf %276, %277 : vector<16x128xf32>
    %279 = vector.extract_strided_slice %270 {offsets = [0, 128], sizes = [16, 128], strides = [1, 1]} : vector<16x512xf32> to vector<16x128xf32>
    %cst_102 = arith.constant 5.000000e-01 : f32
    %280 = vector.broadcast %cst_102 : f32 to vector<16x128xf32>
    %281 = arith.mulf %280, %279 : vector<16x128xf32>
    %282 = math.tanh %281 : vector<16x128xf32>
    %cst_103 = arith.constant 5.000000e-01 : f32
    %283 = vector.broadcast %cst_103 : f32 to vector<16x128xf32>
    %284 = arith.mulf %283, %282 : vector<16x128xf32>
    %cst_104 = arith.constant 5.000000e-01 : f32
    %285 = vector.broadcast %cst_104 : f32 to vector<16x128xf32>
    %286 = arith.addf %284, %285 : vector<16x128xf32>
    %287 = vector.extract_strided_slice %270 {offsets = [0, 256], sizes = [16, 128], strides = [1, 1]} : vector<16x512xf32> to vector<16x128xf32>
    %288 = math.tanh %287 : vector<16x128xf32>
    %289 = vector.extract_strided_slice %270 {offsets = [0, 384], sizes = [16, 128], strides = [1, 1]} : vector<16x512xf32> to vector<16x128xf32>
    %cst_105 = arith.constant 5.000000e-01 : f32
    %290 = vector.broadcast %cst_105 : f32 to vector<16x128xf32>
    %291 = arith.mulf %290, %289 : vector<16x128xf32>
    %292 = math.tanh %291 : vector<16x128xf32>
    %cst_106 = arith.constant 5.000000e-01 : f32
    %293 = vector.broadcast %cst_106 : f32 to vector<16x128xf32>
    %294 = arith.mulf %293, %292 : vector<16x128xf32>
    %cst_107 = arith.constant 5.000000e-01 : f32
    %295 = vector.broadcast %cst_107 : f32 to vector<16x128xf32>
    %296 = arith.addf %294, %295 : vector<16x128xf32>
    %297 = arith.mulf %286, %258 : vector<16x128xf32>
    %298 = arith.mulf %278, %288 : vector<16x128xf32>
    %299 = arith.addf %297, %298 : vector<16x128xf32>
    %300 = math.tanh %299 : vector<16x128xf32>
    %301 = arith.mulf %296, %300 : vector<16x128xf32>
    %302 = arith.truncf %301 : vector<16x128xf32> to vector<16x128xbf16>
    %303 = arith.index_cast %265 : i32 to index
    %c0_108 = arith.constant 0 : index
    %304 = vector.load %arg17[%303, %c0_108] : memref<128x128xbf16, #tpu.memory_space<vmem>>, vector<16x128xbf16>
    tpu.vector_store %arg17[%303, %c0_108], %302 {strides = array<i32>} : memref<128x128xbf16, #tpu.memory_space<vmem>>, vector<16x128xbf16>,
    %c7_i32 = arith.constant 7 : i32
    %c16_i32_109 = arith.constant 16 : i32
    %305 = arith.muli %c7_i32, %c16_i32_109 : i32
    %306 = tpu.assume_multiple %305, 16 : i32
    %307 = arith.index_cast %306 : i32 to index
    %c0_110 = arith.constant 0 : index
    %308 = vector.load %arg18[%307, %c0_110] : memref<128x512xf32, #tpu.memory_space<vmem>>, vector<16x512xf32>
    %309 = arith.truncf %301 : vector<16x128xf32> to vector<16x128xbf16>
    %cst_111 = arith.constant dense<0.000000e+00> : vector<16x512xf32>
    %310 = tpu.matmul %309, %13, %cst_111 {dimension_numbers = #tpu.dot_dimension_numbers<[1], [0], [0], [1], [0, 0, 1, 1], [], []>} : vector<16x128xbf16>, vector<128x512xbf16>, vector<16x512xf32> -> vector<16x512xf32>
    %311 = arith.addf %308, %310 : vector<16x512xf32>
    %312 = vector.extract_strided_slice %311 {offsets = [0, 0], sizes = [16, 128], strides = [1, 1]} : vector<16x512xf32> to vector<16x128xf32>
    %cst_112 = arith.constant 5.000000e-01 : f32
    %313 = vector.broadcast %cst_112 : f32 to vector<16x128xf32>
    %314 = arith.mulf %313, %312 : vector<16x128xf32>
    %315 = math.tanh %314 : vector<16x128xf32>
    %cst_113 = arith.constant 5.000000e-01 : f32
    %316 = vector.broadcast %cst_113 : f32 to vector<16x128xf32>
    %317 = arith.mulf %316, %315 : vector<16x128xf32>
    %cst_114 = arith.constant 5.000000e-01 : f32
    %318 = vector.broadcast %cst_114 : f32 to vector<16x128xf32>
    %319 = arith.addf %317, %318 : vector<16x128xf32>
    %320 = vector.extract_strided_slice %311 {offsets = [0, 128], sizes = [16, 128], strides = [1, 1]} : vector<16x512xf32> to vector<16x128xf32>
    %cst_115 = arith.constant 5.000000e-01 : f32
    %321 = vector.broadcast %cst_115 : f32 to vector<16x128xf32>
    %322 = arith.mulf %321, %320 : vector<16x128xf32>
    %323 = math.tanh %322 : vector<16x128xf32>
    %cst_116 = arith.constant 5.000000e-01 : f32
    %324 = vector.broadcast %cst_116 : f32 to vector<16x128xf32>
    %325 = arith.mulf %324, %323 : vector<16x128xf32>
    %cst_117 = arith.constant 5.000000e-01 : f32
    %326 = vector.broadcast %cst_117 : f32 to vector<16x128xf32>
    %327 = arith.addf %325, %326 : vector<16x128xf32>
    %328 = vector.extract_strided_slice %311 {offsets = [0, 256], sizes = [16, 128], strides = [1, 1]} : vector<16x512xf32> to vector<16x128xf32>
    %329 = math.tanh %328 : vector<16x128xf32>
    %330 = vector.extract_strided_slice %311 {offsets = [0, 384], sizes = [16, 128], strides = [1, 1]} : vector<16x512xf32> to vector<16x128xf32>
    %cst_118 = arith.constant 5.000000e-01 : f32
    %331 = vector.broadcast %cst_118 : f32 to vector<16x128xf32>
    %332 = arith.mulf %331, %330 : vector<16x128xf32>
    %333 = math.tanh %332 : vector<16x128xf32>
    %cst_119 = arith.constant 5.000000e-01 : f32
    %334 = vector.broadcast %cst_119 : f32 to vector<16x128xf32>
    %335 = arith.mulf %334, %333 : vector<16x128xf32>
    %cst_120 = arith.constant 5.000000e-01 : f32
    %336 = vector.broadcast %cst_120 : f32 to vector<16x128xf32>
    %337 = arith.addf %335, %336 : vector<16x128xf32>
    %338 = arith.mulf %327, %299 : vector<16x128xf32>
    %339 = arith.mulf %319, %329 : vector<16x128xf32>
    %340 = arith.addf %338, %339 : vector<16x128xf32>
    %341 = math.tanh %340 : vector<16x128xf32>
    %342 = arith.mulf %337, %341 : vector<16x128xf32>
    %343 = arith.truncf %342 : vector<16x128xf32> to vector<16x128xbf16>
    %344 = arith.index_cast %306 : i32 to index
    %c0_121 = arith.constant 0 : index
    %345 = vector.load %arg17[%344, %c0_121] : memref<128x128xbf16, #tpu.memory_space<vmem>>, vector<16x128xbf16>
    tpu.vector_store %arg17[%344, %c0_121], %343 {strides = array<i32>} : memref<128x128xbf16, #tpu.memory_space<vmem>>, vector<16x128xbf16>,
    %c8_i32 = arith.constant 8 : i32
    %c0_122 = arith.constant 0 : index
    %c0_123 = arith.constant 0 : index
    %c0_124 = arith.constant 0 : index
    %346 = vector.load %arg15[%c0_122, %c0_123, %c0_124] : memref<3x16x128xf32, #tpu.memory_space<vmem>>, vector<1x16x128xf32>
    %347 = vector.shape_cast %346 : vector<1x16x128xf32> to vector<16x128xf32>
    %348 = vector.shape_cast %342 : vector<16x128xf32> to vector<1x16x128xf32>
    tpu.vector_store %arg15[%c0_122, %c0_123, %c0_124], %348 {strides = array<i32>} : memref<3x16x128xf32, #tpu.memory_space<vmem>>, vector<1x16x128xf32>,
    %c0_125 = arith.constant 0 : index
    %c0_126 = arith.constant 0 : index
    %c0_127 = arith.constant 0 : index
    %349 = vector.load %arg16[%c0_125, %c0_126, %c0_127] : memref<3x16x128xf32, #tpu.memory_space<vmem>>, vector<1x16x128xf32>
    %350 = vector.shape_cast %349 : vector<1x16x128xf32> to vector<16x128xf32>
    %351 = vector.shape_cast %340 : vector<16x128xf32> to vector<1x16x128xf32>
    tpu.vector_store %arg16[%c0_125, %c0_126, %c0_127], %351 {strides = array<i32>} : memref<3x16x128xf32, #tpu.memory_space<vmem>>, vector<1x16x128xf32>,
    %c0_128 = arith.constant 0 : index
    %c0_129 = arith.constant 0 : index
    %352 = vector.load %arg17[%c0_128, %c0_129] : memref<128x128xbf16, #tpu.memory_space<vmem>>, vector<128x128xbf16>
    %c0_130 = arith.constant 0 : index
    %c0_131 = arith.constant 0 : index
    %c0_132 = arith.constant 0 : index
    %353 = vector.load %arg3[%c0_130, %c0_131, %c0_132] : memref<2x128x512xbf16, #tpu.memory_space<vmem>>, vector<1x128x512xbf16>
    %354 = vector.shape_cast %353 : vector<1x128x512xbf16> to vector<128x512xbf16>
    %cst_133 = arith.constant dense<0.000000e+00> : vector<128x512xf32>
    %355 = tpu.matmul %352, %354, %cst_133 {dimension_numbers = #tpu.dot_dimension_numbers<[1], [0], [0], [1], [0, 0, 1, 1], [], []>} : vector<128x128xbf16>, vector<128x512xbf16>, vector<128x512xf32> -> vector<128x512xf32>
    %c1 = arith.constant 1 : index
    %c0_134 = arith.constant 0 : index
    %c0_135 = arith.constant 0 : index
    %356 = vector.load %arg5[%c1, %c0_134, %c0_135] : memref<3x1x512xf32, #tpu.memory_space<vmem>>, vector<1x1x512xf32>
    %357 = vector.shape_cast %356 : vector<1x1x512xf32> to vector<1x512xf32>
    %358 = vector.broadcast %357 : vector<1x512xf32> to vector<128x512xf32>
    %359 = arith.addf %355, %358 : vector<128x512xf32>
    %c0_136 = arith.constant 0 : index
    %c0_137 = arith.constant 0 : index
    %360 = vector.load %arg18[%c0_136, %c0_137] : memref<128x512xf32, #tpu.memory_space<vmem>>, vector<128x512xf32>
    tpu.vector_store %arg18[%c0_136, %c0_137], %359 {strides = array<i32>} : memref<128x512xf32, #tpu.memory_space<vmem>>, vector<128x512xf32>,
    %c1_138 = arith.constant 1 : index
    %c0_139 = arith.constant 0 : index
    %c0_140 = arith.constant 0 : index
    %361 = vector.load %arg4[%c1_138, %c0_139, %c0_140] : memref<3x128x512xbf16, #tpu.memory_space<vmem>>, vector<1x128x512xbf16>
    %362 = vector.shape_cast %361 : vector<1x128x512xbf16> to vector<128x512xbf16>
    %c1_141 = arith.constant 1 : index
    %c0_142 = arith.constant 0 : index
    %c0_143 = arith.constant 0 : index
    %363 = vector.load %arg6[%c1_141, %c0_142, %c0_143] : memref<3x16x128xf32, #tpu.memory_space<vmem>>, vector<1x16x128xf32>
    %364 = vector.shape_cast %363 : vector<1x16x128xf32> to vector<16x128xf32>
    %c1_144 = arith.constant 1 : index
    %c0_145 = arith.constant 0 : index
    %c0_146 = arith.constant 0 : index
    %365 = vector.load %arg7[%c1_144, %c0_145, %c0_146] : memref<3x16x128xf32, #tpu.memory_space<vmem>>, vector<1x16x128xf32>
    %366 = vector.shape_cast %365 : vector<1x16x128xf32> to vector<16x128xf32>
    %c0_i32_147 = arith.constant 0 : i32
    %c16_i32_148 = arith.constant 16 : i32
    %367 = arith.muli %c0_i32_147, %c16_i32_148 : i32
    %368 = tpu.assume_multiple %367, 16 : i32
    %369 = arith.index_cast %368 : i32 to index
    %c0_149 = arith.constant 0 : index
    %370 = vector.load %arg18[%369, %c0_149] : memref<128x512xf32, #tpu.memory_space<vmem>>, vector<16x512xf32>
    %371 = arith.truncf %364 : vector<16x128xf32> to vector<16x128xbf16>
    %cst_150 = arith.constant dense<0.000000e+00> : vector<16x512xf32>
    %372 = tpu.matmul %371, %362, %cst_150 {dimension_numbers = #tpu.dot_dimension_numbers<[1], [0], [0], [1], [0, 0, 1, 1], [], []>} : vector<16x128xbf16>, vector<128x512xbf16>, vector<16x512xf32> -> vector<16x512xf32>
    %373 = arith.addf %370, %372 : vector<16x512xf32>
    %374 = vector.extract_strided_slice %373 {offsets = [0, 0], sizes = [16, 128], strides = [1, 1]} : vector<16x512xf32> to vector<16x128xf32>
    %cst_151 = arith.constant 5.000000e-01 : f32
    %375 = vector.broadcast %cst_151 : f32 to vector<16x128xf32>
    %376 = arith.mulf %375, %374 : vector<16x128xf32>
    %377 = math.tanh %376 : vector<16x128xf32>
    %cst_152 = arith.constant 5.000000e-01 : f32
    %378 = vector.broadcast %cst_152 : f32 to vector<16x128xf32>
    %379 = arith.mulf %378, %377 : vector<16x128xf32>
    %cst_153 = arith.constant 5.000000e-01 : f32
    %380 = vector.broadcast %cst_153 : f32 to vector<16x128xf32>
    %381 = arith.addf %379, %380 : vector<16x128xf32>
    %382 = vector.extract_strided_slice %373 {offsets = [0, 128], sizes = [16, 128], strides = [1, 1]} : vector<16x512xf32> to vector<16x128xf32>
    %cst_154 = arith.constant 5.000000e-01 : f32
    %383 = vector.broadcast %cst_154 : f32 to vector<16x128xf32>
    %384 = arith.mulf %383, %382 : vector<16x128xf32>
    %385 = math.tanh %384 : vector<16x128xf32>
    %cst_155 = arith.constant 5.000000e-01 : f32
    %386 = vector.broadcast %cst_155 : f32 to vector<16x128xf32>
    %387 = arith.mulf %386, %385 : vector<16x128xf32>
    %cst_156 = arith.constant 5.000000e-01 : f32
    %388 = vector.broadcast %cst_156 : f32 to vector<16x128xf32>
    %389 = arith.addf %387, %388 : vector<16x128xf32>
    %390 = vector.extract_strided_slice %373 {offsets = [0, 256], sizes = [16, 128], strides = [1, 1]} : vector<16x512xf32> to vector<16x128xf32>
    %391 = math.tanh %390 : vector<16x128xf32>
    %392 = vector.extract_strided_slice %373 {offsets = [0, 384], sizes = [16, 128], strides = [1, 1]} : vector<16x512xf32> to vector<16x128xf32>
    %cst_157 = arith.constant 5.000000e-01 : f32
    %393 = vector.broadcast %cst_157 : f32 to vector<16x128xf32>
    %394 = arith.mulf %393, %392 : vector<16x128xf32>
    %395 = math.tanh %394 : vector<16x128xf32>
    %cst_158 = arith.constant 5.000000e-01 : f32
    %396 = vector.broadcast %cst_158 : f32 to vector<16x128xf32>
    %397 = arith.mulf %396, %395 : vector<16x128xf32>
    %cst_159 = arith.constant 5.000000e-01 : f32
    %398 = vector.broadcast %cst_159 : f32 to vector<16x128xf32>
    %399 = arith.addf %397, %398 : vector<16x128xf32>
    %400 = arith.mulf %389, %366 : vector<16x128xf32>
    %401 = arith.mulf %381, %391 : vector<16x128xf32>
    %402 = arith.addf %400, %401 : vector<16x128xf32>
    %403 = math.tanh %402 : vector<16x128xf32>
    %404 = arith.mulf %399, %403 : vector<16x128xf32>
    %405 = arith.truncf %404 : vector<16x128xf32> to vector<16x128xbf16>
    %406 = arith.index_cast %368 : i32 to index
    %c0_160 = arith.constant 0 : index
    %407 = vector.load %arg17[%406, %c0_160] : memref<128x128xbf16, #tpu.memory_space<vmem>>, vector<16x128xbf16>
    tpu.vector_store %arg17[%406, %c0_160], %405 {strides = array<i32>} : memref<128x128xbf16, #tpu.memory_space<vmem>>, vector<16x128xbf16>,
    %c1_i32_161 = arith.constant 1 : i32
    %c16_i32_162 = arith.constant 16 : i32
    %408 = arith.muli %c1_i32_161, %c16_i32_162 : i32
    %409 = tpu.assume_multiple %408, 16 : i32
    %410 = arith.index_cast %409 : i32 to index
    %c0_163 = arith.constant 0 : index
    %411 = vector.load %arg18[%410, %c0_163] : memref<128x512xf32, #tpu.memory_space<vmem>>, vector<16x512xf32>
    %412 = arith.truncf %404 : vector<16x128xf32> to vector<16x128xbf16>
    %cst_164 = arith.constant dense<0.000000e+00> : vector<16x512xf32>
    %413 = tpu.matmul %412, %362, %cst_164 {dimension_numbers = #tpu.dot_dimension_numbers<[1], [0], [0], [1], [0, 0, 1, 1], [], []>} : vector<16x128xbf16>, vector<128x512xbf16>, vector<16x512xf32> -> vector<16x512xf32>
    %414 = arith.addf %411, %413 : vector<16x512xf32>
    %415 = vector.extract_strided_slice %414 {offsets = [0, 0], sizes = [16, 128], strides = [1, 1]} : vector<16x512xf32> to vector<16x128xf32>
    %cst_165 = arith.constant 5.000000e-01 : f32
    %416 = vector.broadcast %cst_165 : f32 to vector<16x128xf32>
    %417 = arith.mulf %416, %415 : vector<16x128xf32>
    %418 = math.tanh %417 : vector<16x128xf32>
    %cst_166 = arith.constant 5.000000e-01 : f32
    %419 = vector.broadcast %cst_166 : f32 to vector<16x128xf32>
    %420 = arith.mulf %419, %418 : vector<16x128xf32>
    %cst_167 = arith.constant 5.000000e-01 : f32
    %421 = vector.broadcast %cst_167 : f32 to vector<16x128xf32>
    %422 = arith.addf %420, %421 : vector<16x128xf32>
    %423 = vector.extract_strided_slice %414 {offsets = [0, 128], sizes = [16, 128], strides = [1, 1]} : vector<16x512xf32> to vector<16x128xf32>
    %cst_168 = arith.constant 5.000000e-01 : f32
    %424 = vector.broadcast %cst_168 : f32 to vector<16x128xf32>
    %425 = arith.mulf %424, %423 : vector<16x128xf32>
    %426 = math.tanh %425 : vector<16x128xf32>
    %cst_169 = arith.constant 5.000000e-01 : f32
    %427 = vector.broadcast %cst_169 : f32 to vector<16x128xf32>
    %428 = arith.mulf %427, %426 : vector<16x128xf32>
    %cst_170 = arith.constant 5.000000e-01 : f32
    %429 = vector.broadcast %cst_170 : f32 to vector<16x128xf32>
    %430 = arith.addf %428, %429 : vector<16x128xf32>
    %431 = vector.extract_strided_slice %414 {offsets = [0, 256], sizes = [16, 128], strides = [1, 1]} : vector<16x512xf32> to vector<16x128xf32>
    %432 = math.tanh %431 : vector<16x128xf32>
    %433 = vector.extract_strided_slice %414 {offsets = [0, 384], sizes = [16, 128], strides = [1, 1]} : vector<16x512xf32> to vector<16x128xf32>
    %cst_171 = arith.constant 5.000000e-01 : f32
    %434 = vector.broadcast %cst_171 : f32 to vector<16x128xf32>
    %435 = arith.mulf %434, %433 : vector<16x128xf32>
    %436 = math.tanh %435 : vector<16x128xf32>
    %cst_172 = arith.constant 5.000000e-01 : f32
    %437 = vector.broadcast %cst_172 : f32 to vector<16x128xf32>
    %438 = arith.mulf %437, %436 : vector<16x128xf32>
    %cst_173 = arith.constant 5.000000e-01 : f32
    %439 = vector.broadcast %cst_173 : f32 to vector<16x128xf32>
    %440 = arith.addf %438, %439 : vector<16x128xf32>
    %441 = arith.mulf %430, %402 : vector<16x128xf32>
    %442 = arith.mulf %422, %432 : vector<16x128xf32>
    %443 = arith.addf %441, %442 : vector<16x128xf32>
    %444 = math.tanh %443 : vector<16x128xf32>
    %445 = arith.mulf %440, %444 : vector<16x128xf32>
    %446 = arith.truncf %445 : vector<16x128xf32> to vector<16x128xbf16>
    %447 = arith.index_cast %409 : i32 to index
    %c0_174 = arith.constant 0 : index
    %448 = vector.load %arg17[%447, %c0_174] : memref<128x128xbf16, #tpu.memory_space<vmem>>, vector<16x128xbf16>
    tpu.vector_store %arg17[%447, %c0_174], %446 {strides = array<i32>} : memref<128x128xbf16, #tpu.memory_space<vmem>>, vector<16x128xbf16>,
    %c2_i32_175 = arith.constant 2 : i32
    %c16_i32_176 = arith.constant 16 : i32
    %449 = arith.muli %c2_i32_175, %c16_i32_176 : i32
    %450 = tpu.assume_multiple %449, 16 : i32
    %451 = arith.index_cast %450 : i32 to index
    %c0_177 = arith.constant 0 : index
    %452 = vector.load %arg18[%451, %c0_177] : memref<128x512xf32, #tpu.memory_space<vmem>>, vector<16x512xf32>
    %453 = arith.truncf %445 : vector<16x128xf32> to vector<16x128xbf16>
    %cst_178 = arith.constant dense<0.000000e+00> : vector<16x512xf32>
    %454 = tpu.matmul %453, %362, %cst_178 {dimension_numbers = #tpu.dot_dimension_numbers<[1], [0], [0], [1], [0, 0, 1, 1], [], []>} : vector<16x128xbf16>, vector<128x512xbf16>, vector<16x512xf32> -> vector<16x512xf32>
    %455 = arith.addf %452, %454 : vector<16x512xf32>
    %456 = vector.extract_strided_slice %455 {offsets = [0, 0], sizes = [16, 128], strides = [1, 1]} : vector<16x512xf32> to vector<16x128xf32>
    %cst_179 = arith.constant 5.000000e-01 : f32
    %457 = vector.broadcast %cst_179 : f32 to vector<16x128xf32>
    %458 = arith.mulf %457, %456 : vector<16x128xf32>
    %459 = math.tanh %458 : vector<16x128xf32>
    %cst_180 = arith.constant 5.000000e-01 : f32
    %460 = vector.broadcast %cst_180 : f32 to vector<16x128xf32>
    %461 = arith.mulf %460, %459 : vector<16x128xf32>
    %cst_181 = arith.constant 5.000000e-01 : f32
    %462 = vector.broadcast %cst_181 : f32 to vector<16x128xf32>
    %463 = arith.addf %461, %462 : vector<16x128xf32>
    %464 = vector.extract_strided_slice %455 {offsets = [0, 128], sizes = [16, 128], strides = [1, 1]} : vector<16x512xf32> to vector<16x128xf32>
    %cst_182 = arith.constant 5.000000e-01 : f32
    %465 = vector.broadcast %cst_182 : f32 to vector<16x128xf32>
    %466 = arith.mulf %465, %464 : vector<16x128xf32>
    %467 = math.tanh %466 : vector<16x128xf32>
    %cst_183 = arith.constant 5.000000e-01 : f32
    %468 = vector.broadcast %cst_183 : f32 to vector<16x128xf32>
    %469 = arith.mulf %468, %467 : vector<16x128xf32>
    %cst_184 = arith.constant 5.000000e-01 : f32
    %470 = vector.broadcast %cst_184 : f32 to vector<16x128xf32>
    %471 = arith.addf %469, %470 : vector<16x128xf32>
    %472 = vector.extract_strided_slice %455 {offsets = [0, 256], sizes = [16, 128], strides = [1, 1]} : vector<16x512xf32> to vector<16x128xf32>
    %473 = math.tanh %472 : vector<16x128xf32>
    %474 = vector.extract_strided_slice %455 {offsets = [0, 384], sizes = [16, 128], strides = [1, 1]} : vector<16x512xf32> to vector<16x128xf32>
    %cst_185 = arith.constant 5.000000e-01 : f32
    %475 = vector.broadcast %cst_185 : f32 to vector<16x128xf32>
    %476 = arith.mulf %475, %474 : vector<16x128xf32>
    %477 = math.tanh %476 : vector<16x128xf32>
    %cst_186 = arith.constant 5.000000e-01 : f32
    %478 = vector.broadcast %cst_186 : f32 to vector<16x128xf32>
    %479 = arith.mulf %478, %477 : vector<16x128xf32>
    %cst_187 = arith.constant 5.000000e-01 : f32
    %480 = vector.broadcast %cst_187 : f32 to vector<16x128xf32>
    %481 = arith.addf %479, %480 : vector<16x128xf32>
    %482 = arith.mulf %471, %443 : vector<16x128xf32>
    %483 = arith.mulf %463, %473 : vector<16x128xf32>
    %484 = arith.addf %482, %483 : vector<16x128xf32>
    %485 = math.tanh %484 : vector<16x128xf32>
    %486 = arith.mulf %481, %485 : vector<16x128xf32>
    %487 = arith.truncf %486 : vector<16x128xf32> to vector<16x128xbf16>
    %488 = arith.index_cast %450 : i32 to index
    %c0_188 = arith.constant 0 : index
    %489 = vector.load %arg17[%488, %c0_188] : memref<128x128xbf16, #tpu.memory_space<vmem>>, vector<16x128xbf16>
    tpu.vector_store %arg17[%488, %c0_188], %487 {strides = array<i32>} : memref<128x128xbf16, #tpu.memory_space<vmem>>, vector<16x128xbf16>,
    %c3_i32_189 = arith.constant 3 : i32
    %c16_i32_190 = arith.constant 16 : i32
    %490 = arith.muli %c3_i32_189, %c16_i32_190 : i32
    %491 = tpu.assume_multiple %490, 16 : i32
    %492 = arith.index_cast %491 : i32 to index
    %c0_191 = arith.constant 0 : index
    %493 = vector.load %arg18[%492, %c0_191] : memref<128x512xf32, #tpu.memory_space<vmem>>, vector<16x512xf32>
    %494 = arith.truncf %486 : vector<16x128xf32> to vector<16x128xbf16>
    %cst_192 = arith.constant dense<0.000000e+00> : vector<16x512xf32>
    %495 = tpu.matmul %494, %362, %cst_192 {dimension_numbers = #tpu.dot_dimension_numbers<[1], [0], [0], [1], [0, 0, 1, 1], [], []>} : vector<16x128xbf16>, vector<128x512xbf16>, vector<16x512xf32> -> vector<16x512xf32>
    %496 = arith.addf %493, %495 : vector<16x512xf32>
    %497 = vector.extract_strided_slice %496 {offsets = [0, 0], sizes = [16, 128], strides = [1, 1]} : vector<16x512xf32> to vector<16x128xf32>
    %cst_193 = arith.constant 5.000000e-01 : f32
    %498 = vector.broadcast %cst_193 : f32 to vector<16x128xf32>
    %499 = arith.mulf %498, %497 : vector<16x128xf32>
    %500 = math.tanh %499 : vector<16x128xf32>
    %cst_194 = arith.constant 5.000000e-01 : f32
    %501 = vector.broadcast %cst_194 : f32 to vector<16x128xf32>
    %502 = arith.mulf %501, %500 : vector<16x128xf32>
    %cst_195 = arith.constant 5.000000e-01 : f32
    %503 = vector.broadcast %cst_195 : f32 to vector<16x128xf32>
    %504 = arith.addf %502, %503 : vector<16x128xf32>
    %505 = vector.extract_strided_slice %496 {offsets = [0, 128], sizes = [16, 128], strides = [1, 1]} : vector<16x512xf32> to vector<16x128xf32>
    %cst_196 = arith.constant 5.000000e-01 : f32
    %506 = vector.broadcast %cst_196 : f32 to vector<16x128xf32>
    %507 = arith.mulf %506, %505 : vector<16x128xf32>
    %508 = math.tanh %507 : vector<16x128xf32>
    %cst_197 = arith.constant 5.000000e-01 : f32
    %509 = vector.broadcast %cst_197 : f32 to vector<16x128xf32>
    %510 = arith.mulf %509, %508 : vector<16x128xf32>
    %cst_198 = arith.constant 5.000000e-01 : f32
    %511 = vector.broadcast %cst_198 : f32 to vector<16x128xf32>
    %512 = arith.addf %510, %511 : vector<16x128xf32>
    %513 = vector.extract_strided_slice %496 {offsets = [0, 256], sizes = [16, 128], strides = [1, 1]} : vector<16x512xf32> to vector<16x128xf32>
    %514 = math.tanh %513 : vector<16x128xf32>
    %515 = vector.extract_strided_slice %496 {offsets = [0, 384], sizes = [16, 128], strides = [1, 1]} : vector<16x512xf32> to vector<16x128xf32>
    %cst_199 = arith.constant 5.000000e-01 : f32
    %516 = vector.broadcast %cst_199 : f32 to vector<16x128xf32>
    %517 = arith.mulf %516, %515 : vector<16x128xf32>
    %518 = math.tanh %517 : vector<16x128xf32>
    %cst_200 = arith.constant 5.000000e-01 : f32
    %519 = vector.broadcast %cst_200 : f32 to vector<16x128xf32>
    %520 = arith.mulf %519, %518 : vector<16x128xf32>
    %cst_201 = arith.constant 5.000000e-01 : f32
    %521 = vector.broadcast %cst_201 : f32 to vector<16x128xf32>
    %522 = arith.addf %520, %521 : vector<16x128xf32>
    %523 = arith.mulf %512, %484 : vector<16x128xf32>
    %524 = arith.mulf %504, %514 : vector<16x128xf32>
    %525 = arith.addf %523, %524 : vector<16x128xf32>
    %526 = math.tanh %525 : vector<16x128xf32>
    %527 = arith.mulf %522, %526 : vector<16x128xf32>
    %528 = arith.truncf %527 : vector<16x128xf32> to vector<16x128xbf16>
    %529 = arith.index_cast %491 : i32 to index
    %c0_202 = arith.constant 0 : index
    %530 = vector.load %arg17[%529, %c0_202] : memref<128x128xbf16, #tpu.memory_space<vmem>>, vector<16x128xbf16>
    tpu.vector_store %arg17[%529, %c0_202], %528 {strides = array<i32>} : memref<128x128xbf16, #tpu.memory_space<vmem>>, vector<16x128xbf16>,
    %c4_i32_203 = arith.constant 4 : i32
    %c16_i32_204 = arith.constant 16 : i32
    %531 = arith.muli %c4_i32_203, %c16_i32_204 : i32
    %532 = tpu.assume_multiple %531, 16 : i32
    %533 = arith.index_cast %532 : i32 to index
    %c0_205 = arith.constant 0 : index
    %534 = vector.load %arg18[%533, %c0_205] : memref<128x512xf32, #tpu.memory_space<vmem>>, vector<16x512xf32>
    %535 = arith.truncf %527 : vector<16x128xf32> to vector<16x128xbf16>
    %cst_206 = arith.constant dense<0.000000e+00> : vector<16x512xf32>
    %536 = tpu.matmul %535, %362, %cst_206 {dimension_numbers = #tpu.dot_dimension_numbers<[1], [0], [0], [1], [0, 0, 1, 1], [], []>} : vector<16x128xbf16>, vector<128x512xbf16>, vector<16x512xf32> -> vector<16x512xf32>
    %537 = arith.addf %534, %536 : vector<16x512xf32>
    %538 = vector.extract_strided_slice %537 {offsets = [0, 0], sizes = [16, 128], strides = [1, 1]} : vector<16x512xf32> to vector<16x128xf32>
    %cst_207 = arith.constant 5.000000e-01 : f32
    %539 = vector.broadcast %cst_207 : f32 to vector<16x128xf32>
    %540 = arith.mulf %539, %538 : vector<16x128xf32>
    %541 = math.tanh %540 : vector<16x128xf32>
    %cst_208 = arith.constant 5.000000e-01 : f32
    %542 = vector.broadcast %cst_208 : f32 to vector<16x128xf32>
    %543 = arith.mulf %542, %541 : vector<16x128xf32>
    %cst_209 = arith.constant 5.000000e-01 : f32
    %544 = vector.broadcast %cst_209 : f32 to vector<16x128xf32>
    %545 = arith.addf %543, %544 : vector<16x128xf32>
    %546 = vector.extract_strided_slice %537 {offsets = [0, 128], sizes = [16, 128], strides = [1, 1]} : vector<16x512xf32> to vector<16x128xf32>
    %cst_210 = arith.constant 5.000000e-01 : f32
    %547 = vector.broadcast %cst_210 : f32 to vector<16x128xf32>
    %548 = arith.mulf %547, %546 : vector<16x128xf32>
    %549 = math.tanh %548 : vector<16x128xf32>
    %cst_211 = arith.constant 5.000000e-01 : f32
    %550 = vector.broadcast %cst_211 : f32 to vector<16x128xf32>
    %551 = arith.mulf %550, %549 : vector<16x128xf32>
    %cst_212 = arith.constant 5.000000e-01 : f32
    %552 = vector.broadcast %cst_212 : f32 to vector<16x128xf32>
    %553 = arith.addf %551, %552 : vector<16x128xf32>
    %554 = vector.extract_strided_slice %537 {offsets = [0, 256], sizes = [16, 128], strides = [1, 1]} : vector<16x512xf32> to vector<16x128xf32>
    %555 = math.tanh %554 : vector<16x128xf32>
    %556 = vector.extract_strided_slice %537 {offsets = [0, 384], sizes = [16, 128], strides = [1, 1]} : vector<16x512xf32> to vector<16x128xf32>
    %cst_213 = arith.constant 5.000000e-01 : f32
    %557 = vector.broadcast %cst_213 : f32 to vector<16x128xf32>
    %558 = arith.mulf %557, %556 : vector<16x128xf32>
    %559 = math.tanh %558 : vector<16x128xf32>
    %cst_214 = arith.constant 5.000000e-01 : f32
    %560 = vector.broadcast %cst_214 : f32 to vector<16x128xf32>
    %561 = arith.mulf %560, %559 : vector<16x128xf32>
    %cst_215 = arith.constant 5.000000e-01 : f32
    %562 = vector.broadcast %cst_215 : f32 to vector<16x128xf32>
    %563 = arith.addf %561, %562 : vector<16x128xf32>
    %564 = arith.mulf %553, %525 : vector<16x128xf32>
    %565 = arith.mulf %545, %555 : vector<16x128xf32>
    %566 = arith.addf %564, %565 : vector<16x128xf32>
    %567 = math.tanh %566 : vector<16x128xf32>
    %568 = arith.mulf %563, %567 : vector<16x128xf32>
    %569 = arith.truncf %568 : vector<16x128xf32> to vector<16x128xbf16>
    %570 = arith.index_cast %532 : i32 to index
    %c0_216 = arith.constant 0 : index
    %571 = vector.load %arg17[%570, %c0_216] : memref<128x128xbf16, #tpu.memory_space<vmem>>, vector<16x128xbf16>
    tpu.vector_store %arg17[%570, %c0_216], %569 {strides = array<i32>} : memref<128x128xbf16, #tpu.memory_space<vmem>>, vector<16x128xbf16>,
    %c5_i32_217 = arith.constant 5 : i32
    %c16_i32_218 = arith.constant 16 : i32
    %572 = arith.muli %c5_i32_217, %c16_i32_218 : i32
    %573 = tpu.assume_multiple %572, 16 : i32
    %574 = arith.index_cast %573 : i32 to index
    %c0_219 = arith.constant 0 : index
    %575 = vector.load %arg18[%574, %c0_219] : memref<128x512xf32, #tpu.memory_space<vmem>>, vector<16x512xf32>
    %576 = arith.truncf %568 : vector<16x128xf32> to vector<16x128xbf16>
    %cst_220 = arith.constant dense<0.000000e+00> : vector<16x512xf32>
    %577 = tpu.matmul %576, %362, %cst_220 {dimension_numbers = #tpu.dot_dimension_numbers<[1], [0], [0], [1], [0, 0, 1, 1], [], []>} : vector<16x128xbf16>, vector<128x512xbf16>, vector<16x512xf32> -> vector<16x512xf32>
    %578 = arith.addf %575, %577 : vector<16x512xf32>
    %579 = vector.extract_strided_slice %578 {offsets = [0, 0], sizes = [16, 128], strides = [1, 1]} : vector<16x512xf32> to vector<16x128xf32>
    %cst_221 = arith.constant 5.000000e-01 : f32
    %580 = vector.broadcast %cst_221 : f32 to vector<16x128xf32>
    %581 = arith.mulf %580, %579 : vector<16x128xf32>
    %582 = math.tanh %581 : vector<16x128xf32>
    %cst_222 = arith.constant 5.000000e-01 : f32
    %583 = vector.broadcast %cst_222 : f32 to vector<16x128xf32>
    %584 = arith.mulf %583, %582 : vector<16x128xf32>
    %cst_223 = arith.constant 5.000000e-01 : f32
    %585 = vector.broadcast %cst_223 : f32 to vector<16x128xf32>
    %586 = arith.addf %584, %585 : vector<16x128xf32>
    %587 = vector.extract_strided_slice %578 {offsets = [0, 128], sizes = [16, 128], strides = [1, 1]} : vector<16x512xf32> to vector<16x128xf32>
    %cst_224 = arith.constant 5.000000e-01 : f32
    %588 = vector.broadcast %cst_224 : f32 to vector<16x128xf32>
    %589 = arith.mulf %588, %587 : vector<16x128xf32>
    %590 = math.tanh %589 : vector<16x128xf32>
    %cst_225 = arith.constant 5.000000e-01 : f32
    %591 = vector.broadcast %cst_225 : f32 to vector<16x128xf32>
    %592 = arith.mulf %591, %590 : vector<16x128xf32>
    %cst_226 = arith.constant 5.000000e-01 : f32
    %593 = vector.broadcast %cst_226 : f32 to vector<16x128xf32>
    %594 = arith.addf %592, %593 : vector<16x128xf32>
    %595 = vector.extract_strided_slice %578 {offsets = [0, 256], sizes = [16, 128], strides = [1, 1]} : vector<16x512xf32> to vector<16x128xf32>
    %596 = math.tanh %595 : vector<16x128xf32>
    %597 = vector.extract_strided_slice %578 {offsets = [0, 384], sizes = [16, 128], strides = [1, 1]} : vector<16x512xf32> to vector<16x128xf32>
    %cst_227 = arith.constant 5.000000e-01 : f32
    %598 = vector.broadcast %cst_227 : f32 to vector<16x128xf32>
    %599 = arith.mulf %598, %597 : vector<16x128xf32>
    %600 = math.tanh %599 : vector<16x128xf32>
    %cst_228 = arith.constant 5.000000e-01 : f32
    %601 = vector.broadcast %cst_228 : f32 to vector<16x128xf32>
    %602 = arith.mulf %601, %600 : vector<16x128xf32>
    %cst_229 = arith.constant 5.000000e-01 : f32
    %603 = vector.broadcast %cst_229 : f32 to vector<16x128xf32>
    %604 = arith.addf %602, %603 : vector<16x128xf32>
    %605 = arith.mulf %594, %566 : vector<16x128xf32>
    %606 = arith.mulf %586, %596 : vector<16x128xf32>
    %607 = arith.addf %605, %606 : vector<16x128xf32>
    %608 = math.tanh %607 : vector<16x128xf32>
    %609 = arith.mulf %604, %608 : vector<16x128xf32>
    %610 = arith.truncf %609 : vector<16x128xf32> to vector<16x128xbf16>
    %611 = arith.index_cast %573 : i32 to index
    %c0_230 = arith.constant 0 : index
    %612 = vector.load %arg17[%611, %c0_230] : memref<128x128xbf16, #tpu.memory_space<vmem>>, vector<16x128xbf16>
    tpu.vector_store %arg17[%611, %c0_230], %610 {strides = array<i32>} : memref<128x128xbf16, #tpu.memory_space<vmem>>, vector<16x128xbf16>,
    %c6_i32_231 = arith.constant 6 : i32
    %c16_i32_232 = arith.constant 16 : i32
    %613 = arith.muli %c6_i32_231, %c16_i32_232 : i32
    %614 = tpu.assume_multiple %613, 16 : i32
    %615 = arith.index_cast %614 : i32 to index
    %c0_233 = arith.constant 0 : index
    %616 = vector.load %arg18[%615, %c0_233] : memref<128x512xf32, #tpu.memory_space<vmem>>, vector<16x512xf32>
    %617 = arith.truncf %609 : vector<16x128xf32> to vector<16x128xbf16>
    %cst_234 = arith.constant dense<0.000000e+00> : vector<16x512xf32>
    %618 = tpu.matmul %617, %362, %cst_234 {dimension_numbers = #tpu.dot_dimension_numbers<[1], [0], [0], [1], [0, 0, 1, 1], [], []>} : vector<16x128xbf16>, vector<128x512xbf16>, vector<16x512xf32> -> vector<16x512xf32>
    %619 = arith.addf %616, %618 : vector<16x512xf32>
    %620 = vector.extract_strided_slice %619 {offsets = [0, 0], sizes = [16, 128], strides = [1, 1]} : vector<16x512xf32> to vector<16x128xf32>
    %cst_235 = arith.constant 5.000000e-01 : f32
    %621 = vector.broadcast %cst_235 : f32 to vector<16x128xf32>
    %622 = arith.mulf %621, %620 : vector<16x128xf32>
    %623 = math.tanh %622 : vector<16x128xf32>
    %cst_236 = arith.constant 5.000000e-01 : f32
    %624 = vector.broadcast %cst_236 : f32 to vector<16x128xf32>
    %625 = arith.mulf %624, %623 : vector<16x128xf32>
    %cst_237 = arith.constant 5.000000e-01 : f32
    %626 = vector.broadcast %cst_237 : f32 to vector<16x128xf32>
    %627 = arith.addf %625, %626 : vector<16x128xf32>
    %628 = vector.extract_strided_slice %619 {offsets = [0, 128], sizes = [16, 128], strides = [1, 1]} : vector<16x512xf32> to vector<16x128xf32>
    %cst_238 = arith.constant 5.000000e-01 : f32
    %629 = vector.broadcast %cst_238 : f32 to vector<16x128xf32>
    %630 = arith.mulf %629, %628 : vector<16x128xf32>
    %631 = math.tanh %630 : vector<16x128xf32>
    %cst_239 = arith.constant 5.000000e-01 : f32
    %632 = vector.broadcast %cst_239 : f32 to vector<16x128xf32>
    %633 = arith.mulf %632, %631 : vector<16x128xf32>
    %cst_240 = arith.constant 5.000000e-01 : f32
    %634 = vector.broadcast %cst_240 : f32 to vector<16x128xf32>
    %635 = arith.addf %633, %634 : vector<16x128xf32>
    %636 = vector.extract_strided_slice %619 {offsets = [0, 256], sizes = [16, 128], strides = [1, 1]} : vector<16x512xf32> to vector<16x128xf32>
    %637 = math.tanh %636 : vector<16x128xf32>
    %638 = vector.extract_strided_slice %619 {offsets = [0, 384], sizes = [16, 128], strides = [1, 1]} : vector<16x512xf32> to vector<16x128xf32>
    %cst_241 = arith.constant 5.000000e-01 : f32
    %639 = vector.broadcast %cst_241 : f32 to vector<16x128xf32>
    %640 = arith.mulf %639, %638 : vector<16x128xf32>
    %641 = math.tanh %640 : vector<16x128xf32>
    %cst_242 = arith.constant 5.000000e-01 : f32
    %642 = vector.broadcast %cst_242 : f32 to vector<16x128xf32>
    %643 = arith.mulf %642, %641 : vector<16x128xf32>
    %cst_243 = arith.constant 5.000000e-01 : f32
    %644 = vector.broadcast %cst_243 : f32 to vector<16x128xf32>
    %645 = arith.addf %643, %644 : vector<16x128xf32>
    %646 = arith.mulf %635, %607 : vector<16x128xf32>
    %647 = arith.mulf %627, %637 : vector<16x128xf32>
    %648 = arith.addf %646, %647 : vector<16x128xf32>
    %649 = math.tanh %648 : vector<16x128xf32>
    %650 = arith.mulf %645, %649 : vector<16x128xf32>
    %651 = arith.truncf %650 : vector<16x128xf32> to vector<16x128xbf16>
    %652 = arith.index_cast %614 : i32 to index
    %c0_244 = arith.constant 0 : index
    %653 = vector.load %arg17[%652, %c0_244] : memref<128x128xbf16, #tpu.memory_space<vmem>>, vector<16x128xbf16>
    tpu.vector_store %arg17[%652, %c0_244], %651 {strides = array<i32>} : memref<128x128xbf16, #tpu.memory_space<vmem>>, vector<16x128xbf16>,
    %c7_i32_245 = arith.constant 7 : i32
    %c16_i32_246 = arith.constant 16 : i32
    %654 = arith.muli %c7_i32_245, %c16_i32_246 : i32
    %655 = tpu.assume_multiple %654, 16 : i32
    %656 = arith.index_cast %655 : i32 to index
    %c0_247 = arith.constant 0 : index
    %657 = vector.load %arg18[%656, %c0_247] : memref<128x512xf32, #tpu.memory_space<vmem>>, vector<16x512xf32>
    %658 = arith.truncf %650 : vector<16x128xf32> to vector<16x128xbf16>
    %cst_248 = arith.constant dense<0.000000e+00> : vector<16x512xf32>
    %659 = tpu.matmul %658, %362, %cst_248 {dimension_numbers = #tpu.dot_dimension_numbers<[1], [0], [0], [1], [0, 0, 1, 1], [], []>} : vector<16x128xbf16>, vector<128x512xbf16>, vector<16x512xf32> -> vector<16x512xf32>
    %660 = arith.addf %657, %659 : vector<16x512xf32>
    %661 = vector.extract_strided_slice %660 {offsets = [0, 0], sizes = [16, 128], strides = [1, 1]} : vector<16x512xf32> to vector<16x128xf32>
    %cst_249 = arith.constant 5.000000e-01 : f32
    %662 = vector.broadcast %cst_249 : f32 to vector<16x128xf32>
    %663 = arith.mulf %662, %661 : vector<16x128xf32>
    %664 = math.tanh %663 : vector<16x128xf32>
    %cst_250 = arith.constant 5.000000e-01 : f32
    %665 = vector.broadcast %cst_250 : f32 to vector<16x128xf32>
    %666 = arith.mulf %665, %664 : vector<16x128xf32>
    %cst_251 = arith.constant 5.000000e-01 : f32
    %667 = vector.broadcast %cst_251 : f32 to vector<16x128xf32>
    %668 = arith.addf %666, %667 : vector<16x128xf32>
    %669 = vector.extract_strided_slice %660 {offsets = [0, 128], sizes = [16, 128], strides = [1, 1]} : vector<16x512xf32> to vector<16x128xf32>
    %cst_252 = arith.constant 5.000000e-01 : f32
    %670 = vector.broadcast %cst_252 : f32 to vector<16x128xf32>
    %671 = arith.mulf %670, %669 : vector<16x128xf32>
    %672 = math.tanh %671 : vector<16x128xf32>
    %cst_253 = arith.constant 5.000000e-01 : f32
    %673 = vector.broadcast %cst_253 : f32 to vector<16x128xf32>
    %674 = arith.mulf %673, %672 : vector<16x128xf32>
    %cst_254 = arith.constant 5.000000e-01 : f32
    %675 = vector.broadcast %cst_254 : f32 to vector<16x128xf32>
    %676 = arith.addf %674, %675 : vector<16x128xf32>
    %677 = vector.extract_strided_slice %660 {offsets = [0, 256], sizes = [16, 128], strides = [1, 1]} : vector<16x512xf32> to vector<16x128xf32>
    %678 = math.tanh %677 : vector<16x128xf32>
    %679 = vector.extract_strided_slice %660 {offsets = [0, 384], sizes = [16, 128], strides = [1, 1]} : vector<16x512xf32> to vector<16x128xf32>
    %cst_255 = arith.constant 5.000000e-01 : f32
    %680 = vector.broadcast %cst_255 : f32 to vector<16x128xf32>
    %681 = arith.mulf %680, %679 : vector<16x128xf32>
    %682 = math.tanh %681 : vector<16x128xf32>
    %cst_256 = arith.constant 5.000000e-01 : f32
    %683 = vector.broadcast %cst_256 : f32 to vector<16x128xf32>
    %684 = arith.mulf %683, %682 : vector<16x128xf32>
    %cst_257 = arith.constant 5.000000e-01 : f32
    %685 = vector.broadcast %cst_257 : f32 to vector<16x128xf32>
    %686 = arith.addf %684, %685 : vector<16x128xf32>
    %687 = arith.mulf %676, %648 : vector<16x128xf32>
    %688 = arith.mulf %668, %678 : vector<16x128xf32>
    %689 = arith.addf %687, %688 : vector<16x128xf32>
    %690 = math.tanh %689 : vector<16x128xf32>
    %691 = arith.mulf %686, %690 : vector<16x128xf32>
    %692 = arith.truncf %691 : vector<16x128xf32> to vector<16x128xbf16>
    %693 = arith.index_cast %655 : i32 to index
    %c0_258 = arith.constant 0 : index
    %694 = vector.load %arg17[%693, %c0_258] : memref<128x128xbf16, #tpu.memory_space<vmem>>, vector<16x128xbf16>
    tpu.vector_store %arg17[%693, %c0_258], %692 {strides = array<i32>} : memref<128x128xbf16, #tpu.memory_space<vmem>>, vector<16x128xbf16>,
    %c8_i32_259 = arith.constant 8 : i32
    %c1_260 = arith.constant 1 : index
    %c0_261 = arith.constant 0 : index
    %c0_262 = arith.constant 0 : index
    %695 = vector.load %arg15[%c1_260, %c0_261, %c0_262] : memref<3x16x128xf32, #tpu.memory_space<vmem>>, vector<1x16x128xf32>
    %696 = vector.shape_cast %695 : vector<1x16x128xf32> to vector<16x128xf32>
    %697 = vector.shape_cast %691 : vector<16x128xf32> to vector<1x16x128xf32>
    tpu.vector_store %arg15[%c1_260, %c0_261, %c0_262], %697 {strides = array<i32>} : memref<3x16x128xf32, #tpu.memory_space<vmem>>, vector<1x16x128xf32>,
    %c1_263 = arith.constant 1 : index
    %c0_264 = arith.constant 0 : index
    %c0_265 = arith.constant 0 : index
    %698 = vector.load %arg16[%c1_263, %c0_264, %c0_265] : memref<3x16x128xf32, #tpu.memory_space<vmem>>, vector<1x16x128xf32>
    %699 = vector.shape_cast %698 : vector<1x16x128xf32> to vector<16x128xf32>
    %700 = vector.shape_cast %689 : vector<16x128xf32> to vector<1x16x128xf32>
    tpu.vector_store %arg16[%c1_263, %c0_264, %c0_265], %700 {strides = array<i32>} : memref<3x16x128xf32, #tpu.memory_space<vmem>>, vector<1x16x128xf32>,
    %c0_266 = arith.constant 0 : index
    %c0_267 = arith.constant 0 : index
    %701 = vector.load %arg17[%c0_266, %c0_267] : memref<128x128xbf16, #tpu.memory_space<vmem>>, vector<128x128xbf16>
    %c1_268 = arith.constant 1 : index
    %c0_269 = arith.constant 0 : index
    %c0_270 = arith.constant 0 : index
    %702 = vector.load %arg3[%c1_268, %c0_269, %c0_270] : memref<2x128x512xbf16, #tpu.memory_space<vmem>>, vector<1x128x512xbf16>
    %703 = vector.shape_cast %702 : vector<1x128x512xbf16> to vector<128x512xbf16>
    %cst_271 = arith.constant dense<0.000000e+00> : vector<128x512xf32>
    %704 = tpu.matmul %701, %703, %cst_271 {dimension_numbers = #tpu.dot_dimension_numbers<[1], [0], [0], [1], [0, 0, 1, 1], [], []>} : vector<128x128xbf16>, vector<128x512xbf16>, vector<128x512xf32> -> vector<128x512xf32>
    %c2 = arith.constant 2 : index
    %c0_272 = arith.constant 0 : index
    %c0_273 = arith.constant 0 : index
    %705 = vector.load %arg5[%c2, %c0_272, %c0_273] : memref<3x1x512xf32, #tpu.memory_space<vmem>>, vector<1x1x512xf32>
    %706 = vector.shape_cast %705 : vector<1x1x512xf32> to vector<1x512xf32>
    %707 = vector.broadcast %706 : vector<1x512xf32> to vector<128x512xf32>
    %708 = arith.addf %704, %707 : vector<128x512xf32>
    %c0_274 = arith.constant 0 : index
    %c0_275 = arith.constant 0 : index
    %709 = vector.load %arg18[%c0_274, %c0_275] : memref<128x512xf32, #tpu.memory_space<vmem>>, vector<128x512xf32>
    tpu.vector_store %arg18[%c0_274, %c0_275], %708 {strides = array<i32>} : memref<128x512xf32, #tpu.memory_space<vmem>>, vector<128x512xf32>,
    %c2_276 = arith.constant 2 : index
    %c0_277 = arith.constant 0 : index
    %c0_278 = arith.constant 0 : index
    %710 = vector.load %arg4[%c2_276, %c0_277, %c0_278] : memref<3x128x512xbf16, #tpu.memory_space<vmem>>, vector<1x128x512xbf16>
    %711 = vector.shape_cast %710 : vector<1x128x512xbf16> to vector<128x512xbf16>
    %c2_279 = arith.constant 2 : index
    %c0_280 = arith.constant 0 : index
    %c0_281 = arith.constant 0 : index
    %712 = vector.load %arg6[%c2_279, %c0_280, %c0_281] : memref<3x16x128xf32, #tpu.memory_space<vmem>>, vector<1x16x128xf32>
    %713 = vector.shape_cast %712 : vector<1x16x128xf32> to vector<16x128xf32>
    %c2_282 = arith.constant 2 : index
    %c0_283 = arith.constant 0 : index
    %c0_284 = arith.constant 0 : index
    %714 = vector.load %arg7[%c2_282, %c0_283, %c0_284] : memref<3x16x128xf32, #tpu.memory_space<vmem>>, vector<1x16x128xf32>
    %715 = vector.shape_cast %714 : vector<1x16x128xf32> to vector<16x128xf32>
    %c0_i32_285 = arith.constant 0 : i32
    %c16_i32_286 = arith.constant 16 : i32
    %716 = arith.muli %c0_i32_285, %c16_i32_286 : i32
    %717 = tpu.assume_multiple %716, 16 : i32
    %718 = arith.index_cast %717 : i32 to index
    %c0_287 = arith.constant 0 : index
    %719 = vector.load %arg18[%718, %c0_287] : memref<128x512xf32, #tpu.memory_space<vmem>>, vector<16x512xf32>
    %720 = arith.truncf %713 : vector<16x128xf32> to vector<16x128xbf16>
    %cst_288 = arith.constant dense<0.000000e+00> : vector<16x512xf32>
    %721 = tpu.matmul %720, %711, %cst_288 {dimension_numbers = #tpu.dot_dimension_numbers<[1], [0], [0], [1], [0, 0, 1, 1], [], []>} : vector<16x128xbf16>, vector<128x512xbf16>, vector<16x512xf32> -> vector<16x512xf32>
    %722 = arith.addf %719, %721 : vector<16x512xf32>
    %723 = vector.extract_strided_slice %722 {offsets = [0, 0], sizes = [16, 128], strides = [1, 1]} : vector<16x512xf32> to vector<16x128xf32>
    %cst_289 = arith.constant 5.000000e-01 : f32
    %724 = vector.broadcast %cst_289 : f32 to vector<16x128xf32>
    %725 = arith.mulf %724, %723 : vector<16x128xf32>
    %726 = math.tanh %725 : vector<16x128xf32>
    %cst_290 = arith.constant 5.000000e-01 : f32
    %727 = vector.broadcast %cst_290 : f32 to vector<16x128xf32>
    %728 = arith.mulf %727, %726 : vector<16x128xf32>
    %cst_291 = arith.constant 5.000000e-01 : f32
    %729 = vector.broadcast %cst_291 : f32 to vector<16x128xf32>
    %730 = arith.addf %728, %729 : vector<16x128xf32>
    %731 = vector.extract_strided_slice %722 {offsets = [0, 128], sizes = [16, 128], strides = [1, 1]} : vector<16x512xf32> to vector<16x128xf32>
    %cst_292 = arith.constant 5.000000e-01 : f32
    %732 = vector.broadcast %cst_292 : f32 to vector<16x128xf32>
    %733 = arith.mulf %732, %731 : vector<16x128xf32>
    %734 = math.tanh %733 : vector<16x128xf32>
    %cst_293 = arith.constant 5.000000e-01 : f32
    %735 = vector.broadcast %cst_293 : f32 to vector<16x128xf32>
    %736 = arith.mulf %735, %734 : vector<16x128xf32>
    %cst_294 = arith.constant 5.000000e-01 : f32
    %737 = vector.broadcast %cst_294 : f32 to vector<16x128xf32>
    %738 = arith.addf %736, %737 : vector<16x128xf32>
    %739 = vector.extract_strided_slice %722 {offsets = [0, 256], sizes = [16, 128], strides = [1, 1]} : vector<16x512xf32> to vector<16x128xf32>
    %740 = math.tanh %739 : vector<16x128xf32>
    %741 = vector.extract_strided_slice %722 {offsets = [0, 384], sizes = [16, 128], strides = [1, 1]} : vector<16x512xf32> to vector<16x128xf32>
    %cst_295 = arith.constant 5.000000e-01 : f32
    %742 = vector.broadcast %cst_295 : f32 to vector<16x128xf32>
    %743 = arith.mulf %742, %741 : vector<16x128xf32>
    %744 = math.tanh %743 : vector<16x128xf32>
    %cst_296 = arith.constant 5.000000e-01 : f32
    %745 = vector.broadcast %cst_296 : f32 to vector<16x128xf32>
    %746 = arith.mulf %745, %744 : vector<16x128xf32>
    %cst_297 = arith.constant 5.000000e-01 : f32
    %747 = vector.broadcast %cst_297 : f32 to vector<16x128xf32>
    %748 = arith.addf %746, %747 : vector<16x128xf32>
    %749 = arith.mulf %738, %715 : vector<16x128xf32>
    %750 = arith.mulf %730, %740 : vector<16x128xf32>
    %751 = arith.addf %749, %750 : vector<16x128xf32>
    %752 = math.tanh %751 : vector<16x128xf32>
    %753 = arith.mulf %748, %752 : vector<16x128xf32>
    %754 = arith.truncf %753 : vector<16x128xf32> to vector<16x128xbf16>
    %755 = arith.index_cast %717 : i32 to index
    %c0_298 = arith.constant 0 : index
    %756 = vector.load %arg17[%755, %c0_298] : memref<128x128xbf16, #tpu.memory_space<vmem>>, vector<16x128xbf16>
    tpu.vector_store %arg17[%755, %c0_298], %754 {strides = array<i32>} : memref<128x128xbf16, #tpu.memory_space<vmem>>, vector<16x128xbf16>,
    %c1_i32_299 = arith.constant 1 : i32
    %c16_i32_300 = arith.constant 16 : i32
    %757 = arith.muli %c1_i32_299, %c16_i32_300 : i32
    %758 = tpu.assume_multiple %757, 16 : i32
    %759 = arith.index_cast %758 : i32 to index
    %c0_301 = arith.constant 0 : index
    %760 = vector.load %arg18[%759, %c0_301] : memref<128x512xf32, #tpu.memory_space<vmem>>, vector<16x512xf32>
    %761 = arith.truncf %753 : vector<16x128xf32> to vector<16x128xbf16>
    %cst_302 = arith.constant dense<0.000000e+00> : vector<16x512xf32>
    %762 = tpu.matmul %761, %711, %cst_302 {dimension_numbers = #tpu.dot_dimension_numbers<[1], [0], [0], [1], [0, 0, 1, 1], [], []>} : vector<16x128xbf16>, vector<128x512xbf16>, vector<16x512xf32> -> vector<16x512xf32>
    %763 = arith.addf %760, %762 : vector<16x512xf32>
    %764 = vector.extract_strided_slice %763 {offsets = [0, 0], sizes = [16, 128], strides = [1, 1]} : vector<16x512xf32> to vector<16x128xf32>
    %cst_303 = arith.constant 5.000000e-01 : f32
    %765 = vector.broadcast %cst_303 : f32 to vector<16x128xf32>
    %766 = arith.mulf %765, %764 : vector<16x128xf32>
    %767 = math.tanh %766 : vector<16x128xf32>
    %cst_304 = arith.constant 5.000000e-01 : f32
    %768 = vector.broadcast %cst_304 : f32 to vector<16x128xf32>
    %769 = arith.mulf %768, %767 : vector<16x128xf32>
    %cst_305 = arith.constant 5.000000e-01 : f32
    %770 = vector.broadcast %cst_305 : f32 to vector<16x128xf32>
    %771 = arith.addf %769, %770 : vector<16x128xf32>
    %772 = vector.extract_strided_slice %763 {offsets = [0, 128], sizes = [16, 128], strides = [1, 1]} : vector<16x512xf32> to vector<16x128xf32>
    %cst_306 = arith.constant 5.000000e-01 : f32
    %773 = vector.broadcast %cst_306 : f32 to vector<16x128xf32>
    %774 = arith.mulf %773, %772 : vector<16x128xf32>
    %775 = math.tanh %774 : vector<16x128xf32>
    %cst_307 = arith.constant 5.000000e-01 : f32
    %776 = vector.broadcast %cst_307 : f32 to vector<16x128xf32>
    %777 = arith.mulf %776, %775 : vector<16x128xf32>
    %cst_308 = arith.constant 5.000000e-01 : f32
    %778 = vector.broadcast %cst_308 : f32 to vector<16x128xf32>
    %779 = arith.addf %777, %778 : vector<16x128xf32>
    %780 = vector.extract_strided_slice %763 {offsets = [0, 256], sizes = [16, 128], strides = [1, 1]} : vector<16x512xf32> to vector<16x128xf32>
    %781 = math.tanh %780 : vector<16x128xf32>
    %782 = vector.extract_strided_slice %763 {offsets = [0, 384], sizes = [16, 128], strides = [1, 1]} : vector<16x512xf32> to vector<16x128xf32>
    %cst_309 = arith.constant 5.000000e-01 : f32
    %783 = vector.broadcast %cst_309 : f32 to vector<16x128xf32>
    %784 = arith.mulf %783, %782 : vector<16x128xf32>
    %785 = math.tanh %784 : vector<16x128xf32>
    %cst_310 = arith.constant 5.000000e-01 : f32
    %786 = vector.broadcast %cst_310 : f32 to vector<16x128xf32>
    %787 = arith.mulf %786, %785 : vector<16x128xf32>
    %cst_311 = arith.constant 5.000000e-01 : f32
    %788 = vector.broadcast %cst_311 : f32 to vector<16x128xf32>
    %789 = arith.addf %787, %788 : vector<16x128xf32>
    %790 = arith.mulf %779, %751 : vector<16x128xf32>
    %791 = arith.mulf %771, %781 : vector<16x128xf32>
    %792 = arith.addf %790, %791 : vector<16x128xf32>
    %793 = math.tanh %792 : vector<16x128xf32>
    %794 = arith.mulf %789, %793 : vector<16x128xf32>
    %795 = arith.truncf %794 : vector<16x128xf32> to vector<16x128xbf16>
    %796 = arith.index_cast %758 : i32 to index
    %c0_312 = arith.constant 0 : index
    %797 = vector.load %arg17[%796, %c0_312] : memref<128x128xbf16, #tpu.memory_space<vmem>>, vector<16x128xbf16>
    tpu.vector_store %arg17[%796, %c0_312], %795 {strides = array<i32>} : memref<128x128xbf16, #tpu.memory_space<vmem>>, vector<16x128xbf16>,
    %c2_i32_313 = arith.constant 2 : i32
    %c16_i32_314 = arith.constant 16 : i32
    %798 = arith.muli %c2_i32_313, %c16_i32_314 : i32
    %799 = tpu.assume_multiple %798, 16 : i32
    %800 = arith.index_cast %799 : i32 to index
    %c0_315 = arith.constant 0 : index
    %801 = vector.load %arg18[%800, %c0_315] : memref<128x512xf32, #tpu.memory_space<vmem>>, vector<16x512xf32>
    %802 = arith.truncf %794 : vector<16x128xf32> to vector<16x128xbf16>
    %cst_316 = arith.constant dense<0.000000e+00> : vector<16x512xf32>
    %803 = tpu.matmul %802, %711, %cst_316 {dimension_numbers = #tpu.dot_dimension_numbers<[1], [0], [0], [1], [0, 0, 1, 1], [], []>} : vector<16x128xbf16>, vector<128x512xbf16>, vector<16x512xf32> -> vector<16x512xf32>
    %804 = arith.addf %801, %803 : vector<16x512xf32>
    %805 = vector.extract_strided_slice %804 {offsets = [0, 0], sizes = [16, 128], strides = [1, 1]} : vector<16x512xf32> to vector<16x128xf32>
    %cst_317 = arith.constant 5.000000e-01 : f32
    %806 = vector.broadcast %cst_317 : f32 to vector<16x128xf32>
    %807 = arith.mulf %806, %805 : vector<16x128xf32>
    %808 = math.tanh %807 : vector<16x128xf32>
    %cst_318 = arith.constant 5.000000e-01 : f32
    %809 = vector.broadcast %cst_318 : f32 to vector<16x128xf32>
    %810 = arith.mulf %809, %808 : vector<16x128xf32>
    %cst_319 = arith.constant 5.000000e-01 : f32
    %811 = vector.broadcast %cst_319 : f32 to vector<16x128xf32>
    %812 = arith.addf %810, %811 : vector<16x128xf32>
    %813 = vector.extract_strided_slice %804 {offsets = [0, 128], sizes = [16, 128], strides = [1, 1]} : vector<16x512xf32> to vector<16x128xf32>
    %cst_320 = arith.constant 5.000000e-01 : f32
    %814 = vector.broadcast %cst_320 : f32 to vector<16x128xf32>
    %815 = arith.mulf %814, %813 : vector<16x128xf32>
    %816 = math.tanh %815 : vector<16x128xf32>
    %cst_321 = arith.constant 5.000000e-01 : f32
    %817 = vector.broadcast %cst_321 : f32 to vector<16x128xf32>
    %818 = arith.mulf %817, %816 : vector<16x128xf32>
    %cst_322 = arith.constant 5.000000e-01 : f32
    %819 = vector.broadcast %cst_322 : f32 to vector<16x128xf32>
    %820 = arith.addf %818, %819 : vector<16x128xf32>
    %821 = vector.extract_strided_slice %804 {offsets = [0, 256], sizes = [16, 128], strides = [1, 1]} : vector<16x512xf32> to vector<16x128xf32>
    %822 = math.tanh %821 : vector<16x128xf32>
    %823 = vector.extract_strided_slice %804 {offsets = [0, 384], sizes = [16, 128], strides = [1, 1]} : vector<16x512xf32> to vector<16x128xf32>
    %cst_323 = arith.constant 5.000000e-01 : f32
    %824 = vector.broadcast %cst_323 : f32 to vector<16x128xf32>
    %825 = arith.mulf %824, %823 : vector<16x128xf32>
    %826 = math.tanh %825 : vector<16x128xf32>
    %cst_324 = arith.constant 5.000000e-01 : f32
    %827 = vector.broadcast %cst_324 : f32 to vector<16x128xf32>
    %828 = arith.mulf %827, %826 : vector<16x128xf32>
    %cst_325 = arith.constant 5.000000e-01 : f32
    %829 = vector.broadcast %cst_325 : f32 to vector<16x128xf32>
    %830 = arith.addf %828, %829 : vector<16x128xf32>
    %831 = arith.mulf %820, %792 : vector<16x128xf32>
    %832 = arith.mulf %812, %822 : vector<16x128xf32>
    %833 = arith.addf %831, %832 : vector<16x128xf32>
    %834 = math.tanh %833 : vector<16x128xf32>
    %835 = arith.mulf %830, %834 : vector<16x128xf32>
    %836 = arith.truncf %835 : vector<16x128xf32> to vector<16x128xbf16>
    %837 = arith.index_cast %799 : i32 to index
    %c0_326 = arith.constant 0 : index
    %838 = vector.load %arg17[%837, %c0_326] : memref<128x128xbf16, #tpu.memory_space<vmem>>, vector<16x128xbf16>
    tpu.vector_store %arg17[%837, %c0_326], %836 {strides = array<i32>} : memref<128x128xbf16, #tpu.memory_space<vmem>>, vector<16x128xbf16>,
    %c3_i32_327 = arith.constant 3 : i32
    %c16_i32_328 = arith.constant 16 : i32
    %839 = arith.muli %c3_i32_327, %c16_i32_328 : i32
    %840 = tpu.assume_multiple %839, 16 : i32
    %841 = arith.index_cast %840 : i32 to index
    %c0_329 = arith.constant 0 : index
    %842 = vector.load %arg18[%841, %c0_329] : memref<128x512xf32, #tpu.memory_space<vmem>>, vector<16x512xf32>
    %843 = arith.truncf %835 : vector<16x128xf32> to vector<16x128xbf16>
    %cst_330 = arith.constant dense<0.000000e+00> : vector<16x512xf32>
    %844 = tpu.matmul %843, %711, %cst_330 {dimension_numbers = #tpu.dot_dimension_numbers<[1], [0], [0], [1], [0, 0, 1, 1], [], []>} : vector<16x128xbf16>, vector<128x512xbf16>, vector<16x512xf32> -> vector<16x512xf32>
    %845 = arith.addf %842, %844 : vector<16x512xf32>
    %846 = vector.extract_strided_slice %845 {offsets = [0, 0], sizes = [16, 128], strides = [1, 1]} : vector<16x512xf32> to vector<16x128xf32>
    %cst_331 = arith.constant 5.000000e-01 : f32
    %847 = vector.broadcast %cst_331 : f32 to vector<16x128xf32>
    %848 = arith.mulf %847, %846 : vector<16x128xf32>
    %849 = math.tanh %848 : vector<16x128xf32>
    %cst_332 = arith.constant 5.000000e-01 : f32
    %850 = vector.broadcast %cst_332 : f32 to vector<16x128xf32>
    %851 = arith.mulf %850, %849 : vector<16x128xf32>
    %cst_333 = arith.constant 5.000000e-01 : f32
    %852 = vector.broadcast %cst_333 : f32 to vector<16x128xf32>
    %853 = arith.addf %851, %852 : vector<16x128xf32>
    %854 = vector.extract_strided_slice %845 {offsets = [0, 128], sizes = [16, 128], strides = [1, 1]} : vector<16x512xf32> to vector<16x128xf32>
    %cst_334 = arith.constant 5.000000e-01 : f32
    %855 = vector.broadcast %cst_334 : f32 to vector<16x128xf32>
    %856 = arith.mulf %855, %854 : vector<16x128xf32>
    %857 = math.tanh %856 : vector<16x128xf32>
    %cst_335 = arith.constant 5.000000e-01 : f32
    %858 = vector.broadcast %cst_335 : f32 to vector<16x128xf32>
    %859 = arith.mulf %858, %857 : vector<16x128xf32>
    %cst_336 = arith.constant 5.000000e-01 : f32
    %860 = vector.broadcast %cst_336 : f32 to vector<16x128xf32>
    %861 = arith.addf %859, %860 : vector<16x128xf32>
    %862 = vector.extract_strided_slice %845 {offsets = [0, 256], sizes = [16, 128], strides = [1, 1]} : vector<16x512xf32> to vector<16x128xf32>
    %863 = math.tanh %862 : vector<16x128xf32>
    %864 = vector.extract_strided_slice %845 {offsets = [0, 384], sizes = [16, 128], strides = [1, 1]} : vector<16x512xf32> to vector<16x128xf32>
    %cst_337 = arith.constant 5.000000e-01 : f32
    %865 = vector.broadcast %cst_337 : f32 to vector<16x128xf32>
    %866 = arith.mulf %865, %864 : vector<16x128xf32>
    %867 = math.tanh %866 : vector<16x128xf32>
    %cst_338 = arith.constant 5.000000e-01 : f32
    %868 = vector.broadcast %cst_338 : f32 to vector<16x128xf32>
    %869 = arith.mulf %868, %867 : vector<16x128xf32>
    %cst_339 = arith.constant 5.000000e-01 : f32
    %870 = vector.broadcast %cst_339 : f32 to vector<16x128xf32>
    %871 = arith.addf %869, %870 : vector<16x128xf32>
    %872 = arith.mulf %861, %833 : vector<16x128xf32>
    %873 = arith.mulf %853, %863 : vector<16x128xf32>
    %874 = arith.addf %872, %873 : vector<16x128xf32>
    %875 = math.tanh %874 : vector<16x128xf32>
    %876 = arith.mulf %871, %875 : vector<16x128xf32>
    %877 = arith.truncf %876 : vector<16x128xf32> to vector<16x128xbf16>
    %878 = arith.index_cast %840 : i32 to index
    %c0_340 = arith.constant 0 : index
    %879 = vector.load %arg17[%878, %c0_340] : memref<128x128xbf16, #tpu.memory_space<vmem>>, vector<16x128xbf16>
    tpu.vector_store %arg17[%878, %c0_340], %877 {strides = array<i32>} : memref<128x128xbf16, #tpu.memory_space<vmem>>, vector<16x128xbf16>,
    %c4_i32_341 = arith.constant 4 : i32
    %c16_i32_342 = arith.constant 16 : i32
    %880 = arith.muli %c4_i32_341, %c16_i32_342 : i32
    %881 = tpu.assume_multiple %880, 16 : i32
    %882 = arith.index_cast %881 : i32 to index
    %c0_343 = arith.constant 0 : index
    %883 = vector.load %arg18[%882, %c0_343] : memref<128x512xf32, #tpu.memory_space<vmem>>, vector<16x512xf32>
    %884 = arith.truncf %876 : vector<16x128xf32> to vector<16x128xbf16>
    %cst_344 = arith.constant dense<0.000000e+00> : vector<16x512xf32>
    %885 = tpu.matmul %884, %711, %cst_344 {dimension_numbers = #tpu.dot_dimension_numbers<[1], [0], [0], [1], [0, 0, 1, 1], [], []>} : vector<16x128xbf16>, vector<128x512xbf16>, vector<16x512xf32> -> vector<16x512xf32>
    %886 = arith.addf %883, %885 : vector<16x512xf32>
    %887 = vector.extract_strided_slice %886 {offsets = [0, 0], sizes = [16, 128], strides = [1, 1]} : vector<16x512xf32> to vector<16x128xf32>
    %cst_345 = arith.constant 5.000000e-01 : f32
    %888 = vector.broadcast %cst_345 : f32 to vector<16x128xf32>
    %889 = arith.mulf %888, %887 : vector<16x128xf32>
    %890 = math.tanh %889 : vector<16x128xf32>
    %cst_346 = arith.constant 5.000000e-01 : f32
    %891 = vector.broadcast %cst_346 : f32 to vector<16x128xf32>
    %892 = arith.mulf %891, %890 : vector<16x128xf32>
    %cst_347 = arith.constant 5.000000e-01 : f32
    %893 = vector.broadcast %cst_347 : f32 to vector<16x128xf32>
    %894 = arith.addf %892, %893 : vector<16x128xf32>
    %895 = vector.extract_strided_slice %886 {offsets = [0, 128], sizes = [16, 128], strides = [1, 1]} : vector<16x512xf32> to vector<16x128xf32>
    %cst_348 = arith.constant 5.000000e-01 : f32
    %896 = vector.broadcast %cst_348 : f32 to vector<16x128xf32>
    %897 = arith.mulf %896, %895 : vector<16x128xf32>
    %898 = math.tanh %897 : vector<16x128xf32>
    %cst_349 = arith.constant 5.000000e-01 : f32
    %899 = vector.broadcast %cst_349 : f32 to vector<16x128xf32>
    %900 = arith.mulf %899, %898 : vector<16x128xf32>
    %cst_350 = arith.constant 5.000000e-01 : f32
    %901 = vector.broadcast %cst_350 : f32 to vector<16x128xf32>
    %902 = arith.addf %900, %901 : vector<16x128xf32>
    %903 = vector.extract_strided_slice %886 {offsets = [0, 256], sizes = [16, 128], strides = [1, 1]} : vector<16x512xf32> to vector<16x128xf32>
    %904 = math.tanh %903 : vector<16x128xf32>
    %905 = vector.extract_strided_slice %886 {offsets = [0, 384], sizes = [16, 128], strides = [1, 1]} : vector<16x512xf32> to vector<16x128xf32>
    %cst_351 = arith.constant 5.000000e-01 : f32
    %906 = vector.broadcast %cst_351 : f32 to vector<16x128xf32>
    %907 = arith.mulf %906, %905 : vector<16x128xf32>
    %908 = math.tanh %907 : vector<16x128xf32>
    %cst_352 = arith.constant 5.000000e-01 : f32
    %909 = vector.broadcast %cst_352 : f32 to vector<16x128xf32>
    %910 = arith.mulf %909, %908 : vector<16x128xf32>
    %cst_353 = arith.constant 5.000000e-01 : f32
    %911 = vector.broadcast %cst_353 : f32 to vector<16x128xf32>
    %912 = arith.addf %910, %911 : vector<16x128xf32>
    %913 = arith.mulf %902, %874 : vector<16x128xf32>
    %914 = arith.mulf %894, %904 : vector<16x128xf32>
    %915 = arith.addf %913, %914 : vector<16x128xf32>
    %916 = math.tanh %915 : vector<16x128xf32>
    %917 = arith.mulf %912, %916 : vector<16x128xf32>
    %918 = arith.truncf %917 : vector<16x128xf32> to vector<16x128xbf16>
    %919 = arith.index_cast %881 : i32 to index
    %c0_354 = arith.constant 0 : index
    %920 = vector.load %arg17[%919, %c0_354] : memref<128x128xbf16, #tpu.memory_space<vmem>>, vector<16x128xbf16>
    tpu.vector_store %arg17[%919, %c0_354], %918 {strides = array<i32>} : memref<128x128xbf16, #tpu.memory_space<vmem>>, vector<16x128xbf16>,
    %c5_i32_355 = arith.constant 5 : i32
    %c16_i32_356 = arith.constant 16 : i32
    %921 = arith.muli %c5_i32_355, %c16_i32_356 : i32
    %922 = tpu.assume_multiple %921, 16 : i32
    %923 = arith.index_cast %922 : i32 to index
    %c0_357 = arith.constant 0 : index
    %924 = vector.load %arg18[%923, %c0_357] : memref<128x512xf32, #tpu.memory_space<vmem>>, vector<16x512xf32>
    %925 = arith.truncf %917 : vector<16x128xf32> to vector<16x128xbf16>
    %cst_358 = arith.constant dense<0.000000e+00> : vector<16x512xf32>
    %926 = tpu.matmul %925, %711, %cst_358 {dimension_numbers = #tpu.dot_dimension_numbers<[1], [0], [0], [1], [0, 0, 1, 1], [], []>} : vector<16x128xbf16>, vector<128x512xbf16>, vector<16x512xf32> -> vector<16x512xf32>
    %927 = arith.addf %924, %926 : vector<16x512xf32>
    %928 = vector.extract_strided_slice %927 {offsets = [0, 0], sizes = [16, 128], strides = [1, 1]} : vector<16x512xf32> to vector<16x128xf32>
    %cst_359 = arith.constant 5.000000e-01 : f32
    %929 = vector.broadcast %cst_359 : f32 to vector<16x128xf32>
    %930 = arith.mulf %929, %928 : vector<16x128xf32>
    %931 = math.tanh %930 : vector<16x128xf32>
    %cst_360 = arith.constant 5.000000e-01 : f32
    %932 = vector.broadcast %cst_360 : f32 to vector<16x128xf32>
    %933 = arith.mulf %932, %931 : vector<16x128xf32>
    %cst_361 = arith.constant 5.000000e-01 : f32
    %934 = vector.broadcast %cst_361 : f32 to vector<16x128xf32>
    %935 = arith.addf %933, %934 : vector<16x128xf32>
    %936 = vector.extract_strided_slice %927 {offsets = [0, 128], sizes = [16, 128], strides = [1, 1]} : vector<16x512xf32> to vector<16x128xf32>
    %cst_362 = arith.constant 5.000000e-01 : f32
    %937 = vector.broadcast %cst_362 : f32 to vector<16x128xf32>
    %938 = arith.mulf %937, %936 : vector<16x128xf32>
    %939 = math.tanh %938 : vector<16x128xf32>
    %cst_363 = arith.constant 5.000000e-01 : f32
    %940 = vector.broadcast %cst_363 : f32 to vector<16x128xf32>
    %941 = arith.mulf %940, %939 : vector<16x128xf32>
    %cst_364 = arith.constant 5.000000e-01 : f32
    %942 = vector.broadcast %cst_364 : f32 to vector<16x128xf32>
    %943 = arith.addf %941, %942 : vector<16x128xf32>
    %944 = vector.extract_strided_slice %927 {offsets = [0, 256], sizes = [16, 128], strides = [1, 1]} : vector<16x512xf32> to vector<16x128xf32>
    %945 = math.tanh %944 : vector<16x128xf32>
    %946 = vector.extract_strided_slice %927 {offsets = [0, 384], sizes = [16, 128], strides = [1, 1]} : vector<16x512xf32> to vector<16x128xf32>
    %cst_365 = arith.constant 5.000000e-01 : f32
    %947 = vector.broadcast %cst_365 : f32 to vector<16x128xf32>
    %948 = arith.mulf %947, %946 : vector<16x128xf32>
    %949 = math.tanh %948 : vector<16x128xf32>
    %cst_366 = arith.constant 5.000000e-01 : f32
    %950 = vector.broadcast %cst_366 : f32 to vector<16x128xf32>
    %951 = arith.mulf %950, %949 : vector<16x128xf32>
    %cst_367 = arith.constant 5.000000e-01 : f32
    %952 = vector.broadcast %cst_367 : f32 to vector<16x128xf32>
    %953 = arith.addf %951, %952 : vector<16x128xf32>
    %954 = arith.mulf %943, %915 : vector<16x128xf32>
    %955 = arith.mulf %935, %945 : vector<16x128xf32>
    %956 = arith.addf %954, %955 : vector<16x128xf32>
    %957 = math.tanh %956 : vector<16x128xf32>
    %958 = arith.mulf %953, %957 : vector<16x128xf32>
    %959 = arith.truncf %958 : vector<16x128xf32> to vector<16x128xbf16>
    %960 = arith.index_cast %922 : i32 to index
    %c0_368 = arith.constant 0 : index
    %961 = vector.load %arg17[%960, %c0_368] : memref<128x128xbf16, #tpu.memory_space<vmem>>, vector<16x128xbf16>
    tpu.vector_store %arg17[%960, %c0_368], %959 {strides = array<i32>} : memref<128x128xbf16, #tpu.memory_space<vmem>>, vector<16x128xbf16>,
    %c6_i32_369 = arith.constant 6 : i32
    %c16_i32_370 = arith.constant 16 : i32
    %962 = arith.muli %c6_i32_369, %c16_i32_370 : i32
    %963 = tpu.assume_multiple %962, 16 : i32
    %964 = arith.index_cast %963 : i32 to index
    %c0_371 = arith.constant 0 : index
    %965 = vector.load %arg18[%964, %c0_371] : memref<128x512xf32, #tpu.memory_space<vmem>>, vector<16x512xf32>
    %966 = arith.truncf %958 : vector<16x128xf32> to vector<16x128xbf16>
    %cst_372 = arith.constant dense<0.000000e+00> : vector<16x512xf32>
    %967 = tpu.matmul %966, %711, %cst_372 {dimension_numbers = #tpu.dot_dimension_numbers<[1], [0], [0], [1], [0, 0, 1, 1], [], []>} : vector<16x128xbf16>, vector<128x512xbf16>, vector<16x512xf32> -> vector<16x512xf32>
    %968 = arith.addf %965, %967 : vector<16x512xf32>
    %969 = vector.extract_strided_slice %968 {offsets = [0, 0], sizes = [16, 128], strides = [1, 1]} : vector<16x512xf32> to vector<16x128xf32>
    %cst_373 = arith.constant 5.000000e-01 : f32
    %970 = vector.broadcast %cst_373 : f32 to vector<16x128xf32>
    %971 = arith.mulf %970, %969 : vector<16x128xf32>
    %972 = math.tanh %971 : vector<16x128xf32>
    %cst_374 = arith.constant 5.000000e-01 : f32
    %973 = vector.broadcast %cst_374 : f32 to vector<16x128xf32>
    %974 = arith.mulf %973, %972 : vector<16x128xf32>
    %cst_375 = arith.constant 5.000000e-01 : f32
    %975 = vector.broadcast %cst_375 : f32 to vector<16x128xf32>
    %976 = arith.addf %974, %975 : vector<16x128xf32>
    %977 = vector.extract_strided_slice %968 {offsets = [0, 128], sizes = [16, 128], strides = [1, 1]} : vector<16x512xf32> to vector<16x128xf32>
    %cst_376 = arith.constant 5.000000e-01 : f32
    %978 = vector.broadcast %cst_376 : f32 to vector<16x128xf32>
    %979 = arith.mulf %978, %977 : vector<16x128xf32>
    %980 = math.tanh %979 : vector<16x128xf32>
    %cst_377 = arith.constant 5.000000e-01 : f32
    %981 = vector.broadcast %cst_377 : f32 to vector<16x128xf32>
    %982 = arith.mulf %981, %980 : vector<16x128xf32>
    %cst_378 = arith.constant 5.000000e-01 : f32
    %983 = vector.broadcast %cst_378 : f32 to vector<16x128xf32>
    %984 = arith.addf %982, %983 : vector<16x128xf32>
    %985 = vector.extract_strided_slice %968 {offsets = [0, 256], sizes = [16, 128], strides = [1, 1]} : vector<16x512xf32> to vector<16x128xf32>
    %986 = math.tanh %985 : vector<16x128xf32>
    %987 = vector.extract_strided_slice %968 {offsets = [0, 384], sizes = [16, 128], strides = [1, 1]} : vector<16x512xf32> to vector<16x128xf32>
    %cst_379 = arith.constant 5.000000e-01 : f32
    %988 = vector.broadcast %cst_379 : f32 to vector<16x128xf32>
    %989 = arith.mulf %988, %987 : vector<16x128xf32>
    %990 = math.tanh %989 : vector<16x128xf32>
    %cst_380 = arith.constant 5.000000e-01 : f32
    %991 = vector.broadcast %cst_380 : f32 to vector<16x128xf32>
    %992 = arith.mulf %991, %990 : vector<16x128xf32>
    %cst_381 = arith.constant 5.000000e-01 : f32
    %993 = vector.broadcast %cst_381 : f32 to vector<16x128xf32>
    %994 = arith.addf %992, %993 : vector<16x128xf32>
    %995 = arith.mulf %984, %956 : vector<16x128xf32>
    %996 = arith.mulf %976, %986 : vector<16x128xf32>
    %997 = arith.addf %995, %996 : vector<16x128xf32>
    %998 = math.tanh %997 : vector<16x128xf32>
    %999 = arith.mulf %994, %998 : vector<16x128xf32>
    %1000 = arith.truncf %999 : vector<16x128xf32> to vector<16x128xbf16>
    %1001 = arith.index_cast %963 : i32 to index
    %c0_382 = arith.constant 0 : index
    %1002 = vector.load %arg17[%1001, %c0_382] : memref<128x128xbf16, #tpu.memory_space<vmem>>, vector<16x128xbf16>
    tpu.vector_store %arg17[%1001, %c0_382], %1000 {strides = array<i32>} : memref<128x128xbf16, #tpu.memory_space<vmem>>, vector<16x128xbf16>,
    %c7_i32_383 = arith.constant 7 : i32
    %c16_i32_384 = arith.constant 16 : i32
    %1003 = arith.muli %c7_i32_383, %c16_i32_384 : i32
    %1004 = tpu.assume_multiple %1003, 16 : i32
    %1005 = arith.index_cast %1004 : i32 to index
    %c0_385 = arith.constant 0 : index
    %1006 = vector.load %arg18[%1005, %c0_385] : memref<128x512xf32, #tpu.memory_space<vmem>>, vector<16x512xf32>
    %1007 = arith.truncf %999 : vector<16x128xf32> to vector<16x128xbf16>
    %cst_386 = arith.constant dense<0.000000e+00> : vector<16x512xf32>
    %1008 = tpu.matmul %1007, %711, %cst_386 {dimension_numbers = #tpu.dot_dimension_numbers<[1], [0], [0], [1], [0, 0, 1, 1], [], []>} : vector<16x128xbf16>, vector<128x512xbf16>, vector<16x512xf32> -> vector<16x512xf32>
    %1009 = arith.addf %1006, %1008 : vector<16x512xf32>
    %1010 = vector.extract_strided_slice %1009 {offsets = [0, 0], sizes = [16, 128], strides = [1, 1]} : vector<16x512xf32> to vector<16x128xf32>
    %cst_387 = arith.constant 5.000000e-01 : f32
    %1011 = vector.broadcast %cst_387 : f32 to vector<16x128xf32>
    %1012 = arith.mulf %1011, %1010 : vector<16x128xf32>
    %1013 = math.tanh %1012 : vector<16x128xf32>
    %cst_388 = arith.constant 5.000000e-01 : f32
    %1014 = vector.broadcast %cst_388 : f32 to vector<16x128xf32>
    %1015 = arith.mulf %1014, %1013 : vector<16x128xf32>
    %cst_389 = arith.constant 5.000000e-01 : f32
    %1016 = vector.broadcast %cst_389 : f32 to vector<16x128xf32>
    %1017 = arith.addf %1015, %1016 : vector<16x128xf32>
    %1018 = vector.extract_strided_slice %1009 {offsets = [0, 128], sizes = [16, 128], strides = [1, 1]} : vector<16x512xf32> to vector<16x128xf32>
    %cst_390 = arith.constant 5.000000e-01 : f32
    %1019 = vector.broadcast %cst_390 : f32 to vector<16x128xf32>
    %1020 = arith.mulf %1019, %1018 : vector<16x128xf32>
    %1021 = math.tanh %1020 : vector<16x128xf32>
    %cst_391 = arith.constant 5.000000e-01 : f32
    %1022 = vector.broadcast %cst_391 : f32 to vector<16x128xf32>
    %1023 = arith.mulf %1022, %1021 : vector<16x128xf32>
    %cst_392 = arith.constant 5.000000e-01 : f32
    %1024 = vector.broadcast %cst_392 : f32 to vector<16x128xf32>
    %1025 = arith.addf %1023, %1024 : vector<16x128xf32>
    %1026 = vector.extract_strided_slice %1009 {offsets = [0, 256], sizes = [16, 128], strides = [1, 1]} : vector<16x512xf32> to vector<16x128xf32>
    %1027 = math.tanh %1026 : vector<16x128xf32>
    %1028 = vector.extract_strided_slice %1009 {offsets = [0, 384], sizes = [16, 128], strides = [1, 1]} : vector<16x512xf32> to vector<16x128xf32>
    %cst_393 = arith.constant 5.000000e-01 : f32
    %1029 = vector.broadcast %cst_393 : f32 to vector<16x128xf32>
    %1030 = arith.mulf %1029, %1028 : vector<16x128xf32>
    %1031 = math.tanh %1030 : vector<16x128xf32>
    %cst_394 = arith.constant 5.000000e-01 : f32
    %1032 = vector.broadcast %cst_394 : f32 to vector<16x128xf32>
    %1033 = arith.mulf %1032, %1031 : vector<16x128xf32>
    %cst_395 = arith.constant 5.000000e-01 : f32
    %1034 = vector.broadcast %cst_395 : f32 to vector<16x128xf32>
    %1035 = arith.addf %1033, %1034 : vector<16x128xf32>
    %1036 = arith.mulf %1025, %997 : vector<16x128xf32>
    %1037 = arith.mulf %1017, %1027 : vector<16x128xf32>
    %1038 = arith.addf %1036, %1037 : vector<16x128xf32>
    %1039 = math.tanh %1038 : vector<16x128xf32>
    %1040 = arith.mulf %1035, %1039 : vector<16x128xf32>
    %1041 = arith.truncf %1040 : vector<16x128xf32> to vector<16x128xbf16>
    %1042 = arith.index_cast %1004 : i32 to index
    %c0_396 = arith.constant 0 : index
    %1043 = vector.load %arg17[%1042, %c0_396] : memref<128x128xbf16, #tpu.memory_space<vmem>>, vector<16x128xbf16>
    tpu.vector_store %arg17[%1042, %c0_396], %1041 {strides = array<i32>} : memref<128x128xbf16, #tpu.memory_space<vmem>>, vector<16x128xbf16>,
    %c8_i32_397 = arith.constant 8 : i32
    %c2_398 = arith.constant 2 : index
    %c0_399 = arith.constant 0 : index
    %c0_400 = arith.constant 0 : index
    %1044 = vector.load %arg15[%c2_398, %c0_399, %c0_400] : memref<3x16x128xf32, #tpu.memory_space<vmem>>, vector<1x16x128xf32>
    %1045 = vector.shape_cast %1044 : vector<1x16x128xf32> to vector<16x128xf32>
    %1046 = vector.shape_cast %1040 : vector<16x128xf32> to vector<1x16x128xf32>
    tpu.vector_store %arg15[%c2_398, %c0_399, %c0_400], %1046 {strides = array<i32>} : memref<3x16x128xf32, #tpu.memory_space<vmem>>, vector<1x16x128xf32>,
    %c2_401 = arith.constant 2 : index
    %c0_402 = arith.constant 0 : index
    %c0_403 = arith.constant 0 : index
    %1047 = vector.load %arg16[%c2_401, %c0_402, %c0_403] : memref<3x16x128xf32, #tpu.memory_space<vmem>>, vector<1x16x128xf32>
    %1048 = vector.shape_cast %1047 : vector<1x16x128xf32> to vector<16x128xf32>
    %1049 = vector.shape_cast %1038 : vector<16x128xf32> to vector<1x16x128xf32>
    tpu.vector_store %arg16[%c2_401, %c0_402, %c0_403], %1049 {strides = array<i32>} : memref<3x16x128xf32, #tpu.memory_space<vmem>>, vector<1x16x128xf32>,
    %c0_404 = arith.constant 0 : index
    %c0_405 = arith.constant 0 : index
    %1050 = vector.load %arg17[%c0_404, %c0_405] : memref<128x128xbf16, #tpu.memory_space<vmem>>, vector<128x128xbf16>
    %c0_406 = arith.constant 0 : index
    %c0_407 = arith.constant 0 : index
    %1051 = vector.load %arg8[%c0_406, %c0_407] : memref<128x256xbf16, #tpu.memory_space<vmem>>, vector<128x256xbf16>
    %cst_408 = arith.constant dense<0.000000e+00> : vector<128x256xf32>
    %1052 = tpu.matmul %1050, %1051, %cst_408 {dimension_numbers = #tpu.dot_dimension_numbers<[1], [0], [0], [1], [0, 0, 1, 1], [], []>} : vector<128x128xbf16>, vector<128x256xbf16>, vector<128x256xf32> -> vector<128x256xf32>
    %c0_409 = arith.constant 0 : index
    %c0_410 = arith.constant 0 : index
    %1053 = vector.load %arg9[%c0_409, %c0_410] : memref<1x256xf32, #tpu.memory_space<vmem>>, vector<1x256xf32>
    %1054 = vector.broadcast %1053 : vector<1x256xf32> to vector<128x256xf32>
    %1055 = arith.addf %1052, %1054 : vector<128x256xf32>
    %1056 = math.tanh %1055 : vector<128x256xf32>
    %c0_i32_411 = arith.constant 0 : i32
    %1057 = tpu.memref_slice %arg21[%c0_i32_411] : memref<2x!tpu.dma_semaphore, #tpu.memory_space<semaphore_mem>> -> memref<1x!tpu.dma_semaphore, #tpu.memory_space<semaphore_mem>>
    %1058 = tpu.memref_squeeze %1057 : memref<1x!tpu.dma_semaphore, #tpu.memory_space<semaphore_mem>> -> memref<!tpu.dma_semaphore, #tpu.memory_space<semaphore_mem>>
    tpu.wait_dma2 semaphore(%1058 : memref<!tpu.dma_semaphore, #tpu.memory_space<semaphore_mem>>) src(%arg12 : memref<256x512xbf16, #tpu.memory_space<any>>) dst(%arg19 : memref<256x512xbf16, #tpu.memory_space<vmem>>)
    %1059 = arith.truncf %1056 : vector<128x256xf32> to vector<128x256xbf16>
    %c0_412 = arith.constant 0 : index
    %c0_413 = arith.constant 0 : index
    %1060 = vector.load %arg19[%c0_412, %c0_413] : memref<256x512xbf16, #tpu.memory_space<vmem>>, vector<256x512xbf16>
    %cst_414 = arith.constant dense<0.000000e+00> : vector<128x512xf32>
    %1061 = tpu.matmul %1059, %1060, %cst_414 {dimension_numbers = #tpu.dot_dimension_numbers<[1], [0], [0], [1], [0, 0, 1, 1], [], []>} : vector<128x256xbf16>, vector<256x512xbf16>, vector<128x512xf32> -> vector<128x512xf32>
    %c0_415 = arith.constant 0 : index
    %c0_416 = arith.constant 0 : index
    %1062 = vector.load %arg10[%c0_415, %c0_416] : memref<1x512xf32, #tpu.memory_space<vmem>>, vector<1x512xf32>
    %1063 = vector.broadcast %1062 : vector<1x512xf32> to vector<128x512xf32>
    %1064 = arith.addf %1061, %1063 : vector<128x512xf32>
    %1065 = math.tanh %1064 : vector<128x512xf32>
    %c1_i32_417 = arith.constant 1 : i32
    %1066 = tpu.memref_slice %arg21[%c1_i32_417] : memref<2x!tpu.dma_semaphore, #tpu.memory_space<semaphore_mem>> -> memref<1x!tpu.dma_semaphore, #tpu.memory_space<semaphore_mem>>
    %1067 = tpu.memref_squeeze %1066 : memref<1x!tpu.dma_semaphore, #tpu.memory_space<semaphore_mem>> -> memref<!tpu.dma_semaphore, #tpu.memory_space<semaphore_mem>>
    tpu.wait_dma2 semaphore(%1067 : memref<!tpu.dma_semaphore, #tpu.memory_space<semaphore_mem>>) src(%arg13 : memref<512x256xbf16, #tpu.memory_space<any>>) dst(%arg20 : memref<512x256xbf16, #tpu.memory_space<vmem>>)
    %1068 = arith.truncf %1065 : vector<128x512xf32> to vector<128x512xbf16>
    %c0_418 = arith.constant 0 : index
    %c0_419 = arith.constant 0 : index
    %1069 = vector.load %arg20[%c0_418, %c0_419] : memref<512x256xbf16, #tpu.memory_space<vmem>>, vector<512x256xbf16>
    %cst_420 = arith.constant dense<0.000000e+00> : vector<128x256xf32>
    %1070 = tpu.matmul %1068, %1069, %cst_420 {dimension_numbers = #tpu.dot_dimension_numbers<[1], [0], [0], [1], [0, 0, 1, 1], [], []>} : vector<128x512xbf16>, vector<512x256xbf16>, vector<128x256xf32> -> vector<128x256xf32>
    %c0_421 = arith.constant 0 : index
    %c0_422 = arith.constant 0 : index
    %1071 = vector.load %arg11[%c0_421, %c0_422] : memref<1x256xf32, #tpu.memory_space<vmem>>, vector<1x256xf32>
    %1072 = vector.broadcast %1071 : vector<1x256xf32> to vector<128x256xf32>
    %1073 = arith.addf %1070, %1072 : vector<128x256xf32>
    %c0_423 = arith.constant 0 : index
    %c0_424 = arith.constant 0 : index
    %1074 = vector.load %arg14[%c0_423, %c0_424] : memref<128x256xf32, #tpu.memory_space<vmem>>, vector<128x256xf32>
    tpu.vector_store %arg14[%c0_423, %c0_424], %1073 {strides = array<i32>} : memref<128x256xf32, #tpu.memory_space<vmem>>, vector<128x256xf32>,
    return
  }
  func.func @transform_0(%arg0: i32) -> (i32, i32) {
    %c0_i32 = arith.constant 0 : i32
    %c0_i32_0 = arith.constant 0 : i32
    %c0_i32_1 = arith.constant 0 : i32
    return %c0_i32, %c0_i32_0 : i32, i32
  }
  func.func @transform_1(%arg0: i32) -> (i32, i32) {
    %c0_i32 = arith.constant 0 : i32
    %c0_i32_0 = arith.constant 0 : i32
    %c0_i32_1 = arith.constant 0 : i32
    return %c0_i32, %c0_i32_0 : i32, i32
  }
  func.func @transform_2(%arg0: i32) -> (i32, i32, i32) {
    %c0_i32 = arith.constant 0 : i32
    %c0_i32_0 = arith.constant 0 : i32
    %c0_i32_1 = arith.constant 0 : i32
    %c0_i32_2 = arith.constant 0 : i32
    return %c0_i32, %c0_i32_0, %c0_i32_1 : i32, i32, i32
  }
  func.func @transform_3(%arg0: i32) -> (i32, i32, i32) {
    %c0_i32 = arith.constant 0 : i32
    %c0_i32_0 = arith.constant 0 : i32
    %c0_i32_1 = arith.constant 0 : i32
    %c0_i32_2 = arith.constant 0 : i32
    return %c0_i32, %c0_i32_0, %c0_i32_1 : i32, i32, i32
  }
  func.func @transform_4(%arg0: i32) -> (i32, i32, i32) {
    %c0_i32 = arith.constant 0 : i32
    %c0_i32_0 = arith.constant 0 : i32
    %c0_i32_1 = arith.constant 0 : i32
    %c0_i32_2 = arith.constant 0 : i32
    return %c0_i32, %c0_i32_0, %c0_i32_1 : i32, i32, i32
  }
  func.func @transform_5(%arg0: i32) -> (i32, i32, i32) {
    %c0_i32 = arith.constant 0 : i32
    %c0_i32_0 = arith.constant 0 : i32
    %c0_i32_1 = arith.constant 0 : i32
    %c0_i32_2 = arith.constant 0 : i32
    return %c0_i32, %c0_i32_0, %c0_i32_1 : i32, i32, i32
  }
  func.func @transform_6(%arg0: i32) -> (i32, i32, i32) {
    %c0_i32 = arith.constant 0 : i32
    %c0_i32_0 = arith.constant 0 : i32
    %c0_i32_1 = arith.constant 0 : i32
    %c0_i32_2 = arith.constant 0 : i32
    return %c0_i32, %c0_i32_0, %c0_i32_1 : i32, i32, i32
  }
  func.func @transform_7(%arg0: i32) -> (i32, i32) {
    %c0_i32 = arith.constant 0 : i32
    %c0_i32_0 = arith.constant 0 : i32
    %c0_i32_1 = arith.constant 0 : i32
    return %c0_i32, %c0_i32_0 : i32, i32
  }
  func.func @transform_8(%arg0: i32) -> (i32, i32) {
    %c0_i32 = arith.constant 0 : i32
    %c0_i32_0 = arith.constant 0 : i32
    %c0_i32_1 = arith.constant 0 : i32
    return %c0_i32, %c0_i32_0 : i32, i32
  }
  func.func @transform_9(%arg0: i32) -> (i32, i32) {
    %c0_i32 = arith.constant 0 : i32
    %c0_i32_0 = arith.constant 0 : i32
    %c0_i32_1 = arith.constant 0 : i32
    return %c0_i32, %c0_i32_0 : i32, i32
  }
  func.func @transform_10(%arg0: i32) -> (i32, i32) {
    %c0_i32 = arith.constant 0 : i32
    %c0_i32_0 = arith.constant 0 : i32
    %c0_i32_1 = arith.constant 0 : i32
    return %c0_i32, %c0_i32_0 : i32, i32
  }
  func.func @transform_13(%arg0: i32) -> (i32, i32) {
    %c0_i32 = arith.constant 0 : i32
    %c0_i32_0 = arith.constant 0 : i32
    %c0_i32_1 = arith.constant 0 : i32
    return %c0_i32, %c0_i32_0 : i32, i32
  }
  func.func @transform_14(%arg0: i32) -> (i32, i32, i32) {
    %c0_i32 = arith.constant 0 : i32
    %c0_i32_0 = arith.constant 0 : i32
    %c0_i32_1 = arith.constant 0 : i32
    %c0_i32_2 = arith.constant 0 : i32
    return %c0_i32, %c0_i32_0, %c0_i32_1 : i32, i32, i32
  }
  func.func @transform_15(%arg0: i32) -> (i32, i32, i32) {
    %c0_i32 = arith.constant 0 : i32
    %c0_i32_0 = arith.constant 0 : i32
    %c0_i32_1 = arith.constant 0 : i32
    %c0_i32_2 = arith.constant 0 : i32
    return %c0_i32, %c0_i32_0, %c0_i32_1 : i32, i32, i32
  }
}

</mosaic_0001>

<llo_original>
// kernel: forward.1
$region0: #{forward.1}
  #allocation0 [shape = 'u32[]', space=smem, size = 0x4, offset = 0x4, fixed_abs, tag = 'smem constant byte address 0x4 - core index']
  #allocation1 [shape = 'u32[144,128]{1,0:T(1,128)}', space=vmem, size = 0x12000, scoped, tag = 'internal scratch']
  #allocation2 [shape = 'bf16[128,128]{1,0:T(16,128)(2,1)}', space=vmem, size = 0x8000, scoped, tag = 'scratch operand']
  #allocation3 [shape = 'f32[128,512]{1,0:T(8,128)}', space=vmem, size = 0x40000, scoped, tag = 'scratch operand']
  #allocation4 [shape = 'bf16[256,512]{1,0:T(16,128)(2,1)}', space=vmem, size = 0x40000, scoped, tag = 'scratch operand']
  #allocation5 [shape = 'bf16[512,256]{1,0:T(16,128)(2,1)}', space=vmem, size = 0x40000, scoped, tag = 'scratch operand']
  #allocation6 [shape = 's32[2]{0}', space=sflag, size = 0x8, scoped, tag = 'scratch operand']
  #allocation7 [shape = 's32[]', space=sflag, size = 0x4, offset = 0, fixed_abs, tag = 'sflag constant byte address 0x0 - dummy sync flag']
  #allocation8 [shape = 's32[]', space=sflag, size = 0x4, offset = 0, fixed_abs, tag = 'sflag constant byte address 0x0 - dummy sync flag']
  %s0 = inlined_call_operand.vmem [shape: bf16[128,64], index: 0, kind: input, shape index: {}]
  %s1 = inlined_call_operand.vmem [shape: bf16[64,512], index: 1, kind: input, shape index: {}]
  %s2 = inlined_call_operand.vmem [shape: bf16[2,128,512], index: 2, kind: input, shape index: {}]
  %s3 = inlined_call_operand.vmem [shape: bf16[3,128,512], index: 3, kind: input, shape index: {}]
  %s4 = inlined_call_operand.vmem [shape: f32[3,1,512], index: 4, kind: input, shape index: {}]
  %s5 = inlined_call_operand.vmem [shape: f32[3,16,128], index: 5, kind: input, shape index: {}, may-alias: {5,6}]
  %s6 = inlined_call_operand.vmem [shape: f32[3,16,128], index: 6, kind: input, shape index: {}, may-alias: {5,6}]
  %s7 = inlined_call_operand.vmem [shape: bf16[128,256], index: 7, kind: input, shape index: {}]
  %s8 = inlined_call_operand.vmem [shape: f32[1,256], index: 8, kind: input, shape index: {}]
  %s9 = inlined_call_operand.vmem [shape: f32[1,512], index: 9, kind: input, shape index: {}]
  %s10 = inlined_call_operand.vmem [shape: f32[1,256], index: 10, kind: input, shape index: {}]
  %s11 = inlined_call_operand.vmem [shape: bf16[256,512], index: 11, kind: input, shape index: {}]
  %s12 = inlined_call_operand.vmem [shape: bf16[512,256], index: 12, kind: input, shape index: {}]
  %s13 = inlined_call_operand.vmem [shape: f32[128,256], index: 13, kind: output, shape index: {0}]
  %s14 = inlined_call_operand.vmem [shape: f32[3,16,128], index: 14, kind: output, shape index: {1}]
  %s15 = inlined_call_operand.vmem [shape: f32[3,16,128], index: 15, kind: output, shape index: {2}]
  %16 = xla_tuple %s13, %s14, %s15
  %s17 = sld [smem:[#allocation0]]
  $region144: #{forward.1} parent=0
    _
  %s19 = ssub.s32 1, %s17
  %s20 = scalar_select 0, %s19, %s17
  // Predicated region
  $region2: #{forward.1} parent=0 // pred_check
    _
  $region3: #{forward.1} parent=0 // pred_check_branch
    %22 = sbr.rel (0) target = $region5
  $region4: #{forward.1} parent=0 // pred_region
    _
  $region5: #{forward.1} parent=0 // pred_fallthru
    _
  // Predicated region
  $region6: #{forward.1} parent=0 // pred_check
    _
  $region7: #{forward.1} parent=0 // pred_check_branch
    %24 = sbr.rel (0) target = $region9
  $region8: #{forward.1} parent=0 // pred_region
    _
  $region9: #{forward.1} parent=0 // pred_fallthru
    _
  // Predicated region
  $region10: #{forward.1} parent=0 // pred_check
    _
  $region11: #{forward.1} parent=0 // pred_check_branch
    %26 = sbr.rel (0) target = $region13
  $region12: #{forward.1} parent=0 // pred_region
    _
  $region13: #{forward.1} parent=0 // pred_fallthru
    _
  // Predicated region
  $region14: #{forward.1} parent=0 // pred_check
    _
  $region15: #{forward.1} parent=0 // pred_check_branch
    %28 = sbr.rel (0) target = $region17
  $region16: #{forward.1} parent=0 // pred_region
    _
  $region17: #{forward.1} parent=0 // pred_fallthru
    _
  // Predicated region
  $region18: #{forward.1} parent=0 // pred_check
    _
  $region19: #{forward.1} parent=0 // pred_check_branch
    %30 = sbr.rel (0) target = $region21
  $region20: #{forward.1} parent=0 // pred_region
    _
  $region21: #{forward.1} parent=0 // pred_fallthru
    _
  // Predicated region
  $region22: #{forward.1} parent=0 // pred_check
    _
  $region23: #{forward.1} parent=0 // pred_check_branch
    %32 = sbr.rel (0) target = $region25
  $region24: #{forward.1} parent=0 // pred_region
    _
  $region25: #{forward.1} parent=0 // pred_fallthru
    _
  // Predicated region
  $region26: #{forward.1} parent=0 // pred_check
    _
  $region27: #{forward.1} parent=0 // pred_check_branch
    %34 = sbr.rel (0) target = $region29
  $region28: #{forward.1} parent=0 // pred_region
    _
  $region29: #{forward.1} parent=0 // pred_fallthru
    _
  // Predicated region
  $region30: #{forward.1} parent=0 // pred_check
    _
  $region31: #{forward.1} parent=0 // pred_check_branch
    %36 = sbr.rel (0) target = $region33
  $region32: #{forward.1} parent=0 // pred_region
    _
  $region33: #{forward.1} parent=0 // pred_fallthru
    _
  // Predicated region
  $region34: #{forward.1} parent=0 // pred_check
    _
  $region35: #{forward.1} parent=0 // pred_check_branch
    %38 = sbr.rel (0) target = $region37
  $region36: #{forward.1} parent=0 // pred_region
    _
  $region37: #{forward.1} parent=0 // pred_fallthru
    _
  // Predicated region
  $region38: #{forward.1} parent=0 // pred_check
    _
  $region39: #{forward.1} parent=0 // pred_check_branch
    %40 = sbr.rel (0) target = $region41
  $region40: #{forward.1} parent=0 // pred_region
    _
  $region41: #{forward.1} parent=0 // pred_fallthru
    _
  // Predicated region
  $region42: #{forward.1} parent=0 // pred_check
    _
  $region43: #{forward.1} parent=0 // pred_check_branch
    %42 = sbr.rel (0) target = $region45
  $region44: #{forward.1} parent=0 // pred_region
    _
  $region45: #{forward.1} parent=0 // pred_fallthru
    _
  %p45 = scmp.lt.u32.totalorder 4, 8
  %p46 = pneg %p45
  // Predicated region
  $region46: #{forward.1} parent=0 // pred_check
    _
  $region47: #{forward.1} parent=0 // pred_check_branch
    %48 = sbr.rel (%p45) target = $region49
  $region48: #{forward.1} parent=0 // pred_region
    %s317 = sand.u32 4, 7
    %p318 = scmp.eq.s32.totalorder %s317, 0
    %p319 = pneg %p318
    // Predicated region
    $region61: #{forward.1} parent=48 // pred_check
      _
    $region62: #{forward.1} parent=48 // pred_check_branch
      %321 = sbr.rel (%p318) target = $region64
    $region63: #{forward.1} parent=48 // pred_region
      %s322 = sand.u32 4, 7
      %s323 = ssub.s32 4, %s322
      %s324 = scalar_lea.vmem %s11, %s323
      %s325 = ssub.s32 4, %s322
      %s326 = scalar_lea.vmem [#allocation4], %s325
      loop: start=0, step=1, limit=1
      $region65: #{forward.1} parent=63 // loop_pre_header
        _
      $region66: #{forward.1} parent=63 // loop_header
        %s328 = sphi 0, %s332
        %p329 = scmp.ge.s32.totalorder %s328, 1
        %s333 = sphi %s11, %s11
        %s334 = sphi [#allocation4], [#allocation4]
      $region67: #{forward.1} parent=63 // loop_header_branch
        %331 = sbr.rel (%p329) target = $region71
      $region68: #{forward.1} parent=63 // loop_body
        _
      $region69: #{forward.1} parent=63 // loop_footer
        %s332 = sadd.s32 1, %s328
      $region70: #{forward.1} parent=63 // loop_footer_branch
        %327 = sbr.rel target = $region66
      $region71: #{forward.1} parent=63 // loop_exit
        _
      %s335 = sshllo.u32 0, %s322
      loop: start=0, step=1, limit=1
      $region72: #{forward.1} parent=63 // loop_pre_header
        _
      $region73: #{forward.1} parent=63 // loop_header
        %s337 = sphi 0, %s341
        %p338 = scmp.ge.s32.totalorder %s337, 1
        %s342 = sphi %s324, %s324
        %s343 = sphi %s326, %s326
      $region74: #{forward.1} parent=63 // loop_header_branch
        %340 = sbr.rel (%p338) target = $region78
      $region75: #{forward.1} parent=63 // loop_body
        %v344 = vld [vmem:[%s342] sm:%s335]
        %345 = vst [vmem:[%s343] sm:%s335] %v344
        %v346 = vld [vmem:[%s342 + $0x10] sm:%s335]
        %347 = vst [vmem:[%s343 + $0x4] sm:%s335] %v346
        %v348 = vld [vmem:[%s342 + $0x4] sm:%s335]
        %349 = vst [vmem:[%s343 + $0x8] sm:%s335] %v348
        %v350 = vld [vmem:[%s342 + $0x14] sm:%s335]
        %351 = vst [vmem:[%s343 + $0xc] sm:%s335] %v350
        %v352 = vld [vmem:[%s342 + $0x8] sm:%s335]
        %353 = vst [vmem:[%s343 + $0x10] sm:%s335] %v352
        %v354 = vld [vmem:[%s342 + $0x18] sm:%s335]
        %355 = vst [vmem:[%s343 + $0x14] sm:%s335] %v354
        %v356 = vld [vmem:[%s342 + $0xc] sm:%s335]
        %357 = vst [vmem:[%s343 + $0x18] sm:%s335] %v356
        %v358 = vld [vmem:[%s342 + $0x1c] sm:%s335]
        %359 = vst [vmem:[%s343 + $0x1c] sm:%s335] %v358
        %v360 = vld [vmem:[%s342 + $0x20] sm:%s335]
        %361 = vst [vmem:[%s343 + $0x20] sm:%s335] %v360
        %v362 = vld [vmem:[%s342 + $0x30] sm:%s335]
        %363 = vst [vmem:[%s343 + $0x24] sm:%s335] %v362
        %v364 = vld [vmem:[%s342 + $0x24] sm:%s335]
        %365 = vst [vmem:[%s343 + $0x28] sm:%s335] %v364
        %v366 = vld [vmem:[%s342 + $0x34] sm:%s335]
        %367 = vst [vmem:[%s343 + $0x2c] sm:%s335] %v366
        %v368 = vld [vmem:[%s342 + $0x28] sm:%s335]
        %369 = vst [vmem:[%s343 + $0x30] sm:%s335] %v368
        %v370 = vld [vmem:[%s342 + $0x38] sm:%s335]
        %371 = vst [vmem:[%s343 + $0x34] sm:%s335] %v370
        %v372 = vld [vmem:[%s342 + $0x2c] sm:%s335]
        %373 = vst [vmem:[%s343 + $0x38] sm:%s335] %v372
        %v374 = vld [vmem:[%s342 + $0x3c] sm:%s335]
        %375 = vst [vmem:[%s343 + $0x3c] sm:%s335] %v374
        %v376 = vld [vmem:[%s342 + $0x40] sm:%s335]
        %377 = vst [vmem:[%s343 + $0x40] sm:%s335] %v376
        %v378 = vld [vmem:[%s342 + $0x50] sm:%s335]
        %379 = vst [vmem:[%s343 + $0x44] sm:%s335] %v378
        %v380 = vld [vmem:[%s342 + $0x44] sm:%s335]
        %381 = vst [vmem:[%s343 + $0x48] sm:%s335] %v380
        %v382 = vld [vmem:[%s342 + $0x54] sm:%s335]
        %383 = vst [vmem:[%s343 + $0x4c] sm:%s335] %v382
        %v384 = vld [vmem:[%s342 + $0x48] sm:%s335]
        %385 = vst [vmem:[%s343 + $0x50] sm:%s335] %v384
        %v386 = vld [vmem:[%s342 + $0x58] sm:%s335]
        %387 = vst [vmem:[%s343 + $0x54] sm:%s335] %v386
        %v388 = vld [vmem:[%s342 + $0x4c] sm:%s335]
        %389 = vst [vmem:[%s343 + $0x58] sm:%s335] %v388
        %v390 = vld [vmem:[%s342 + $0x5c] sm:%s335]
        %391 = vst [vmem:[%s343 + $0x5c] sm:%s335] %v390
        %v392 = vld [vmem:[%s342 + $0x60] sm:%s335]
        %393 = vst [vmem:[%s343 + $0x60] sm:%s335] %v392
        %v394 = vld [vmem:[%s342 + $0x70] sm:%s335]
        %395 = vst [vmem:[%s343 + $0x64] sm:%s335] %v394
        %v396 = vld [vmem:[%s342 + $0x64] sm:%s335]
        %397 = vst [vmem:[%s343 + $0x68] sm:%s335] %v396
        %v398 = vld [vmem:[%s342 + $0x74] sm:%s335]
        %399 = vst [vmem:[%s343 + $0x6c] sm:%s335] %v398
        %v400 = vld [vmem:[%s342 + $0x68] sm:%s335]
        %401 = vst [vmem:[%s343 + $0x70] sm:%s335] %v400
        %v402 = vld [vmem:[%s342 + $0x78] sm:%s335]
        %403 = vst [vmem:[%s343 + $0x74] sm:%s335] %v402
        %v404 = vld [vmem:[%s342 + $0x6c] sm:%s335]
        %405 = vst [vmem:[%s343 + $0x78] sm:%s335] %v404
        %v406 = vld [vmem:[%s342 + $0x7c] sm:%s335]
        %407 = vst [vmem:[%s343 + $0x7c] sm:%s335] %v406
        %v408 = vld [vmem:[%s342 + $0x80] sm:%s335]
        %409 = vst [vmem:[%s343 + $0x80] sm:%s335] %v408
        %v410 = vld [vmem:[%s342 + $0x90] sm:%s335]
        %411 = vst [vmem:[%s343 + $0x84] sm:%s335] %v410
        %v412 = vld [vmem:[%s342 + $0x84] sm:%s335]
        %413 = vst [vmem:[%s343 + $0x88] sm:%s335] %v412
        %v414 = vld [vmem:[%s342 + $0x94] sm:%s335]
        %415 = vst [vmem:[%s343 + $0x8c] sm:%s335] %v414
        %v416 = vld [vmem:[%s342 + $0x88] sm:%s335]
        %417 = vst [vmem:[%s343 + $0x90] sm:%s335] %v416
        %v418 = vld [vmem:[%s342 + $0x98] sm:%s335]
        %419 = vst [vmem:[%s343 + $0x94] sm:%s335] %v418
        %v420 = vld [vmem:[%s342 + $0x8c] sm:%s335]
        %421 = vst [vmem:[%s343 + $0x98] sm:%s335] %v420
        %v422 = vld [vmem:[%s342 + $0x9c] sm:%s335]
        %423 = vst [vmem:[%s343 + $0x9c] sm:%s335] %v422
        %v424 = vld [vmem:[%s342 + $0xa0] sm:%s335]
        %425 = vst [vmem:[%s343 + $0xa0] sm:%s335] %v424
        %v426 = vld [vmem:[%s342 + $0xb0] sm:%s335]
        %427 = vst [vmem:[%s343 + $0xa4] sm:%s335] %v426
        %v428 = vld [vmem:[%s342 + $0xa4] sm:%s335]
        %429 = vst [vmem:[%s343 + $0xa8] sm:%s335] %v428
        %v430 = vld [vmem:[%s342 + $0xb4] sm:%s335]
        %431 = vst [vmem:[%s343 + $0xac] sm:%s335] %v430
        %v432 = vld [vmem:[%s342 + $0xa8] sm:%s335]
        %433 = vst [vmem:[%s343 + $0xb0] sm:%s335] %v432
        %v434 = vld [vmem:[%s342 + $0xb8] sm:%s335]
        %435 = vst [vmem:[%s343 + $0xb4] sm:%s335] %v434
        %v436 = vld [vmem:[%s342 + $0xac] sm:%s335]
        %437 = vst [vmem:[%s343 + $0xb8] sm:%s335] %v436
        %v438 = vld [vmem:[%s342 + $0xbc] sm:%s335]
        %439 = vst [vmem:[%s343 + $0xbc] sm:%s335] %v438
        %v440 = vld [vmem:[%s342 + $0xc0] sm:%s335]
        %441 = vst [vmem:[%s343 + $0xc0] sm:%s335] %v440
        %v442 = vld [vmem:[%s342 + $0xd0] sm:%s335]
        %443 = vst [vmem:[%s343 + $0xc4] sm:%s335] %v442
        %v444 = vld [vmem:[%s342 + $0xc4] sm:%s335]
        %445 = vst [vmem:[%s343 + $0xc8] sm:%s335] %v444
        %v446 = vld [vmem:[%s342 + $0xd4] sm:%s335]
        %447 = vst [vmem:[%s343 + $0xcc] sm:%s335] %v446
        %v448 = vld [vmem:[%s342 + $0xc8] sm:%s335]
        %449 = vst [vmem:[%s343 + $0xd0] sm:%s335] %v448
        %v450 = vld [vmem:[%s342 + $0xd8] sm:%s335]
        %451 = vst [vmem:[%s343 + $0xd4] sm:%s335] %v450
        %v452 = vld [vmem:[%s342 + $0xcc] sm:%s335]
        %453 = vst [vmem:[%s343 + $0xd8] sm:%s335] %v452
        %v454 = vld [vmem:[%s342 + $0xdc] sm:%s335]
        %455 = vst [vmem:[%s343 + $0xdc] sm:%s335] %v454
        %v456 = vld [vmem:[%s342 + $0xe0] sm:%s335]
        %457 = vst [vmem:[%s343 + $0xe0] sm:%s335] %v456
        %v458 = vld [vmem:[%s342 + $0xf0] sm:%s335]
        %459 = vst [vmem:[%s343 + $0xe4] sm:%s335] %v458
        %v460 = vld [vmem:[%s342 + $0xe4] sm:%s335]
        %461 = vst [vmem:[%s343 + $0xe8] sm:%s335] %v460
        %v462 = vld [vmem:[%s342 + $0xf4] sm:%s335]
        %463 = vst [vmem:[%s343 + $0xec] sm:%s335] %v462
        %v464 = vld [vmem:[%s342 + $0xe8] sm:%s335]
        %465 = vst [vmem:[%s343 + $0xf0] sm:%s335] %v464
        %v466 = vld [vmem:[%s342 + $0xf8] sm:%s335]
        %467 = vst [vmem:[%s343 + $0xf4] sm:%s335] %v466
        %v468 = vld [vmem:[%s342 + $0xec] sm:%s335]
        %469 = vst [vmem:[%s343 + $0xf8] sm:%s335] %v468
        %v470 = vld [vmem:[%s342 + $0xfc] sm:%s335]
        %471 = vst [vmem:[%s343 + $0xfc] sm:%s335] %v470
        %v472 = vld [vmem:[%s342 + $0x100] sm:%s335]
        %473 = vst [vmem:[%s343 + $0x100] sm:%s335] %v472
        %v474 = vld [vmem:[%s342 + $0x110] sm:%s335]
        %475 = vst [vmem:[%s343 + $0x104] sm:%s335] %v474
        %v476 = vld [vmem:[%s342 + $0x104] sm:%s335]
        %477 = vst [vmem:[%s343 + $0x108] sm:%s335] %v476
        %v478 = vld [vmem:[%s342 + $0x114] sm:%s335]
        %479 = vst [vmem:[%s343 + $0x10c] sm:%s335] %v478
        %v480 = vld [vmem:[%s342 + $0x108] sm:%s335]
        %481 = vst [vmem:[%s343 + $0x110] sm:%s335] %v480
        %v482 = vld [vmem:[%s342 + $0x118] sm:%s335]
        %483 = vst [vmem:[%s343 + $0x114] sm:%s335] %v482
        %v484 = vld [vmem:[%s342 + $0x10c] sm:%s335]
        %485 = vst [vmem:[%s343 + $0x118] sm:%s335] %v484
        %v486 = vld [vmem:[%s342 + $0x11c] sm:%s335]
        %487 = vst [vmem:[%s343 + $0x11c] sm:%s335] %v486
        %v488 = vld [vmem:[%s342 + $0x120] sm:%s335]
        %489 = vst [vmem:[%s343 + $0x120] sm:%s335] %v488
        %v490 = vld [vmem:[%s342 + $0x130] sm:%s335]
        %491 = vst [vmem:[%s343 + $0x124] sm:%s335] %v490
        %v492 = vld [vmem:[%s342 + $0x124] sm:%s335]
        %493 = vst [vmem:[%s343 + $0x128] sm:%s335] %v492
        %v494 = vld [vmem:[%s342 + $0x134] sm:%s335]
        %495 = vst [vmem:[%s343 + $0x12c] sm:%s335] %v494
        %v496 = vld [vmem:[%s342 + $0x128] sm:%s335]
        %497 = vst [vmem:[%s343 + $0x130] sm:%s335] %v496
        %v498 = vld [vmem:[%s342 + $0x138] sm:%s335]
        %499 = vst [vmem:[%s343 + $0x134] sm:%s335] %v498
        %v500 = vld [vmem:[%s342 + $0x12c] sm:%s335]
        %501 = vst [vmem:[%s343 + $0x138] sm:%s335] %v500
        %v502 = vld [vmem:[%s342 + $0x13c] sm:%s335]
        %503 = vst [vmem:[%s343 + $0x13c] sm:%s335] %v502
        %v504 = vld [vmem:[%s342 + $0x140] sm:%s335]
        %505 = vst [vmem:[%s343 + $0x140] sm:%s335] %v504
        %v506 = vld [vmem:[%s342 + $0x150] sm:%s335]
        %507 = vst [vmem:[%s343 + $0x144] sm:%s335] %v506
        %v508 = vld [vmem:[%s342 + $0x144] sm:%s335]
        %509 = vst [vmem:[%s343 + $0x148] sm:%s335] %v508
        %v510 = vld [vmem:[%s342 + $0x154] sm:%s335]
        %511 = vst [vmem:[%s343 + $0x14c] sm:%s335] %v510
        %v512 = vld [vmem:[%s342 + $0x148] sm:%s335]
        %513 = vst [vmem:[%s343 + $0x150] sm:%s335] %v512
        %v514 = vld [vmem:[%s342 + $0x158] sm:%s335]
        %515 = vst [vmem:[%s343 + $0x154] sm:%s335] %v514
        %v516 = vld [vmem:[%s342 + $0x14c] sm:%s335]
        %517 = vst [vmem:[%s343 + $0x158] sm:%s335] %v516
        %v518 = vld [vmem:[%s342 + $0x15c] sm:%s335]
        %519 = vst [vmem:[%s343 + $0x15c] sm:%s335] %v518
        %v520 = vld [vmem:[%s342 + $0x160] sm:%s335]
        %521 = vst [vmem:[%s343 + $0x160] sm:%s335] %v520
        %v522 = vld [vmem:[%s342 + $0x170] sm:%s335]
        %523 = vst [vmem:[%s343 + $0x164] sm:%s335] %v522
        %v524 = vld [vmem:[%s342 + $0x164] sm:%s335]
        %525 = vst [vmem:[%s343 + $0x168] sm:%s335] %v524
        %v526 = vld [vmem:[%s342 + $0x174] sm:%s335]
        %527 = vst [vmem:[%s343 + $0x16c] sm:%s335] %v526
        %v528 = vld [vmem:[%s342 + $0x168] sm:%s335]
        %529 = vst [vmem:[%s343 + $0x170] sm:%s335] %v528
        %v530 = vld [vmem:[%s342 + $0x178] sm:%s335]
        %531 = vst [vmem:[%s343 + $0x174] sm:%s335] %v530
        %v532 = vld [vmem:[%s342 + $0x16c] sm:%s335]
        %533 = vst [vmem:[%s343 + $0x178] sm:%s335] %v532
        %v534 = vld [vmem:[%s342 + $0x17c] sm:%s335]
        %535 = vst [vmem:[%s343 + $0x17c] sm:%s335] %v534
        %v536 = vld [vmem:[%s342 + $0x180] sm:%s335]
        %537 = vst [vmem:[%s343 + $0x180] sm:%s335] %v536
        %v538 = vld [vmem:[%s342 + $0x190] sm:%s335]
        %539 = vst [vmem:[%s343 + $0x184] sm:%s335] %v538
        %v540 = vld [vmem:[%s342 + $0x184] sm:%s335]
        %541 = vst [vmem:[%s343 + $0x188] sm:%s335] %v540
        %v542 = vld [vmem:[%s342 + $0x194] sm:%s335]
        %543 = vst [vmem:[%s343 + $0x18c] sm:%s335] %v542
        %v544 = vld [vmem:[%s342 + $0x188] sm:%s335]
        %545 = vst [vmem:[%s343 + $0x190] sm:%s335] %v544
        %v546 = vld [vmem:[%s342 + $0x198] sm:%s335]
        %547 = vst [vmem:[%s343 + $0x194] sm:%s335] %v546
        %v548 = vld [vmem:[%s342 + $0x18c] sm:%s335]
        %549 = vst [vmem:[%s343 + $0x198] sm:%s335] %v548
        %v550 = vld [vmem:[%s342 + $0x19c] sm:%s335]
        %551 = vst [vmem:[%s343 + $0x19c] sm:%s335] %v550
        %v552 = vld [vmem:[%s342 + $0x1a0] sm:%s335]
        %553 = vst [vmem:[%s343 + $0x1a0] sm:%s335] %v552
        %v554 = vld [vmem:[%s342 + $0x1b0] sm:%s335]
        %555 = vst [vmem:[%s343 + $0x1a4] sm:%s335] %v554
        %v556 = vld [vmem:[%s342 + $0x1a4] sm:%s335]
        %557 = vst [vmem:[%s343 + $0x1a8] sm:%s335] %v556
        %v558 = vld [vmem:[%s342 + $0x1b4] sm:%s335]
        %559 = vst [vmem:[%s343 + $0x1ac] sm:%s335] %v558
        %v560 = vld [vmem:[%s342 + $0x1a8] sm:%s335]
        %561 = vst [vmem:[%s343 + $0x1b0] sm:%s335] %v560
        %v562 = vld [vmem:[%s342 + $0x1b8] sm:%s335]
        %563 = vst [vmem:[%s343 + $0x1b4] sm:%s335] %v562
        %v564 = vld [vmem:[%s342 + $0x1ac] sm:%s335]
        %565 = vst [vmem:[%s343 + $0x1b8] sm:%s335] %v564
        %v566 = vld [vmem:[%s342 + $0x1bc] sm:%s335]
        %567 = vst [vmem:[%s343 + $0x1bc] sm:%s335] %v566
        %v568 = vld [vmem:[%s342 + $0x1c0] sm:%s335]
        %569 = vst [vmem:[%s343 + $0x1c0] sm:%s335] %v568
        %v570 = vld [vmem:[%s342 + $0x1d0] sm:%s335]
        %571 = vst [vmem:[%s343 + $0x1c4] sm:%s335] %v570
        %v572 = vld [vmem:[%s342 + $0x1c4] sm:%s335]
        %573 = vst [vmem:[%s343 + $0x1c8] sm:%s335] %v572
        %v574 = vld [vmem:[%s342 + $0x1d4] sm:%s335]
        %575 = vst [vmem:[%s343 + $0x1cc] sm:%s335] %v574
        %v576 = vld [vmem:[%s342 + $0x1c8] sm:%s335]
        %577 = vst [vmem:[%s343 + $0x1d0] sm:%s335] %v576
        %v578 = vld [vmem:[%s342 + $0x1d8] sm:%s335]
        %579 = vst [vmem:[%s343 + $0x1d4] sm:%s335] %v578
        %v580 = vld [vmem:[%s342 + $0x1cc] sm:%s335]
        %581 = vst [vmem:[%s343 + $0x1d8] sm:%s335] %v580
        %v582 = vld [vmem:[%s342 + $0x1dc] sm:%s335]
        %583 = vst [vmem:[%s343 + $0x1dc] sm:%s335] %v582
        %v584 = vld [vmem:[%s342 + $0x1e0] sm:%s335]
        %585 = vst [vmem:[%s343 + $0x1e0] sm:%s335] %v584
        %v586 = vld [vmem:[%s342 + $0x1f0] sm:%s335]
        %587 = vst [vmem:[%s343 + $0x1e4] sm:%s335] %v586
        %v588 = vld [vmem:[%s342 + $0x1e4] sm:%s335]
        %589 = vst [vmem:[%s343 + $0x1e8] sm:%s335] %v588
        %v590 = vld [vmem:[%s342 + $0x1f4] sm:%s335]
        %591 = vst [vmem:[%s343 + $0x1ec] sm:%s335] %v590
        %v592 = vld [vmem:[%s342 + $0x1e8] sm:%s335]
        %593 = vst [vmem:[%s343 + $0x1f0] sm:%s335] %v592
        %v594 = vld [vmem:[%s342 + $0x1f8] sm:%s335]
        %595 = vst [vmem:[%s343 + $0x1f4] sm:%s335] %v594
        %v596 = vld [vmem:[%s342 + $0x1ec] sm:%s335]
        %597 = vst [vmem:[%s343 + $0x1f8] sm:%s335] %v596
        %v598 = vld [vmem:[%s342 + $0x1fc] sm:%s335]
        %599 = vst [vmem:[%s343 + $0x1fc] sm:%s335] %v598
      $region76: #{forward.1} parent=63 // loop_footer
        %s341 = sadd.s32 1, %s337
      $region77: #{forward.1} parent=63 // loop_footer_branch
        %336 = sbr.rel target = $region73
      $region78: #{forward.1} parent=63 // loop_exit
        _
    $region64: #{forward.1} parent=48 // pred_fallthru
      _
  $region49: #{forward.1} parent=0 // pred_fallthru
    _
  // Predicated region
  $region50: #{forward.1} parent=0 // pred_check
    %p49 = pneg %p45
  $region51: #{forward.1} parent=0 // pred_check_branch
    %51 = sbr.rel (%p49) target = $region53
  $region52: #{forward.1} parent=0 // pred_region
    %s52 = sshllo.u32 0, 4
    loop: start=0, step=1, limit=1
    $region54: #{forward.1} parent=52 // loop_pre_header
      _
    $region55: #{forward.1} parent=52 // loop_header
      %s54 = sphi 0, %s58
      %p55 = scmp.ge.s32.totalorder %s54, 1
      %s59 = sphi %s11, %s11
      %s60 = sphi [#allocation4], [#allocation4]
    $region56: #{forward.1} parent=52 // loop_header_branch
      %57 = sbr.rel (%p55) target = $region60
    $region57: #{forward.1} parent=52 // loop_body
      %v61 = vld [vmem:[%s59] sm:%s52]
      %62 = vst [vmem:[%s60] sm:%s52] %v61
      %v63 = vld [vmem:[%s59 + $0x10] sm:%s52]
      %64 = vst [vmem:[%s60 + $0x4] sm:%s52] %v63
      %v65 = vld [vmem:[%s59 + $0x4] sm:%s52]
      %66 = vst [vmem:[%s60 + $0x8] sm:%s52] %v65
      %v67 = vld [vmem:[%s59 + $0x14] sm:%s52]
      %68 = vst [vmem:[%s60 + $0xc] sm:%s52] %v67
      %v69 = vld [vmem:[%s59 + $0x8] sm:%s52]
      %70 = vst [vmem:[%s60 + $0x10] sm:%s52] %v69
      %v71 = vld [vmem:[%s59 + $0x18] sm:%s52]
      %72 = vst [vmem:[%s60 + $0x14] sm:%s52] %v71
      %v73 = vld [vmem:[%s59 + $0xc] sm:%s52]
      %74 = vst [vmem:[%s60 + $0x18] sm:%s52] %v73
      %v75 = vld [vmem:[%s59 + $0x1c] sm:%s52]
      %76 = vst [vmem:[%s60 + $0x1c] sm:%s52] %v75
      %v77 = vld [vmem:[%s59 + $0x20] sm:%s52]
      %78 = vst [vmem:[%s60 + $0x20] sm:%s52] %v77
      %v79 = vld [vmem:[%s59 + $0x30] sm:%s52]
      %80 = vst [vmem:[%s60 + $0x24] sm:%s52] %v79
      %v81 = vld [vmem:[%s59 + $0x24] sm:%s52]
      %82 = vst [vmem:[%s60 + $0x28] sm:%s52] %v81
      %v83 = vld [vmem:[%s59 + $0x34] sm:%s52]
      %84 = vst [vmem:[%s60 + $0x2c] sm:%s52] %v83
      %v85 = vld [vmem:[%s59 + $0x28] sm:%s52]
      %86 = vst [vmem:[%s60 + $0x30] sm:%s52] %v85
      %v87 = vld [vmem:[%s59 + $0x38] sm:%s52]
      %88 = vst [vmem:[%s60 + $0x34] sm:%s52] %v87
      %v89 = vld [vmem:[%s59 + $0x2c] sm:%s52]
      %90 = vst [vmem:[%s60 + $0x38] sm:%s52] %v89
      %v91 = vld [vmem:[%s59 + $0x3c] sm:%s52]
      %92 = vst [vmem:[%s60 + $0x3c] sm:%s52] %v91
      %v93 = vld [vmem:[%s59 + $0x40] sm:%s52]
      %94 = vst [vmem:[%s60 + $0x40] sm:%s52] %v93
      %v95 = vld [vmem:[%s59 + $0x50] sm:%s52]
      %96 = vst [vmem:[%s60 + $0x44] sm:%s52] %v95
      %v97 = vld [vmem:[%s59 + $0x44] sm:%s52]
      %98 = vst [vmem:[%s60 + $0x48] sm:%s52] %v97
      %v99 = vld [vmem:[%s59 + $0x54] sm:%s52]
      %100 = vst [vmem:[%s60 + $0x4c] sm:%s52] %v99
      %v101 = vld [vmem:[%s59 + $0x48] sm:%s52]
      %102 = vst [vmem:[%s60 + $0x50] sm:%s52] %v101
      %v103 = vld [vmem:[%s59 + $0x58] sm:%s52]
      %104 = vst [vmem:[%s60 + $0x54] sm:%s52] %v103
      %v105 = vld [vmem:[%s59 + $0x4c] sm:%s52]
      %106 = vst [vmem:[%s60 + $0x58] sm:%s52] %v105
      %v107 = vld [vmem:[%s59 + $0x5c] sm:%s52]
      %108 = vst [vmem:[%s60 + $0x5c] sm:%s52] %v107
      %v109 = vld [vmem:[%s59 + $0x60] sm:%s52]
      %110 = vst [vmem:[%s60 + $0x60] sm:%s52] %v109
      %v111 = vld [vmem:[%s59 + $0x70] sm:%s52]
      %112 = vst [vmem:[%s60 + $0x64] sm:%s52] %v111
      %v113 = vld [vmem:[%s59 + $0x64] sm:%s52]
      %114 = vst [vmem:[%s60 + $0x68] sm:%s52] %v113
      %v115 = vld [vmem:[%s59 + $0x74] sm:%s52]
      %116 = vst [vmem:[%s60 + $0x6c] sm:%s52] %v115
      %v117 = vld [vmem:[%s59 + $0x68] sm:%s52]
      %118 = vst [vmem:[%s60 + $0x70] sm:%s52] %v117
      %v119 = vld [vmem:[%s59 + $0x78] sm:%s52]
      %120 = vst [vmem:[%s60 + $0x74] sm:%s52] %v119
      %v121 = vld [vmem:[%s59 + $0x6c] sm:%s52]
      %122 = vst [vmem:[%s60 + $0x78] sm:%s52] %v121
      %v123 = vld [vmem:[%s59 + $0x7c] sm:%s52]
      %124 = vst [vmem:[%s60 + $0x7c] sm:%s52] %v123
      %v125 = vld [vmem:[%s59 + $0x80] sm:%s52]
      %126 = vst [vmem:[%s60 + $0x80] sm:%s52] %v125
      %v127 = vld [vmem:[%s59 + $0x90] sm:%s52]
      %128 = vst [vmem:[%s60 + $0x84] sm:%s52] %v127
      %v129 = vld [vmem:[%s59 + $0x84] sm:%s52]
      %130 = vst [vmem:[%s60 + $0x88] sm:%s52] %v129
      %v131 = vld [vmem:[%s59 + $0x94] sm:%s52]
      %132 = vst [vmem:[%s60 + $0x8c] sm:%s52] %v131
      %v133 = vld [vmem:[%s59 + $0x88] sm:%s52]
      %134 = vst [vmem:[%s60 + $0x90] sm:%s52] %v133
      %v135 = vld [vmem:[%s59 + $0x98] sm:%s52]
      %136 = vst [vmem:[%s60 + $0x94] sm:%s52] %v135
      %v137 = vld [vmem:[%s59 + $0x8c] sm:%s52]
      %138 = vst [vmem:[%s60 + $0x98] sm:%s52] %v137
      %v139 = vld [vmem:[%s59 + $0x9c] sm:%s52]
      %140 = vst [vmem:[%s60 + $0x9c] sm:%s52] %v139
      %v141 = vld [vmem:[%s59 + $0xa0] sm:%s52]
      %142 = vst [vmem:[%s60 + $0xa0] sm:%s52] %v141
      %v143 = vld [vmem:[%s59 + $0xb0] sm:%s52]
      %144 = vst [vmem:[%s60 + $0xa4] sm:%s52] %v143
      %v145 = vld [vmem:[%s59 + $0xa4] sm:%s52]
      %146 = vst [vmem:[%s60 + $0xa8] sm:%s52] %v145
      %v147 = vld [vmem:[%s59 + $0xb4] sm:%s52]
      %148 = vst [vmem:[%s60 + $0xac] sm:%s52] %v147
      %v149 = vld [vmem:[%s59 + $0xa8] sm:%s52]
      %150 = vst [vmem:[%s60 + $0xb0] sm:%s52] %v149
      %v151 = vld [vmem:[%s59 + $0xb8] sm:%s52]
      %152 = vst [vmem:[%s60 + $0xb4] sm:%s52] %v151
      %v153 = vld [vmem:[%s59 + $0xac] sm:%s52]
      %154 = vst [vmem:[%s60 + $0xb8] sm:%s52] %v153
      %v155 = vld [vmem:[%s59 + $0xbc] sm:%s52]
      %156 = vst [vmem:[%s60 + $0xbc] sm:%s52] %v155
      %v157 = vld [vmem:[%s59 + $0xc0] sm:%s52]
      %158 = vst [vmem:[%s60 + $0xc0] sm:%s52] %v157
      %v159 = vld [vmem:[%s59 + $0xd0] sm:%s52]
      %160 = vst [vmem:[%s60 + $0xc4] sm:%s52] %v159
      %v161 = vld [vmem:[%s59 + $0xc4] sm:%s52]
      %162 = vst [vmem:[%s60 + $0xc8] sm:%s52] %v161
      %v163 = vld [vmem:[%s59 + $0xd4] sm:%s52]
      %164 = vst [vmem:[%s60 + $0xcc] sm:%s52] %v163
      %v165 = vld [vmem:[%s59 + $0xc8] sm:%s52]
      %166 = vst [vmem:[%s60 + $0xd0] sm:%s52] %v165
      %v167 = vld [vmem:[%s59 + $0xd8] sm:%s52]
      %168 = vst [vmem:[%s60 + $0xd4] sm:%s52] %v167
      %v169 = vld [vmem:[%s59 + $0xcc] sm:%s52]
      %170 = vst [vmem:[%s60 + $0xd8] sm:%s52] %v169
      %v171 = vld [vmem:[%s59 + $0xdc] sm:%s52]
      %172 = vst [vmem:[%s60 + $0xdc] sm:%s52] %v171
      %v173 = vld [vmem:[%s59 + $0xe0] sm:%s52]
      %174 = vst [vmem:[%s60 + $0xe0] sm:%s52] %v173
      %v175 = vld [vmem:[%s59 + $0xf0] sm:%s52]
      %176 = vst [vmem:[%s60 + $0xe4] sm:%s52] %v175
      %v177 = vld [vmem:[%s59 + $0xe4] sm:%s52]
      %178 = vst [vmem:[%s60 + $0xe8] sm:%s52] %v177
      %v179 = vld [vmem:[%s59 + $0xf4] sm:%s52]
      %180 = vst [vmem:[%s60 + $0xec] sm:%s52] %v179
      %v181 = vld [vmem:[%s59 + $0xe8] sm:%s52]
      %182 = vst [vmem:[%s60 + $0xf0] sm:%s52] %v181
      %v183 = vld [vmem:[%s59 + $0xf8] sm:%s52]
      %184 = vst [vmem:[%s60 + $0xf4] sm:%s52] %v183
      %v185 = vld [vmem:[%s59 + $0xec] sm:%s52]
      %186 = vst [vmem:[%s60 + $0xf8] sm:%s52] %v185
      %v187 = vld [vmem:[%s59 + $0xfc] sm:%s52]
      %188 = vst [vmem:[%s60 + $0xfc] sm:%s52] %v187
      %v189 = vld [vmem:[%s59 + $0x100] sm:%s52]
      %190 = vst [vmem:[%s60 + $0x100] sm:%s52] %v189
      %v191 = vld [vmem:[%s59 + $0x110] sm:%s52]
      %192 = vst [vmem:[%s60 + $0x104] sm:%s52] %v191
      %v193 = vld [vmem:[%s59 + $0x104] sm:%s52]
      %194 = vst [vmem:[%s60 + $0x108] sm:%s52] %v193
      %v195 = vld [vmem:[%s59 + $0x114] sm:%s52]
      %196 = vst [vmem:[%s60 + $0x10c] sm:%s52] %v195
      %v197 = vld [vmem:[%s59 + $0x108] sm:%s52]
      %198 = vst [vmem:[%s60 + $0x110] sm:%s52] %v197
      %v199 = vld [vmem:[%s59 + $0x118] sm:%s52]
      %200 = vst [vmem:[%s60 + $0x114] sm:%s52] %v199
      %v201 = vld [vmem:[%s59 + $0x10c] sm:%s52]
      %202 = vst [vmem:[%s60 + $0x118] sm:%s52] %v201
      %v203 = vld [vmem:[%s59 + $0x11c] sm:%s52]
      %204 = vst [vmem:[%s60 + $0x11c] sm:%s52] %v203
      %v205 = vld [vmem:[%s59 + $0x120] sm:%s52]
      %206 = vst [vmem:[%s60 + $0x120] sm:%s52] %v205
      %v207 = vld [vmem:[%s59 + $0x130] sm:%s52]
      %208 = vst [vmem:[%s60 + $0x124] sm:%s52] %v207
      %v209 = vld [vmem:[%s59 + $0x124] sm:%s52]
      %210 = vst [vmem:[%s60 + $0x128] sm:%s52] %v209
      %v211 = vld [vmem:[%s59 + $0x134] sm:%s52]
      %212 = vst [vmem:[%s60 + $0x12c] sm:%s52] %v211
      %v213 = vld [vmem:[%s59 + $0x128] sm:%s52]
      %214 = vst [vmem:[%s60 + $0x130] sm:%s52] %v213
      %v215 = vld [vmem:[%s59 + $0x138] sm:%s52]
      %216 = vst [vmem:[%s60 + $0x134] sm:%s52] %v215
      %v217 = vld [vmem:[%s59 + $0x12c] sm:%s52]
      %218 = vst [vmem:[%s60 + $0x138] sm:%s52] %v217
      %v219 = vld [vmem:[%s59 + $0x13c] sm:%s52]
      %220 = vst [vmem:[%s60 + $0x13c] sm:%s52] %v219
      %v221 = vld [vmem:[%s59 + $0x140] sm:%s52]
      %222 = vst [vmem:[%s60 + $0x140] sm:%s52] %v221
      %v223 = vld [vmem:[%s59 + $0x150] sm:%s52]
      %224 = vst [vmem:[%s60 + $0x144] sm:%s52] %v223
      %v225 = vld [vmem:[%s59 + $0x144] sm:%s52]
      %226 = vst [vmem:[%s60 + $0x148] sm:%s52] %v225
      %v227 = vld [vmem:[%s59 + $0x154] sm:%s52]
      %228 = vst [vmem:[%s60 + $0x14c] sm:%s52] %v227
      %v229 = vld [vmem:[%s59 + $0x148] sm:%s52]
      %230 = vst [vmem:[%s60 + $0x150] sm:%s52] %v229
      %v231 = vld [vmem:[%s59 + $0x158] sm:%s52]
      %232 = vst [vmem:[%s60 + $0x154] sm:%s52] %v231
      %v233 = vld [vmem:[%s59 + $0x14c] sm:%s52]
      %234 = vst [vmem:[%s60 + $0x158] sm:%s52] %v233
      %v235 = vld [vmem:[%s59 + $0x15c] sm:%s52]
      %236 = vst [vmem:[%s60 + $0x15c] sm:%s52] %v235
      %v237 = vld [vmem:[%s59 + $0x160] sm:%s52]
      %238 = vst [vmem:[%s60 + $0x160] sm:%s52] %v237
      %v239 = vld [vmem:[%s59 + $0x170] sm:%s52]
      %240 = vst [vmem:[%s60 + $0x164] sm:%s52] %v239
      %v241 = vld [vmem:[%s59 + $0x164] sm:%s52]
      %242 = vst [vmem:[%s60 + $0x168] sm:%s52] %v241
      %v243 = vld [vmem:[%s59 + $0x174] sm:%s52]
      %244 = vst [vmem:[%s60 + $0x16c] sm:%s52] %v243
      %v245 = vld [vmem:[%s59 + $0x168] sm:%s52]
      %246 = vst [vmem:[%s60 + $0x170] sm:%s52] %v245
      %v247 = vld [vmem:[%s59 + $0x178] sm:%s52]
      %248 = vst [vmem:[%s60 + $0x174] sm:%s52] %v247
      %v249 = vld [vmem:[%s59 + $0x16c] sm:%s52]
      %250 = vst [vmem:[%s60 + $0x178] sm:%s52] %v249
      %v251 = vld [vmem:[%s59 + $0x17c] sm:%s52]
      %252 = vst [vmem:[%s60 + $0x17c] sm:%s52] %v251
      %v253 = vld [vmem:[%s59 + $0x180] sm:%s52]
      %254 = vst [vmem:[%s60 + $0x180] sm:%s52] %v253
      %v255 = vld [vmem:[%s59 + $0x190] sm:%s52]
      %256 = vst [vmem:[%s60 + $0x184] sm:%s52] %v255
      %v257 = vld [vmem:[%s59 + $0x184] sm:%s52]
      %258 = vst [vmem:[%s60 + $0x188] sm:%s52] %v257
      %v259 = vld [vmem:[%s59 + $0x194] sm:%s52]
      %260 = vst [vmem:[%s60 + $0x18c] sm:%s52] %v259
      %v261 = vld [vmem:[%s59 + $0x188] sm:%s52]
      %262 = vst [vmem:[%s60 + $0x190] sm:%s52] %v261
      %v263 = vld [vmem:[%s59 + $0x198] sm:%s52]
      %264 = vst [vmem:[%s60 + $0x194] sm:%s52] %v263
      %v265 = vld [vmem:[%s59 + $0x18c] sm:%s52]
      %266 = vst [vmem:[%s60 + $0x198] sm:%s52] %v265
      %v267 = vld [vmem:[%s59 + $0x19c] sm:%s52]
      %268 = vst [vmem:[%s60 + $0x19c] sm:%s52] %v267
      %v269 = vld [vmem:[%s59 + $0x1a0] sm:%s52]
      %270 = vst [vmem:[%s60 + $0x1a0] sm:%s52] %v269
      %v271 = vld [vmem:[%s59 + $0x1b0] sm:%s52]
      %272 = vst [vmem:[%s60 + $0x1a4] sm:%s52] %v271
      %v273 = vld [vmem:[%s59 + $0x1a4] sm:%s52]
      %274 = vst [vmem:[%s60 + $0x1a8] sm:%s52] %v273
      %v275 = vld [vmem:[%s59 + $0x1b4] sm:%s52]
      %276 = vst [vmem:[%s60 + $0x1ac] sm:%s52] %v275
      %v277 = vld [vmem:[%s59 + $0x1a8] sm:%s52]
      %278 = vst [vmem:[%s60 + $0x1b0] sm:%s52] %v277
      %v279 = vld [vmem:[%s59 + $0x1b8] sm:%s52]
      %280 = vst [vmem:[%s60 + $0x1b4] sm:%s52] %v279
      %v281 = vld [vmem:[%s59 + $0x1ac] sm:%s52]
      %282 = vst [vmem:[%s60 + $0x1b8] sm:%s52] %v281
      %v283 = vld [vmem:[%s59 + $0x1bc] sm:%s52]
      %284 = vst [vmem:[%s60 + $0x1bc] sm:%s52] %v283
      %v285 = vld [vmem:[%s59 + $0x1c0] sm:%s52]
      %286 = vst [vmem:[%s60 + $0x1c0] sm:%s52] %v285
      %v287 = vld [vmem:[%s59 + $0x1d0] sm:%s52]
      %288 = vst [vmem:[%s60 + $0x1c4] sm:%s52] %v287
      %v289 = vld [vmem:[%s59 + $0x1c4] sm:%s52]
      %290 = vst [vmem:[%s60 + $0x1c8] sm:%s52] %v289
      %v291 = vld [vmem:[%s59 + $0x1d4] sm:%s52]
      %292 = vst [vmem:[%s60 + $0x1cc] sm:%s52] %v291
      %v293 = vld [vmem:[%s59 + $0x1c8] sm:%s52]
      %294 = vst [vmem:[%s60 + $0x1d0] sm:%s52] %v293
      %v295 = vld [vmem:[%s59 + $0x1d8] sm:%s52]
      %296 = vst [vmem:[%s60 + $0x1d4] sm:%s52] %v295
      %v297 = vld [vmem:[%s59 + $0x1cc] sm:%s52]
      %298 = vst [vmem:[%s60 + $0x1d8] sm:%s52] %v297
      %v299 = vld [vmem:[%s59 + $0x1dc] sm:%s52]
      %300 = vst [vmem:[%s60 + $0x1dc] sm:%s52] %v299
      %v301 = vld [vmem:[%s59 + $0x1e0] sm:%s52]
      %302 = vst [vmem:[%s60 + $0x1e0] sm:%s52] %v301
      %v303 = vld [vmem:[%s59 + $0x1f0] sm:%s52]
      %304 = vst [vmem:[%s60 + $0x1e4] sm:%s52] %v303
      %v305 = vld [vmem:[%s59 + $0x1e4] sm:%s52]
      %306 = vst [vmem:[%s60 + $0x1e8] sm:%s52] %v305
      %v307 = vld [vmem:[%s59 + $0x1f4] sm:%s52]
      %308 = vst [vmem:[%s60 + $0x1ec] sm:%s52] %v307
      %v309 = vld [vmem:[%s59 + $0x1e8] sm:%s52]
      %310 = vst [vmem:[%s60 + $0x1f0] sm:%s52] %v309
      %v311 = vld [vmem:[%s59 + $0x1f8] sm:%s52]
      %312 = vst [vmem:[%s60 + $0x1f4] sm:%s52] %v311
      %v313 = vld [vmem:[%s59 + $0x1ec] sm:%s52]
      %314 = vst [vmem:[%s60 + $0x1f8] sm:%s52] %v313
      %v315 = vld [vmem:[%s59 + $0x1fc] sm:%s52]
      %316 = vst [vmem:[%s60 + $0x1fc] sm:%s52] %v315
    $region58: #{forward.1} parent=52 // loop_footer
      %s58 = sadd.s32 1, %s54
    $region59: #{forward.1} parent=52 // loop_footer_branch
      %53 = sbr.rel target = $region55
    $region60: #{forward.1} parent=52 // loop_exit
      _
  $region53: #{forward.1} parent=0 // pred_fallthru
    _
  // Predicated region
  $region79: #{forward.1} parent=0 // pred_check
    _
  $region80: #{forward.1} parent=0 // pred_check_branch
    %602 = sbr.rel (0) target = $region82
  $region81: #{forward.1} parent=0 // pred_region
    %603 = vsyncadd [#allocation6], 8192
  $region82: #{forward.1} parent=0 // pred_fallthru
    _
  %s604 = scalar_lea.sflag [#allocation6], 1
  %p606 = scmp.lt.u32.totalorder 4, 8
  %p607 = pneg %p606
  // Predicated region
  $region83: #{forward.1} parent=0 // pred_check
    _
  $region84: #{forward.1} parent=0 // pred_check_branch
    %609 = sbr.rel (%p606) target = $region86
  $region85: #{forward.1} parent=0 // pred_region
    %s878 = sand.u32 4, 7
    %p879 = scmp.eq.s32.totalorder %s878, 0
    %p880 = pneg %p879
    // Predicated region
    $region98: #{forward.1} parent=85 // pred_check
      _
    $region99: #{forward.1} parent=85 // pred_check_branch
      %882 = sbr.rel (%p879) target = $region101
    $region100: #{forward.1} parent=85 // pred_region
      %s883 = sand.u32 4, 7
      %s884 = ssub.s32 4, %s883
      %s885 = scalar_lea.vmem %s12, %s884
      %s886 = ssub.s32 4, %s883
      %s887 = scalar_lea.vmem [#allocation5], %s886
      loop: start=0, step=1, limit=1
      $region102: #{forward.1} parent=100 // loop_pre_header
        _
      $region103: #{forward.1} parent=100 // loop_header
        %s889 = sphi 0, %s893
        %p890 = scmp.ge.s32.totalorder %s889, 1
        %s894 = sphi %s12, %s12
        %s895 = sphi [#allocation5], [#allocation5]
      $region104: #{forward.1} parent=100 // loop_header_branch
        %892 = sbr.rel (%p890) target = $region108
      $region105: #{forward.1} parent=100 // loop_body
        _
      $region106: #{forward.1} parent=100 // loop_footer
        %s893 = sadd.s32 1, %s889
      $region107: #{forward.1} parent=100 // loop_footer_branch
        %888 = sbr.rel target = $region103
      $region108: #{forward.1} parent=100 // loop_exit
        _
      %s896 = sshllo.u32 0, %s883
      loop: start=0, step=1, limit=1
      $region109: #{forward.1} parent=100 // loop_pre_header
        _
      $region110: #{forward.1} parent=100 // loop_header
        %s898 = sphi 0, %s902
        %p899 = scmp.ge.s32.totalorder %s898, 1
        %s903 = sphi %s885, %s885
        %s904 = sphi %s887, %s887
      $region111: #{forward.1} parent=100 // loop_header_branch
        %901 = sbr.rel (%p899) target = $region115
      $region112: #{forward.1} parent=100 // loop_body
        %v905 = vld [vmem:[%s903] sm:%s896]
        %906 = vst [vmem:[%s904] sm:%s896] %v905
        %v907 = vld [vmem:[%s903 + $0x8] sm:%s896]
        %908 = vst [vmem:[%s904 + $0x4] sm:%s896] %v907
        %v909 = vld [vmem:[%s903 + $0x4] sm:%s896]
        %910 = vst [vmem:[%s904 + $0x8] sm:%s896] %v909
        %v911 = vld [vmem:[%s903 + $0xc] sm:%s896]
        %912 = vst [vmem:[%s904 + $0xc] sm:%s896] %v911
        %v913 = vld [vmem:[%s903 + $0x10] sm:%s896]
        %914 = vst [vmem:[%s904 + $0x10] sm:%s896] %v913
        %v915 = vld [vmem:[%s903 + $0x18] sm:%s896]
        %916 = vst [vmem:[%s904 + $0x14] sm:%s896] %v915
        %v917 = vld [vmem:[%s903 + $0x14] sm:%s896]
        %918 = vst [vmem:[%s904 + $0x18] sm:%s896] %v917
        %v919 = vld [vmem:[%s903 + $0x1c] sm:%s896]
        %920 = vst [vmem:[%s904 + $0x1c] sm:%s896] %v919
        %v921 = vld [vmem:[%s903 + $0x20] sm:%s896]
        %922 = vst [vmem:[%s904 + $0x20] sm:%s896] %v921
        %v923 = vld [vmem:[%s903 + $0x28] sm:%s896]
        %924 = vst [vmem:[%s904 + $0x24] sm:%s896] %v923
        %v925 = vld [vmem:[%s903 + $0x24] sm:%s896]
        %926 = vst [vmem:[%s904 + $0x28] sm:%s896] %v925
        %v927 = vld [vmem:[%s903 + $0x2c] sm:%s896]
        %928 = vst [vmem:[%s904 + $0x2c] sm:%s896] %v927
        %v929 = vld [vmem:[%s903 + $0x30] sm:%s896]
        %930 = vst [vmem:[%s904 + $0x30] sm:%s896] %v929
        %v931 = vld [vmem:[%s903 + $0x38] sm:%s896]
        %932 = vst [vmem:[%s904 + $0x34] sm:%s896] %v931
        %v933 = vld [vmem:[%s903 + $0x34] sm:%s896]
        %934 = vst [vmem:[%s904 + $0x38] sm:%s896] %v933
        %v935 = vld [vmem:[%s903 + $0x3c] sm:%s896]
        %936 = vst [vmem:[%s904 + $0x3c] sm:%s896] %v935
        %v937 = vld [vmem:[%s903 + $0x40] sm:%s896]
        %938 = vst [vmem:[%s904 + $0x40] sm:%s896] %v937
        %v939 = vld [vmem:[%s903 + $0x48] sm:%s896]
        %940 = vst [vmem:[%s904 + $0x44] sm:%s896] %v939
        %v941 = vld [vmem:[%s903 + $0x44] sm:%s896]
        %942 = vst [vmem:[%s904 + $0x48] sm:%s896] %v941
        %v943 = vld [vmem:[%s903 + $0x4c] sm:%s896]
        %944 = vst [vmem:[%s904 + $0x4c] sm:%s896] %v943
        %v945 = vld [vmem:[%s903 + $0x50] sm:%s896]
        %946 = vst [vmem:[%s904 + $0x50] sm:%s896] %v945
        %v947 = vld [vmem:[%s903 + $0x58] sm:%s896]
        %948 = vst [vmem:[%s904 + $0x54] sm:%s896] %v947
        %v949 = vld [vmem:[%s903 + $0x54] sm:%s896]
        %950 = vst [vmem:[%s904 + $0x58] sm:%s896] %v949
        %v951 = vld [vmem:[%s903 + $0x5c] sm:%s896]
        %952 = vst [vmem:[%s904 + $0x5c] sm:%s896] %v951
        %v953 = vld [vmem:[%s903 + $0x60] sm:%s896]
        %954 = vst [vmem:[%s904 + $0x60] sm:%s896] %v953
        %v955 = vld [vmem:[%s903 + $0x68] sm:%s896]
        %956 = vst [vmem:[%s904 + $0x64] sm:%s896] %v955
        %v957 = vld [vmem:[%s903 + $0x64] sm:%s896]
        %958 = vst [vmem:[%s904 + $0x68] sm:%s896] %v957
        %v959 = vld [vmem:[%s903 + $0x6c] sm:%s896]
        %960 = vst [vmem:[%s904 + $0x6c] sm:%s896] %v959
        %v961 = vld [vmem:[%s903 + $0x70] sm:%s896]
        %962 = vst [vmem:[%s904 + $0x70] sm:%s896] %v961
        %v963 = vld [vmem:[%s903 + $0x78] sm:%s896]
        %964 = vst [vmem:[%s904 + $0x74] sm:%s896] %v963
        %v965 = vld [vmem:[%s903 + $0x74] sm:%s896]
        %966 = vst [vmem:[%s904 + $0x78] sm:%s896] %v965
        %v967 = vld [vmem:[%s903 + $0x7c] sm:%s896]
        %968 = vst [vmem:[%s904 + $0x7c] sm:%s896] %v967
        %v969 = vld [vmem:[%s903 + $0x80] sm:%s896]
        %970 = vst [vmem:[%s904 + $0x80] sm:%s896] %v969
        %v971 = vld [vmem:[%s903 + $0x88] sm:%s896]
        %972 = vst [vmem:[%s904 + $0x84] sm:%s896] %v971
        %v973 = vld [vmem:[%s903 + $0x84] sm:%s896]
        %974 = vst [vmem:[%s904 + $0x88] sm:%s896] %v973
        %v975 = vld [vmem:[%s903 + $0x8c] sm:%s896]
        %976 = vst [vmem:[%s904 + $0x8c] sm:%s896] %v975
        %v977 = vld [vmem:[%s903 + $0x90] sm:%s896]
        %978 = vst [vmem:[%s904 + $0x90] sm:%s896] %v977
        %v979 = vld [vmem:[%s903 + $0x98] sm:%s896]
        %980 = vst [vmem:[%s904 + $0x94] sm:%s896] %v979
        %v981 = vld [vmem:[%s903 + $0x94] sm:%s896]
        %982 = vst [vmem:[%s904 + $0x98] sm:%s896] %v981
        %v983 = vld [vmem:[%s903 + $0x9c] sm:%s896]
        %984 = vst [vmem:[%s904 + $0x9c] sm:%s896] %v983
        %v985 = vld [vmem:[%s903 + $0xa0] sm:%s896]
        %986 = vst [vmem:[%s904 + $0xa0] sm:%s896] %v985
        %v987 = vld [vmem:[%s903 + $0xa8] sm:%s896]
        %988 = vst [vmem:[%s904 + $0xa4] sm:%s896] %v987
        %v989 = vld [vmem:[%s903 + $0xa4] sm:%s896]
        %990 = vst [vmem:[%s904 + $0xa8] sm:%s896] %v989
        %v991 = vld [vmem:[%s903 + $0xac] sm:%s896]
        %992 = vst [vmem:[%s904 + $0xac] sm:%s896] %v991
        %v993 = vld [vmem:[%s903 + $0xb0] sm:%s896]
        %994 = vst [vmem:[%s904 + $0xb0] sm:%s896] %v993
        %v995 = vld [vmem:[%s903 + $0xb8] sm:%s896]
        %996 = vst [vmem:[%s904 + $0xb4] sm:%s896] %v995
        %v997 = vld [vmem:[%s903 + $0xb4] sm:%s896]
        %998 = vst [vmem:[%s904 + $0xb8] sm:%s896] %v997
        %v999 = vld [vmem:[%s903 + $0xbc] sm:%s896]
        %1000 = vst [vmem:[%s904 + $0xbc] sm:%s896] %v999
        %v1001 = vld [vmem:[%s903 + $0xc0] sm:%s896]
        %1002 = vst [vmem:[%s904 + $0xc0] sm:%s896] %v1001
        %v1003 = vld [vmem:[%s903 + $0xc8] sm:%s896]
        %1004 = vst [vmem:[%s904 + $0xc4] sm:%s896] %v1003
        %v1005 = vld [vmem:[%s903 + $0xc4] sm:%s896]
        %1006 = vst [vmem:[%s904 + $0xc8] sm:%s896] %v1005
        %v1007 = vld [vmem:[%s903 + $0xcc] sm:%s896]
        %1008 = vst [vmem:[%s904 + $0xcc] sm:%s896] %v1007
        %v1009 = vld [vmem:[%s903 + $0xd0] sm:%s896]
        %1010 = vst [vmem:[%s904 + $0xd0] sm:%s896] %v1009
        %v1011 = vld [vmem:[%s903 + $0xd8] sm:%s896]
        %1012 = vst [vmem:[%s904 + $0xd4] sm:%s896] %v1011
        %v1013 = vld [vmem:[%s903 + $0xd4] sm:%s896]
        %1014 = vst [vmem:[%s904 + $0xd8] sm:%s896] %v1013
        %v1015 = vld [vmem:[%s903 + $0xdc] sm:%s896]
        %1016 = vst [vmem:[%s904 + $0xdc] sm:%s896] %v1015
        %v1017 = vld [vmem:[%s903 + $0xe0] sm:%s896]
        %1018 = vst [vmem:[%s904 + $0xe0] sm:%s896] %v1017
        %v1019 = vld [vmem:[%s903 + $0xe8] sm:%s896]
        %1020 = vst [vmem:[%s904 + $0xe4] sm:%s896] %v1019
        %v1021 = vld [vmem:[%s903 + $0xe4] sm:%s896]
        %1022 = vst [vmem:[%s904 + $0xe8] sm:%s896] %v1021
        %v1023 = vld [vmem:[%s903 + $0xec] sm:%s896]
        %1024 = vst [vmem:[%s904 + $0xec] sm:%s896] %v1023
        %v1025 = vld [vmem:[%s903 + $0xf0] sm:%s896]
        %1026 = vst [vmem:[%s904 + $0xf0] sm:%s896] %v1025
        %v1027 = vld [vmem:[%s903 + $0xf8] sm:%s896]
        %1028 = vst [vmem:[%s904 + $0xf4] sm:%s896] %v1027
        %v1029 = vld [vmem:[%s903 + $0xf4] sm:%s896]
        %1030 = vst [vmem:[%s904 + $0xf8] sm:%s896] %v1029
        %v1031 = vld [vmem:[%s903 + $0xfc] sm:%s896]
        %1032 = vst [vmem:[%s904 + $0xfc] sm:%s896] %v1031
        %v1033 = vld [vmem:[%s903 + $0x100] sm:%s896]
        %1034 = vst [vmem:[%s904 + $0x100] sm:%s896] %v1033
        %v1035 = vld [vmem:[%s903 + $0x108] sm:%s896]
        %1036 = vst [vmem:[%s904 + $0x104] sm:%s896] %v1035
        %v1037 = vld [vmem:[%s903 + $0x104] sm:%s896]
        %1038 = vst [vmem:[%s904 + $0x108] sm:%s896] %v1037
        %v1039 = vld [vmem:[%s903 + $0x10c] sm:%s896]
        %1040 = vst [vmem:[%s904 + $0x10c] sm:%s896] %v1039
        %v1041 = vld [vmem:[%s903 + $0x110] sm:%s896]
        %1042 = vst [vmem:[%s904 + $0x110] sm:%s896] %v1041
        %v1043 = vld [vmem:[%s903 + $0x118] sm:%s896]
        %1044 = vst [vmem:[%s904 + $0x114] sm:%s896] %v1043
        %v1045 = vld [vmem:[%s903 + $0x114] sm:%s896]
        %1046 = vst [vmem:[%s904 + $0x118] sm:%s896] %v1045
        %v1047 = vld [vmem:[%s903 + $0x11c] sm:%s896]
        %1048 = vst [vmem:[%s904 + $0x11c] sm:%s896] %v1047
        %v1049 = vld [vmem:[%s903 + $0x120] sm:%s896]
        %1050 = vst [vmem:[%s904 + $0x120] sm:%s896] %v1049
        %v1051 = vld [vmem:[%s903 + $0x128] sm:%s896]
        %1052 = vst [vmem:[%s904 + $0x124] sm:%s896] %v1051
        %v1053 = vld [vmem:[%s903 + $0x124] sm:%s896]
        %1054 = vst [vmem:[%s904 + $0x128] sm:%s896] %v1053
        %v1055 = vld [vmem:[%s903 + $0x12c] sm:%s896]
        %1056 = vst [vmem:[%s904 + $0x12c] sm:%s896] %v1055
        %v1057 = vld [vmem:[%s903 + $0x130] sm:%s896]
        %1058 = vst [vmem:[%s904 + $0x130] sm:%s896] %v1057
        %v1059 = vld [vmem:[%s903 + $0x138] sm:%s896]
        %1060 = vst [vmem:[%s904 + $0x134] sm:%s896] %v1059
        %v1061 = vld [vmem:[%s903 + $0x134] sm:%s896]
        %1062 = vst [vmem:[%s904 + $0x138] sm:%s896] %v1061
        %v1063 = vld [vmem:[%s903 + $0x13c] sm:%s896]
        %1064 = vst [vmem:[%s904 + $0x13c] sm:%s896] %v1063
        %v1065 = vld [vmem:[%s903 + $0x140] sm:%s896]
        %1066 = vst [vmem:[%s904 + $0x140] sm:%s896] %v1065
        %v1067 = vld [vmem:[%s903 + $0x148] sm:%s896]
        %1068 = vst [vmem:[%s904 + $0x144] sm:%s896] %v1067
        %v1069 = vld [vmem:[%s903 + $0x144] sm:%s896]
        %1070 = vst [vmem:[%s904 + $0x148] sm:%s896] %v1069
        %v1071 = vld [vmem:[%s903 + $0x14c] sm:%s896]
        %1072 = vst [vmem:[%s904 + $0x14c] sm:%s896] %v1071
        %v1073 = vld [vmem:[%s903 + $0x150] sm:%s896]
        %1074 = vst [vmem:[%s904 + $0x150] sm:%s896] %v1073
        %v1075 = vld [vmem:[%s903 + $0x158] sm:%s896]
        %1076 = vst [vmem:[%s904 + $0x154] sm:%s896] %v1075
        %v1077 = vld [vmem:[%s903 + $0x154] sm:%s896]
        %1078 = vst [vmem:[%s904 + $0x158] sm:%s896] %v1077
        %v1079 = vld [vmem:[%s903 + $0x15c] sm:%s896]
        %1080 = vst [vmem:[%s904 + $0x15c] sm:%s896] %v1079
        %v1081 = vld [vmem:[%s903 + $0x160] sm:%s896]
        %1082 = vst [vmem:[%s904 + $0x160] sm:%s896] %v1081
        %v1083 = vld [vmem:[%s903 + $0x168] sm:%s896]
        %1084 = vst [vmem:[%s904 + $0x164] sm:%s896] %v1083
        %v1085 = vld [vmem:[%s903 + $0x164] sm:%s896]
        %1086 = vst [vmem:[%s904 + $0x168] sm:%s896] %v1085
        %v1087 = vld [vmem:[%s903 + $0x16c] sm:%s896]
        %1088 = vst [vmem:[%s904 + $0x16c] sm:%s896] %v1087
        %v1089 = vld [vmem:[%s903 + $0x170] sm:%s896]
        %1090 = vst [vmem:[%s904 + $0x170] sm:%s896] %v1089
        %v1091 = vld [vmem:[%s903 + $0x178] sm:%s896]
        %1092 = vst [vmem:[%s904 + $0x174] sm:%s896] %v1091
        %v1093 = vld [vmem:[%s903 + $0x174] sm:%s896]
        %1094 = vst [vmem:[%s904 + $0x178] sm:%s896] %v1093
        %v1095 = vld [vmem:[%s903 + $0x17c] sm:%s896]
        %1096 = vst [vmem:[%s904 + $0x17c] sm:%s896] %v1095
        %v1097 = vld [vmem:[%s903 + $0x180] sm:%s896]
        %1098 = vst [vmem:[%s904 + $0x180] sm:%s896] %v1097
        %v1099 = vld [vmem:[%s903 + $0x188] sm:%s896]
        %1100 = vst [vmem:[%s904 + $0x184] sm:%s896] %v1099
        %v1101 = vld [vmem:[%s903 + $0x184] sm:%s896]
        %1102 = vst [vmem:[%s904 + $0x188] sm:%s896] %v1101
        %v1103 = vld [vmem:[%s903 + $0x18c] sm:%s896]
        %1104 = vst [vmem:[%s904 + $0x18c] sm:%s896] %v1103
        %v1105 = vld [vmem:[%s903 + $0x190] sm:%s896]
        %1106 = vst [vmem:[%s904 + $0x190] sm:%s896] %v1105
        %v1107 = vld [vmem:[%s903 + $0x198] sm:%s896]
        %1108 = vst [vmem:[%s904 + $0x194] sm:%s896] %v1107
        %v1109 = vld [vmem:[%s903 + $0x194] sm:%s896]
        %1110 = vst [vmem:[%s904 + $0x198] sm:%s896] %v1109
        %v1111 = vld [vmem:[%s903 + $0x19c] sm:%s896]
        %1112 = vst [vmem:[%s904 + $0x19c] sm:%s896] %v1111
        %v1113 = vld [vmem:[%s903 + $0x1a0] sm:%s896]
        %1114 = vst [vmem:[%s904 + $0x1a0] sm:%s896] %v1113
        %v1115 = vld [vmem:[%s903 + $0x1a8] sm:%s896]
        %1116 = vst [vmem:[%s904 + $0x1a4] sm:%s896] %v1115
        %v1117 = vld [vmem:[%s903 + $0x1a4] sm:%s896]
        %1118 = vst [vmem:[%s904 + $0x1a8] sm:%s896] %v1117
        %v1119 = vld [vmem:[%s903 + $0x1ac] sm:%s896]
        %1120 = vst [vmem:[%s904 + $0x1ac] sm:%s896] %v1119
        %v1121 = vld [vmem:[%s903 + $0x1b0] sm:%s896]
        %1122 = vst [vmem:[%s904 + $0x1b0] sm:%s896] %v1121
        %v1123 = vld [vmem:[%s903 + $0x1b8] sm:%s896]
        %1124 = vst [vmem:[%s904 + $0x1b4] sm:%s896] %v1123
        %v1125 = vld [vmem:[%s903 + $0x1b4] sm:%s896]
        %1126 = vst [vmem:[%s904 + $0x1b8] sm:%s896] %v1125
        %v1127 = vld [vmem:[%s903 + $0x1bc] sm:%s896]
        %1128 = vst [vmem:[%s904 + $0x1bc] sm:%s896] %v1127
        %v1129 = vld [vmem:[%s903 + $0x1c0] sm:%s896]
        %1130 = vst [vmem:[%s904 + $0x1c0] sm:%s896] %v1129
        %v1131 = vld [vmem:[%s903 + $0x1c8] sm:%s896]
        %1132 = vst [vmem:[%s904 + $0x1c4] sm:%s896] %v1131
        %v1133 = vld [vmem:[%s903 + $0x1c4] sm:%s896]
        %1134 = vst [vmem:[%s904 + $0x1c8] sm:%s896] %v1133
        %v1135 = vld [vmem:[%s903 + $0x1cc] sm:%s896]
        %1136 = vst [vmem:[%s904 + $0x1cc] sm:%s896] %v1135
        %v1137 = vld [vmem:[%s903 + $0x1d0] sm:%s896]
        %1138 = vst [vmem:[%s904 + $0x1d0] sm:%s896] %v1137
        %v1139 = vld [vmem:[%s903 + $0x1d8] sm:%s896]
        %1140 = vst [vmem:[%s904 + $0x1d4] sm:%s896] %v1139
        %v1141 = vld [vmem:[%s903 + $0x1d4] sm:%s896]
        %1142 = vst [vmem:[%s904 + $0x1d8] sm:%s896] %v1141
        %v1143 = vld [vmem:[%s903 + $0x1dc] sm:%s896]
        %1144 = vst [vmem:[%s904 + $0x1dc] sm:%s896] %v1143
        %v1145 = vld [vmem:[%s903 + $0x1e0] sm:%s896]
        %1146 = vst [vmem:[%s904 + $0x1e0] sm:%s896] %v1145
        %v1147 = vld [vmem:[%s903 + $0x1e8] sm:%s896]
        %1148 = vst [vmem:[%s904 + $0x1e4] sm:%s896] %v1147
        %v1149 = vld [vmem:[%s903 + $0x1e4] sm:%s896]
        %1150 = vst [vmem:[%s904 + $0x1e8] sm:%s896] %v1149
        %v1151 = vld [vmem:[%s903 + $0x1ec] sm:%s896]
        %1152 = vst [vmem:[%s904 + $0x1ec] sm:%s896] %v1151
        %v1153 = vld [vmem:[%s903 + $0x1f0] sm:%s896]
        %1154 = vst [vmem:[%s904 + $0x1f0] sm:%s896] %v1153
        %v1155 = vld [vmem:[%s903 + $0x1f8] sm:%s896]
        %1156 = vst [vmem:[%s904 + $0x1f4] sm:%s896] %v1155
        %v1157 = vld [vmem:[%s903 + $0x1f4] sm:%s896]
        %1158 = vst [vmem:[%s904 + $0x1f8] sm:%s896] %v1157
        %v1159 = vld [vmem:[%s903 + $0x1fc] sm:%s896]
        %1160 = vst [vmem:[%s904 + $0x1fc] sm:%s896] %v1159
      $region113: #{forward.1} parent=100 // loop_footer
        %s902 = sadd.s32 1, %s898
      $region114: #{forward.1} parent=100 // loop_footer_branch
        %897 = sbr.rel target = $region110
      $region115: #{forward.1} parent=100 // loop_exit
        _
    $region101: #{forward.1} parent=85 // pred_fallthru
      _
  $region86: #{forward.1} parent=0 // pred_fallthru
    _
  // Predicated region
  $region87: #{forward.1} parent=0 // pred_check
    %p610 = pneg %p606
  $region88: #{forward.1} parent=0 // pred_check_branch
    %612 = sbr.rel (%p610) target = $region90
  $region89: #{forward.1} parent=0 // pred_region
    %s613 = sshllo.u32 0, 4
    loop: start=0, step=1, limit=1
    $region91: #{forward.1} parent=89 // loop_pre_header
      _
    $region92: #{forward.1} parent=89 // loop_header
      %s615 = sphi 0, %s619
      %p616 = scmp.ge.s32.totalorder %s615, 1
      %s620 = sphi %s12, %s12
      %s621 = sphi [#allocation5], [#allocation5]
    $region93: #{forward.1} parent=89 // loop_header_branch
      %618 = sbr.rel (%p616) target = $region97
    $region94: #{forward.1} parent=89 // loop_body
      %v622 = vld [vmem:[%s620] sm:%s613]
      %623 = vst [vmem:[%s621] sm:%s613] %v622
      %v624 = vld [vmem:[%s620 + $0x8] sm:%s613]
      %625 = vst [vmem:[%s621 + $0x4] sm:%s613] %v624
      %v626 = vld [vmem:[%s620 + $0x4] sm:%s613]
      %627 = vst [vmem:[%s621 + $0x8] sm:%s613] %v626
      %v628 = vld [vmem:[%s620 + $0xc] sm:%s613]
      %629 = vst [vmem:[%s621 + $0xc] sm:%s613] %v628
      %v630 = vld [vmem:[%s620 + $0x10] sm:%s613]
      %631 = vst [vmem:[%s621 + $0x10] sm:%s613] %v630
      %v632 = vld [vmem:[%s620 + $0x18] sm:%s613]
      %633 = vst [vmem:[%s621 + $0x14] sm:%s613] %v632
      %v634 = vld [vmem:[%s620 + $0x14] sm:%s613]
      %635 = vst [vmem:[%s621 + $0x18] sm:%s613] %v634
      %v636 = vld [vmem:[%s620 + $0x1c] sm:%s613]
      %637 = vst [vmem:[%s621 + $0x1c] sm:%s613] %v636
      %v638 = vld [vmem:[%s620 + $0x20] sm:%s613]
      %639 = vst [vmem:[%s621 + $0x20] sm:%s613] %v638
      %v640 = vld [vmem:[%s620 + $0x28] sm:%s613]
      %641 = vst [vmem:[%s621 + $0x24] sm:%s613] %v640
      %v642 = vld [vmem:[%s620 + $0x24] sm:%s613]
      %643 = vst [vmem:[%s621 + $0x28] sm:%s613] %v642
      %v644 = vld [vmem:[%s620 + $0x2c] sm:%s613]
      %645 = vst [vmem:[%s621 + $0x2c] sm:%s613] %v644
      %v646 = vld [vmem:[%s620 + $0x30] sm:%s613]
      %647 = vst [vmem:[%s621 + $0x30] sm:%s613] %v646
      %v648 = vld [vmem:[%s620 + $0x38] sm:%s613]
      %649 = vst [vmem:[%s621 + $0x34] sm:%s613] %v648
      %v650 = vld [vmem:[%s620 + $0x34] sm:%s613]
      %651 = vst [vmem:[%s621 + $0x38] sm:%s613] %v650
      %v652 = vld [vmem:[%s620 + $0x3c] sm:%s613]
      %653 = vst [vmem:[%s621 + $0x3c] sm:%s613] %v652
      %v654 = vld [vmem:[%s620 + $0x40] sm:%s613]
      %655 = vst [vmem:[%s621 + $0x40] sm:%s613] %v654
      %v656 = vld [vmem:[%s620 + $0x48] sm:%s613]
      %657 = vst [vmem:[%s621 + $0x44] sm:%s613] %v656
      %v658 = vld [vmem:[%s620 + $0x44] sm:%s613]
      %659 = vst [vmem:[%s621 + $0x48] sm:%s613] %v658
      %v660 = vld [vmem:[%s620 + $0x4c] sm:%s613]
      %661 = vst [vmem:[%s621 + $0x4c] sm:%s613] %v660
      %v662 = vld [vmem:[%s620 + $0x50] sm:%s613]
      %663 = vst [vmem:[%s621 + $0x50] sm:%s613] %v662
      %v664 = vld [vmem:[%s620 + $0x58] sm:%s613]
      %665 = vst [vmem:[%s621 + $0x54] sm:%s613] %v664
      %v666 = vld [vmem:[%s620 + $0x54] sm:%s613]
      %667 = vst [vmem:[%s621 + $0x58] sm:%s613] %v666
      %v668 = vld [vmem:[%s620 + $0x5c] sm:%s613]
      %669 = vst [vmem:[%s621 + $0x5c] sm:%s613] %v668
      %v670 = vld [vmem:[%s620 + $0x60] sm:%s613]
      %671 = vst [vmem:[%s621 + $0x60] sm:%s613] %v670
      %v672 = vld [vmem:[%s620 + $0x68] sm:%s613]
      %673 = vst [vmem:[%s621 + $0x64] sm:%s613] %v672
      %v674 = vld [vmem:[%s620 + $0x64] sm:%s613]
      %675 = vst [vmem:[%s621 + $0x68] sm:%s613] %v674
      %v676 = vld [vmem:[%s620 + $0x6c] sm:%s613]
      %677 = vst [vmem:[%s621 + $0x6c] sm:%s613] %v676
      %v678 = vld [vmem:[%s620 + $0x70] sm:%s613]
      %679 = vst [vmem:[%s621 + $0x70] sm:%s613] %v678
      %v680 = vld [vmem:[%s620 + $0x78] sm:%s613]
      %681 = vst [vmem:[%s621 + $0x74] sm:%s613] %v680
      %v682 = vld [vmem:[%s620 + $0x74] sm:%s613]
      %683 = vst [vmem:[%s621 + $0x78] sm:%s613] %v682
      %v684 = vld [vmem:[%s620 + $0x7c] sm:%s613]
      %685 = vst [vmem:[%s621 + $0x7c] sm:%s613] %v684
      %v686 = vld [vmem:[%s620 + $0x80] sm:%s613]
      %687 = vst [vmem:[%s621 + $0x80] sm:%s613] %v686
      %v688 = vld [vmem:[%s620 + $0x88] sm:%s613]
      %689 = vst [vmem:[%s621 + $0x84] sm:%s613] %v688
      %v690 = vld [vmem:[%s620 + $0x84] sm:%s613]
      %691 = vst [vmem:[%s621 + $0x88] sm:%s613] %v690
      %v692 = vld [vmem:[%s620 + $0x8c] sm:%s613]
      %693 = vst [vmem:[%s621 + $0x8c] sm:%s613] %v692
      %v694 = vld [vmem:[%s620 + $0x90] sm:%s613]
      %695 = vst [vmem:[%s621 + $0x90] sm:%s613] %v694
      %v696 = vld [vmem:[%s620 + $0x98] sm:%s613]
      %697 = vst [vmem:[%s621 + $0x94] sm:%s613] %v696
      %v698 = vld [vmem:[%s620 + $0x94] sm:%s613]
      %699 = vst [vmem:[%s621 + $0x98] sm:%s613] %v698
      %v700 = vld [vmem:[%s620 + $0x9c] sm:%s613]
      %701 = vst [vmem:[%s621 + $0x9c] sm:%s613] %v700
      %v702 = vld [vmem:[%s620 + $0xa0] sm:%s613]
      %703 = vst [vmem:[%s621 + $0xa0] sm:%s613] %v702
      %v704 = vld [vmem:[%s620 + $0xa8] sm:%s613]
      %705 = vst [vmem:[%s621 + $0xa4] sm:%s613] %v704
      %v706 = vld [vmem:[%s620 + $0xa4] sm:%s613]
      %707 = vst [vmem:[%s621 + $0xa8] sm:%s613] %v706
      %v708 = vld [vmem:[%s620 + $0xac] sm:%s613]
      %709 = vst [vmem:[%s621 + $0xac] sm:%s613] %v708
      %v710 = vld [vmem:[%s620 + $0xb0] sm:%s613]
      %711 = vst [vmem:[%s621 + $0xb0] sm:%s613] %v710
      %v712 = vld [vmem:[%s620 + $0xb8] sm:%s613]
      %713 = vst [vmem:[%s621 + $0xb4] sm:%s613] %v712
      %v714 = vld [vmem:[%s620 + $0xb4] sm:%s613]
      %715 = vst [vmem:[%s621 + $0xb8] sm:%s613] %v714
      %v716 = vld [vmem:[%s620 + $0xbc] sm:%s613]
      %717 = vst [vmem:[%s621 + $0xbc] sm:%s613] %v716
      %v718 = vld [vmem:[%s620 + $0xc0] sm:%s613]
      %719 = vst [vmem:[%s621 + $0xc0] sm:%s613] %v718
      %v720 = vld [vmem:[%s620 + $0xc8] sm:%s613]
      %721 = vst [vmem:[%s621 + $0xc4] sm:%s613] %v720
      %v722 = vld [vmem:[%s620 + $0xc4] sm:%s613]
      %723 = vst [vmem:[%s621 + $0xc8] sm:%s613] %v722
      %v724 = vld [vmem:[%s620 + $0xcc] sm:%s613]
      %725 = vst [vmem:[%s621 + $0xcc] sm:%s613] %v724
      %v726 = vld [vmem:[%s620 + $0xd0] sm:%s613]
      %727 = vst [vmem:[%s621 + $0xd0] sm:%s613] %v726
      %v728 = vld [vmem:[%s620 + $0xd8] sm:%s613]
      %729 = vst [vmem:[%s621 + $0xd4] sm:%s613] %v728
      %v730 = vld [vmem:[%s620 + $0xd4] sm:%s613]
      %731 = vst [vmem:[%s621 + $0xd8] sm:%s613] %v730
      %v732 = vld [vmem:[%s620 + $0xdc] sm:%s613]
      %733 = vst [vmem:[%s621 + $0xdc] sm:%s613] %v732
      %v734 = vld [vmem:[%s620 + $0xe0] sm:%s613]
      %735 = vst [vmem:[%s621 + $0xe0] sm:%s613] %v734
      %v736 = vld [vmem:[%s620 + $0xe8] sm:%s613]
      %737 = vst [vmem:[%s621 + $0xe4] sm:%s613] %v736
      %v738 = vld [vmem:[%s620 + $0xe4] sm:%s613]
      %739 = vst [vmem:[%s621 + $0xe8] sm:%s613] %v738
      %v740 = vld [vmem:[%s620 + $0xec] sm:%s613]
      %741 = vst [vmem:[%s621 + $0xec] sm:%s613] %v740
      %v742 = vld [vmem:[%s620 + $0xf0] sm:%s613]
      %743 = vst [vmem:[%s621 + $0xf0] sm:%s613] %v742
      %v744 = vld [vmem:[%s620 + $0xf8] sm:%s613]
      %745 = vst [vmem:[%s621 + $0xf4] sm:%s613] %v744
      %v746 = vld [vmem:[%s620 + $0xf4] sm:%s613]
      %747 = vst [vmem:[%s621 + $0xf8] sm:%s613] %v746
      %v748 = vld [vmem:[%s620 + $0xfc] sm:%s613]
      %749 = vst [vmem:[%s621 + $0xfc] sm:%s613] %v748
      %v750 = vld [vmem:[%s620 + $0x100] sm:%s613]
      %751 = vst [vmem:[%s621 + $0x100] sm:%s613] %v750
      %v752 = vld [vmem:[%s620 + $0x108] sm:%s613]
      %753 = vst [vmem:[%s621 + $0x104] sm:%s613] %v752
      %v754 = vld [vmem:[%s620 + $0x104] sm:%s613]
      %755 = vst [vmem:[%s621 + $0x108] sm:%s613] %v754
      %v756 = vld [vmem:[%s620 + $0x10c] sm:%s613]
      %757 = vst [vmem:[%s621 + $0x10c] sm:%s613] %v756
      %v758 = vld [vmem:[%s620 + $0x110] sm:%s613]
      %759 = vst [vmem:[%s621 + $0x110] sm:%s613] %v758
      %v760 = vld [vmem:[%s620 + $0x118] sm:%s613]
      %761 = vst [vmem:[%s621 + $0x114] sm:%s613] %v760
      %v762 = vld [vmem:[%s620 + $0x114] sm:%s613]
      %763 = vst [vmem:[%s621 + $0x118] sm:%s613] %v762
      %v764 = vld [vmem:[%s620 + $0x11c] sm:%s613]
      %765 = vst [vmem:[%s621 + $0x11c] sm:%s613] %v764
      %v766 = vld [vmem:[%s620 + $0x120] sm:%s613]
      %767 = vst [vmem:[%s621 + $0x120] sm:%s613] %v766
      %v768 = vld [vmem:[%s620 + $0x128] sm:%s613]
      %769 = vst [vmem:[%s621 + $0x124] sm:%s613] %v768
      %v770 = vld [vmem:[%s620 + $0x124] sm:%s613]
      %771 = vst [vmem:[%s621 + $0x128] sm:%s613] %v770
      %v772 = vld [vmem:[%s620 + $0x12c] sm:%s613]
      %773 = vst [vmem:[%s621 + $0x12c] sm:%s613] %v772
      %v774 = vld [vmem:[%s620 + $0x130] sm:%s613]
      %775 = vst [vmem:[%s621 + $0x130] sm:%s613] %v774
      %v776 = vld [vmem:[%s620 + $0x138] sm:%s613]
      %777 = vst [vmem:[%s621 + $0x134] sm:%s613] %v776
      %v778 = vld [vmem:[%s620 + $0x134] sm:%s613]
      %779 = vst [vmem:[%s621 + $0x138] sm:%s613] %v778
      %v780 = vld [vmem:[%s620 + $0x13c] sm:%s613]
      %781 = vst [vmem:[%s621 + $0x13c] sm:%s613] %v780
      %v782 = vld [vmem:[%s620 + $0x140] sm:%s613]
      %783 = vst [vmem:[%s621 + $0x140] sm:%s613] %v782
      %v784 = vld [vmem:[%s620 + $0x148] sm:%s613]
      %785 = vst [vmem:[%s621 + $0x144] sm:%s613] %v784
      %v786 = vld [vmem:[%s620 + $0x144] sm:%s613]
      %787 = vst [vmem:[%s621 + $0x148] sm:%s613] %v786
      %v788 = vld [vmem:[%s620 + $0x14c] sm:%s613]
      %789 = vst [vmem:[%s621 + $0x14c] sm:%s613] %v788
      %v790 = vld [vmem:[%s620 + $0x150] sm:%s613]
      %791 = vst [vmem:[%s621 + $0x150] sm:%s613] %v790
      %v792 = vld [vmem:[%s620 + $0x158] sm:%s613]
      %793 = vst [vmem:[%s621 + $0x154] sm:%s613] %v792
      %v794 = vld [vmem:[%s620 + $0x154] sm:%s613]
      %795 = vst [vmem:[%s621 + $0x158] sm:%s613] %v794
      %v796 = vld [vmem:[%s620 + $0x15c] sm:%s613]
      %797 = vst [vmem:[%s621 + $0x15c] sm:%s613] %v796
      %v798 = vld [vmem:[%s620 + $0x160] sm:%s613]
      %799 = vst [vmem:[%s621 + $0x160] sm:%s613] %v798
      %v800 = vld [vmem:[%s620 + $0x168] sm:%s613]
      %801 = vst [vmem:[%s621 + $0x164] sm:%s613] %v800
      %v802 = vld [vmem:[%s620 + $0x164] sm:%s613]
      %803 = vst [vmem:[%s621 + $0x168] sm:%s613] %v802
      %v804 = vld [vmem:[%s620 + $0x16c] sm:%s613]
      %805 = vst [vmem:[%s621 + $0x16c] sm:%s613] %v804
      %v806 = vld [vmem:[%s620 + $0x170] sm:%s613]
      %807 = vst [vmem:[%s621 + $0x170] sm:%s613] %v806
      %v808 = vld [vmem:[%s620 + $0x178] sm:%s613]
      %809 = vst [vmem:[%s621 + $0x174] sm:%s613] %v808
      %v810 = vld [vmem:[%s620 + $0x174] sm:%s613]
      %811 = vst [vmem:[%s621 + $0x178] sm:%s613] %v810
      %v812 = vld [vmem:[%s620 + $0x17c] sm:%s613]
      %813 = vst [vmem:[%s621 + $0x17c] sm:%s613] %v812
      %v814 = vld [vmem:[%s620 + $0x180] sm:%s613]
      %815 = vst [vmem:[%s621 + $0x180] sm:%s613] %v814
      %v816 = vld [vmem:[%s620 + $0x188] sm:%s613]
      %817 = vst [vmem:[%s621 + $0x184] sm:%s613] %v816
      %v818 = vld [vmem:[%s620 + $0x184] sm:%s613]
      %819 = vst [vmem:[%s621 + $0x188] sm:%s613] %v818
      %v820 = vld [vmem:[%s620 + $0x18c] sm:%s613]
      %821 = vst [vmem:[%s621 + $0x18c] sm:%s613] %v820
      %v822 = vld [vmem:[%s620 + $0x190] sm:%s613]
      %823 = vst [vmem:[%s621 + $0x190] sm:%s613] %v822
      %v824 = vld [vmem:[%s620 + $0x198] sm:%s613]
      %825 = vst [vmem:[%s621 + $0x194] sm:%s613] %v824
      %v826 = vld [vmem:[%s620 + $0x194] sm:%s613]
      %827 = vst [vmem:[%s621 + $0x198] sm:%s613] %v826
      %v828 = vld [vmem:[%s620 + $0x19c] sm:%s613]
      %829 = vst [vmem:[%s621 + $0x19c] sm:%s613] %v828
      %v830 = vld [vmem:[%s620 + $0x1a0] sm:%s613]
      %831 = vst [vmem:[%s621 + $0x1a0] sm:%s613] %v830
      %v832 = vld [vmem:[%s620 + $0x1a8] sm:%s613]
      %833 = vst [vmem:[%s621 + $0x1a4] sm:%s613] %v832
      %v834 = vld [vmem:[%s620 + $0x1a4] sm:%s613]
      %835 = vst [vmem:[%s621 + $0x1a8] sm:%s613] %v834
      %v836 = vld [vmem:[%s620 + $0x1ac] sm:%s613]
      %837 = vst [vmem:[%s621 + $0x1ac] sm:%s613] %v836
      %v838 = vld [vmem:[%s620 + $0x1b0] sm:%s613]
      %839 = vst [vmem:[%s621 + $0x1b0] sm:%s613] %v838
      %v840 = vld [vmem:[%s620 + $0x1b8] sm:%s613]
      %841 = vst [vmem:[%s621 + $0x1b4] sm:%s613] %v840
      %v842 = vld [vmem:[%s620 + $0x1b4] sm:%s613]
      %843 = vst [vmem:[%s621 + $0x1b8] sm:%s613] %v842
      %v844 = vld [vmem:[%s620 + $0x1bc] sm:%s613]
      %845 = vst [vmem:[%s621 + $0x1bc] sm:%s613] %v844
      %v846 = vld [vmem:[%s620 + $0x1c0] sm:%s613]
      %847 = vst [vmem:[%s621 + $0x1c0] sm:%s613] %v846
      %v848 = vld [vmem:[%s620 + $0x1c8] sm:%s613]
      %849 = vst [vmem:[%s621 + $0x1c4] sm:%s613] %v848
      %v850 = vld [vmem:[%s620 + $0x1c4] sm:%s613]
      %851 = vst [vmem:[%s621 + $0x1c8] sm:%s613] %v850
      %v852 = vld [vmem:[%s620 + $0x1cc] sm:%s613]
      %853 = vst [vmem:[%s621 + $0x1cc] sm:%s613] %v852
      %v854 = vld [vmem:[%s620 + $0x1d0] sm:%s613]
      %855 = vst [vmem:[%s621 + $0x1d0] sm:%s613] %v854
      %v856 = vld [vmem:[%s620 + $0x1d8] sm:%s613]
      %857 = vst [vmem:[%s621 + $0x1d4] sm:%s613] %v856
      %v858 = vld [vmem:[%s620 + $0x1d4] sm:%s613]
      %859 = vst [vmem:[%s621 + $0x1d8] sm:%s613] %v858
      %v860 = vld [vmem:[%s620 + $0x1dc] sm:%s613]
      %861 = vst [vmem:[%s621 + $0x1dc] sm:%s613] %v860
      %v862 = vld [vmem:[%s620 + $0x1e0] sm:%s613]
      %863 = vst [vmem:[%s621 + $0x1e0] sm:%s613] %v862
      %v864 = vld [vmem:[%s620 + $0x1e8] sm:%s613]
      %865 = vst [vmem:[%s621 + $0x1e4] sm:%s613] %v864
      %v866 = vld [vmem:[%s620 + $0x1e4] sm:%s613]
      %867 = vst [vmem:[%s621 + $0x1e8] sm:%s613] %v866
      %v868 = vld [vmem:[%s620 + $0x1ec] sm:%s613]
      %869 = vst [vmem:[%s621 + $0x1ec] sm:%s613] %v868
      %v870 = vld [vmem:[%s620 + $0x1f0] sm:%s613]
      %871 = vst [vmem:[%s621 + $0x1f0] sm:%s613] %v870
      %v872 = vld [vmem:[%s620 + $0x1f8] sm:%s613]
      %873 = vst [vmem:[%s621 + $0x1f4] sm:%s613] %v872
      %v874 = vld [vmem:[%s620 + $0x1f4] sm:%s613]
      %875 = vst [vmem:[%s621 + $0x1f8] sm:%s613] %v874
      %v876 = vld [vmem:[%s620 + $0x1fc] sm:%s613]
      %877 = vst [vmem:[%s621 + $0x1fc] sm:%s613] %v876
    $region95: #{forward.1} parent=89 // loop_footer
      %s619 = sadd.s32 1, %s615
    $region96: #{forward.1} parent=89 // loop_footer_branch
      %614 = sbr.rel target = $region92
    $region97: #{forward.1} parent=89 // loop_exit
      _
  $region90: #{forward.1} parent=0 // pred_fallthru
    _
  // Predicated region
  $region116: #{forward.1} parent=0 // pred_check
    _
  $region117: #{forward.1} parent=0 // pred_check_branch
    %1163 = sbr.rel (0) target = $region119
  $region118: #{forward.1} parent=0 // pred_region
    %1164 = vsyncadd %s604, 8192
  $region119: #{forward.1} parent=0 // pred_fallthru
    _
  %v1165 = vld [vmem:[%s0] sm:$0xf]
  %v1166 = vld [vmem:[%s0 + $0x4] sm:$0xf]
  %v1167 = vld [vmem:[%s0 + $0x8] sm:$0xf]
  %v1168 = vld [vmem:[%s0 + $0xc] sm:$0xf]
  %v1169 = vld [vmem:[%s0 + $0x10] sm:$0xf]
  %v1170 = vld [vmem:[%s0 + $0x14] sm:$0xf]
  %v1171 = vld [vmem:[%s0 + $0x18] sm:$0xf]
  %v1172 = vld [vmem:[%s0 + $0x1c] sm:$0xf]
  %v1173 = vld [vmem:[%s0 + $0x20] sm:$0xf]
  %v1174 = vld [vmem:[%s0 + $0x24] sm:$0xf]
  %v1175 = vld [vmem:[%s0 + $0x28] sm:$0xf]
  %v1176 = vld [vmem:[%s0 + $0x2c] sm:$0xf]
  %v1177 = vld [vmem:[%s0 + $0x30] sm:$0xf]
  %v1178 = vld [vmem:[%s0 + $0x34] sm:$0xf]
  %v1179 = vld [vmem:[%s0 + $0x38] sm:$0xf]
  %v1180 = vld [vmem:[%s0 + $0x3c] sm:$0xf]
  %v1181 = vld [vmem:[%s1] sm:$0xff]
  %v1182 = vld [vmem:[%s1 + $0x8] sm:$0xff]
  %v1183 = vld [vmem:[%s1 + $0x10] sm:$0xff]
  %v1184 = vld [vmem:[%s1 + $0x18] sm:$0xff]
  %v1185 = vld [vmem:[%s1 + $0x20] sm:$0xff]
  %v1186 = vld [vmem:[%s1 + $0x28] sm:$0xff]
  %v1187 = vld [vmem:[%s1 + $0x30] sm:$0xff]
  %v1188 = vld [vmem:[%s1 + $0x38] sm:$0xff]
  %v1189 = vld [vmem:[%s1 + $0x40] sm:$0xff]
  %v1190 = vld [vmem:[%s1 + $0x48] sm:$0xff]
  %v1191 = vld [vmem:[%s1 + $0x50] sm:$0xff]
  %v1192 = vld [vmem:[%s1 + $0x58] sm:$0xff]
  %v1193 = vld [vmem:[%s1 + $0x60] sm:$0xff]
  %v1194 = vld [vmem:[%s1 + $0x68] sm:$0xff]
  %v1195 = vld [vmem:[%s1 + $0x70] sm:$0xff]
  %v1196 = vld [vmem:[%s1 + $0x78] sm:$0xff]
  %v1197 = vld [vmem:[%s4] sm:$0xf]
  %v1199 = vlaneseq
  %v1200 = vshrl.u32 %v1199, 7
  %v1201 = vsub.s32 0, %v1200
  %v1202 = vrot.slane %v1197, %v1201
  %v1203 = vlaneseq
  %v1204 = vshrl.u32 %v1203, 7
  %v1205 = vsub.s32 1, %v1204
  %v1206 = vrot.slane %v1197, %v1205
  %v1207 = vlaneseq
  %v1208 = vshrl.u32 %v1207, 7
  %v1209 = vsub.s32 2, %v1208
  %v1210 = vrot.slane %v1197, %v1209
  %v1211 = vlaneseq
  %v1212 = vshrl.u32 %v1211, 7
  %v1213 = vsub.s32 3, %v1212
  %v1214 = vrot.slane %v1197, %v1213
  %v1235 = vunpack.c.l.b16 %v1165
  %v1236 = vunpack.c.l.b16 %v1166
  %v1237 = vunpack.c.l.b16 %v1167
  %v1238 = vunpack.c.l.b16 %v1168
  %v1239 = vunpack.c.l.b16 %v1169
  %v1240 = vunpack.c.l.b16 %v1170
  %v1241 = vunpack.c.l.b16 %v1171
  %v1242 = vunpack.c.l.b16 %v1172
  %v1243 = vunpack.c.l.b16 %v1173
  %v1244 = vunpack.c.l.b16 %v1174
  %v1245 = vunpack.c.l.b16 %v1175
  %v1246 = vunpack.c.l.b16 %v1176
  %v1247 = vunpack.c.l.b16 %v1177
  %v1248 = vunpack.c.l.b16 %v1178
  %v1249 = vunpack.c.l.b16 %v1179
  %v1250 = vunpack.c.l.b16 %v1180
  %v1251 = vpack.c.b16 %v1236, %v1235
  %v1252 = vpack.c.b16 %v1238, %v1237
  %v1253 = vpack.c.b16 %v1240, %v1239
  %v1254 = vpack.c.b16 %v1242, %v1241
  %v1255 = vpack.c.b16 %v1244, %v1243
  %v1256 = vpack.c.b16 %v1246, %v1245
  %v1257 = vpack.c.b16 %v1248, %v1247
  %v1258 = vpack.c.b16 %v1250, %v1249
  %v1275 = vunpack.c.l.b16 %v1181
  %v1276 = vunpack.c.h.b16 %v1181
  %v1277 = vunpack.c.l.b16 %v1182
  %v1278 = vunpack.c.h.b16 %v1182
  %v1279 = vunpack.c.l.b16 %v1183
  %v1280 = vunpack.c.h.b16 %v1183
  %v1281 = vunpack.c.l.b16 %v1184
  %v1282 = vunpack.c.h.b16 %v1184
  %v1283 = vunpack.c.l.b16 %v1185
  %v1284 = vunpack.c.h.b16 %v1185
  %v1285 = vunpack.c.l.b16 %v1186
  %v1286 = vunpack.c.h.b16 %v1186
  %v1287 = vunpack.c.l.b16 %v1187
  %v1288 = vunpack.c.h.b16 %v1187
  %v1289 = vunpack.c.l.b16 %v1188
  %v1290 = vunpack.c.h.b16 %v1188
  %v1291 = vunpack.c.l.b16 %v1189
  %v1292 = vunpack.c.h.b16 %v1189
  %v1293 = vunpack.c.l.b16 %v1190
  %v1294 = vunpack.c.h.b16 %v1190
  %v1295 = vunpack.c.l.b16 %v1191
  %v1296 = vunpack.c.h.b16 %v1191
  %v1297 = vunpack.c.l.b16 %v1192
  %v1298 = vunpack.c.h.b16 %v1192
  %v1299 = vunpack.c.l.b16 %v1193
  %v1300 = vunpack.c.h.b16 %v1193
  %v1301 = vunpack.c.l.b16 %v1194
  %v1302 = vunpack.c.h.b16 %v1194
  %v1303 = vunpack.c.l.b16 %v1195
  %v1304 = vunpack.c.h.b16 %v1195
  %v1305 = vunpack.c.l.b16 %v1196
  %v1306 = vunpack.c.h.b16 %v1196
  %v1307 = vpack.c.b16 %v1279, %v1275
  %v1308 = vpack.c.b16 %v1280, %v1276
  %v1309 = vpack.c.b16 %v1281, %v1277
  %v1310 = vpack.c.b16 %v1282, %v1278
  %v1311 = vpack.c.b16 %v1287, %v1283
  %v1312 = vpack.c.b16 %v1288, %v1284
  %v1313 = vpack.c.b16 %v1289, %v1285
  %v1314 = vpack.c.b16 %v1290, %v1286
  %v1315 = vpack.c.b16 %v1295, %v1291
  %v1316 = vpack.c.b16 %v1296, %v1292
  %v1317 = vpack.c.b16 %v1297, %v1293
  %v1318 = vpack.c.b16 %v1298, %v1294
  %v1319 = vpack.c.b16 %v1303, %v1299
  %v1320 = vpack.c.b16 %v1304, %v1300
  %v1321 = vpack.c.b16 %v1305, %v1301
  %v1322 = vpack.c.b16 %v1306, %v1302
  %vm1339 = vcmask 523264
  %v1341 = vsel %vm1339, %v1251, 0
  %v1344 = vsel %vm1339, %v1252, 0
  %v1347 = vsel %vm1339, %v1253, 0
  %v1350 = vsel %vm1339, %v1254, 0
  %v1353 = vsel %vm1339, %v1255, 0
  %v1356 = vsel %vm1339, %v1256, 0
  %v1359 = vsel %vm1339, %v1257, 0
  %v1362 = vsel %vm1339, %v1258, 0
  %1364 = vmatprep.subr.bf16.mxu0 %v1308
  %1365 = vmatpush1.bf16.msra.mxu0 %v1307
  %1366 = vmatprep.subr.bf16.mxu0 %v1312
  %1367 = vmatpush1.bf16.msra.mxu0 %v1311
  %1368 = vmatprep.subr.bf16.mxu0 %v1316
  %1369 = vmatpush1.bf16.msra.mxu0 %v1315
  %1370 = vmatprep.subr.bf16.mxu0 %v1320
  %1371 = vmatpush1.bf16.msra.mxu0 %v1319
  %1372 = vmatprep.subr.bf16.mxu0 0
  %1373 = vmatpush1.bf16.msra.mxu0 0
  %1374 = vmatprep.subr.bf16.mxu0 0
  %1375 = vmatpush1.bf16.msra.mxu0 0
  %1376 = vmatprep.subr.bf16.mxu0 0
  %1377 = vmatpush1.bf16.msra.mxu0 0
  %1378 = vmatprep.subr.bf16.mxu0 0
  %1379 = vmatpush1.bf16.msra.mxu0 0
  %1380 = vmatprep.subr.bf16.mxu0 0
  %1381 = vmatpush1.bf16.msra.mxu0 0
  %1382 = vmatprep.subr.bf16.mxu0 0
  %1383 = vmatpush1.bf16.msra.mxu0 0
  %1384 = vmatprep.subr.bf16.mxu0 0
  %1385 = vmatpush1.bf16.msra.mxu0 0
  %1386 = vmatprep.subr.bf16.mxu0 0
  %1387 = vmatpush1.bf16.msra.mxu0 0
  %1388 = vmatprep.subr.bf16.mxu0 0
  %1389 = vmatpush1.bf16.msra.mxu0 0
  %1390 = vmatprep.subr.bf16.mxu0 0
  %1391 = vmatpush1.bf16.msra.mxu0 0
  %1392 = vmatprep.subr.bf16.mxu0 0
  %1393 = vmatpush1.bf16.msra.mxu0 0
  %1394 = vmatprep.subr.bf16.mxu0 0
  %1395 = vmatpush1.bf16.msra.mxu0 0
  %1396 = vmatprep.mubr.bf16.mxu0 0
  %1397 = vmatmul.mubr.bf16.gmra.mrb[0].mxu0 %v1341
  %v1398 = vpop.f32.mrb[0].mxu0
  %v1399 = vadd.f32 %v1202, %v1398
  %v1400 = vpop.f32.mrb[0].mxu0
  %v1401 = vadd.f32 %v1206, %v1400
  %v1402 = vpop.f32.mrb[0].mxu0
  %v1403 = vadd.f32 %v1202, %v1402
  %v1404 = vpop.f32.mrb[0].mxu0
  %v1405 = vadd.f32 %v1206, %v1404
  %1406 = vmatprep.mubr.bf16.mxu0 0
  %1407 = vmatmul.mubr.bf16.gmra.mrb[0].mxu0 %v1344
  %v1408 = vpop.f32.mrb[0].mxu0
  %v1409 = vadd.f32 %v1202, %v1408
  %v1410 = vpop.f32.mrb[0].mxu0
  %v1411 = vadd.f32 %v1206, %v1410
  %v1412 = vpop.f32.mrb[0].mxu0
  %v1413 = vadd.f32 %v1202, %v1412
  %v1414 = vpop.f32.mrb[0].mxu0
  %v1415 = vadd.f32 %v1206, %v1414
  %1416 = vmatprep.mubr.bf16.mxu0 0
  %1417 = vmatmul.mubr.bf16.gmra.mrb[0].mxu0 %v1347
  %v1418 = vpop.f32.mrb[0].mxu0
  %v1419 = vadd.f32 %v1202, %v1418
  %v1420 = vpop.f32.mrb[0].mxu0
  %v1421 = vadd.f32 %v1206, %v1420
  %v1422 = vpop.f32.mrb[0].mxu0
  %v1423 = vadd.f32 %v1202, %v1422
  %v1424 = vpop.f32.mrb[0].mxu0
  %v1425 = vadd.f32 %v1206, %v1424
  %1426 = vmatprep.mubr.bf16.mxu0 0
  %1427 = vmatmul.mubr.bf16.gmra.mrb[0].mxu0 %v1350
  %v1428 = vpop.f32.mrb[0].mxu0
  %v1429 = vadd.f32 %v1202, %v1428
  %v1430 = vpop.f32.mrb[0].mxu0
  %v1431 = vadd.f32 %v1206, %v1430
  %v1432 = vpop.f32.mrb[0].mxu0
  %v1433 = vadd.f32 %v1202, %v1432
  %v1434 = vpop.f32.mrb[0].mxu0
  %v1435 = vadd.f32 %v1206, %v1434
  %1436 = vmatprep.mubr.bf16.mxu0 0
  %1437 = vmatmul.mubr.bf16.gmra.mrb[0].mxu0 %v1353
  %v1438 = vpop.f32.mrb[0].mxu0
  %v1439 = vadd.f32 %v1202, %v1438
  %v1440 = vpop.f32.mrb[0].mxu0
  %v1441 = vadd.f32 %v1206, %v1440
  %v1442 = vpop.f32.mrb[0].mxu0
  %v1443 = vadd.f32 %v1202, %v1442
  %v1444 = vpop.f32.mrb[0].mxu0
  %v1445 = vadd.f32 %v1206, %v1444
  %1446 = vmatprep.mubr.bf16.mxu0 0
  %1447 = vmatmul.mubr.bf16.gmra.mrb[0].mxu0 %v1356
  %v1448 = vpop.f32.mrb[0].mxu0
  %v1449 = vadd.f32 %v1202, %v1448
  %v1450 = vpop.f32.mrb[0].mxu0
  %v1451 = vadd.f32 %v1206, %v1450
  %v1452 = vpop.f32.mrb[0].mxu0
  %v1453 = vadd.f32 %v1202, %v1452
  %v1454 = vpop.f32.mrb[0].mxu0
  %v1455 = vadd.f32 %v1206, %v1454
  %1456 = vmatprep.mubr.bf16.mxu0 0
  %1457 = vmatmul.mubr.bf16.gmra.mrb[0].mxu0 %v1359
  %v1458 = vpop.f32.mrb[0].mxu0
  %v1459 = vadd.f32 %v1202, %v1458
  %v1460 = vpop.f32.mrb[0].mxu0
  %v1461 = vadd.f32 %v1206, %v1460
  %v1462 = vpop.f32.mrb[0].mxu0
  %v1463 = vadd.f32 %v1202, %v1462
  %v1464 = vpop.f32.mrb[0].mxu0
  %v1465 = vadd.f32 %v1206, %v1464
  %1466 = vmatprep.mubr.bf16.mxu0 0
  %1467 = vmatmul.mubr.bf16.gmra.mrb[0].mxu0 %v1362
  %v1468 = vpop.f32.mrb[0].mxu0
  %v1469 = vadd.f32 %v1202, %v1468
  %v1470 = vpop.f32.mrb[0].mxu0
  %v1471 = vadd.f32 %v1206, %v1470
  %v1472 = vpop.f32.mrb[0].mxu0
  %v1473 = vadd.f32 %v1202, %v1472
  %v1474 = vpop.f32.mrb[0].mxu0
  %v1475 = vadd.f32 %v1206, %v1474
  %1476 = vdwg.mxu0
  %1477 = vmatprep.subr.bf16.mxu0 %v1310
  %1478 = vmatpush1.bf16.msra.mxu0 %v1309
  %1479 = vmatprep.subr.bf16.mxu0 %v1314
  %1480 = vmatpush1.bf16.msra.mxu0 %v1313
  %1481 = vmatprep.subr.bf16.mxu0 %v1318
  %1482 = vmatpush1.bf16.msra.mxu0 %v1317
  %1483 = vmatprep.subr.bf16.mxu0 %v1322
  %1484 = vmatpush1.bf16.msra.mxu0 %v1321
  %1485 = vmatprep.subr.bf16.mxu0 0
  %1486 = vmatpush1.bf16.msra.mxu0 0
  %1487 = vmatprep.subr.bf16.mxu0 0
  %1488 = vmatpush1.bf16.msra.mxu0 0
  %1489 = vmatprep.subr.bf16.mxu0 0
  %1490 = vmatpush1.bf16.msra.mxu0 0
  %1491 = vmatprep.subr.bf16.mxu0 0
  %1492 = vmatpush1.bf16.msra.mxu0 0
  %1493 = vmatprep.subr.bf16.mxu0 0
  %1494 = vmatpush1.bf16.msra.mxu0 0
  %1495 = vmatprep.subr.bf16.mxu0 0
  %1496 = vmatpush1.bf16.msra.mxu0 0
  %1497 = vmatprep.subr.bf16.mxu0 0
  %1498 = vmatpush1.bf16.msra.mxu0 0
  %1499 = vmatprep.subr.bf16.mxu0 0
  %1500 = vmatpush1.bf16.msra.mxu0 0
  %1501 = vmatprep.subr.bf16.mxu0 0
  %1502 = vmatpush1.bf16.msra.mxu0 0
  %1503 = vmatprep.subr.bf16.mxu0 0
  %1504 = vmatpush1.bf16.msra.mxu0 0
  %1505 = vmatprep.subr.bf16.mxu0 0
  %1506 = vmatpush1.bf16.msra.mxu0 0
  %1507 = vmatprep.subr.bf16.mxu0 0
  %1508 = vmatpush1.bf16.msra.mxu0 0
  %1509 = vmatprep.mubr.bf16.mxu0 0
  %1510 = vmatmul.mubr.bf16.gmra.mrb[0].mxu0 %v1341
  %v1511 = vpop.f32.mrb[0].mxu0
  %v1512 = vadd.f32 %v1210, %v1511
  %v1513 = vpop.f32.mrb[0].mxu0
  %v1514 = vadd.f32 %v1214, %v1513
  %v1515 = vpop.f32.mrb[0].mxu0
  %v1516 = vadd.f32 %v1210, %v1515
  %v1517 = vpop.f32.mrb[0].mxu0
  %v1518 = vadd.f32 %v1214, %v1517
  %1519 = vmatprep.mubr.bf16.mxu0 0
  %1520 = vmatmul.mubr.bf16.gmra.mrb[0].mxu0 %v1344
  %v1521 = vpop.f32.mrb[0].mxu0
  %v1522 = vadd.f32 %v1210, %v1521
  %v1523 = vpop.f32.mrb[0].mxu0
  %v1524 = vadd.f32 %v1214, %v1523
  %v1525 = vpop.f32.mrb[0].mxu0
  %v1526 = vadd.f32 %v1210, %v1525
  %v1527 = vpop.f32.mrb[0].mxu0
  %v1528 = vadd.f32 %v1214, %v1527
  %1529 = vmatprep.mubr.bf16.mxu0 0
  %1530 = vmatmul.mubr.bf16.gmra.mrb[0].mxu0 %v1347
  %v1531 = vpop.f32.mrb[0].mxu0
  %v1532 = vadd.f32 %v1210, %v1531
  %v1533 = vpop.f32.mrb[0].mxu0
  %v1534 = vadd.f32 %v1214, %v1533
  %v1535 = vpop.f32.mrb[0].mxu0
  %v1536 = vadd.f32 %v1210, %v1535
  %v1537 = vpop.f32.mrb[0].mxu0
  %v1538 = vadd.f32 %v1214, %v1537
  %1539 = vmatprep.mubr.bf16.mxu0 0
  %1540 = vmatmul.mubr.bf16.gmra.mrb[0].mxu0 %v1350
  %v1541 = vpop.f32.mrb[0].mxu0
  %v1542 = vadd.f32 %v1210, %v1541
  %v1543 = vpop.f32.mrb[0].mxu0
  %v1544 = vadd.f32 %v1214, %v1543
  %v1545 = vpop.f32.mrb[0].mxu0
  %v1546 = vadd.f32 %v1210, %v1545
  %v1547 = vpop.f32.mrb[0].mxu0
  %v1548 = vadd.f32 %v1214, %v1547
  %1549 = vmatprep.mubr.bf16.mxu0 0
  %1550 = vmatmul.mubr.bf16.gmra.mrb[0].mxu0 %v1353
  %v1551 = vpop.f32.mrb[0].mxu0
  %v1552 = vadd.f32 %v1210, %v1551
  %v1553 = vpop.f32.mrb[0].mxu0
  %v1554 = vadd.f32 %v1214, %v1553
  %v1555 = vpop.f32.mrb[0].mxu0
  %v1556 = vadd.f32 %v1210, %v1555
  %v1557 = vpop.f32.mrb[0].mxu0
  %v1558 = vadd.f32 %v1214, %v1557
  %1559 = vmatprep.mubr.bf16.mxu0 0
  %1560 = vmatmul.mubr.bf16.gmra.mrb[0].mxu0 %v1356
  %v1561 = vpop.f32.mrb[0].mxu0
  %v1562 = vadd.f32 %v1210, %v1561
  %v1563 = vpop.f32.mrb[0].mxu0
  %v1564 = vadd.f32 %v1214, %v1563
  %v1565 = vpop.f32.mrb[0].mxu0
  %v1566 = vadd.f32 %v1210, %v1565
  %v1567 = vpop.f32.mrb[0].mxu0
  %v1568 = vadd.f32 %v1214, %v1567
  %1569 = vmatprep.mubr.bf16.mxu0 0
  %1570 = vmatmul.mubr.bf16.gmra.mrb[0].mxu0 %v1359
  %v1571 = vpop.f32.mrb[0].mxu0
  %v1572 = vadd.f32 %v1210, %v1571
  %v1573 = vpop.f32.mrb[0].mxu0
  %v1574 = vadd.f32 %v1214, %v1573
  %v1575 = vpop.f32.mrb[0].mxu0
  %v1576 = vadd.f32 %v1210, %v1575
  %v1577 = vpop.f32.mrb[0].mxu0
  %v1578 = vadd.f32 %v1214, %v1577
  %1579 = vmatprep.mubr.bf16.mxu0 0
  %1580 = vmatmul.mubr.bf16.gmra.mrb[0].mxu0 %v1362
  %v1581 = vpop.f32.mrb[0].mxu0
  %v1582 = vadd.f32 %v1210, %v1581
  %v1583 = vpop.f32.mrb[0].mxu0
  %v1584 = vadd.f32 %v1214, %v1583
  %v1585 = vpop.f32.mrb[0].mxu0
  %v1586 = vadd.f32 %v1210, %v1585
  %v1587 = vpop.f32.mrb[0].mxu0
  %v1588 = vadd.f32 %v1214, %v1587
  %1589 = vdwg.mxu0
  %1590 = vst [vmem:[#allocation3] sm:$0xff] %v1399
  %1591 = vst [vmem:[#allocation3 + $0x8] sm:$0xff] %v1401
  %1592 = vst [vmem:[#allocation3 + $0x10] sm:$0xff] %v1512
  %1593 = vst [vmem:[#allocation3 + $0x18] sm:$0xff] %v1514
  %1594 = vst [vmem:[#allocation3 + $0x20] sm:$0xff] %v1403
  %1595 = vst [vmem:[#allocation3 + $0x28] sm:$0xff] %v1405
  %1596 = vst [vmem:[#allocation3 + $0x30] sm:$0xff] %v1516
  %1597 = vst [vmem:[#allocation3 + $0x38] sm:$0xff] %v1518
  %1598 = vst [vmem:[#allocation3 + $0x40] sm:$0xff] %v1409
  %1599 = vst [vmem:[#allocation3 + $0x48] sm:$0xff] %v1411
  %1600 = vst [vmem:[#allocation3 + $0x50] sm:$0xff] %v1522
  %1601 = vst [vmem:[#allocation3 + $0x58] sm:$0xff] %v1524
  %1602 = vst [vmem:[#allocation3 + $0x60] sm:$0xff] %v1413
  %1603 = vst [vmem:[#allocation3 + $0x68] sm:$0xff] %v1415
  %1604 = vst [vmem:[#allocation3 + $0x70] sm:$0xff] %v1526
  %1605 = vst [vmem:[#allocation3 + $0x78] sm:$0xff] %v1528
  %1606 = vst [vmem:[#allocation3 + $0x80] sm:$0xff] %v1419
  %1607 = vst [vmem:[#allocation3 + $0x88] sm:$0xff] %v1421
  %1608 = vst [vmem:[#allocation3 + $0x90] sm:$0xff] %v1532
  %1609 = vst [vmem:[#allocation3 + $0x98] sm:$0xff] %v1534
  %1610 = vst [vmem:[#allocation3 + $0xa0] sm:$0xff] %v1423
  %1611 = vst [vmem:[#allocation3 + $0xa8] sm:$0xff] %v1425
  %1612 = vst [vmem:[#allocation3 + $0xb0] sm:$0xff] %v1536
  %1613 = vst [vmem:[#allocation3 + $0xb8] sm:$0xff] %v1538
  %1614 = vst [vmem:[#allocation3 + $0xc0] sm:$0xff] %v1429
  %1615 = vst [vmem:[#allocation3 + $0xc8] sm:$0xff] %v1431
  %1616 = vst [vmem:[#allocation3 + $0xd0] sm:$0xff] %v1542
  %1617 = vst [vmem:[#allocation3 + $0xd8] sm:$0xff] %v1544
  %1618 = vst [vmem:[#allocation3 + $0xe0] sm:$0xff] %v1433
  %1619 = vst [vmem:[#allocation3 + $0xe8] sm:$0xff] %v1435
  %1620 = vst [vmem:[#allocation3 + $0xf0] sm:$0xff] %v1546
  %1621 = vst [vmem:[#allocation3 + $0xf8] sm:$0xff] %v1548
  %1622 = vst [vmem:[#allocation3 + $0x100] sm:$0xff] %v1439
  %1623 = vst [vmem:[#allocation3 + $0x108] sm:$0xff] %v1441
  %1624 = vst [vmem:[#allocation3 + $0x110] sm:$0xff] %v1552
  %1625 = vst [vmem:[#allocation3 + $0x118] sm:$0xff] %v1554
  %1626 = vst [vmem:[#allocation3 + $0x120] sm:$0xff] %v1443
  %1627 = vst [vmem:[#allocation3 + $0x128] sm:$0xff] %v1445
  %1628 = vst [vmem:[#allocation3 + $0x130] sm:$0xff] %v1556
  %1629 = vst [vmem:[#allocation3 + $0x138] sm:$0xff] %v1558
  %1630 = vst [vmem:[#allocation3 + $0x140] sm:$0xff] %v1449
  %1631 = vst [vmem:[#allocation3 + $0x148] sm:$0xff] %v1451
  %1632 = vst [vmem:[#allocation3 + $0x150] sm:$0xff] %v1562
  %1633 = vst [vmem:[#allocation3 + $0x158] sm:$0xff] %v1564
  %1634 = vst [vmem:[#allocation3 + $0x160] sm:$0xff] %v1453
  %1635 = vst [vmem:[#allocation3 + $0x168] sm:$0xff] %v1455
  %1636 = vst [vmem:[#allocation3 + $0x170] sm:$0xff] %v1566
  %1637 = vst [vmem:[#allocation3 + $0x178] sm:$0xff] %v1568
  %1638 = vst [vmem:[#allocation3 + $0x180] sm:$0xff] %v1459
  %1639 = vst [vmem:[#allocation3 + $0x188] sm:$0xff] %v1461
  %1640 = vst [vmem:[#allocation3 + $0x190] sm:$0xff] %v1572
  %1641 = vst [vmem:[#allocation3 + $0x198] sm:$0xff] %v1574
  %1642 = vst [vmem:[#allocation3 + $0x1a0] sm:$0xff] %v1463
  %1643 = vst [vmem:[#allocation3 + $0x1a8] sm:$0xff] %v1465
  %1644 = vst [vmem:[#allocation3 + $0x1b0] sm:$0xff] %v1576
  %1645 = vst [vmem:[#allocation3 + $0x1b8] sm:$0xff] %v1578
  %1646 = vst [vmem:[#allocation3 + $0x1c0] sm:$0xff] %v1469
  %1647 = vst [vmem:[#allocation3 + $0x1c8] sm:$0xff] %v1471
  %1648 = vst [vmem:[#allocation3 + $0x1d0] sm:$0xff] %v1582
  %1649 = vst [vmem:[#allocation3 + $0x1d8] sm:$0xff] %v1584
  %1650 = vst [vmem:[#allocation3 + $0x1e0] sm:$0xff] %v1473
  %1651 = vst [vmem:[#allocation3 + $0x1e8] sm:$0xff] %v1475
  %1652 = vst [vmem:[#allocation3 + $0x1f0] sm:$0xff] %v1586
  %1653 = vst [vmem:[#allocation3 + $0x1f8] sm:$0xff] %v1588
  %v1654 = vld [vmem:[%s3] sm:$0xff]
  %v1655 = vld [vmem:[%s3 + $0x8] sm:$0xff]
  %v1656 = vld [vmem:[%s3 + $0x10] sm:$0xff]
  %v1657 = vld [vmem:[%s3 + $0x18] sm:$0xff]
  %v1658 = vld [vmem:[%s3 + $0x20] sm:$0xff]
  %v1659 = vld [vmem:[%s3 + $0x28] sm:$0xff]
  %v1660 = vld [vmem:[%s3 + $0x30] sm:$0xff]
  %v1661 = vld [vmem:[%s3 + $0x38] sm:$0xff]
  %v1662 = vld [vmem:[%s3 + $0x40] sm:$0xff]
  %v1663 = vld [vmem:[%s3 + $0x48] sm:$0xff]
  %v1664 = vld [vmem:[%s3 + $0x50] sm:$0xff]
  %v1665 = vld [vmem:[%s3 + $0x58] sm:$0xff]
  %v1666 = vld [vmem:[%s3 + $0x60] sm:$0xff]
  %v1667 = vld [vmem:[%s3 + $0x68] sm:$0xff]
  %v1668 = vld [vmem:[%s3 + $0x70] sm:$0xff]
  %v1669 = vld [vmem:[%s3 + $0x78] sm:$0xff]
  %v1670 = vld [vmem:[%s3 + $0x80] sm:$0xff]
  %v1671 = vld [vmem:[%s3 + $0x88] sm:$0xff]
  %v1672 = vld [vmem:[%s3 + $0x90] sm:$0xff]
  %v1673 = vld [vmem:[%s3 + $0x98] sm:$0xff]
  %v1674 = vld [vmem:[%s3 + $0xa0] sm:$0xff]
  %v1675 = vld [vmem:[%s3 + $0xa8] sm:$0xff]
  %v1676 = vld [vmem:[%s3 + $0xb0] sm:$0xff]
  %v1677 = vld [vmem:[%s3 + $0xb8] sm:$0xff]
  %v1678 = vld [vmem:[%s3 + $0xc0] sm:$0xff]
  %v1679 = vld [vmem:[%s3 + $0xc8] sm:$0xff]
  %v1680 = vld [vmem:[%s3 + $0xd0] sm:$0xff]
  %v1681 = vld [vmem:[%s3 + $0xd8] sm:$0xff]
  %v1682 = vld [vmem:[%s3 + $0xe0] sm:$0xff]
  %v1683 = vld [vmem:[%s3 + $0xe8] sm:$0xff]
  %v1684 = vld [vmem:[%s3 + $0xf0] sm:$0xff]
  %v1685 = vld [vmem:[%s3 + $0xf8] sm:$0xff]
  %v1686 = vld [vmem:[%s5] sm:$0xff]
  %v1687 = vld [vmem:[%s5 + $0x8] sm:$0xff]
  %v1688 = vld [vmem:[%s6] sm:$0xff]
  %v1689 = vld [vmem:[%s6 + $0x8] sm:$0xff]
  %s1690 = smul.u32 0, 4
  %s1691 = smul.addr %s1690, 8
  %s1692 = scalar_lea.vmem [#allocation3], %s1691
  %v1693 = vld [vmem:[%s1692] sm:$0xff]
  %v1694 = vld [vmem:[%s1692 + $0x8] sm:$0xff]
  %v1695 = vld [vmem:[%s1692 + $0x10] sm:$0xff]
  %v1696 = vld [vmem:[%s1692 + $0x18] sm:$0xff]
  %v1697 = vld [vmem:[%s1692 + $0x20] sm:$0xff]
  %v1698 = vld [vmem:[%s1692 + $0x28] sm:$0xff]
  %v1699 = vld [vmem:[%s1692 + $0x30] sm:$0xff]
  %v1700 = vld [vmem:[%s1692 + $0x38] sm:$0xff]
  %v1701 = vpack.c.bf16 %v1687, %v1686
  %v1734 = vunpack.c.l.b16 %v1654
  %v1735 = vunpack.c.h.b16 %v1654
  %v1736 = vunpack.c.l.b16 %v1655
  %v1737 = vunpack.c.h.b16 %v1655
  %v1738 = vunpack.c.l.b16 %v1656
  %v1739 = vunpack.c.h.b16 %v1656
  %v1740 = vunpack.c.l.b16 %v1657
  %v1741 = vunpack.c.h.b16 %v1657
  %v1742 = vunpack.c.l.b16 %v1658
  %v1743 = vunpack.c.h.b16 %v1658
  %v1744 = vunpack.c.l.b16 %v1659
  %v1745 = vunpack.c.h.b16 %v1659
  %v1746 = vunpack.c.l.b16 %v1660
  %v1747 = vunpack.c.h.b16 %v1660
  %v1748 = vunpack.c.l.b16 %v1661
  %v1749 = vunpack.c.h.b16 %v1661
  %v1750 = vunpack.c.l.b16 %v1662
  %v1751 = vunpack.c.h.b16 %v1662
  %v1752 = vunpack.c.l.b16 %v1663
  %v1753 = vunpack.c.h.b16 %v1663
  %v1754 = vunpack.c.l.b16 %v1664
  %v1755 = vunpack.c.h.b16 %v1664
  %v1756 = vunpack.c.l.b16 %v1665
  %v1757 = vunpack.c.h.b16 %v1665
  %v1758 = vunpack.c.l.b16 %v1666
  %v1759 = vunpack.c.h.b16 %v1666
  %v1760 = vunpack.c.l.b16 %v1667
  %v1761 = vunpack.c.h.b16 %v1667
  %v1762 = vunpack.c.l.b16 %v1668
  %v1763 = vunpack.c.h.b16 %v1668
  %v1764 = vunpack.c.l.b16 %v1669
  %v1765 = vunpack.c.h.b16 %v1669
  %v1766 = vunpack.c.l.b16 %v1670
  %v1767 = vunpack.c.h.b16 %v1670
  %v1768 = vunpack.c.l.b16 %v1671
  %v1769 = vunpack.c.h.b16 %v1671
  %v1770 = vunpack.c.l.b16 %v1672
  %v1771 = vunpack.c.h.b16 %v1672
  %v1772 = vunpack.c.l.b16 %v1673
  %v1773 = vunpack.c.h.b16 %v1673
  %v1774 = vunpack.c.l.b16 %v1674
  %v1775 = vunpack.c.h.b16 %v1674
  %v1776 = vunpack.c.l.b16 %v1675
  %v1777 = vunpack.c.h.b16 %v1675
  %v1778 = vunpack.c.l.b16 %v1676
  %v1779 = vunpack.c.h.b16 %v1676
  %v1780 = vunpack.c.l.b16 %v1677
  %v1781 = vunpack.c.h.b16 %v1677
  %v1782 = vunpack.c.l.b16 %v1678
  %v1783 = vunpack.c.h.b16 %v1678
  %v1784 = vunpack.c.l.b16 %v1679
  %v1785 = vunpack.c.h.b16 %v1679
  %v1786 = vunpack.c.l.b16 %v1680
  %v1787 = vunpack.c.h.b16 %v1680
  %v1788 = vunpack.c.l.b16 %v1681
  %v1789 = vunpack.c.h.b16 %v1681
  %v1790 = vunpack.c.l.b16 %v1682
  %v1791 = vunpack.c.h.b16 %v1682
  %v1792 = vunpack.c.l.b16 %v1683
  %v1793 = vunpack.c.h.b16 %v1683
  %v1794 = vunpack.c.l.b16 %v1684
  %v1795 = vunpack.c.h.b16 %v1684
  %v1796 = vunpack.c.l.b16 %v1685
  %v1797 = vunpack.c.h.b16 %v1685
  %v1798 = vpack.c.b16 %v1738, %v1734
  %v1799 = vpack.c.b16 %v1739, %v1735
  %v1800 = vpack.c.b16 %v1740, %v1736
  %v1801 = vpack.c.b16 %v1741, %v1737
  %v1802 = vpack.c.b16 %v1746, %v1742
  %v1803 = vpack.c.b16 %v1747, %v1743
  %v1804 = vpack.c.b16 %v1748, %v1744
  %v1805 = vpack.c.b16 %v1749, %v1745
  %v1806 = vpack.c.b16 %v1754, %v1750
  %v1807 = vpack.c.b16 %v1755, %v1751
  %v1808 = vpack.c.b16 %v1756, %v1752
  %v1809 = vpack.c.b16 %v1757, %v1753
  %v1810 = vpack.c.b16 %v1762, %v1758
  %v1811 = vpack.c.b16 %v1763, %v1759
  %v1812 = vpack.c.b16 %v1764, %v1760
  %v1813 = vpack.c.b16 %v1765, %v1761
  %v1814 = vpack.c.b16 %v1770, %v1766
  %v1815 = vpack.c.b16 %v1771, %v1767
  %v1816 = vpack.c.b16 %v1772, %v1768
  %v1817 = vpack.c.b16 %v1773, %v1769
  %v1818 = vpack.c.b16 %v1778, %v1774
  %v1819 = vpack.c.b16 %v1779, %v1775
  %v1820 = vpack.c.b16 %v1780, %v1776
  %v1821 = vpack.c.b16 %v1781, %v1777
  %v1822 = vpack.c.b16 %v1786, %v1782
  %v1823 = vpack.c.b16 %v1787, %v1783
  %v1824 = vpack.c.b16 %v1788, %v1784
  %v1825 = vpack.c.b16 %v1789, %v1785
  %v1826 = vpack.c.b16 %v1794, %v1790
  %v1827 = vpack.c.b16 %v1795, %v1791
  %v1828 = vpack.c.b16 %v1796, %v1792
  %v1829 = vpack.c.b16 %v1797, %v1793
  %1862 = vmatprep.subr.bf16.mxu0 %v1799
  %1863 = vmatpush1.bf16.msra.mxu0 %v1798
  %1864 = vmatprep.subr.bf16.mxu0 %v1803
  %1865 = vmatpush1.bf16.msra.mxu0 %v1802
  %1866 = vmatprep.subr.bf16.mxu0 %v1807
  %1867 = vmatpush1.bf16.msra.mxu0 %v1806
  %1868 = vmatprep.subr.bf16.mxu0 %v1811
  %1869 = vmatpush1.bf16.msra.mxu0 %v1810
  %1870 = vmatprep.subr.bf16.mxu0 %v1815
  %1871 = vmatpush1.bf16.msra.mxu0 %v1814
  %1872 = vmatprep.subr.bf16.mxu0 %v1819
  %1873 = vmatpush1.bf16.msra.mxu0 %v1818
  %1874 = vmatprep.subr.bf16.mxu0 %v1823
  %1875 = vmatpush1.bf16.msra.mxu0 %v1822
  %1876 = vmatprep.subr.bf16.mxu0 %v1827
  %1877 = vmatpush1.bf16.msra.mxu0 %v1826
  %1878 = vmatprep.subr.bf16.mxu0 0
  %1879 = vmatpush1.bf16.msra.mxu0 0
  %1880 = vmatprep.subr.bf16.mxu0 0
  %1881 = vmatpush1.bf16.msra.mxu0 0
  %1882 = vmatprep.subr.bf16.mxu0 0
  %1883 = vmatpush1.bf16.msra.mxu0 0
  %1884 = vmatprep.subr.bf16.mxu0 0
  %1885 = vmatpush1.bf16.msra.mxu0 0
  %1886 = vmatprep.subr.bf16.mxu0 0
  %1887 = vmatpush1.bf16.msra.mxu0 0
  %1888 = vmatprep.subr.bf16.mxu0 0
  %1889 = vmatpush1.bf16.msra.mxu0 0
  %1890 = vmatprep.subr.bf16.mxu0 0
  %1891 = vmatpush1.bf16.msra.mxu0 0
  %1892 = vmatprep.subr.bf16.mxu0 0
  %1893 = vmatpush1.bf16.msra.mxu0 0
  %1894 = vmatprep.mubr.bf16.mxu0 0
  %1895 = vmatmul.mubr.bf16.gmra.mrb[0].mxu0 %v1701
  %v1896 = vpop.f32.mrb[0].mxu0
  %v1897 = vadd.f32 0.0, %v1896
  %v1898 = vpop.f32.mrb[0].mxu0
  %v1899 = vadd.f32 0.0, %v1898
  %v1900 = vpop.f32.mrb[0].mxu0
  %v1901 = vadd.f32 0.0, %v1900
  %v1902 = vpop.f32.mrb[0].mxu0
  %v1903 = vadd.f32 0.0, %v1902
  %1904 = vdwg.mxu0
  %1905 = vmatprep.subr.bf16.mxu0 %v1801
  %1906 = vmatpush1.bf16.msra.mxu0 %v1800
  %1907 = vmatprep.subr.bf16.mxu0 %v1805
  %1908 = vmatpush1.bf16.msra.mxu0 %v1804
  %1909 = vmatprep.subr.bf16.mxu0 %v1809
  %1910 = vmatpush1.bf16.msra.mxu0 %v1808
  %1911 = vmatprep.subr.bf16.mxu0 %v1813
  %1912 = vmatpush1.bf16.msra.mxu0 %v1812
  %1913 = vmatprep.subr.bf16.mxu0 %v1817
  %1914 = vmatpush1.bf16.msra.mxu0 %v1816
  %1915 = vmatprep.subr.bf16.mxu0 %v1821
  %1916 = vmatpush1.bf16.msra.mxu0 %v1820
  %1917 = vmatprep.subr.bf16.mxu0 %v1825
  %1918 = vmatpush1.bf16.msra.mxu0 %v1824
  %1919 = vmatprep.subr.bf16.mxu0 %v1829
  %1920 = vmatpush1.bf16.msra.mxu0 %v1828
  %1921 = vmatprep.subr.bf16.mxu0 0
  %1922 = vmatpush1.bf16.msra.mxu0 0
  %1923 = vmatprep.subr.bf16.mxu0 0
  %1924 = vmatpush1.bf16.msra.mxu0 0
  %1925 = vmatprep.subr.bf16.mxu0 0
  %1926 = vmatpush1.bf16.msra.mxu0 0
  %1927 = vmatprep.subr.bf16.mxu0 0
  %1928 = vmatpush1.bf16.msra.mxu0 0
  %1929 = vmatprep.subr.bf16.mxu0 0
  %1930 = vmatpush1.bf16.msra.mxu0 0
  %1931 = vmatprep.subr.bf16.mxu0 0
  %1932 = vmatpush1.bf16.msra.mxu0 0
  %1933 = vmatprep.subr.bf16.mxu0 0
  %1934 = vmatpush1.bf16.msra.mxu0 0
  %1935 = vmatprep.subr.bf16.mxu0 0
  %1936 = vmatpush1.bf16.msra.mxu0 0
  %1937 = vmatprep.mubr.bf16.mxu0 0
  %1938 = vmatmul.mubr.bf16.gmra.mrb[0].mxu0 %v1701
  %v1939 = vpop.f32.mrb[0].mxu0
  %v1940 = vadd.f32 0.0, %v1939
  %v1941 = vpop.f32.mrb[0].mxu0
  %v1942 = vadd.f32 0.0, %v1941
  %v1943 = vpop.f32.mrb[0].mxu0
  %v1944 = vadd.f32 0.0, %v1943
  %v1945 = vpop.f32.mrb[0].mxu0
  %v1946 = vadd.f32 0.0, %v1945
  %1947 = vdwg.mxu0
  %v1948 = vadd.f32 %v1693, %v1897
  %v1949 = vadd.f32 %v1694, %v1899
  %v1950 = vadd.f32 %v1695, %v1940
  %v1951 = vadd.f32 %v1696, %v1942
  %v1952 = vadd.f32 %v1697, %v1901
  %v1953 = vadd.f32 %v1698, %v1903
  %v1954 = vadd.f32 %v1699, %v1944
  %v1955 = vadd.f32 %v1700, %v1946
  %v1956 = vmul.f32 %v1948, 0.5
  %v1957 = vmul.f32 %v1952, 0.5
  %v1958 = vtanh.pop %v1956
  %v1959 = vtanh.pop %v1957
  %v1960 = vmul.f32 %v1958, 0.5
  %v1961 = vmul.f32 %v1959, 0.5
  %v1962 = vadd.f32 %v1960, 0.5
  %v1963 = vadd.f32 %v1961, 0.5
  %v1964 = vmul.f32 %v1949, 0.5
  %v1965 = vmul.f32 %v1953, 0.5
  %v1966 = vtanh.pop %v1964
  %v1967 = vtanh.pop %v1965
  %v1968 = vmul.f32 %v1966, 0.5
  %v1969 = vmul.f32 %v1967, 0.5
  %v1970 = vadd.f32 %v1968, 0.5
  %v1971 = vadd.f32 %v1969, 0.5
  %v1972 = vtanh.pop %v1950
  %v1973 = vtanh.pop %v1954
  %v1974 = vmul.f32 %v1951, 0.5
  %v1975 = vmul.f32 %v1955, 0.5
  %v1976 = vtanh.pop %v1974
  %v1977 = vtanh.pop %v1975
  %v1978 = vmul.f32 %v1976, 0.5
  %v1979 = vmul.f32 %v1977, 0.5
  %v1980 = vadd.f32 %v1978, 0.5
  %v1981 = vadd.f32 %v1979, 0.5
  %v1982 = vmul.f32 %v1970, %v1688
  %v1983 = vmul.f32 %v1971, %v1689
  %v1984 = vmul.f32 %v1962, %v1972
  %v1985 = vmul.f32 %v1963, %v1973
  %v1986 = vadd.f32 %v1982, %v1984
  %v1987 = vadd.f32 %v1983, %v1985
  %v1988 = vtanh.pop %v1986
  %v1989 = vtanh.pop %v1987
  %v1990 = vmul.f32 %v1980, %v1988
  %v1991 = vmul.f32 %v1981, %v1989
  %v1992 = vpack.c.bf16 %v1991, %v1990
  %1993 = vst [vmem:[#allocation2] sm:$0xff] %v1992
  %s1994 = smul.u32 2, 4
  %s1995 = smul.addr %s1994, 8
  %s1996 = scalar_lea.vmem [#allocation3], %s1995
  %v1997 = vld [vmem:[%s1996] sm:$0xff]
  %v1998 = vld [vmem:[%s1996 + $0x8] sm:$0xff]
  %v1999 = vld [vmem:[%s1996 + $0x10] sm:$0xff]
  %v2000 = vld [vmem:[%s1996 + $0x18] sm:$0xff]
  %v2001 = vld [vmem:[%s1996 + $0x20] sm:$0xff]
  %v2002 = vld [vmem:[%s1996 + $0x28] sm:$0xff]
  %v2003 = vld [vmem:[%s1996 + $0x30] sm:$0xff]
  %v2004 = vld [vmem:[%s1996 + $0x38] sm:$0xff]
  %2005 = vmatprep.subr.bf16.mxu0 %v1799
  %2006 = vmatpush1.bf16.msra.mxu0 %v1798
  %2007 = vmatprep.subr.bf16.mxu0 %v1803
  %2008 = vmatpush1.bf16.msra.mxu0 %v1802
  %2009 = vmatprep.subr.bf16.mxu0 %v1807
  %2010 = vmatpush1.bf16.msra.mxu0 %v1806
  %2011 = vmatprep.subr.bf16.mxu0 %v1811
  %2012 = vmatpush1.bf16.msra.mxu0 %v1810
  %2013 = vmatprep.subr.bf16.mxu0 %v1815
  %2014 = vmatpush1.bf16.msra.mxu0 %v1814
  %2015 = vmatprep.subr.bf16.mxu0 %v1819
  %2016 = vmatpush1.bf16.msra.mxu0 %v1818
  %2017 = vmatprep.subr.bf16.mxu0 %v1823
  %2018 = vmatpush1.bf16.msra.mxu0 %v1822
  %2019 = vmatprep.subr.bf16.mxu0 %v1827
  %2020 = vmatpush1.bf16.msra.mxu0 %v1826
  %2021 = vmatprep.subr.bf16.mxu0 0
  %2022 = vmatpush1.bf16.msra.mxu0 0
  %2023 = vmatprep.subr.bf16.mxu0 0
  %2024 = vmatpush1.bf16.msra.mxu0 0
  %2025 = vmatprep.subr.bf16.mxu0 0
  %2026 = vmatpush1.bf16.msra.mxu0 0
  %2027 = vmatprep.subr.bf16.mxu0 0
  %2028 = vmatpush1.bf16.msra.mxu0 0
  %2029 = vmatprep.subr.bf16.mxu0 0
  %2030 = vmatpush1.bf16.msra.mxu0 0
  %2031 = vmatprep.subr.bf16.mxu0 0
  %2032 = vmatpush1.bf16.msra.mxu0 0
  %2033 = vmatprep.subr.bf16.mxu0 0
  %2034 = vmatpush1.bf16.msra.mxu0 0
  %2035 = vmatprep.subr.bf16.mxu0 0
  %2036 = vmatpush1.bf16.msra.mxu0 0
  %2037 = vmatprep.mubr.bf16.mxu0 0
  %2038 = vmatmul.mubr.bf16.gmra.mrb[0].mxu0 %v1992
  %v2039 = vpop.f32.mrb[0].mxu0
  %v2040 = vadd.f32 0.0, %v2039
  %v2041 = vpop.f32.mrb[0].mxu0
  %v2042 = vadd.f32 0.0, %v2041
  %v2043 = vpop.f32.mrb[0].mxu0
  %v2044 = vadd.f32 0.0, %v2043
  %v2045 = vpop.f32.mrb[0].mxu0
  %v2046 = vadd.f32 0.0, %v2045
  %2047 = vdwg.mxu0
  %2048 = vmatprep.subr.bf16.mxu0 %v1801
  %2049 = vmatpush1.bf16.msra.mxu0 %v1800
  %2050 = vmatprep.subr.bf16.mxu0 %v1805
  %2051 = vmatpush1.bf16.msra.mxu0 %v1804
  %2052 = vmatprep.subr.bf16.mxu0 %v1809
  %2053 = vmatpush1.bf16.msra.mxu0 %v1808
  %2054 = vmatprep.subr.bf16.mxu0 %v1813
  %2055 = vmatpush1.bf16.msra.mxu0 %v1812
  %2056 = vmatprep.subr.bf16.mxu0 %v1817
  %2057 = vmatpush1.bf16.msra.mxu0 %v1816
  %2058 = vmatprep.subr.bf16.mxu0 %v1821
  %2059 = vmatpush1.bf16.msra.mxu0 %v1820
  %2060 = vmatprep.subr.bf16.mxu0 %v1825
  %2061 = vmatpush1.bf16.msra.mxu0 %v1824
  %2062 = vmatprep.subr.bf16.mxu0 %v1829
  %2063 = vmatpush1.bf16.msra.mxu0 %v1828
  %2064 = vmatprep.subr.bf16.mxu0 0
  %2065 = vmatpush1.bf16.msra.mxu0 0
  %2066 = vmatprep.subr.bf16.mxu0 0
  %2067 = vmatpush1.bf16.msra.mxu0 0
  %2068 = vmatprep.subr.bf16.mxu0 0
  %2069 = vmatpush1.bf16.msra.mxu0 0
  %2070 = vmatprep.subr.bf16.mxu0 0
  %2071 = vmatpush1.bf16.msra.mxu0 0
  %2072 = vmatprep.subr.bf16.mxu0 0
  %2073 = vmatpush1.bf16.msra.mxu0 0
  %2074 = vmatprep.subr.bf16.mxu0 0
  %2075 = vmatpush1.bf16.msra.mxu0 0
  %2076 = vmatprep.subr.bf16.mxu0 0
  %2077 = vmatpush1.bf16.msra.mxu0 0
  %2078 = vmatprep.subr.bf16.mxu0 0
  %2079 = vmatpush1.bf16.msra.mxu0 0
  %2080 = vmatprep.mubr.bf16.mxu0 0
  %2081 = vmatmul.mubr.bf16.gmra.mrb[0].mxu0 %v1992
  %v2082 = vpop.f32.mrb[0].mxu0
  %v2083 = vadd.f32 0.0, %v2082
  %v2084 = vpop.f32.mrb[0].mxu0
  %v2085 = vadd.f32 0.0, %v2084
  %v2086 = vpop.f32.mrb[0].mxu0
  %v2087 = vadd.f32 0.0, %v2086
  %v2088 = vpop.f32.mrb[0].mxu0
  %v2089 = vadd.f32 0.0, %v2088
  %2090 = vdwg.mxu0
  %v2091 = vadd.f32 %v1997, %v2040
  %v2092 = vadd.f32 %v1998, %v2042
  %v2093 = vadd.f32 %v1999, %v2083
  %v2094 = vadd.f32 %v2000, %v2085
  %v2095 = vadd.f32 %v2001, %v2044
  %v2096 = vadd.f32 %v2002, %v2046
  %v2097 = vadd.f32 %v2003, %v2087
  %v2098 = vadd.f32 %v2004, %v2089
  %v2099 = vmul.f32 %v2091, 0.5
  %v2100 = vmul.f32 %v2095, 0.5
  %v2101 = vtanh.pop %v2099
  %v2102 = vtanh.pop %v2100
  %v2103 = vmul.f32 %v2101, 0.5
  %v2104 = vmul.f32 %v2102, 0.5
  %v2105 = vadd.f32 %v2103, 0.5
  %v2106 = vadd.f32 %v2104, 0.5
  %v2107 = vmul.f32 %v2092, 0.5
  %v2108 = vmul.f32 %v2096, 0.5
  %v2109 = vtanh.pop %v2107
  %v2110 = vtanh.pop %v2108
  %v2111 = vmul.f32 %v2109, 0.5
  %v2112 = vmul.f32 %v2110, 0.5
  %v2113 = vadd.f32 %v2111, 0.5
  %v2114 = vadd.f32 %v2112, 0.5
  %v2115 = vtanh.pop %v2093
  %v2116 = vtanh.pop %v2097
  %v2117 = vmul.f32 %v2094, 0.5
  %v2118 = vmul.f32 %v2098, 0.5
  %v2119 = vtanh.pop %v2117
  %v2120 = vtanh.pop %v2118
  %v2121 = vmul.f32 %v2119, 0.5
  %v2122 = vmul.f32 %v2120, 0.5
  %v2123 = vadd.f32 %v2121, 0.5
  %v2124 = vadd.f32 %v2122, 0.5
  %v2125 = vmul.f32 %v2113, %v1986
  %v2126 = vmul.f32 %v2114, %v1987
  %v2127 = vmul.f32 %v2105, %v2115
  %v2128 = vmul.f32 %v2106, %v2116
  %v2129 = vadd.f32 %v2125, %v2127
  %v2130 = vadd.f32 %v2126, %v2128
  %v2131 = vtanh.pop %v2129
  %v2132 = vtanh.pop %v2130
  %v2133 = vmul.f32 %v2123, %v2131
  %v2134 = vmul.f32 %v2124, %v2132
  %v2135 = vpack.c.bf16 %v2134, %v2133
  %s2136 = scalar_lea.vmem [#allocation2], 8
  %2137 = vst [vmem:[%s2136] sm:$0xff] %v2135
  %s2138 = smul.u32 4, 4
  %s2139 = smul.addr %s2138, 8
  %s2140 = scalar_lea.vmem [#allocation3], %s2139
  %v2141 = vld [vmem:[%s2140] sm:$0xff]
  %v2142 = vld [vmem:[%s2140 + $0x8] sm:$0xff]
  %v2143 = vld [vmem:[%s2140 + $0x10] sm:$0xff]
  %v2144 = vld [vmem:[%s2140 + $0x18] sm:$0xff]
  %v2145 = vld [vmem:[%s2140 + $0x20] sm:$0xff]
  %v2146 = vld [vmem:[%s2140 + $0x28] sm:$0xff]
  %v2147 = vld [vmem:[%s2140 + $0x30] sm:$0xff]
  %v2148 = vld [vmem:[%s2140 + $0x38] sm:$0xff]
  %2149 = vmatprep.subr.bf16.mxu0 %v1799
  %2150 = vmatpush1.bf16.msra.mxu0 %v1798
  %2151 = vmatprep.subr.bf16.mxu0 %v1803
  %2152 = vmatpush1.bf16.msra.mxu0 %v1802
  %2153 = vmatprep.subr.bf16.mxu0 %v1807
  %2154 = vmatpush1.bf16.msra.mxu0 %v1806
  %2155 = vmatprep.subr.bf16.mxu0 %v1811
  %2156 = vmatpush1.bf16.msra.mxu0 %v1810
  %2157 = vmatprep.subr.bf16.mxu0 %v1815
  %2158 = vmatpush1.bf16.msra.mxu0 %v1814
  %2159 = vmatprep.subr.bf16.mxu0 %v1819
  %2160 = vmatpush1.bf16.msra.mxu0 %v1818
  %2161 = vmatprep.subr.bf16.mxu0 %v1823
  %2162 = vmatpush1.bf16.msra.mxu0 %v1822
  %2163 = vmatprep.subr.bf16.mxu0 %v1827
  %2164 = vmatpush1.bf16.msra.mxu0 %v1826
  %2165 = vmatprep.subr.bf16.mxu0 0
  %2166 = vmatpush1.bf16.msra.mxu0 0
  %2167 = vmatprep.subr.bf16.mxu0 0
  %2168 = vmatpush1.bf16.msra.mxu0 0
  %2169 = vmatprep.subr.bf16.mxu0 0
  %2170 = vmatpush1.bf16.msra.mxu0 0
  %2171 = vmatprep.subr.bf16.mxu0 0
  %2172 = vmatpush1.bf16.msra.mxu0 0
  %2173 = vmatprep.subr.bf16.mxu0 0
  %2174 = vmatpush1.bf16.msra.mxu0 0
  %2175 = vmatprep.subr.bf16.mxu0 0
  %2176 = vmatpush1.bf16.msra.mxu0 0
  %2177 = vmatprep.subr.bf16.mxu0 0
  %2178 = vmatpush1.bf16.msra.mxu0 0
  %2179 = vmatprep.subr.bf16.mxu0 0
  %2180 = vmatpush1.bf16.msra.mxu0 0
  %2181 = vmatprep.mubr.bf16.mxu0 0
  %2182 = vmatmul.mubr.bf16.gmra.mrb[0].mxu0 %v2135
  %v2183 = vpop.f32.mrb[0].mxu0
  %v2184 = vadd.f32 0.0, %v2183
  %v2185 = vpop.f32.mrb[0].mxu0
  %v2186 = vadd.f32 0.0, %v2185
  %v2187 = vpop.f32.mrb[0].mxu0
  %v2188 = vadd.f32 0.0, %v2187
  %v2189 = vpop.f32.mrb[0].mxu0
  %v2190 = vadd.f32 0.0, %v2189
  %2191 = vdwg.mxu0
  %2192 = vmatprep.subr.bf16.mxu0 %v1801
  %2193 = vmatpush1.bf16.msra.mxu0 %v1800
  %2194 = vmatprep.subr.bf16.mxu0 %v1805
  %2195 = vmatpush1.bf16.msra.mxu0 %v1804
  %2196 = vmatprep.subr.bf16.mxu0 %v1809
  %2197 = vmatpush1.bf16.msra.mxu0 %v1808
  %2198 = vmatprep.subr.bf16.mxu0 %v1813
  %2199 = vmatpush1.bf16.msra.mxu0 %v1812
  %2200 = vmatprep.subr.bf16.mxu0 %v1817
  %2201 = vmatpush1.bf16.msra.mxu0 %v1816
  %2202 = vmatprep.subr.bf16.mxu0 %v1821
  %2203 = vmatpush1.bf16.msra.mxu0 %v1820
  %2204 = vmatprep.subr.bf16.mxu0 %v1825
  %2205 = vmatpush1.bf16.msra.mxu0 %v1824
  %2206 = vmatprep.subr.bf16.mxu0 %v1829
  %2207 = vmatpush1.bf16.msra.mxu0 %v1828
  %2208 = vmatprep.subr.bf16.mxu0 0
  %2209 = vmatpush1.bf16.msra.mxu0 0
  %2210 = vmatprep.subr.bf16.mxu0 0
  %2211 = vmatpush1.bf16.msra.mxu0 0
  %2212 = vmatprep.subr.bf16.mxu0 0
  %2213 = vmatpush1.bf16.msra.mxu0 0
  %2214 = vmatprep.subr.bf16.mxu0 0
  %2215 = vmatpush1.bf16.msra.mxu0 0
  %2216 = vmatprep.subr.bf16.mxu0 0
  %2217 = vmatpush1.bf16.msra.mxu0 0
  %2218 = vmatprep.subr.bf16.mxu0 0
  %2219 = vmatpush1.bf16.msra.mxu0 0
  %2220 = vmatprep.subr.bf16.mxu0 0
  %2221 = vmatpush1.bf16.msra.mxu0 0
  %2222 = vmatprep.subr.bf16.mxu0 0
  %2223 = vmatpush1.bf16.msra.mxu0 0
  %2224 = vmatprep.mubr.bf16.mxu0 0
  %2225 = vmatmul.mubr.bf16.gmra.mrb[0].mxu0 %v2135
  %v2226 = vpop.f32.mrb[0].mxu0
  %v2227 = vadd.f32 0.0, %v2226
  %v2228 = vpop.f32.mrb[0].mxu0
  %v2229 = vadd.f32 0.0, %v2228
  %v2230 = vpop.f32.mrb[0].mxu0
  %v2231 = vadd.f32 0.0, %v2230
  %v2232 = vpop.f32.mrb[0].mxu0
  %v2233 = vadd.f32 0.0, %v2232
  %2234 = vdwg.mxu0
  %v2235 = vadd.f32 %v2141, %v2184
  %v2236 = vadd.f32 %v2142, %v2186
  %v2237 = vadd.f32 %v2143, %v2227
  %v2238 = vadd.f32 %v2144, %v2229
  %v2239 = vadd.f32 %v2145, %v2188
  %v2240 = vadd.f32 %v2146, %v2190
  %v2241 = vadd.f32 %v2147, %v2231
  %v2242 = vadd.f32 %v2148, %v2233
  %v2243 = vmul.f32 %v2235, 0.5
  %v2244 = vmul.f32 %v2239, 0.5
  %v2245 = vtanh.pop %v2243
  %v2246 = vtanh.pop %v2244
  %v2247 = vmul.f32 %v2245, 0.5
  %v2248 = vmul.f32 %v2246, 0.5
  %v2249 = vadd.f32 %v2247, 0.5
  %v2250 = vadd.f32 %v2248, 0.5
  %v2251 = vmul.f32 %v2236, 0.5
  %v2252 = vmul.f32 %v2240, 0.5
  %v2253 = vtanh.pop %v2251
  %v2254 = vtanh.pop %v2252
  %v2255 = vmul.f32 %v2253, 0.5
  %v2256 = vmul.f32 %v2254, 0.5
  %v2257 = vadd.f32 %v2255, 0.5
  %v2258 = vadd.f32 %v2256, 0.5
  %v2259 = vtanh.pop %v2237
  %v2260 = vtanh.pop %v2241
  %v2261 = vmul.f32 %v2238, 0.5
  %v2262 = vmul.f32 %v2242, 0.5
  %v2263 = vtanh.pop %v2261
  %v2264 = vtanh.pop %v2262
  %v2265 = vmul.f32 %v2263, 0.5
  %v2266 = vmul.f32 %v2264, 0.5
  %v2267 = vadd.f32 %v2265, 0.5
  %v2268 = vadd.f32 %v2266, 0.5
  %v2269 = vmul.f32 %v2257, %v2129
  %v2270 = vmul.f32 %v2258, %v2130
  %v2271 = vmul.f32 %v2249, %v2259
  %v2272 = vmul.f32 %v2250, %v2260
  %v2273 = vadd.f32 %v2269, %v2271
  %v2274 = vadd.f32 %v2270, %v2272
  %v2275 = vtanh.pop %v2273
  %v2276 = vtanh.pop %v2274
  %v2277 = vmul.f32 %v2267, %v2275
  %v2278 = vmul.f32 %v2268, %v2276
  %v2279 = vpack.c.bf16 %v2278, %v2277
  %s2280 = scalar_lea.vmem [#allocation2], 16
  %2281 = vst [vmem:[%s2280] sm:$0xff] %v2279
  %s2282 = smul.u32 6, 4
  %s2283 = smul.addr %s2282, 8
  %s2284 = scalar_lea.vmem [#allocation3], %s2283
  %v2285 = vld [vmem:[%s2284] sm:$0xff]
  %v2286 = vld [vmem:[%s2284 + $0x8] sm:$0xff]
  %v2287 = vld [vmem:[%s2284 + $0x10] sm:$0xff]
  %v2288 = vld [vmem:[%s2284 + $0x18] sm:$0xff]
  %v2289 = vld [vmem:[%s2284 + $0x20] sm:$0xff]
  %v2290 = vld [vmem:[%s2284 + $0x28] sm:$0xff]
  %v2291 = vld [vmem:[%s2284 + $0x30] sm:$0xff]
  %v2292 = vld [vmem:[%s2284 + $0x38] sm:$0xff]
  %2293 = vmatprep.subr.bf16.mxu0 %v1799
  %2294 = vmatpush1.bf16.msra.mxu0 %v1798
  %2295 = vmatprep.subr.bf16.mxu0 %v1803
  %2296 = vmatpush1.bf16.msra.mxu0 %v1802
  %2297 = vmatprep.subr.bf16.mxu0 %v1807
  %2298 = vmatpush1.bf16.msra.mxu0 %v1806
  %2299 = vmatprep.subr.bf16.mxu0 %v1811
  %2300 = vmatpush1.bf16.msra.mxu0 %v1810
  %2301 = vmatprep.subr.bf16.mxu0 %v1815
  %2302 = vmatpush1.bf16.msra.mxu0 %v1814
  %2303 = vmatprep.subr.bf16.mxu0 %v1819
  %2304 = vmatpush1.bf16.msra.mxu0 %v1818
  %2305 = vmatprep.subr.bf16.mxu0 %v1823
  %2306 = vmatpush1.bf16.msra.mxu0 %v1822
  %2307 = vmatprep.subr.bf16.mxu0 %v1827
  %2308 = vmatpush1.bf16.msra.mxu0 %v1826
  %2309 = vmatprep.subr.bf16.mxu0 0
  %2310 = vmatpush1.bf16.msra.mxu0 0
  %2311 = vmatprep.subr.bf16.mxu0 0
  %2312 = vmatpush1.bf16.msra.mxu0 0
  %2313 = vmatprep.subr.bf16.mxu0 0
  %2314 = vmatpush1.bf16.msra.mxu0 0
  %2315 = vmatprep.subr.bf16.mxu0 0
  %2316 = vmatpush1.bf16.msra.mxu0 0
  %2317 = vmatprep.subr.bf16.mxu0 0
  %2318 = vmatpush1.bf16.msra.mxu0 0
  %2319 = vmatprep.subr.bf16.mxu0 0
  %2320 = vmatpush1.bf16.msra.mxu0 0
  %2321 = vmatprep.subr.bf16.mxu0 0
  %2322 = vmatpush1.bf16.msra.mxu0 0
  %2323 = vmatprep.subr.bf16.mxu0 0
  %2324 = vmatpush1.bf16.msra.mxu0 0
  %2325 = vmatprep.mubr.bf16.mxu0 0
  %2326 = vmatmul.mubr.bf16.gmra.mrb[0].mxu0 %v2279
  %v2327 = vpop.f32.mrb[0].mxu0
  %v2328 = vadd.f32 0.0, %v2327
  %v2329 = vpop.f32.mrb[0].mxu0
  %v2330 = vadd.f32 0.0, %v2329
  %v2331 = vpop.f32.mrb[0].mxu0
  %v2332 = vadd.f32 0.0, %v2331
  %v2333 = vpop.f32.mrb[0].mxu0
  %v2334 = vadd.f32 0.0, %v2333
  %2335 = vdwg.mxu0
  %2336 = vmatprep.subr.bf16.mxu0 %v1801
  %2337 = vmatpush1.bf16.msra.mxu0 %v1800
  %2338 = vmatprep.subr.bf16.mxu0 %v1805
  %2339 = vmatpush1.bf16.msra.mxu0 %v1804
  %2340 = vmatprep.subr.bf16.mxu0 %v1809
  %2341 = vmatpush1.bf16.msra.mxu0 %v1808
  %2342 = vmatprep.subr.bf16.mxu0 %v1813
  %2343 = vmatpush1.bf16.msra.mxu0 %v1812
  %2344 = vmatprep.subr.bf16.mxu0 %v1817
  %2345 = vmatpush1.bf16.msra.mxu0 %v1816
  %2346 = vmatprep.subr.bf16.mxu0 %v1821
  %2347 = vmatpush1.bf16.msra.mxu0 %v1820
  %2348 = vmatprep.subr.bf16.mxu0 %v1825
  %2349 = vmatpush1.bf16.msra.mxu0 %v1824
  %2350 = vmatprep.subr.bf16.mxu0 %v1829
  %2351 = vmatpush1.bf16.msra.mxu0 %v1828
  %2352 = vmatprep.subr.bf16.mxu0 0
  %2353 = vmatpush1.bf16.msra.mxu0 0
  %2354 = vmatprep.subr.bf16.mxu0 0
  %2355 = vmatpush1.bf16.msra.mxu0 0
  %2356 = vmatprep.subr.bf16.mxu0 0
  %2357 = vmatpush1.bf16.msra.mxu0 0
  %2358 = vmatprep.subr.bf16.mxu0 0
  %2359 = vmatpush1.bf16.msra.mxu0 0
  %2360 = vmatprep.subr.bf16.mxu0 0
  %2361 = vmatpush1.bf16.msra.mxu0 0
  %2362 = vmatprep.subr.bf16.mxu0 0
  %2363 = vmatpush1.bf16.msra.mxu0 0
  %2364 = vmatprep.subr.bf16.mxu0 0
  %2365 = vmatpush1.bf16.msra.mxu0 0
  %2366 = vmatprep.subr.bf16.mxu0 0
  %2367 = vmatpush1.bf16.msra.mxu0 0
  %2368 = vmatprep.mubr.bf16.mxu0 0
  %2369 = vmatmul.mubr.bf16.gmra.mrb[0].mxu0 %v2279
  %v2370 = vpop.f32.mrb[0].mxu0
  %v2371 = vadd.f32 0.0, %v2370
  %v2372 = vpop.f32.mrb[0].mxu0
  %v2373 = vadd.f32 0.0, %v2372
  %v2374 = vpop.f32.mrb[0].mxu0
  %v2375 = vadd.f32 0.0, %v2374
  %v2376 = vpop.f32.mrb[0].mxu0
  %v2377 = vadd.f32 0.0, %v2376
  %2378 = vdwg.mxu0
  %v2379 = vadd.f32 %v2285, %v2328
  %v2380 = vadd.f32 %v2286, %v2330
  %v2381 = vadd.f32 %v2287, %v2371
  %v2382 = vadd.f32 %v2288, %v2373
  %v2383 = vadd.f32 %v2289, %v2332
  %v2384 = vadd.f32 %v2290, %v2334
  %v2385 = vadd.f32 %v2291, %v2375
  %v2386 = vadd.f32 %v2292, %v2377
  %v2387 = vmul.f32 %v2379, 0.5
  %v2388 = vmul.f32 %v2383, 0.5
  %v2389 = vtanh.pop %v2387
  %v2390 = vtanh.pop %v2388
  %v2391 = vmul.f32 %v2389, 0.5
  %v2392 = vmul.f32 %v2390, 0.5
  %v2393 = vadd.f32 %v2391, 0.5
  %v2394 = vadd.f32 %v2392, 0.5
  %v2395 = vmul.f32 %v2380, 0.5
  %v2396 = vmul.f32 %v2384, 0.5
  %v2397 = vtanh.pop %v2395
  %v2398 = vtanh.pop %v2396
  %v2399 = vmul.f32 %v2397, 0.5
  %v2400 = vmul.f32 %v2398, 0.5
  %v2401 = vadd.f32 %v2399, 0.5
  %v2402 = vadd.f32 %v2400, 0.5
  %v2403 = vtanh.pop %v2381
  %v2404 = vtanh.pop %v2385
  %v2405 = vmul.f32 %v2382, 0.5
  %v2406 = vmul.f32 %v2386, 0.5
  %v2407 = vtanh.pop %v2405
  %v2408 = vtanh.pop %v2406
  %v2409 = vmul.f32 %v2407, 0.5
  %v2410 = vmul.f32 %v2408, 0.5
  %v2411 = vadd.f32 %v2409, 0.5
  %v2412 = vadd.f32 %v2410, 0.5
  %v2413 = vmul.f32 %v2401, %v2273
  %v2414 = vmul.f32 %v2402, %v2274
  %v2415 = vmul.f32 %v2393, %v2403
  %v2416 = vmul.f32 %v2394, %v2404
  %v2417 = vadd.f32 %v2413, %v2415
  %v2418 = vadd.f32 %v2414, %v2416
  %v2419 = vtanh.pop %v2417
  %v2420 = vtanh.pop %v2418
  %v2421 = vmul.f32 %v2411, %v2419
  %v2422 = vmul.f32 %v2412, %v2420
  %v2423 = vpack.c.bf16 %v2422, %v2421
  %s2424 = scalar_lea.vmem [#allocation2], 24
  %2425 = vst [vmem:[%s2424] sm:$0xff] %v2423
  %s2426 = smul.u32 8, 4
  %s2427 = smul.addr %s2426, 8
  %s2428 = scalar_lea.vmem [#allocation3], %s2427
  %v2429 = vld [vmem:[%s2428] sm:$0xff]
  %v2430 = vld [vmem:[%s2428 + $0x8] sm:$0xff]
  %v2431 = vld [vmem:[%s2428 + $0x10] sm:$0xff]
  %v2432 = vld [vmem:[%s2428 + $0x18] sm:$0xff]
  %v2433 = vld [vmem:[%s2428 + $0x20] sm:$0xff]
  %v2434 = vld [vmem:[%s2428 + $0x28] sm:$0xff]
  %v2435 = vld [vmem:[%s2428 + $0x30] sm:$0xff]
  %v2436 = vld [vmem:[%s2428 + $0x38] sm:$0xff]
  %2437 = vmatprep.subr.bf16.mxu0 %v1799
  %2438 = vmatpush1.bf16.msra.mxu0 %v1798
  %2439 = vmatprep.subr.bf16.mxu0 %v1803
  %2440 = vmatpush1.bf16.msra.mxu0 %v1802
  %2441 = vmatprep.subr.bf16.mxu0 %v1807
  %2442 = vmatpush1.bf16.msra.mxu0 %v1806
  %2443 = vmatprep.subr.bf16.mxu0 %v1811
  %2444 = vmatpush1.bf16.msra.mxu0 %v1810
  %2445 = vmatprep.subr.bf16.mxu0 %v1815
  %2446 = vmatpush1.bf16.msra.mxu0 %v1814
  %2447 = vmatprep.subr.bf16.mxu0 %v1819
  %2448 = vmatpush1.bf16.msra.mxu0 %v1818
  %2449 = vmatprep.subr.bf16.mxu0 %v1823
  %2450 = vmatpush1.bf16.msra.mxu0 %v1822
  %2451 = vmatprep.subr.bf16.mxu0 %v1827
  %2452 = vmatpush1.bf16.msra.mxu0 %v1826
  %2453 = vmatprep.subr.bf16.mxu0 0
  %2454 = vmatpush1.bf16.msra.mxu0 0
  %2455 = vmatprep.subr.bf16.mxu0 0
  %2456 = vmatpush1.bf16.msra.mxu0 0
  %2457 = vmatprep.subr.bf16.mxu0 0
  %2458 = vmatpush1.bf16.msra.mxu0 0
  %2459 = vmatprep.subr.bf16.mxu0 0
  %2460 = vmatpush1.bf16.msra.mxu0 0
  %2461 = vmatprep.subr.bf16.mxu0 0
  %2462 = vmatpush1.bf16.msra.mxu0 0
  %2463 = vmatprep.subr.bf16.mxu0 0
  %2464 = vmatpush1.bf16.msra.mxu0 0
  %2465 = vmatprep.subr.bf16.mxu0 0
  %2466 = vmatpush1.bf16.msra.mxu0 0
  %2467 = vmatprep.subr.bf16.mxu0 0
  %2468 = vmatpush1.bf16.msra.mxu0 0
  %2469 = vmatprep.mubr.bf16.mxu0 0
  %2470 = vmatmul.mubr.bf16.gmra.mrb[0].mxu0 %v2423
  %v2471 = vpop.f32.mrb[0].mxu0
  %v2472 = vadd.f32 0.0, %v2471
  %v2473 = vpop.f32.mrb[0].mxu0
  %v2474 = vadd.f32 0.0, %v2473
  %v2475 = vpop.f32.mrb[0].mxu0
  %v2476 = vadd.f32 0.0, %v2475
  %v2477 = vpop.f32.mrb[0].mxu0
  %v2478 = vadd.f32 0.0, %v2477
  %2479 = vdwg.mxu0
  %2480 = vmatprep.subr.bf16.mxu0 %v1801
  %2481 = vmatpush1.bf16.msra.mxu0 %v1800
  %2482 = vmatprep.subr.bf16.mxu0 %v1805
  %2483 = vmatpush1.bf16.msra.mxu0 %v1804
  %2484 = vmatprep.subr.bf16.mxu0 %v1809
  %2485 = vmatpush1.bf16.msra.mxu0 %v1808
  %2486 = vmatprep.subr.bf16.mxu0 %v1813
  %2487 = vmatpush1.bf16.msra.mxu0 %v1812
  %2488 = vmatprep.subr.bf16.mxu0 %v1817
  %2489 = vmatpush1.bf16.msra.mxu0 %v1816
  %2490 = vmatprep.subr.bf16.mxu0 %v1821
  %2491 = vmatpush1.bf16.msra.mxu0 %v1820
  %2492 = vmatprep.subr.bf16.mxu0 %v1825
  %2493 = vmatpush1.bf16.msra.mxu0 %v1824
  %2494 = vmatprep.subr.bf16.mxu0 %v1829
  %2495 = vmatpush1.bf16.msra.mxu0 %v1828
  %2496 = vmatprep.subr.bf16.mxu0 0
  %2497 = vmatpush1.bf16.msra.mxu0 0
  %2498 = vmatprep.subr.bf16.mxu0 0
  %2499 = vmatpush1.bf16.msra.mxu0 0
  %2500 = vmatprep.subr.bf16.mxu0 0
  %2501 = vmatpush1.bf16.msra.mxu0 0
  %2502 = vmatprep.subr.bf16.mxu0 0
  %2503 = vmatpush1.bf16.msra.mxu0 0
  %2504 = vmatprep.subr.bf16.mxu0 0
  %2505 = vmatpush1.bf16.msra.mxu0 0
  %2506 = vmatprep.subr.bf16.mxu0 0
  %2507 = vmatpush1.bf16.msra.mxu0 0
  %2508 = vmatprep.subr.bf16.mxu0 0
  %2509 = vmatpush1.bf16.msra.mxu0 0
  %2510 = vmatprep.subr.bf16.mxu0 0
  %2511 = vmatpush1.bf16.msra.mxu0 0
  %2512 = vmatprep.mubr.bf16.mxu0 0
  %2513 = vmatmul.mubr.bf16.gmra.mrb[0].mxu0 %v2423
  %v2514 = vpop.f32.mrb[0].mxu0
  %v2515 = vadd.f32 0.0, %v2514
  %v2516 = vpop.f32.mrb[0].mxu0
  %v2517 = vadd.f32 0.0, %v2516
  %v2518 = vpop.f32.mrb[0].mxu0
  %v2519 = vadd.f32 0.0, %v2518
  %v2520 = vpop.f32.mrb[0].mxu0
  %v2521 = vadd.f32 0.0, %v2520
  %2522 = vdwg.mxu0
  %v2523 = vadd.f32 %v2429, %v2472
  %v2524 = vadd.f32 %v2430, %v2474
  %v2525 = vadd.f32 %v2431, %v2515
  %v2526 = vadd.f32 %v2432, %v2517
  %v2527 = vadd.f32 %v2433, %v2476
  %v2528 = vadd.f32 %v2434, %v2478
  %v2529 = vadd.f32 %v2435, %v2519
  %v2530 = vadd.f32 %v2436, %v2521
  %v2531 = vmul.f32 %v2523, 0.5
  %v2532 = vmul.f32 %v2527, 0.5
  %v2533 = vtanh.pop %v2531
  %v2534 = vtanh.pop %v2532
  %v2535 = vmul.f32 %v2533, 0.5
  %v2536 = vmul.f32 %v2534, 0.5
  %v2537 = vadd.f32 %v2535, 0.5
  %v2538 = vadd.f32 %v2536, 0.5
  %v2539 = vmul.f32 %v2524, 0.5
  %v2540 = vmul.f32 %v2528, 0.5
  %v2541 = vtanh.pop %v2539
  %v2542 = vtanh.pop %v2540
  %v2543 = vmul.f32 %v2541, 0.5
  %v2544 = vmul.f32 %v2542, 0.5
  %v2545 = vadd.f32 %v2543, 0.5
  %v2546 = vadd.f32 %v2544, 0.5
  %v2547 = vtanh.pop %v2525
  %v2548 = vtanh.pop %v2529
  %v2549 = vmul.f32 %v2526, 0.5
  %v2550 = vmul.f32 %v2530, 0.5
  %v2551 = vtanh.pop %v2549
  %v2552 = vtanh.pop %v2550
  %v2553 = vmul.f32 %v2551, 0.5
  %v2554 = vmul.f32 %v2552, 0.5
  %v2555 = vadd.f32 %v2553, 0.5
  %v2556 = vadd.f32 %v2554, 0.5
  %v2557 = vmul.f32 %v2545, %v2417
  %v2558 = vmul.f32 %v2546, %v2418
  %v2559 = vmul.f32 %v2537, %v2547
  %v2560 = vmul.f32 %v2538, %v2548
  %v2561 = vadd.f32 %v2557, %v2559
  %v2562 = vadd.f32 %v2558, %v2560
  %v2563 = vtanh.pop %v2561
  %v2564 = vtanh.pop %v2562
  %v2565 = vmul.f32 %v2555, %v2563
  %v2566 = vmul.f32 %v2556, %v2564
  %v2567 = vpack.c.bf16 %v2566, %v2565
  %s2568 = scalar_lea.vmem [#allocation2], 32
  %2569 = vst [vmem:[%s2568] sm:$0xff] %v2567
  %s2570 = smul.u32 10, 4
  %s2571 = smul.addr %s2570, 8
  %s2572 = scalar_lea.vmem [#allocation3], %s2571
  %v2573 = vld [vmem:[%s2572] sm:$0xff]
  %v2574 = vld [vmem:[%s2572 + $0x8] sm:$0xff]
  %v2575 = vld [vmem:[%s2572 + $0x10] sm:$0xff]
  %v2576 = vld [vmem:[%s2572 + $0x18] sm:$0xff]
  %v2577 = vld [vmem:[%s2572 + $0x20] sm:$0xff]
  %v2578 = vld [vmem:[%s2572 + $0x28] sm:$0xff]
  %v2579 = vld [vmem:[%s2572 + $0x30] sm:$0xff]
  %v2580 = vld [vmem:[%s2572 + $0x38] sm:$0xff]
  %2581 = vmatprep.subr.bf16.mxu0 %v1799
  %2582 = vmatpush1.bf16.msra.mxu0 %v1798
  %2583 = vmatprep.subr.bf16.mxu0 %v1803
  %2584 = vmatpush1.bf16.msra.mxu0 %v1802
  %2585 = vmatprep.subr.bf16.mxu0 %v1807
  %2586 = vmatpush1.bf16.msra.mxu0 %v1806
  %2587 = vmatprep.subr.bf16.mxu0 %v1811
  %2588 = vmatpush1.bf16.msra.mxu0 %v1810
  %2589 = vmatprep.subr.bf16.mxu0 %v1815
  %2590 = vmatpush1.bf16.msra.mxu0 %v1814
  %2591 = vmatprep.subr.bf16.mxu0 %v1819
  %2592 = vmatpush1.bf16.msra.mxu0 %v1818
  %2593 = vmatprep.subr.bf16.mxu0 %v1823
  %2594 = vmatpush1.bf16.msra.mxu0 %v1822
  %2595 = vmatprep.subr.bf16.mxu0 %v1827
  %2596 = vmatpush1.bf16.msra.mxu0 %v1826
  %2597 = vmatprep.subr.bf16.mxu0 0
  %2598 = vmatpush1.bf16.msra.mxu0 0
  %2599 = vmatprep.subr.bf16.mxu0 0
  %2600 = vmatpush1.bf16.msra.mxu0 0
  %2601 = vmatprep.subr.bf16.mxu0 0
  %2602 = vmatpush1.bf16.msra.mxu0 0
  %2603 = vmatprep.subr.bf16.mxu0 0
  %2604 = vmatpush1.bf16.msra.mxu0 0
  %2605 = vmatprep.subr.bf16.mxu0 0
  %2606 = vmatpush1.bf16.msra.mxu0 0
  %2607 = vmatprep.subr.bf16.mxu0 0
  %2608 = vmatpush1.bf16.msra.mxu0 0
  %2609 = vmatprep.subr.bf16.mxu0 0
  %2610 = vmatpush1.bf16.msra.mxu0 0
  %2611 = vmatprep.subr.bf16.mxu0 0
  %2612 = vmatpush1.bf16.msra.mxu0 0
  %2613 = vmatprep.mubr.bf16.mxu0 0
  %2614 = vmatmul.mubr.bf16.gmra.mrb[0].mxu0 %v2567
  %v2615 = vpop.f32.mrb[0].mxu0
  %v2616 = vadd.f32 0.0, %v2615
  %v2617 = vpop.f32.mrb[0].mxu0
  %v2618 = vadd.f32 0.0, %v2617
  %v2619 = vpop.f32.mrb[0].mxu0
  %v2620 = vadd.f32 0.0, %v2619
  %v2621 = vpop.f32.mrb[0].mxu0
  %v2622 = vadd.f32 0.0, %v2621
  %2623 = vdwg.mxu0
  %2624 = vmatprep.subr.bf16.mxu0 %v1801
  %2625 = vmatpush1.bf16.msra.mxu0 %v1800
  %2626 = vmatprep.subr.bf16.mxu0 %v1805
  %2627 = vmatpush1.bf16.msra.mxu0 %v1804
  %2628 = vmatprep.subr.bf16.mxu0 %v1809
  %2629 = vmatpush1.bf16.msra.mxu0 %v1808
  %2630 = vmatprep.subr.bf16.mxu0 %v1813
  %2631 = vmatpush1.bf16.msra.mxu0 %v1812
  %2632 = vmatprep.subr.bf16.mxu0 %v1817
  %2633 = vmatpush1.bf16.msra.mxu0 %v1816
  %2634 = vmatprep.subr.bf16.mxu0 %v1821
  %2635 = vmatpush1.bf16.msra.mxu0 %v1820
  %2636 = vmatprep.subr.bf16.mxu0 %v1825
  %2637 = vmatpush1.bf16.msra.mxu0 %v1824
  %2638 = vmatprep.subr.bf16.mxu0 %v1829
  %2639 = vmatpush1.bf16.msra.mxu0 %v1828
  %2640 = vmatprep.subr.bf16.mxu0 0
  %2641 = vmatpush1.bf16.msra.mxu0 0
  %2642 = vmatprep.subr.bf16.mxu0 0
  %2643 = vmatpush1.bf16.msra.mxu0 0
  %2644 = vmatprep.subr.bf16.mxu0 0
  %2645 = vmatpush1.bf16.msra.mxu0 0
  %2646 = vmatprep.subr.bf16.mxu0 0
  %2647 = vmatpush1.bf16.msra.mxu0 0
  %2648 = vmatprep.subr.bf16.mxu0 0
  %2649 = vmatpush1.bf16.msra.mxu0 0
  %2650 = vmatprep.subr.bf16.mxu0 0
  %2651 = vmatpush1.bf16.msra.mxu0 0
  %2652 = vmatprep.subr.bf16.mxu0 0
  %2653 = vmatpush1.bf16.msra.mxu0 0
  %2654 = vmatprep.subr.bf16.mxu0 0
  %2655 = vmatpush1.bf16.msra.mxu0 0
  %2656 = vmatprep.mubr.bf16.mxu0 0
  %2657 = vmatmul.mubr.bf16.gmra.mrb[0].mxu0 %v2567
  %v2658 = vpop.f32.mrb[0].mxu0
  %v2659 = vadd.f32 0.0, %v2658
  %v2660 = vpop.f32.mrb[0].mxu0
  %v2661 = vadd.f32 0.0, %v2660
  %v2662 = vpop.f32.mrb[0].mxu0
  %v2663 = vadd.f32 0.0, %v2662
  %v2664 = vpop.f32.mrb[0].mxu0
  %v2665 = vadd.f32 0.0, %v2664
  %2666 = vdwg.mxu0
  %v2667 = vadd.f32 %v2573, %v2616
  %v2668 = vadd.f32 %v2574, %v2618
  %v2669 = vadd.f32 %v2575, %v2659
  %v2670 = vadd.f32 %v2576, %v2661
  %v2671 = vadd.f32 %v2577, %v2620
  %v2672 = vadd.f32 %v2578, %v2622
  %v2673 = vadd.f32 %v2579, %v2663
  %v2674 = vadd.f32 %v2580, %v2665
  %v2675 = vmul.f32 %v2667, 0.5
  %v2676 = vmul.f32 %v2671, 0.5
  %v2677 = vtanh.pop %v2675
  %v2678 = vtanh.pop %v2676
  %v2679 = vmul.f32 %v2677, 0.5
  %v2680 = vmul.f32 %v2678, 0.5
  %v2681 = vadd.f32 %v2679, 0.5
  %v2682 = vadd.f32 %v2680, 0.5
  %v2683 = vmul.f32 %v2668, 0.5
  %v2684 = vmul.f32 %v2672, 0.5
  %v2685 = vtanh.pop %v2683
  %v2686 = vtanh.pop %v2684
  %v2687 = vmul.f32 %v2685, 0.5
  %v2688 = vmul.f32 %v2686, 0.5
  %v2689 = vadd.f32 %v2687, 0.5
  %v2690 = vadd.f32 %v2688, 0.5
  %v2691 = vtanh.pop %v2669
  %v2692 = vtanh.pop %v2673
  %v2693 = vmul.f32 %v2670, 0.5
  %v2694 = vmul.f32 %v2674, 0.5
  %v2695 = vtanh.pop %v2693
  %v2696 = vtanh.pop %v2694
  %v2697 = vmul.f32 %v2695, 0.5
  %v2698 = vmul.f32 %v2696, 0.5
  %v2699 = vadd.f32 %v2697, 0.5
  %v2700 = vadd.f32 %v2698, 0.5
  %v2701 = vmul.f32 %v2689, %v2561
  %v2702 = vmul.f32 %v2690, %v2562
  %v2703 = vmul.f32 %v2681, %v2691
  %v2704 = vmul.f32 %v2682, %v2692
  %v2705 = vadd.f32 %v2701, %v2703
  %v2706 = vadd.f32 %v2702, %v2704
  %v2707 = vtanh.pop %v2705
  %v2708 = vtanh.pop %v2706
  %v2709 = vmul.f32 %v2699, %v2707
  %v2710 = vmul.f32 %v2700, %v2708
  %v2711 = vpack.c.bf16 %v2710, %v2709
  %s2712 = scalar_lea.vmem [#allocation2], 40
  %2713 = vst [vmem:[%s2712] sm:$0xff] %v2711
  %s2714 = smul.u32 12, 4
  %s2715 = smul.addr %s2714, 8
  %s2716 = scalar_lea.vmem [#allocation3], %s2715
  %v2717 = vld [vmem:[%s2716] sm:$0xff]
  %v2718 = vld [vmem:[%s2716 + $0x8] sm:$0xff]
  %v2719 = vld [vmem:[%s2716 + $0x10] sm:$0xff]
  %v2720 = vld [vmem:[%s2716 + $0x18] sm:$0xff]
  %v2721 = vld [vmem:[%s2716 + $0x20] sm:$0xff]
  %v2722 = vld [vmem:[%s2716 + $0x28] sm:$0xff]
  %v2723 = vld [vmem:[%s2716 + $0x30] sm:$0xff]
  %v2724 = vld [vmem:[%s2716 + $0x38] sm:$0xff]
  %2725 = vmatprep.subr.bf16.mxu0 %v1799
  %2726 = vmatpush1.bf16.msra.mxu0 %v1798
  %2727 = vmatprep.subr.bf16.mxu0 %v1803
  %2728 = vmatpush1.bf16.msra.mxu0 %v1802
  %2729 = vmatprep.subr.bf16.mxu0 %v1807
  %2730 = vmatpush1.bf16.msra.mxu0 %v1806
  %2731 = vmatprep.subr.bf16.mxu0 %v1811
  %2732 = vmatpush1.bf16.msra.mxu0 %v1810
  %2733 = vmatprep.subr.bf16.mxu0 %v1815
  %2734 = vmatpush1.bf16.msra.mxu0 %v1814
  %2735 = vmatprep.subr.bf16.mxu0 %v1819
  %2736 = vmatpush1.bf16.msra.mxu0 %v1818
  %2737 = vmatprep.subr.bf16.mxu0 %v1823
  %2738 = vmatpush1.bf16.msra.mxu0 %v1822
  %2739 = vmatprep.subr.bf16.mxu0 %v1827
  %2740 = vmatpush1.bf16.msra.mxu0 %v1826
  %2741 = vmatprep.subr.bf16.mxu0 0
  %2742 = vmatpush1.bf16.msra.mxu0 0
  %2743 = vmatprep.subr.bf16.mxu0 0
  %2744 = vmatpush1.bf16.msra.mxu0 0
  %2745 = vmatprep.subr.bf16.mxu0 0
  %2746 = vmatpush1.bf16.msra.mxu0 0
  %2747 = vmatprep.subr.bf16.mxu0 0
  %2748 = vmatpush1.bf16.msra.mxu0 0
  %2749 = vmatprep.subr.bf16.mxu0 0
  %2750 = vmatpush1.bf16.msra.mxu0 0
  %2751 = vmatprep.subr.bf16.mxu0 0
  %2752 = vmatpush1.bf16.msra.mxu0 0
  %2753 = vmatprep.subr.bf16.mxu0 0
  %2754 = vmatpush1.bf16.msra.mxu0 0
  %2755 = vmatprep.subr.bf16.mxu0 0
  %2756 = vmatpush1.bf16.msra.mxu0 0
  %2757 = vmatprep.mubr.bf16.mxu0 0
  %2758 = vmatmul.mubr.bf16.gmra.mrb[0].mxu0 %v2711
  %v2759 = vpop.f32.mrb[0].mxu0
  %v2760 = vadd.f32 0.0, %v2759
  %v2761 = vpop.f32.mrb[0].mxu0
  %v2762 = vadd.f32 0.0, %v2761
  %v2763 = vpop.f32.mrb[0].mxu0
  %v2764 = vadd.f32 0.0, %v2763
  %v2765 = vpop.f32.mrb[0].mxu0
  %v2766 = vadd.f32 0.0, %v2765
  %2767 = vdwg.mxu0
  %2768 = vmatprep.subr.bf16.mxu0 %v1801
  %2769 = vmatpush1.bf16.msra.mxu0 %v1800
  %2770 = vmatprep.subr.bf16.mxu0 %v1805
  %2771 = vmatpush1.bf16.msra.mxu0 %v1804
  %2772 = vmatprep.subr.bf16.mxu0 %v1809
  %2773 = vmatpush1.bf16.msra.mxu0 %v1808
  %2774 = vmatprep.subr.bf16.mxu0 %v1813
  %2775 = vmatpush1.bf16.msra.mxu0 %v1812
  %2776 = vmatprep.subr.bf16.mxu0 %v1817
  %2777 = vmatpush1.bf16.msra.mxu0 %v1816
  %2778 = vmatprep.subr.bf16.mxu0 %v1821
  %2779 = vmatpush1.bf16.msra.mxu0 %v1820
  %2780 = vmatprep.subr.bf16.mxu0 %v1825
  %2781 = vmatpush1.bf16.msra.mxu0 %v1824
  %2782 = vmatprep.subr.bf16.mxu0 %v1829
  %2783 = vmatpush1.bf16.msra.mxu0 %v1828
  %2784 = vmatprep.subr.bf16.mxu0 0
  %2785 = vmatpush1.bf16.msra.mxu0 0
  %2786 = vmatprep.subr.bf16.mxu0 0
  %2787 = vmatpush1.bf16.msra.mxu0 0
  %2788 = vmatprep.subr.bf16.mxu0 0
  %2789 = vmatpush1.bf16.msra.mxu0 0
  %2790 = vmatprep.subr.bf16.mxu0 0
  %2791 = vmatpush1.bf16.msra.mxu0 0
  %2792 = vmatprep.subr.bf16.mxu0 0
  %2793 = vmatpush1.bf16.msra.mxu0 0
  %2794 = vmatprep.subr.bf16.mxu0 0
  %2795 = vmatpush1.bf16.msra.mxu0 0
  %2796 = vmatprep.subr.bf16.mxu0 0
  %2797 = vmatpush1.bf16.msra.mxu0 0
  %2798 = vmatprep.subr.bf16.mxu0 0
  %2799 = vmatpush1.bf16.msra.mxu0 0
  %2800 = vmatprep.mubr.bf16.mxu0 0
  %2801 = vmatmul.mubr.bf16.gmra.mrb[0].mxu0 %v2711
  %v2802 = vpop.f32.mrb[0].mxu0
  %v2803 = vadd.f32 0.0, %v2802
  %v2804 = vpop.f32.mrb[0].mxu0
  %v2805 = vadd.f32 0.0, %v2804
  %v2806 = vpop.f32.mrb[0].mxu0
  %v2807 = vadd.f32 0.0, %v2806
  %v2808 = vpop.f32.mrb[0].mxu0
  %v2809 = vadd.f32 0.0, %v2808
  %2810 = vdwg.mxu0
  %v2811 = vadd.f32 %v2717, %v2760
  %v2812 = vadd.f32 %v2718, %v2762
  %v2813 = vadd.f32 %v2719, %v2803
  %v2814 = vadd.f32 %v2720, %v2805
  %v2815 = vadd.f32 %v2721, %v2764
  %v2816 = vadd.f32 %v2722, %v2766
  %v2817 = vadd.f32 %v2723, %v2807
  %v2818 = vadd.f32 %v2724, %v2809
  %v2819 = vmul.f32 %v2811, 0.5
  %v2820 = vmul.f32 %v2815, 0.5
  %v2821 = vtanh.pop %v2819
  %v2822 = vtanh.pop %v2820
  %v2823 = vmul.f32 %v2821, 0.5
  %v2824 = vmul.f32 %v2822, 0.5
  %v2825 = vadd.f32 %v2823, 0.5
  %v2826 = vadd.f32 %v2824, 0.5
  %v2827 = vmul.f32 %v2812, 0.5
  %v2828 = vmul.f32 %v2816, 0.5
  %v2829 = vtanh.pop %v2827
  %v2830 = vtanh.pop %v2828
  %v2831 = vmul.f32 %v2829, 0.5
  %v2832 = vmul.f32 %v2830, 0.5
  %v2833 = vadd.f32 %v2831, 0.5
  %v2834 = vadd.f32 %v2832, 0.5
  %v2835 = vtanh.pop %v2813
  %v2836 = vtanh.pop %v2817
  %v2837 = vmul.f32 %v2814, 0.5
  %v2838 = vmul.f32 %v2818, 0.5
  %v2839 = vtanh.pop %v2837
  %v2840 = vtanh.pop %v2838
  %v2841 = vmul.f32 %v2839, 0.5
  %v2842 = vmul.f32 %v2840, 0.5
  %v2843 = vadd.f32 %v2841, 0.5
  %v2844 = vadd.f32 %v2842, 0.5
  %v2845 = vmul.f32 %v2833, %v2705
  %v2846 = vmul.f32 %v2834, %v2706
  %v2847 = vmul.f32 %v2825, %v2835
  %v2848 = vmul.f32 %v2826, %v2836
  %v2849 = vadd.f32 %v2845, %v2847
  %v2850 = vadd.f32 %v2846, %v2848
  %v2851 = vtanh.pop %v2849
  %v2852 = vtanh.pop %v2850
  %v2853 = vmul.f32 %v2843, %v2851
  %v2854 = vmul.f32 %v2844, %v2852
  %v2855 = vpack.c.bf16 %v2854, %v2853
  %s2856 = scalar_lea.vmem [#allocation2], 48
  %2857 = vst [vmem:[%s2856] sm:$0xff] %v2855
  %s2858 = smul.u32 14, 4
  %s2859 = smul.addr %s2858, 8
  %s2860 = scalar_lea.vmem [#allocation3], %s2859
  %v2861 = vld [vmem:[%s2860] sm:$0xff]
  %v2862 = vld [vmem:[%s2860 + $0x8] sm:$0xff]
  %v2863 = vld [vmem:[%s2860 + $0x10] sm:$0xff]
  %v2864 = vld [vmem:[%s2860 + $0x18] sm:$0xff]
  %v2865 = vld [vmem:[%s2860 + $0x20] sm:$0xff]
  %v2866 = vld [vmem:[%s2860 + $0x28] sm:$0xff]
  %v2867 = vld [vmem:[%s2860 + $0x30] sm:$0xff]
  %v2868 = vld [vmem:[%s2860 + $0x38] sm:$0xff]
  %2869 = vmatprep.subr.bf16.mxu0 %v1799
  %2870 = vmatpush1.bf16.msra.mxu0 %v1798
  %2871 = vmatprep.subr.bf16.mxu0 %v1803
  %2872 = vmatpush1.bf16.msra.mxu0 %v1802
  %2873 = vmatprep.subr.bf16.mxu0 %v1807
  %2874 = vmatpush1.bf16.msra.mxu0 %v1806
  %2875 = vmatprep.subr.bf16.mxu0 %v1811
  %2876 = vmatpush1.bf16.msra.mxu0 %v1810
  %2877 = vmatprep.subr.bf16.mxu0 %v1815
  %2878 = vmatpush1.bf16.msra.mxu0 %v1814
  %2879 = vmatprep.subr.bf16.mxu0 %v1819
  %2880 = vmatpush1.bf16.msra.mxu0 %v1818
  %2881 = vmatprep.subr.bf16.mxu0 %v1823
  %2882 = vmatpush1.bf16.msra.mxu0 %v1822
  %2883 = vmatprep.subr.bf16.mxu0 %v1827
  %2884 = vmatpush1.bf16.msra.mxu0 %v1826
  %2885 = vmatprep.subr.bf16.mxu0 0
  %2886 = vmatpush1.bf16.msra.mxu0 0
  %2887 = vmatprep.subr.bf16.mxu0 0
  %2888 = vmatpush1.bf16.msra.mxu0 0
  %2889 = vmatprep.subr.bf16.mxu0 0
  %2890 = vmatpush1.bf16.msra.mxu0 0
  %2891 = vmatprep.subr.bf16.mxu0 0
  %2892 = vmatpush1.bf16.msra.mxu0 0
  %2893 = vmatprep.subr.bf16.mxu0 0
  %2894 = vmatpush1.bf16.msra.mxu0 0
  %2895 = vmatprep.subr.bf16.mxu0 0
  %2896 = vmatpush1.bf16.msra.mxu0 0
  %2897 = vmatprep.subr.bf16.mxu0 0
  %2898 = vmatpush1.bf16.msra.mxu0 0
  %2899 = vmatprep.subr.bf16.mxu0 0
  %2900 = vmatpush1.bf16.msra.mxu0 0
  %2901 = vmatprep.mubr.bf16.mxu0 0
  %2902 = vmatmul.mubr.bf16.gmra.mrb[0].mxu0 %v2855
  %v2903 = vpop.f32.mrb[0].mxu0
  %v2904 = vadd.f32 0.0, %v2903
  %v2905 = vpop.f32.mrb[0].mxu0
  %v2906 = vadd.f32 0.0, %v2905
  %v2907 = vpop.f32.mrb[0].mxu0
  %v2908 = vadd.f32 0.0, %v2907
  %v2909 = vpop.f32.mrb[0].mxu0
  %v2910 = vadd.f32 0.0, %v2909
  %2911 = vdwg.mxu0
  %2912 = vmatprep.subr.bf16.mxu0 %v1801
  %2913 = vmatpush1.bf16.msra.mxu0 %v1800
  %2914 = vmatprep.subr.bf16.mxu0 %v1805
  %2915 = vmatpush1.bf16.msra.mxu0 %v1804
  %2916 = vmatprep.subr.bf16.mxu0 %v1809
  %2917 = vmatpush1.bf16.msra.mxu0 %v1808
  %2918 = vmatprep.subr.bf16.mxu0 %v1813
  %2919 = vmatpush1.bf16.msra.mxu0 %v1812
  %2920 = vmatprep.subr.bf16.mxu0 %v1817
  %2921 = vmatpush1.bf16.msra.mxu0 %v1816
  %2922 = vmatprep.subr.bf16.mxu0 %v1821
  %2923 = vmatpush1.bf16.msra.mxu0 %v1820
  %2924 = vmatprep.subr.bf16.mxu0 %v1825
  %2925 = vmatpush1.bf16.msra.mxu0 %v1824
  %2926 = vmatprep.subr.bf16.mxu0 %v1829
  %2927 = vmatpush1.bf16.msra.mxu0 %v1828
  %2928 = vmatprep.subr.bf16.mxu0 0
  %2929 = vmatpush1.bf16.msra.mxu0 0
  %2930 = vmatprep.subr.bf16.mxu0 0
  %2931 = vmatpush1.bf16.msra.mxu0 0
  %2932 = vmatprep.subr.bf16.mxu0 0
  %2933 = vmatpush1.bf16.msra.mxu0 0
  %2934 = vmatprep.subr.bf16.mxu0 0
  %2935 = vmatpush1.bf16.msra.mxu0 0
  %2936 = vmatprep.subr.bf16.mxu0 0
  %2937 = vmatpush1.bf16.msra.mxu0 0
  %2938 = vmatprep.subr.bf16.mxu0 0
  %2939 = vmatpush1.bf16.msra.mxu0 0
  %2940 = vmatprep.subr.bf16.mxu0 0
  %2941 = vmatpush1.bf16.msra.mxu0 0
  %2942 = vmatprep.subr.bf16.mxu0 0
  %2943 = vmatpush1.bf16.msra.mxu0 0
  %2944 = vmatprep.mubr.bf16.mxu0 0
  %2945 = vmatmul.mubr.bf16.gmra.mrb[0].mxu0 %v2855
  %v2946 = vpop.f32.mrb[0].mxu0
  %v2947 = vadd.f32 0.0, %v2946
  %v2948 = vpop.f32.mrb[0].mxu0
  %v2949 = vadd.f32 0.0, %v2948
  %v2950 = vpop.f32.mrb[0].mxu0
  %v2951 = vadd.f32 0.0, %v2950
  %v2952 = vpop.f32.mrb[0].mxu0
  %v2953 = vadd.f32 0.0, %v2952
  %2954 = vdwg.mxu0
  %v2955 = vadd.f32 %v2861, %v2904
  %v2956 = vadd.f32 %v2862, %v2906
  %v2957 = vadd.f32 %v2863, %v2947
  %v2958 = vadd.f32 %v2864, %v2949
  %v2959 = vadd.f32 %v2865, %v2908
  %v2960 = vadd.f32 %v2866, %v2910
  %v2961 = vadd.f32 %v2867, %v2951
  %v2962 = vadd.f32 %v2868, %v2953
  %v2963 = vmul.f32 %v2955, 0.5
  %v2964 = vmul.f32 %v2959, 0.5
  %v2965 = vtanh.pop %v2963
  %v2966 = vtanh.pop %v2964
  %v2967 = vmul.f32 %v2965, 0.5
  %v2968 = vmul.f32 %v2966, 0.5
  %v2969 = vadd.f32 %v2967, 0.5
  %v2970 = vadd.f32 %v2968, 0.5
  %v2971 = vmul.f32 %v2956, 0.5
  %v2972 = vmul.f32 %v2960, 0.5
  %v2973 = vtanh.pop %v2971
  %v2974 = vtanh.pop %v2972
  %v2975 = vmul.f32 %v2973, 0.5
  %v2976 = vmul.f32 %v2974, 0.5
  %v2977 = vadd.f32 %v2975, 0.5
  %v2978 = vadd.f32 %v2976, 0.5
  %v2979 = vtanh.pop %v2957
  %v2980 = vtanh.pop %v2961
  %v2981 = vmul.f32 %v2958, 0.5
  %v2982 = vmul.f32 %v2962, 0.5
  %v2983 = vtanh.pop %v2981
  %v2984 = vtanh.pop %v2982
  %v2985 = vmul.f32 %v2983, 0.5
  %v2986 = vmul.f32 %v2984, 0.5
  %v2987 = vadd.f32 %v2985, 0.5
  %v2988 = vadd.f32 %v2986, 0.5
  %v2989 = vmul.f32 %v2977, %v2849
  %v2990 = vmul.f32 %v2978, %v2850
  %v2991 = vmul.f32 %v2969, %v2979
  %v2992 = vmul.f32 %v2970, %v2980
  %v2993 = vadd.f32 %v2989, %v2991
  %v2994 = vadd.f32 %v2990, %v2992
  %v2995 = vtanh.pop %v2993
  %v2996 = vtanh.pop %v2994
  %v2997 = vmul.f32 %v2987, %v2995
  %v2998 = vmul.f32 %v2988, %v2996
  %v2999 = vpack.c.bf16 %v2998, %v2997
  %s3000 = scalar_lea.vmem [#allocation2], 56
  %3001 = vst [vmem:[%s3000] sm:$0xff] %v2999
  %3002 = vst [vmem:[%s14] sm:$0xff] %v2997
  %3003 = vst [vmem:[%s14 + $0x8] sm:$0xff] %v2998
  %3004 = vst [vmem:[%s15] sm:$0xff] %v2993
  %3005 = vst [vmem:[%s15 + $0x8] sm:$0xff] %v2994
  %v3006 = vld [vmem:[#allocation2] sm:$0xff]
  %v3007 = vld [vmem:[#allocation2 + $0x8] sm:$0xff]
  %v3008 = vld [vmem:[#allocation2 + $0x10] sm:$0xff]
  %v3009 = vld [vmem:[#allocation2 + $0x18] sm:$0xff]
  %v3010 = vld [vmem:[#allocation2 + $0x20] sm:$0xff]
  %v3011 = vld [vmem:[#allocation2 + $0x28] sm:$0xff]
  %v3012 = vld [vmem:[#allocation2 + $0x30] sm:$0xff]
  %v3013 = vld [vmem:[#allocation2 + $0x38] sm:$0xff]
  %v3014 = vld [vmem:[%s2] sm:$0xff]
  %v3015 = vld [vmem:[%s2 + $0x8] sm:$0xff]
  %v3016 = vld [vmem:[%s2 + $0x10] sm:$0xff]
  %v3017 = vld [vmem:[%s2 + $0x18] sm:$0xff]
  %v3018 = vld [vmem:[%s2 + $0x20] sm:$0xff]
  %v3019 = vld [vmem:[%s2 + $0x28] sm:$0xff]
  %v3020 = vld [vmem:[%s2 + $0x30] sm:$0xff]
  %v3021 = vld [vmem:[%s2 + $0x38] sm:$0xff]
  %v3022 = vld [vmem:[%s2 + $0x40] sm:$0xff]
  %v3023 = vld [vmem:[%s2 + $0x48] sm:$0xff]
  %v3024 = vld [vmem:[%s2 + $0x50] sm:$0xff]
  %v3025 = vld [vmem:[%s2 + $0x58] sm:$0xff]
  %v3026 = vld [vmem:[%s2 + $0x60] sm:$0xff]
  %v3027 = vld [vmem:[%s2 + $0x68] sm:$0xff]
  %v3028 = vld [vmem:[%s2 + $0x70] sm:$0xff]
  %v3029 = vld [vmem:[%s2 + $0x78] sm:$0xff]
  %v3030 = vld [vmem:[%s2 + $0x80] sm:$0xff]
  %v3031 = vld [vmem:[%s2 + $0x88] sm:$0xff]
  %v3032 = vld [vmem:[%s2 + $0x90] sm:$0xff]
  %v3033 = vld [vmem:[%s2 + $0x98] sm:$0xff]
  %v3034 = vld [vmem:[%s2 + $0xa0] sm:$0xff]
  %v3035 = vld [vmem:[%s2 + $0xa8] sm:$0xff]
  %v3036 = vld [vmem:[%s2 + $0xb0] sm:$0xff]
  %v3037 = vld [vmem:[%s2 + $0xb8] sm:$0xff]
  %v3038 = vld [vmem:[%s2 + $0xc0] sm:$0xff]
  %v3039 = vld [vmem:[%s2 + $0xc8] sm:$0xff]
  %v3040 = vld [vmem:[%s2 + $0xd0] sm:$0xff]
  %v3041 = vld [vmem:[%s2 + $0xd8] sm:$0xff]
  %v3042 = vld [vmem:[%s2 + $0xe0] sm:$0xff]
  %v3043 = vld [vmem:[%s2 + $0xe8] sm:$0xff]
  %v3044 = vld [vmem:[%s2 + $0xf0] sm:$0xff]
  %v3045 = vld [vmem:[%s2 + $0xf8] sm:$0xff]
  %s3046 = scalar_lea.vmem %s4, 4
  %v3047 = vld [vmem:[%s3046] sm:$0xf]
  %v3049 = vlaneseq
  %v3050 = vshrl.u32 %v3049, 7
  %v3051 = vsub.s32 0, %v3050
  %v3052 = vrot.slane %v3047, %v3051
  %v3053 = vlaneseq
  %v3054 = vshrl.u32 %v3053, 7
  %v3055 = vsub.s32 1, %v3054
  %v3056 = vrot.slane %v3047, %v3055
  %v3057 = vlaneseq
  %v3058 = vshrl.u32 %v3057, 7
  %v3059 = vsub.s32 2, %v3058
  %v3060 = vrot.slane %v3047, %v3059
  %v3061 = vlaneseq
  %v3062 = vshrl.u32 %v3061, 7
  %v3063 = vsub.s32 3, %v3062
  %v3064 = vrot.slane %v3047, %v3063
  %v3101 = vunpack.c.l.b16 %v3014
  %v3102 = vunpack.c.h.b16 %v3014
  %v3103 = vunpack.c.l.b16 %v3015
  %v3104 = vunpack.c.h.b16 %v3015
  %v3105 = vunpack.c.l.b16 %v3016
  %v3106 = vunpack.c.h.b16 %v3016
  %v3107 = vunpack.c.l.b16 %v3017
  %v3108 = vunpack.c.h.b16 %v3017
  %v3109 = vunpack.c.l.b16 %v3018
  %v3110 = vunpack.c.h.b16 %v3018
  %v3111 = vunpack.c.l.b16 %v3019
  %v3112 = vunpack.c.h.b16 %v3019
  %v3113 = vunpack.c.l.b16 %v3020
  %v3114 = vunpack.c.h.b16 %v3020
  %v3115 = vunpack.c.l.b16 %v3021
  %v3116 = vunpack.c.h.b16 %v3021
  %v3117 = vunpack.c.l.b16 %v3022
  %v3118 = vunpack.c.h.b16 %v3022
  %v3119 = vunpack.c.l.b16 %v3023
  %v3120 = vunpack.c.h.b16 %v3023
  %v3121 = vunpack.c.l.b16 %v3024
  %v3122 = vunpack.c.h.b16 %v3024
  %v3123 = vunpack.c.l.b16 %v3025
  %v3124 = vunpack.c.h.b16 %v3025
  %v3125 = vunpack.c.l.b16 %v3026
  %v3126 = vunpack.c.h.b16 %v3026
  %v3127 = vunpack.c.l.b16 %v3027
  %v3128 = vunpack.c.h.b16 %v3027
  %v3129 = vunpack.c.l.b16 %v3028
  %v3130 = vunpack.c.h.b16 %v3028
  %v3131 = vunpack.c.l.b16 %v3029
  %v3132 = vunpack.c.h.b16 %v3029
  %v3133 = vunpack.c.l.b16 %v3030
  %v3134 = vunpack.c.h.b16 %v3030
  %v3135 = vunpack.c.l.b16 %v3031
  %v3136 = vunpack.c.h.b16 %v3031
  %v3137 = vunpack.c.l.b16 %v3032
  %v3138 = vunpack.c.h.b16 %v3032
  %v3139 = vunpack.c.l.b16 %v3033
  %v3140 = vunpack.c.h.b16 %v3033
  %v3141 = vunpack.c.l.b16 %v3034
  %v3142 = vunpack.c.h.b16 %v3034
  %v3143 = vunpack.c.l.b16 %v3035
  %v3144 = vunpack.c.h.b16 %v3035
  %v3145 = vunpack.c.l.b16 %v3036
  %v3146 = vunpack.c.h.b16 %v3036
  %v3147 = vunpack.c.l.b16 %v3037
  %v3148 = vunpack.c.h.b16 %v3037
  %v3149 = vunpack.c.l.b16 %v3038
  %v3150 = vunpack.c.h.b16 %v3038
  %v3151 = vunpack.c.l.b16 %v3039
  %v3152 = vunpack.c.h.b16 %v3039
  %v3153 = vunpack.c.l.b16 %v3040
  %v3154 = vunpack.c.h.b16 %v3040
  %v3155 = vunpack.c.l.b16 %v3041
  %v3156 = vunpack.c.h.b16 %v3041
  %v3157 = vunpack.c.l.b16 %v3042
  %v3158 = vunpack.c.h.b16 %v3042
  %v3159 = vunpack.c.l.b16 %v3043
  %v3160 = vunpack.c.h.b16 %v3043
  %v3161 = vunpack.c.l.b16 %v3044
  %v3162 = vunpack.c.h.b16 %v3044
  %v3163 = vunpack.c.l.b16 %v3045
  %v3164 = vunpack.c.h.b16 %v3045
  %v3165 = vpack.c.b16 %v3105, %v3101
  %v3166 = vpack.c.b16 %v3106, %v3102
  %v3167 = vpack.c.b16 %v3107, %v3103
  %v3168 = vpack.c.b16 %v3108, %v3104
  %v3169 = vpack.c.b16 %v3113, %v3109
  %v3170 = vpack.c.b16 %v3114, %v3110
  %v3171 = vpack.c.b16 %v3115, %v3111
  %v3172 = vpack.c.b16 %v3116, %v3112
  %v3173 = vpack.c.b16 %v3121, %v3117
  %v3174 = vpack.c.b16 %v3122, %v3118
  %v3175 = vpack.c.b16 %v3123, %v3119
  %v3176 = vpack.c.b16 %v3124, %v3120
  %v3177 = vpack.c.b16 %v3129, %v3125
  %v3178 = vpack.c.b16 %v3130, %v3126
  %v3179 = vpack.c.b16 %v3131, %v3127
  %v3180 = vpack.c.b16 %v3132, %v3128
  %v3181 = vpack.c.b16 %v3137, %v3133
  %v3182 = vpack.c.b16 %v3138, %v3134
  %v3183 = vpack.c.b16 %v3139, %v3135
  %v3184 = vpack.c.b16 %v3140, %v3136
  %v3185 = vpack.c.b16 %v3145, %v3141
  %v3186 = vpack.c.b16 %v3146, %v3142
  %v3187 = vpack.c.b16 %v3147, %v3143
  %v3188 = vpack.c.b16 %v3148, %v3144
  %v3189 = vpack.c.b16 %v3153, %v3149
  %v3190 = vpack.c.b16 %v3154, %v3150
  %v3191 = vpack.c.b16 %v3155, %v3151
  %v3192 = vpack.c.b16 %v3156, %v3152
  %v3193 = vpack.c.b16 %v3161, %v3157
  %v3194 = vpack.c.b16 %v3162, %v3158
  %v3195 = vpack.c.b16 %v3163, %v3159
  %v3196 = vpack.c.b16 %v3164, %v3160
  %3229 = vmatprep.subr.bf16.mxu0 %v3166
  %3230 = vmatpush1.bf16.msra.mxu0 %v3165
  %3231 = vmatprep.subr.bf16.mxu0 %v3170
  %3232 = vmatpush1.bf16.msra.mxu0 %v3169
  %3233 = vmatprep.subr.bf16.mxu0 %v3174
  %3234 = vmatpush1.bf16.msra.mxu0 %v3173
  %3235 = vmatprep.subr.bf16.mxu0 %v3178
  %3236 = vmatpush1.bf16.msra.mxu0 %v3177
  %3237 = vmatprep.subr.bf16.mxu0 %v3182
  %3238 = vmatpush1.bf16.msra.mxu0 %v3181
  %3239 = vmatprep.subr.bf16.mxu0 %v3186
  %3240 = vmatpush1.bf16.msra.mxu0 %v3185
  %3241 = vmatprep.subr.bf16.mxu0 %v3190
  %3242 = vmatpush1.bf16.msra.mxu0 %v3189
  %3243 = vmatprep.subr.bf16.mxu0 %v3194
  %3244 = vmatpush1.bf16.msra.mxu0 %v3193
  %3245 = vmatprep.subr.bf16.mxu0 0
  %3246 = vmatpush1.bf16.msra.mxu0 0
  %3247 = vmatprep.subr.bf16.mxu0 0
  %3248 = vmatpush1.bf16.msra.mxu0 0
  %3249 = vmatprep.subr.bf16.mxu0 0
  %3250 = vmatpush1.bf16.msra.mxu0 0
  %3251 = vmatprep.subr.bf16.mxu0 0
  %3252 = vmatpush1.bf16.msra.mxu0 0
  %3253 = vmatprep.subr.bf16.mxu0 0
  %3254 = vmatpush1.bf16.msra.mxu0 0
  %3255 = vmatprep.subr.bf16.mxu0 0
  %3256 = vmatpush1.bf16.msra.mxu0 0
  %3257 = vmatprep.subr.bf16.mxu0 0
  %3258 = vmatpush1.bf16.msra.mxu0 0
  %3259 = vmatprep.subr.bf16.mxu0 0
  %3260 = vmatpush1.bf16.msra.mxu0 0
  %3261 = vmatprep.mubr.bf16.mxu0 0
  %3262 = vmatmul.mubr.bf16.gmra.mrb[0].mxu0 %v3006
  %v3263 = vpop.f32.mrb[0].mxu0
  %v3264 = vadd.f32 %v3052, %v3263
  %v3265 = vpop.f32.mrb[0].mxu0
  %v3266 = vadd.f32 %v3056, %v3265
  %v3267 = vpop.f32.mrb[0].mxu0
  %v3268 = vadd.f32 %v3052, %v3267
  %v3269 = vpop.f32.mrb[0].mxu0
  %v3270 = vadd.f32 %v3056, %v3269
  %3271 = vmatprep.mubr.bf16.mxu0 0
  %3272 = vmatmul.mubr.bf16.gmra.mrb[0].mxu0 %v3007
  %v3273 = vpop.f32.mrb[0].mxu0
  %v3274 = vadd.f32 %v3052, %v3273
  %v3275 = vpop.f32.mrb[0].mxu0
  %v3276 = vadd.f32 %v3056, %v3275
  %v3277 = vpop.f32.mrb[0].mxu0
  %v3278 = vadd.f32 %v3052, %v3277
  %v3279 = vpop.f32.mrb[0].mxu0
  %v3280 = vadd.f32 %v3056, %v3279
  %3281 = vmatprep.mubr.bf16.mxu0 0
  %3282 = vmatmul.mubr.bf16.gmra.mrb[0].mxu0 %v3008
  %v3283 = vpop.f32.mrb[0].mxu0
  %v3284 = vadd.f32 %v3052, %v3283
  %v3285 = vpop.f32.mrb[0].mxu0
  %v3286 = vadd.f32 %v3056, %v3285
  %v3287 = vpop.f32.mrb[0].mxu0
  %v3288 = vadd.f32 %v3052, %v3287
  %v3289 = vpop.f32.mrb[0].mxu0
  %v3290 = vadd.f32 %v3056, %v3289
  %3291 = vmatprep.mubr.bf16.mxu0 0
  %3292 = vmatmul.mubr.bf16.gmra.mrb[0].mxu0 %v3009
  %v3293 = vpop.f32.mrb[0].mxu0
  %v3294 = vadd.f32 %v3052, %v3293
  %v3295 = vpop.f32.mrb[0].mxu0
  %v3296 = vadd.f32 %v3056, %v3295
  %v3297 = vpop.f32.mrb[0].mxu0
  %v3298 = vadd.f32 %v3052, %v3297
  %v3299 = vpop.f32.mrb[0].mxu0
  %v3300 = vadd.f32 %v3056, %v3299
  %3301 = vmatprep.mubr.bf16.mxu0 0
  %3302 = vmatmul.mubr.bf16.gmra.mrb[0].mxu0 %v3010
  %v3303 = vpop.f32.mrb[0].mxu0
  %v3304 = vadd.f32 %v3052, %v3303
  %v3305 = vpop.f32.mrb[0].mxu0
  %v3306 = vadd.f32 %v3056, %v3305
  %v3307 = vpop.f32.mrb[0].mxu0
  %v3308 = vadd.f32 %v3052, %v3307
  %v3309 = vpop.f32.mrb[0].mxu0
  %v3310 = vadd.f32 %v3056, %v3309
  %3311 = vmatprep.mubr.bf16.mxu0 0
  %3312 = vmatmul.mubr.bf16.gmra.mrb[0].mxu0 %v3011
  %v3313 = vpop.f32.mrb[0].mxu0
  %v3314 = vadd.f32 %v3052, %v3313
  %v3315 = vpop.f32.mrb[0].mxu0
  %v3316 = vadd.f32 %v3056, %v3315
  %v3317 = vpop.f32.mrb[0].mxu0
  %v3318 = vadd.f32 %v3052, %v3317
  %v3319 = vpop.f32.mrb[0].mxu0
  %v3320 = vadd.f32 %v3056, %v3319
  %3321 = vmatprep.mubr.bf16.mxu0 0
  %3322 = vmatmul.mubr.bf16.gmra.mrb[0].mxu0 %v3012
  %v3323 = vpop.f32.mrb[0].mxu0
  %v3324 = vadd.f32 %v3052, %v3323
  %v3325 = vpop.f32.mrb[0].mxu0
  %v3326 = vadd.f32 %v3056, %v3325
  %v3327 = vpop.f32.mrb[0].mxu0
  %v3328 = vadd.f32 %v3052, %v3327
  %v3329 = vpop.f32.mrb[0].mxu0
  %v3330 = vadd.f32 %v3056, %v3329
  %3331 = vmatprep.mubr.bf16.mxu0 0
  %3332 = vmatmul.mubr.bf16.gmra.mrb[0].mxu0 %v3013
  %v3333 = vpop.f32.mrb[0].mxu0
  %v3334 = vadd.f32 %v3052, %v3333
  %v3335 = vpop.f32.mrb[0].mxu0
  %v3336 = vadd.f32 %v3056, %v3335
  %v3337 = vpop.f32.mrb[0].mxu0
  %v3338 = vadd.f32 %v3052, %v3337
  %v3339 = vpop.f32.mrb[0].mxu0
  %v3340 = vadd.f32 %v3056, %v3339
  %3341 = vdwg.mxu0
  %3342 = vmatprep.subr.bf16.mxu0 %v3168
  %3343 = vmatpush1.bf16.msra.mxu0 %v3167
  %3344 = vmatprep.subr.bf16.mxu0 %v3172
  %3345 = vmatpush1.bf16.msra.mxu0 %v3171
  %3346 = vmatprep.subr.bf16.mxu0 %v3176
  %3347 = vmatpush1.bf16.msra.mxu0 %v3175
  %3348 = vmatprep.subr.bf16.mxu0 %v3180
  %3349 = vmatpush1.bf16.msra.mxu0 %v3179
  %3350 = vmatprep.subr.bf16.mxu0 %v3184
  %3351 = vmatpush1.bf16.msra.mxu0 %v3183
  %3352 = vmatprep.subr.bf16.mxu0 %v3188
  %3353 = vmatpush1.bf16.msra.mxu0 %v3187
  %3354 = vmatprep.subr.bf16.mxu0 %v3192
  %3355 = vmatpush1.bf16.msra.mxu0 %v3191
  %3356 = vmatprep.subr.bf16.mxu0 %v3196
  %3357 = vmatpush1.bf16.msra.mxu0 %v3195
  %3358 = vmatprep.subr.bf16.mxu0 0
  %3359 = vmatpush1.bf16.msra.mxu0 0
  %3360 = vmatprep.subr.bf16.mxu0 0
  %3361 = vmatpush1.bf16.msra.mxu0 0
  %3362 = vmatprep.subr.bf16.mxu0 0
  %3363 = vmatpush1.bf16.msra.mxu0 0
  %3364 = vmatprep.subr.bf16.mxu0 0
  %3365 = vmatpush1.bf16.msra.mxu0 0
  %3366 = vmatprep.subr.bf16.mxu0 0
  %3367 = vmatpush1.bf16.msra.mxu0 0
  %3368 = vmatprep.subr.bf16.mxu0 0
  %3369 = vmatpush1.bf16.msra.mxu0 0
  %3370 = vmatprep.subr.bf16.mxu0 0
  %3371 = vmatpush1.bf16.msra.mxu0 0
  %3372 = vmatprep.subr.bf16.mxu0 0
  %3373 = vmatpush1.bf16.msra.mxu0 0
  %3374 = vmatprep.mubr.bf16.mxu0 0
  %3375 = vmatmul.mubr.bf16.gmra.mrb[0].mxu0 %v3006
  %v3376 = vpop.f32.mrb[0].mxu0
  %v3377 = vadd.f32 %v3060, %v3376
  %v3378 = vpop.f32.mrb[0].mxu0
  %v3379 = vadd.f32 %v3064, %v3378
  %v3380 = vpop.f32.mrb[0].mxu0
  %v3381 = vadd.f32 %v3060, %v3380
  %v3382 = vpop.f32.mrb[0].mxu0
  %v3383 = vadd.f32 %v3064, %v3382
  %3384 = vmatprep.mubr.bf16.mxu0 0
  %3385 = vmatmul.mubr.bf16.gmra.mrb[0].mxu0 %v3007
  %v3386 = vpop.f32.mrb[0].mxu0
  %v3387 = vadd.f32 %v3060, %v3386
  %v3388 = vpop.f32.mrb[0].mxu0
  %v3389 = vadd.f32 %v3064, %v3388
  %v3390 = vpop.f32.mrb[0].mxu0
  %v3391 = vadd.f32 %v3060, %v3390
  %v3392 = vpop.f32.mrb[0].mxu0
  %v3393 = vadd.f32 %v3064, %v3392
  %3394 = vmatprep.mubr.bf16.mxu0 0
  %3395 = vmatmul.mubr.bf16.gmra.mrb[0].mxu0 %v3008
  %v3396 = vpop.f32.mrb[0].mxu0
  %v3397 = vadd.f32 %v3060, %v3396
  %v3398 = vpop.f32.mrb[0].mxu0
  %v3399 = vadd.f32 %v3064, %v3398
  %v3400 = vpop.f32.mrb[0].mxu0
  %v3401 = vadd.f32 %v3060, %v3400
  %v3402 = vpop.f32.mrb[0].mxu0
  %v3403 = vadd.f32 %v3064, %v3402
  %3404 = vmatprep.mubr.bf16.mxu0 0
  %3405 = vmatmul.mubr.bf16.gmra.mrb[0].mxu0 %v3009
  %v3406 = vpop.f32.mrb[0].mxu0
  %v3407 = vadd.f32 %v3060, %v3406
  %v3408 = vpop.f32.mrb[0].mxu0
  %v3409 = vadd.f32 %v3064, %v3408
  %v3410 = vpop.f32.mrb[0].mxu0
  %v3411 = vadd.f32 %v3060, %v3410
  %v3412 = vpop.f32.mrb[0].mxu0
  %v3413 = vadd.f32 %v3064, %v3412
  %3414 = vmatprep.mubr.bf16.mxu0 0
  %3415 = vmatmul.mubr.bf16.gmra.mrb[0].mxu0 %v3010
  %v3416 = vpop.f32.mrb[0].mxu0
  %v3417 = vadd.f32 %v3060, %v3416
  %v3418 = vpop.f32.mrb[0].mxu0
  %v3419 = vadd.f32 %v3064, %v3418
  %v3420 = vpop.f32.mrb[0].mxu0
  %v3421 = vadd.f32 %v3060, %v3420
  %v3422 = vpop.f32.mrb[0].mxu0
  %v3423 = vadd.f32 %v3064, %v3422
  %3424 = vmatprep.mubr.bf16.mxu0 0
  %3425 = vmatmul.mubr.bf16.gmra.mrb[0].mxu0 %v3011
  %v3426 = vpop.f32.mrb[0].mxu0
  %v3427 = vadd.f32 %v3060, %v3426
  %v3428 = vpop.f32.mrb[0].mxu0
  %v3429 = vadd.f32 %v3064, %v3428
  %v3430 = vpop.f32.mrb[0].mxu0
  %v3431 = vadd.f32 %v3060, %v3430
  %v3432 = vpop.f32.mrb[0].mxu0
  %v3433 = vadd.f32 %v3064, %v3432
  %3434 = vmatprep.mubr.bf16.mxu0 0
  %3435 = vmatmul.mubr.bf16.gmra.mrb[0].mxu0 %v3012
  %v3436 = vpop.f32.mrb[0].mxu0
  %v3437 = vadd.f32 %v3060, %v3436
  %v3438 = vpop.f32.mrb[0].mxu0
  %v3439 = vadd.f32 %v3064, %v3438
  %v3440 = vpop.f32.mrb[0].mxu0
  %v3441 = vadd.f32 %v3060, %v3440
  %v3442 = vpop.f32.mrb[0].mxu0
  %v3443 = vadd.f32 %v3064, %v3442
  %3444 = vmatprep.mubr.bf16.mxu0 0
  %3445 = vmatmul.mubr.bf16.gmra.mrb[0].mxu0 %v3013
  %v3446 = vpop.f32.mrb[0].mxu0
  %v3447 = vadd.f32 %v3060, %v3446
  %v3448 = vpop.f32.mrb[0].mxu0
  %v3449 = vadd.f32 %v3064, %v3448
  %v3450 = vpop.f32.mrb[0].mxu0
  %v3451 = vadd.f32 %v3060, %v3450
  %v3452 = vpop.f32.mrb[0].mxu0
  %v3453 = vadd.f32 %v3064, %v3452
  %3454 = vdwg.mxu0
  %3455 = vst [vmem:[#allocation3] sm:$0xff] %v3264
  %3456 = vst [vmem:[#allocation3 + $0x8] sm:$0xff] %v3266
  %3457 = vst [vmem:[#allocation3 + $0x10] sm:$0xff] %v3377
  %3458 = vst [vmem:[#allocation3 + $0x18] sm:$0xff] %v3379
  %3459 = vst [vmem:[#allocation3 + $0x20] sm:$0xff] %v3268
  %3460 = vst [vmem:[#allocation3 + $0x28] sm:$0xff] %v3270
  %3461 = vst [vmem:[#allocation3 + $0x30] sm:$0xff] %v3381
  %3462 = vst [vmem:[#allocation3 + $0x38] sm:$0xff] %v3383
  %3463 = vst [vmem:[#allocation3 + $0x40] sm:$0xff] %v3274
  %3464 = vst [vmem:[#allocation3 + $0x48] sm:$0xff] %v3276
  %3465 = vst [vmem:[#allocation3 + $0x50] sm:$0xff] %v3387
  %3466 = vst [vmem:[#allocation3 + $0x58] sm:$0xff] %v3389
  %3467 = vst [vmem:[#allocation3 + $0x60] sm:$0xff] %v3278
  %3468 = vst [vmem:[#allocation3 + $0x68] sm:$0xff] %v3280
  %3469 = vst [vmem:[#allocation3 + $0x70] sm:$0xff] %v3391
  %3470 = vst [vmem:[#allocation3 + $0x78] sm:$0xff] %v3393
  %3471 = vst [vmem:[#allocation3 + $0x80] sm:$0xff] %v3284
  %3472 = vst [vmem:[#allocation3 + $0x88] sm:$0xff] %v3286
  %3473 = vst [vmem:[#allocation3 + $0x90] sm:$0xff] %v3397
  %3474 = vst [vmem:[#allocation3 + $0x98] sm:$0xff] %v3399
  %3475 = vst [vmem:[#allocation3 + $0xa0] sm:$0xff] %v3288
  %3476 = vst [vmem:[#allocation3 + $0xa8] sm:$0xff] %v3290
  %3477 = vst [vmem:[#allocation3 + $0xb0] sm:$0xff] %v3401
  %3478 = vst [vmem:[#allocation3 + $0xb8] sm:$0xff] %v3403
  %3479 = vst [vmem:[#allocation3 + $0xc0] sm:$0xff] %v3294
  %3480 = vst [vmem:[#allocation3 + $0xc8] sm:$0xff] %v3296
  %3481 = vst [vmem:[#allocation3 + $0xd0] sm:$0xff] %v3407
  %3482 = vst [vmem:[#allocation3 + $0xd8] sm:$0xff] %v3409
  %3483 = vst [vmem:[#allocation3 + $0xe0] sm:$0xff] %v3298
  %3484 = vst [vmem:[#allocation3 + $0xe8] sm:$0xff] %v3300
  %3485 = vst [vmem:[#allocation3 + $0xf0] sm:$0xff] %v3411
  %3486 = vst [vmem:[#allocation3 + $0xf8] sm:$0xff] %v3413
  %3487 = vst [vmem:[#allocation3 + $0x100] sm:$0xff] %v3304
  %3488 = vst [vmem:[#allocation3 + $0x108] sm:$0xff] %v3306
  %3489 = vst [vmem:[#allocation3 + $0x110] sm:$0xff] %v3417
  %3490 = vst [vmem:[#allocation3 + $0x118] sm:$0xff] %v3419
  %3491 = vst [vmem:[#allocation3 + $0x120] sm:$0xff] %v3308
  %3492 = vst [vmem:[#allocation3 + $0x128] sm:$0xff] %v3310
  %3493 = vst [vmem:[#allocation3 + $0x130] sm:$0xff] %v3421
  %3494 = vst [vmem:[#allocation3 + $0x138] sm:$0xff] %v3423
  %3495 = vst [vmem:[#allocation3 + $0x140] sm:$0xff] %v3314
  %3496 = vst [vmem:[#allocation3 + $0x148] sm:$0xff] %v3316
  %3497 = vst [vmem:[#allocation3 + $0x150] sm:$0xff] %v3427
  %3498 = vst [vmem:[#allocation3 + $0x158] sm:$0xff] %v3429
  %3499 = vst [vmem:[#allocation3 + $0x160] sm:$0xff] %v3318
  %3500 = vst [vmem:[#allocation3 + $0x168] sm:$0xff] %v3320
  %3501 = vst [vmem:[#allocation3 + $0x170] sm:$0xff] %v3431
  %3502 = vst [vmem:[#allocation3 + $0x178] sm:$0xff] %v3433
  %3503 = vst [vmem:[#allocation3 + $0x180] sm:$0xff] %v3324
  %3504 = vst [vmem:[#allocation3 + $0x188] sm:$0xff] %v3326
  %3505 = vst [vmem:[#allocation3 + $0x190] sm:$0xff] %v3437
  %3506 = vst [vmem:[#allocation3 + $0x198] sm:$0xff] %v3439
  %3507 = vst [vmem:[#allocation3 + $0x1a0] sm:$0xff] %v3328
  %3508 = vst [vmem:[#allocation3 + $0x1a8] sm:$0xff] %v3330
  %3509 = vst [vmem:[#allocation3 + $0x1b0] sm:$0xff] %v3441
  %3510 = vst [vmem:[#allocation3 + $0x1b8] sm:$0xff] %v3443
  %3511 = vst [vmem:[#allocation3 + $0x1c0] sm:$0xff] %v3334
  %3512 = vst [vmem:[#allocation3 + $0x1c8] sm:$0xff] %v3336
  %3513 = vst [vmem:[#allocation3 + $0x1d0] sm:$0xff] %v3447
  %3514 = vst [vmem:[#allocation3 + $0x1d8] sm:$0xff] %v3449
  %3515 = vst [vmem:[#allocation3 + $0x1e0] sm:$0xff] %v3338
  %3516 = vst [vmem:[#allocation3 + $0x1e8] sm:$0xff] %v3340
  %3517 = vst [vmem:[#allocation3 + $0x1f0] sm:$0xff] %v3451
  %3518 = vst [vmem:[#allocation3 + $0x1f8] sm:$0xff] %v3453
  %s3519 = scalar_lea.vmem %s3, 256
  %v3520 = vld [vmem:[%s3519] sm:$0xff]
  %v3521 = vld [vmem:[%s3519 + $0x8] sm:$0xff]
  %v3522 = vld [vmem:[%s3519 + $0x10] sm:$0xff]
  %v3523 = vld [vmem:[%s3519 + $0x18] sm:$0xff]
  %v3524 = vld [vmem:[%s3519 + $0x20] sm:$0xff]
  %v3525 = vld [vmem:[%s3519 + $0x28] sm:$0xff]
  %v3526 = vld [vmem:[%s3519 + $0x30] sm:$0xff]
  %v3527 = vld [vmem:[%s3519 + $0x38] sm:$0xff]
  %v3528 = vld [vmem:[%s3519 + $0x40] sm:$0xff]
  %v3529 = vld [vmem:[%s3519 + $0x48] sm:$0xff]
  %v3530 = vld [vmem:[%s3519 + $0x50] sm:$0xff]
  %v3531 = vld [vmem:[%s3519 + $0x58] sm:$0xff]
  %v3532 = vld [vmem:[%s3519 + $0x60] sm:$0xff]
  %v3533 = vld [vmem:[%s3519 + $0x68] sm:$0xff]
  %v3534 = vld [vmem:[%s3519 + $0x70] sm:$0xff]
  %v3535 = vld [vmem:[%s3519 + $0x78] sm:$0xff]
  %v3536 = vld [vmem:[%s3519 + $0x80] sm:$0xff]
  %v3537 = vld [vmem:[%s3519 + $0x88] sm:$0xff]
  %v3538 = vld [vmem:[%s3519 + $0x90] sm:$0xff]
  %v3539 = vld [vmem:[%s3519 + $0x98] sm:$0xff]
  %v3540 = vld [vmem:[%s3519 + $0xa0] sm:$0xff]
  %v3541 = vld [vmem:[%s3519 + $0xa8] sm:$0xff]
  %v3542 = vld [vmem:[%s3519 + $0xb0] sm:$0xff]
  %v3543 = vld [vmem:[%s3519 + $0xb8] sm:$0xff]
  %v3544 = vld [vmem:[%s3519 + $0xc0] sm:$0xff]
  %v3545 = vld [vmem:[%s3519 + $0xc8] sm:$0xff]
  %v3546 = vld [vmem:[%s3519 + $0xd0] sm:$0xff]
  %v3547 = vld [vmem:[%s3519 + $0xd8] sm:$0xff]
  %v3548 = vld [vmem:[%s3519 + $0xe0] sm:$0xff]
  %v3549 = vld [vmem:[%s3519 + $0xe8] sm:$0xff]
  %v3550 = vld [vmem:[%s3519 + $0xf0] sm:$0xff]
  %v3551 = vld [vmem:[%s3519 + $0xf8] sm:$0xff]
  %s3552 = scalar_lea.vmem %s5, 16
  %v3553 = vld [vmem:[%s3552] sm:$0xff]
  %v3554 = vld [vmem:[%s3552 + $0x8] sm:$0xff]
  %s3555 = scalar_lea.vmem %s6, 16
  %v3556 = vld [vmem:[%s3555] sm:$0xff]
  %v3557 = vld [vmem:[%s3555 + $0x8] sm:$0xff]
  %v3558 = vld [vmem:[%s1692] sm:$0xff]
  %v3559 = vld [vmem:[%s1692 + $0x8] sm:$0xff]
  %v3560 = vld [vmem:[%s1692 + $0x10] sm:$0xff]
  %v3561 = vld [vmem:[%s1692 + $0x18] sm:$0xff]
  %v3562 = vld [vmem:[%s1692 + $0x20] sm:$0xff]
  %v3563 = vld [vmem:[%s1692 + $0x28] sm:$0xff]
  %v3564 = vld [vmem:[%s1692 + $0x30] sm:$0xff]
  %v3565 = vld [vmem:[%s1692 + $0x38] sm:$0xff]
  %v3566 = vpack.c.bf16 %v3554, %v3553
  %v3599 = vunpack.c.l.b16 %v3520
  %v3600 = vunpack.c.h.b16 %v3520
  %v3601 = vunpack.c.l.b16 %v3521
  %v3602 = vunpack.c.h.b16 %v3521
  %v3603 = vunpack.c.l.b16 %v3522
  %v3604 = vunpack.c.h.b16 %v3522
  %v3605 = vunpack.c.l.b16 %v3523
  %v3606 = vunpack.c.h.b16 %v3523
  %v3607 = vunpack.c.l.b16 %v3524
  %v3608 = vunpack.c.h.b16 %v3524
  %v3609 = vunpack.c.l.b16 %v3525
  %v3610 = vunpack.c.h.b16 %v3525
  %v3611 = vunpack.c.l.b16 %v3526
  %v3612 = vunpack.c.h.b16 %v3526
  %v3613 = vunpack.c.l.b16 %v3527
  %v3614 = vunpack.c.h.b16 %v3527
  %v3615 = vunpack.c.l.b16 %v3528
  %v3616 = vunpack.c.h.b16 %v3528
  %v3617 = vunpack.c.l.b16 %v3529
  %v3618 = vunpack.c.h.b16 %v3529
  %v3619 = vunpack.c.l.b16 %v3530
  %v3620 = vunpack.c.h.b16 %v3530
  %v3621 = vunpack.c.l.b16 %v3531
  %v3622 = vunpack.c.h.b16 %v3531
  %v3623 = vunpack.c.l.b16 %v3532
  %v3624 = vunpack.c.h.b16 %v3532
  %v3625 = vunpack.c.l.b16 %v3533
  %v3626 = vunpack.c.h.b16 %v3533
  %v3627 = vunpack.c.l.b16 %v3534
  %v3628 = vunpack.c.h.b16 %v3534
  %v3629 = vunpack.c.l.b16 %v3535
  %v3630 = vunpack.c.h.b16 %v3535
  %v3631 = vunpack.c.l.b16 %v3536
  %v3632 = vunpack.c.h.b16 %v3536
  %v3633 = vunpack.c.l.b16 %v3537
  %v3634 = vunpack.c.h.b16 %v3537
  %v3635 = vunpack.c.l.b16 %v3538
  %v3636 = vunpack.c.h.b16 %v3538
  %v3637 = vunpack.c.l.b16 %v3539
  %v3638 = vunpack.c.h.b16 %v3539
  %v3639 = vunpack.c.l.b16 %v3540
  %v3640 = vunpack.c.h.b16 %v3540
  %v3641 = vunpack.c.l.b16 %v3541
  %v3642 = vunpack.c.h.b16 %v3541
  %v3643 = vunpack.c.l.b16 %v3542
  %v3644 = vunpack.c.h.b16 %v3542
  %v3645 = vunpack.c.l.b16 %v3543
  %v3646 = vunpack.c.h.b16 %v3543
  %v3647 = vunpack.c.l.b16 %v3544
  %v3648 = vunpack.c.h.b16 %v3544
  %v3649 = vunpack.c.l.b16 %v3545
  %v3650 = vunpack.c.h.b16 %v3545
  %v3651 = vunpack.c.l.b16 %v3546
  %v3652 = vunpack.c.h.b16 %v3546
  %v3653 = vunpack.c.l.b16 %v3547
  %v3654 = vunpack.c.h.b16 %v3547
  %v3655 = vunpack.c.l.b16 %v3548
  %v3656 = vunpack.c.h.b16 %v3548
  %v3657 = vunpack.c.l.b16 %v3549
  %v3658 = vunpack.c.h.b16 %v3549
  %v3659 = vunpack.c.l.b16 %v3550
  %v3660 = vunpack.c.h.b16 %v3550
  %v3661 = vunpack.c.l.b16 %v3551
  %v3662 = vunpack.c.h.b16 %v3551
  %v3663 = vpack.c.b16 %v3603, %v3599
  %v3664 = vpack.c.b16 %v3604, %v3600
  %v3665 = vpack.c.b16 %v3605, %v3601
  %v3666 = vpack.c.b16 %v3606, %v3602
  %v3667 = vpack.c.b16 %v3611, %v3607
  %v3668 = vpack.c.b16 %v3612, %v3608
  %v3669 = vpack.c.b16 %v3613, %v3609
  %v3670 = vpack.c.b16 %v3614, %v3610
  %v3671 = vpack.c.b16 %v3619, %v3615
  %v3672 = vpack.c.b16 %v3620, %v3616
  %v3673 = vpack.c.b16 %v3621, %v3617
  %v3674 = vpack.c.b16 %v3622, %v3618
  %v3675 = vpack.c.b16 %v3627, %v3623
  %v3676 = vpack.c.b16 %v3628, %v3624
  %v3677 = vpack.c.b16 %v3629, %v3625
  %v3678 = vpack.c.b16 %v3630, %v3626
  %v3679 = vpack.c.b16 %v3635, %v3631
  %v3680 = vpack.c.b16 %v3636, %v3632
  %v3681 = vpack.c.b16 %v3637, %v3633
  %v3682 = vpack.c.b16 %v3638, %v3634
  %v3683 = vpack.c.b16 %v3643, %v3639
  %v3684 = vpack.c.b16 %v3644, %v3640
  %v3685 = vpack.c.b16 %v3645, %v3641
  %v3686 = vpack.c.b16 %v3646, %v3642
  %v3687 = vpack.c.b16 %v3651, %v3647
  %v3688 = vpack.c.b16 %v3652, %v3648
  %v3689 = vpack.c.b16 %v3653, %v3649
  %v3690 = vpack.c.b16 %v3654, %v3650
  %v3691 = vpack.c.b16 %v3659, %v3655
  %v3692 = vpack.c.b16 %v3660, %v3656
  %v3693 = vpack.c.b16 %v3661, %v3657
  %v3694 = vpack.c.b16 %v3662, %v3658
  %3727 = vmatprep.subr.bf16.mxu0 %v3664
  %3728 = vmatpush1.bf16.msra.mxu0 %v3663
  %3729 = vmatprep.subr.bf16.mxu0 %v3668
  %3730 = vmatpush1.bf16.msra.mxu0 %v3667
  %3731 = vmatprep.subr.bf16.mxu0 %v3672
  %3732 = vmatpush1.bf16.msra.mxu0 %v3671
  %3733 = vmatprep.subr.bf16.mxu0 %v3676
  %3734 = vmatpush1.bf16.msra.mxu0 %v3675
  %3735 = vmatprep.subr.bf16.mxu0 %v3680
  %3736 = vmatpush1.bf16.msra.mxu0 %v3679
  %3737 = vmatprep.subr.bf16.mxu0 %v3684
  %3738 = vmatpush1.bf16.msra.mxu0 %v3683
  %3739 = vmatprep.subr.bf16.mxu0 %v3688
  %3740 = vmatpush1.bf16.msra.mxu0 %v3687
  %3741 = vmatprep.subr.bf16.mxu0 %v3692
  %3742 = vmatpush1.bf16.msra.mxu0 %v3691
  %3743 = vmatprep.subr.bf16.mxu0 0
  %3744 = vmatpush1.bf16.msra.mxu0 0
  %3745 = vmatprep.subr.bf16.mxu0 0
  %3746 = vmatpush1.bf16.msra.mxu0 0
  %3747 = vmatprep.subr.bf16.mxu0 0
  %3748 = vmatpush1.bf16.msra.mxu0 0
  %3749 = vmatprep.subr.bf16.mxu0 0
  %3750 = vmatpush1.bf16.msra.mxu0 0
  %3751 = vmatprep.subr.bf16.mxu0 0
  %3752 = vmatpush1.bf16.msra.mxu0 0
  %3753 = vmatprep.subr.bf16.mxu0 0
  %3754 = vmatpush1.bf16.msra.mxu0 0
  %3755 = vmatprep.subr.bf16.mxu0 0
  %3756 = vmatpush1.bf16.msra.mxu0 0
  %3757 = vmatprep.subr.bf16.mxu0 0
  %3758 = vmatpush1.bf16.msra.mxu0 0
  %3759 = vmatprep.mubr.bf16.mxu0 0
  %3760 = vmatmul.mubr.bf16.gmra.mrb[0].mxu0 %v3566
  %v3761 = vpop.f32.mrb[0].mxu0
  %v3762 = vadd.f32 0.0, %v3761
  %v3763 = vpop.f32.mrb[0].mxu0
  %v3764 = vadd.f32 0.0, %v3763
  %v3765 = vpop.f32.mrb[0].mxu0
  %v3766 = vadd.f32 0.0, %v3765
  %v3767 = vpop.f32.mrb[0].mxu0
  %v3768 = vadd.f32 0.0, %v3767
  %3769 = vdwg.mxu0
  %3770 = vmatprep.subr.bf16.mxu0 %v3666
  %3771 = vmatpush1.bf16.msra.mxu0 %v3665
  %3772 = vmatprep.subr.bf16.mxu0 %v3670
  %3773 = vmatpush1.bf16.msra.mxu0 %v3669
  %3774 = vmatprep.subr.bf16.mxu0 %v3674
  %3775 = vmatpush1.bf16.msra.mxu0 %v3673
  %3776 = vmatprep.subr.bf16.mxu0 %v3678
  %3777 = vmatpush1.bf16.msra.mxu0 %v3677
  %3778 = vmatprep.subr.bf16.mxu0 %v3682
  %3779 = vmatpush1.bf16.msra.mxu0 %v3681
  %3780 = vmatprep.subr.bf16.mxu0 %v3686
  %3781 = vmatpush1.bf16.msra.mxu0 %v3685
  %3782 = vmatprep.subr.bf16.mxu0 %v3690
  %3783 = vmatpush1.bf16.msra.mxu0 %v3689
  %3784 = vmatprep.subr.bf16.mxu0 %v3694
  %3785 = vmatpush1.bf16.msra.mxu0 %v3693
  %3786 = vmatprep.subr.bf16.mxu0 0
  %3787 = vmatpush1.bf16.msra.mxu0 0
  %3788 = vmatprep.subr.bf16.mxu0 0
  %3789 = vmatpush1.bf16.msra.mxu0 0
  %3790 = vmatprep.subr.bf16.mxu0 0
  %3791 = vmatpush1.bf16.msra.mxu0 0
  %3792 = vmatprep.subr.bf16.mxu0 0
  %3793 = vmatpush1.bf16.msra.mxu0 0
  %3794 = vmatprep.subr.bf16.mxu0 0
  %3795 = vmatpush1.bf16.msra.mxu0 0
  %3796 = vmatprep.subr.bf16.mxu0 0
  %3797 = vmatpush1.bf16.msra.mxu0 0
  %3798 = vmatprep.subr.bf16.mxu0 0
  %3799 = vmatpush1.bf16.msra.mxu0 0
  %3800 = vmatprep.subr.bf16.mxu0 0
  %3801 = vmatpush1.bf16.msra.mxu0 0
  %3802 = vmatprep.mubr.bf16.mxu0 0
  %3803 = vmatmul.mubr.bf16.gmra.mrb[0].mxu0 %v3566
  %v3804 = vpop.f32.mrb[0].mxu0
  %v3805 = vadd.f32 0.0, %v3804
  %v3806 = vpop.f32.mrb[0].mxu0
  %v3807 = vadd.f32 0.0, %v3806
  %v3808 = vpop.f32.mrb[0].mxu0
  %v3809 = vadd.f32 0.0, %v3808
  %v3810 = vpop.f32.mrb[0].mxu0
  %v3811 = vadd.f32 0.0, %v3810
  %3812 = vdwg.mxu0
  %v3813 = vadd.f32 %v3558, %v3762
  %v3814 = vadd.f32 %v3559, %v3764
  %v3815 = vadd.f32 %v3560, %v3805
  %v3816 = vadd.f32 %v3561, %v3807
  %v3817 = vadd.f32 %v3562, %v3766
  %v3818 = vadd.f32 %v3563, %v3768
  %v3819 = vadd.f32 %v3564, %v3809
  %v3820 = vadd.f32 %v3565, %v3811
  %v3821 = vmul.f32 %v3813, 0.5
  %v3822 = vmul.f32 %v3817, 0.5
  %v3823 = vtanh.pop %v3821
  %v3824 = vtanh.pop %v3822
  %v3825 = vmul.f32 %v3823, 0.5
  %v3826 = vmul.f32 %v3824, 0.5
  %v3827 = vadd.f32 %v3825, 0.5
  %v3828 = vadd.f32 %v3826, 0.5
  %v3829 = vmul.f32 %v3814, 0.5
  %v3830 = vmul.f32 %v3818, 0.5
  %v3831 = vtanh.pop %v3829
  %v3832 = vtanh.pop %v3830
  %v3833 = vmul.f32 %v3831, 0.5
  %v3834 = vmul.f32 %v3832, 0.5
  %v3835 = vadd.f32 %v3833, 0.5
  %v3836 = vadd.f32 %v3834, 0.5
  %v3837 = vtanh.pop %v3815
  %v3838 = vtanh.pop %v3819
  %v3839 = vmul.f32 %v3816, 0.5
  %v3840 = vmul.f32 %v3820, 0.5
  %v3841 = vtanh.pop %v3839
  %v3842 = vtanh.pop %v3840
  %v3843 = vmul.f32 %v3841, 0.5
  %v3844 = vmul.f32 %v3842, 0.5
  %v3845 = vadd.f32 %v3843, 0.5
  %v3846 = vadd.f32 %v3844, 0.5
  %v3847 = vmul.f32 %v3835, %v3556
  %v3848 = vmul.f32 %v3836, %v3557
  %v3849 = vmul.f32 %v3827, %v3837
  %v3850 = vmul.f32 %v3828, %v3838
  %v3851 = vadd.f32 %v3847, %v3849
  %v3852 = vadd.f32 %v3848, %v3850
  %v3853 = vtanh.pop %v3851
  %v3854 = vtanh.pop %v3852
  %v3855 = vmul.f32 %v3845, %v3853
  %v3856 = vmul.f32 %v3846, %v3854
  %v3857 = vpack.c.bf16 %v3856, %v3855
  %3858 = vst [vmem:[#allocation2] sm:$0xff] %v3857
  %v3859 = vld [vmem:[%s1996] sm:$0xff]
  %v3860 = vld [vmem:[%s1996 + $0x8] sm:$0xff]
  %v3861 = vld [vmem:[%s1996 + $0x10] sm:$0xff]
  %v3862 = vld [vmem:[%s1996 + $0x18] sm:$0xff]
  %v3863 = vld [vmem:[%s1996 + $0x20] sm:$0xff]
  %v3864 = vld [vmem:[%s1996 + $0x28] sm:$0xff]
  %v3865 = vld [vmem:[%s1996 + $0x30] sm:$0xff]
  %v3866 = vld [vmem:[%s1996 + $0x38] sm:$0xff]
  %3867 = vmatprep.subr.bf16.mxu0 %v3664
  %3868 = vmatpush1.bf16.msra.mxu0 %v3663
  %3869 = vmatprep.subr.bf16.mxu0 %v3668
  %3870 = vmatpush1.bf16.msra.mxu0 %v3667
  %3871 = vmatprep.subr.bf16.mxu0 %v3672
  %3872 = vmatpush1.bf16.msra.mxu0 %v3671
  %3873 = vmatprep.subr.bf16.mxu0 %v3676
  %3874 = vmatpush1.bf16.msra.mxu0 %v3675
  %3875 = vmatprep.subr.bf16.mxu0 %v3680
  %3876 = vmatpush1.bf16.msra.mxu0 %v3679
  %3877 = vmatprep.subr.bf16.mxu0 %v3684
  %3878 = vmatpush1.bf16.msra.mxu0 %v3683
  %3879 = vmatprep.subr.bf16.mxu0 %v3688
  %3880 = vmatpush1.bf16.msra.mxu0 %v3687
  %3881 = vmatprep.subr.bf16.mxu0 %v3692
  %3882 = vmatpush1.bf16.msra.mxu0 %v3691
  %3883 = vmatprep.subr.bf16.mxu0 0
  %3884 = vmatpush1.bf16.msra.mxu0 0
  %3885 = vmatprep.subr.bf16.mxu0 0
  %3886 = vmatpush1.bf16.msra.mxu0 0
  %3887 = vmatprep.subr.bf16.mxu0 0
  %3888 = vmatpush1.bf16.msra.mxu0 0
  %3889 = vmatprep.subr.bf16.mxu0 0
  %3890 = vmatpush1.bf16.msra.mxu0 0
  %3891 = vmatprep.subr.bf16.mxu0 0
  %3892 = vmatpush1.bf16.msra.mxu0 0
  %3893 = vmatprep.subr.bf16.mxu0 0
  %3894 = vmatpush1.bf16.msra.mxu0 0
  %3895 = vmatprep.subr.bf16.mxu0 0
  %3896 = vmatpush1.bf16.msra.mxu0 0
  %3897 = vmatprep.subr.bf16.mxu0 0
  %3898 = vmatpush1.bf16.msra.mxu0 0
  %3899 = vmatprep.mubr.bf16.mxu0 0
  %3900 = vmatmul.mubr.bf16.gmra.mrb[0].mxu0 %v3857
  %v3901 = vpop.f32.mrb[0].mxu0
  %v3902 = vadd.f32 0.0, %v3901
  %v3903 = vpop.f32.mrb[0].mxu0
  %v3904 = vadd.f32 0.0, %v3903
  %v3905 = vpop.f32.mrb[0].mxu0
  %v3906 = vadd.f32 0.0, %v3905
  %v3907 = vpop.f32.mrb[0].mxu0
  %v3908 = vadd.f32 0.0, %v3907
  %3909 = vdwg.mxu0
  %3910 = vmatprep.subr.bf16.mxu0 %v3666
  %3911 = vmatpush1.bf16.msra.mxu0 %v3665
  %3912 = vmatprep.subr.bf16.mxu0 %v3670
  %3913 = vmatpush1.bf16.msra.mxu0 %v3669
  %3914 = vmatprep.subr.bf16.mxu0 %v3674
  %3915 = vmatpush1.bf16.msra.mxu0 %v3673
  %3916 = vmatprep.subr.bf16.mxu0 %v3678
  %3917 = vmatpush1.bf16.msra.mxu0 %v3677
  %3918 = vmatprep.subr.bf16.mxu0 %v3682
  %3919 = vmatpush1.bf16.msra.mxu0 %v3681
  %3920 = vmatprep.subr.bf16.mxu0 %v3686
  %3921 = vmatpush1.bf16.msra.mxu0 %v3685
  %3922 = vmatprep.subr.bf16.mxu0 %v3690
  %3923 = vmatpush1.bf16.msra.mxu0 %v3689
  %3924 = vmatprep.subr.bf16.mxu0 %v3694
  %3925 = vmatpush1.bf16.msra.mxu0 %v3693
  %3926 = vmatprep.subr.bf16.mxu0 0
  %3927 = vmatpush1.bf16.msra.mxu0 0
  %3928 = vmatprep.subr.bf16.mxu0 0
  %3929 = vmatpush1.bf16.msra.mxu0 0
  %3930 = vmatprep.subr.bf16.mxu0 0
  %3931 = vmatpush1.bf16.msra.mxu0 0
  %3932 = vmatprep.subr.bf16.mxu0 0
  %3933 = vmatpush1.bf16.msra.mxu0 0
  %3934 = vmatprep.subr.bf16.mxu0 0
  %3935 = vmatpush1.bf16.msra.mxu0 0
  %3936 = vmatprep.subr.bf16.mxu0 0
  %3937 = vmatpush1.bf16.msra.mxu0 0
  %3938 = vmatprep.subr.bf16.mxu0 0
  %3939 = vmatpush1.bf16.msra.mxu0 0
  %3940 = vmatprep.subr.bf16.mxu0 0
  %3941 = vmatpush1.bf16.msra.mxu0 0
  %3942 = vmatprep.mubr.bf16.mxu0 0
  %3943 = vmatmul.mubr.bf16.gmra.mrb[0].mxu0 %v3857
  %v3944 = vpop.f32.mrb[0].mxu0
  %v3945 = vadd.f32 0.0, %v3944
  %v3946 = vpop.f32.mrb[0].mxu0
  %v3947 = vadd.f32 0.0, %v3946
  %v3948 = vpop.f32.mrb[0].mxu0
  %v3949 = vadd.f32 0.0, %v3948
  %v3950 = vpop.f32.mrb[0].mxu0
  %v3951 = vadd.f32 0.0, %v3950
  %3952 = vdwg.mxu0
  %v3953 = vadd.f32 %v3859, %v3902
  %v3954 = vadd.f32 %v3860, %v3904
  %v3955 = vadd.f32 %v3861, %v3945
  %v3956 = vadd.f32 %v3862, %v3947
  %v3957 = vadd.f32 %v3863, %v3906
  %v3958 = vadd.f32 %v3864, %v3908
  %v3959 = vadd.f32 %v3865, %v3949
  %v3960 = vadd.f32 %v3866, %v3951
  %v3961 = vmul.f32 %v3953, 0.5
  %v3962 = vmul.f32 %v3957, 0.5
  %v3963 = vtanh.pop %v3961
  %v3964 = vtanh.pop %v3962
  %v3965 = vmul.f32 %v3963, 0.5
  %v3966 = vmul.f32 %v3964, 0.5
  %v3967 = vadd.f32 %v3965, 0.5
  %v3968 = vadd.f32 %v3966, 0.5
  %v3969 = vmul.f32 %v3954, 0.5
  %v3970 = vmul.f32 %v3958, 0.5
  %v3971 = vtanh.pop %v3969
  %v3972 = vtanh.pop %v3970
  %v3973 = vmul.f32 %v3971, 0.5
  %v3974 = vmul.f32 %v3972, 0.5
  %v3975 = vadd.f32 %v3973, 0.5
  %v3976 = vadd.f32 %v3974, 0.5
  %v3977 = vtanh.pop %v3955
  %v3978 = vtanh.pop %v3959
  %v3979 = vmul.f32 %v3956, 0.5
  %v3980 = vmul.f32 %v3960, 0.5
  %v3981 = vtanh.pop %v3979
  %v3982 = vtanh.pop %v3980
  %v3983 = vmul.f32 %v3981, 0.5
  %v3984 = vmul.f32 %v3982, 0.5
  %v3985 = vadd.f32 %v3983, 0.5
  %v3986 = vadd.f32 %v3984, 0.5
  %v3987 = vmul.f32 %v3975, %v3851
  %v3988 = vmul.f32 %v3976, %v3852
  %v3989 = vmul.f32 %v3967, %v3977
  %v3990 = vmul.f32 %v3968, %v3978
  %v3991 = vadd.f32 %v3987, %v3989
  %v3992 = vadd.f32 %v3988, %v3990
  %v3993 = vtanh.pop %v3991
  %v3994 = vtanh.pop %v3992
  %v3995 = vmul.f32 %v3985, %v3993
  %v3996 = vmul.f32 %v3986, %v3994
  %v3997 = vpack.c.bf16 %v3996, %v3995
  %3998 = vst [vmem:[%s2136] sm:$0xff] %v3997
  %v3999 = vld [vmem:[%s2140] sm:$0xff]
  %v4000 = vld [vmem:[%s2140 + $0x8] sm:$0xff]
  %v4001 = vld [vmem:[%s2140 + $0x10] sm:$0xff]
  %v4002 = vld [vmem:[%s2140 + $0x18] sm:$0xff]
  %v4003 = vld [vmem:[%s2140 + $0x20] sm:$0xff]
  %v4004 = vld [vmem:[%s2140 + $0x28] sm:$0xff]
  %v4005 = vld [vmem:[%s2140 + $0x30] sm:$0xff]
  %v4006 = vld [vmem:[%s2140 + $0x38] sm:$0xff]
  %4007 = vmatprep.subr.bf16.mxu0 %v3664
  %4008 = vmatpush1.bf16.msra.mxu0 %v3663
  %4009 = vmatprep.subr.bf16.mxu0 %v3668
  %4010 = vmatpush1.bf16.msra.mxu0 %v3667
  %4011 = vmatprep.subr.bf16.mxu0 %v3672
  %4012 = vmatpush1.bf16.msra.mxu0 %v3671
  %4013 = vmatprep.subr.bf16.mxu0 %v3676
  %4014 = vmatpush1.bf16.msra.mxu0 %v3675
  %4015 = vmatprep.subr.bf16.mxu0 %v3680
  %4016 = vmatpush1.bf16.msra.mxu0 %v3679
  %4017 = vmatprep.subr.bf16.mxu0 %v3684
  %4018 = vmatpush1.bf16.msra.mxu0 %v3683
  %4019 = vmatprep.subr.bf16.mxu0 %v3688
  %4020 = vmatpush1.bf16.msra.mxu0 %v3687
  %4021 = vmatprep.subr.bf16.mxu0 %v3692
  %4022 = vmatpush1.bf16.msra.mxu0 %v3691
  %4023 = vmatprep.subr.bf16.mxu0 0
  %4024 = vmatpush1.bf16.msra.mxu0 0
  %4025 = vmatprep.subr.bf16.mxu0 0
  %4026 = vmatpush1.bf16.msra.mxu0 0
  %4027 = vmatprep.subr.bf16.mxu0 0
  %4028 = vmatpush1.bf16.msra.mxu0 0
  %4029 = vmatprep.subr.bf16.mxu0 0
  %4030 = vmatpush1.bf16.msra.mxu0 0
  %4031 = vmatprep.subr.bf16.mxu0 0
  %4032 = vmatpush1.bf16.msra.mxu0 0
  %4033 = vmatprep.subr.bf16.mxu0 0
  %4034 = vmatpush1.bf16.msra.mxu0 0
  %4035 = vmatprep.subr.bf16.mxu0 0
  %4036 = vmatpush1.bf16.msra.mxu0 0
  %4037 = vmatprep.subr.bf16.mxu0 0
  %4038 = vmatpush1.bf16.msra.mxu0 0
  %4039 = vmatprep.mubr.bf16.mxu0 0
  %4040 = vmatmul.mubr.bf16.gmra.mrb[0].mxu0 %v3997
  %v4041 = vpop.f32.mrb[0].mxu0
  %v4042 = vadd.f32 0.0, %v4041
  %v4043 = vpop.f32.mrb[0].mxu0
  %v4044 = vadd.f32 0.0, %v4043
  %v4045 = vpop.f32.mrb[0].mxu0
  %v4046 = vadd.f32 0.0, %v4045
  %v4047 = vpop.f32.mrb[0].mxu0
  %v4048 = vadd.f32 0.0, %v4047
  %4049 = vdwg.mxu0
  %4050 = vmatprep.subr.bf16.mxu0 %v3666
  %4051 = vmatpush1.bf16.msra.mxu0 %v3665
  %4052 = vmatprep.subr.bf16.mxu0 %v3670
  %4053 = vmatpush1.bf16.msra.mxu0 %v3669
  %4054 = vmatprep.subr.bf16.mxu0 %v3674
  %4055 = vmatpush1.bf16.msra.mxu0 %v3673
  %4056 = vmatprep.subr.bf16.mxu0 %v3678
  %4057 = vmatpush1.bf16.msra.mxu0 %v3677
  %4058 = vmatprep.subr.bf16.mxu0 %v3682
  %4059 = vmatpush1.bf16.msra.mxu0 %v3681
  %4060 = vmatprep.subr.bf16.mxu0 %v3686
  %4061 = vmatpush1.bf16.msra.mxu0 %v3685
  %4062 = vmatprep.subr.bf16.mxu0 %v3690
  %4063 = vmatpush1.bf16.msra.mxu0 %v3689
  %4064 = vmatprep.subr.bf16.mxu0 %v3694
  %4065 = vmatpush1.bf16.msra.mxu0 %v3693
  %4066 = vmatprep.subr.bf16.mxu0 0
  %4067 = vmatpush1.bf16.msra.mxu0 0
  %4068 = vmatprep.subr.bf16.mxu0 0
  %4069 = vmatpush1.bf16.msra.mxu0 0
  %4070 = vmatprep.subr.bf16.mxu0 0
  %4071 = vmatpush1.bf16.msra.mxu0 0
  %4072 = vmatprep.subr.bf16.mxu0 0
  %4073 = vmatpush1.bf16.msra.mxu0 0
  %4074 = vmatprep.subr.bf16.mxu0 0
  %4075 = vmatpush1.bf16.msra.mxu0 0
  %4076 = vmatprep.subr.bf16.mxu0 0
  %4077 = vmatpush1.bf16.msra.mxu0 0
  %4078 = vmatprep.subr.bf16.mxu0 0
  %4079 = vmatpush1.bf16.msra.mxu0 0
  %4080 = vmatprep.subr.bf16.mxu0 0
  %4081 = vmatpush1.bf16.msra.mxu0 0
  %4082 = vmatprep.mubr.bf16.mxu0 0
  %4083 = vmatmul.mubr.bf16.gmra.mrb[0].mxu0 %v3997
  %v4084 = vpop.f32.mrb[0].mxu0
  %v4085 = vadd.f32 0.0, %v4084
  %v4086 = vpop.f32.mrb[0].mxu0
  %v4087 = vadd.f32 0.0, %v4086
  %v4088 = vpop.f32.mrb[0].mxu0
  %v4089 = vadd.f32 0.0, %v4088
  %v4090 = vpop.f32.mrb[0].mxu0
  %v4091 = vadd.f32 0.0, %v4090
  %4092 = vdwg.mxu0
  %v4093 = vadd.f32 %v3999, %v4042
  %v4094 = vadd.f32 %v4000, %v4044
  %v4095 = vadd.f32 %v4001, %v4085
  %v4096 = vadd.f32 %v4002, %v4087
  %v4097 = vadd.f32 %v4003, %v4046
  %v4098 = vadd.f32 %v4004, %v4048
  %v4099 = vadd.f32 %v4005, %v4089
  %v4100 = vadd.f32 %v4006, %v4091
  %v4101 = vmul.f32 %v4093, 0.5
  %v4102 = vmul.f32 %v4097, 0.5
  %v4103 = vtanh.pop %v4101
  %v4104 = vtanh.pop %v4102
  %v4105 = vmul.f32 %v4103, 0.5
  %v4106 = vmul.f32 %v4104, 0.5
  %v4107 = vadd.f32 %v4105, 0.5
  %v4108 = vadd.f32 %v4106, 0.5
  %v4109 = vmul.f32 %v4094, 0.5
  %v4110 = vmul.f32 %v4098, 0.5
  %v4111 = vtanh.pop %v4109
  %v4112 = vtanh.pop %v4110
  %v4113 = vmul.f32 %v4111, 0.5
  %v4114 = vmul.f32 %v4112, 0.5
  %v4115 = vadd.f32 %v4113, 0.5
  %v4116 = vadd.f32 %v4114, 0.5
  %v4117 = vtanh.pop %v4095
  %v4118 = vtanh.pop %v4099
  %v4119 = vmul.f32 %v4096, 0.5
  %v4120 = vmul.f32 %v4100, 0.5
  %v4121 = vtanh.pop %v4119
  %v4122 = vtanh.pop %v4120
  %v4123 = vmul.f32 %v4121, 0.5
  %v4124 = vmul.f32 %v4122, 0.5
  %v4125 = vadd.f32 %v4123, 0.5
  %v4126 = vadd.f32 %v4124, 0.5
  %v4127 = vmul.f32 %v4115, %v3991
  %v4128 = vmul.f32 %v4116, %v3992
  %v4129 = vmul.f32 %v4107, %v4117
  %v4130 = vmul.f32 %v4108, %v4118
  %v4131 = vadd.f32 %v4127, %v4129
  %v4132 = vadd.f32 %v4128, %v4130
  %v4133 = vtanh.pop %v4131
  %v4134 = vtanh.pop %v4132
  %v4135 = vmul.f32 %v4125, %v4133
  %v4136 = vmul.f32 %v4126, %v4134
  %v4137 = vpack.c.bf16 %v4136, %v4135
  %4138 = vst [vmem:[%s2280] sm:$0xff] %v4137
  %v4139 = vld [vmem:[%s2284] sm:$0xff]
  %v4140 = vld [vmem:[%s2284 + $0x8] sm:$0xff]
  %v4141 = vld [vmem:[%s2284 + $0x10] sm:$0xff]
  %v4142 = vld [vmem:[%s2284 + $0x18] sm:$0xff]
  %v4143 = vld [vmem:[%s2284 + $0x20] sm:$0xff]
  %v4144 = vld [vmem:[%s2284 + $0x28] sm:$0xff]
  %v4145 = vld [vmem:[%s2284 + $0x30] sm:$0xff]
  %v4146 = vld [vmem:[%s2284 + $0x38] sm:$0xff]
  %4147 = vmatprep.subr.bf16.mxu0 %v3664
  %4148 = vmatpush1.bf16.msra.mxu0 %v3663
  %4149 = vmatprep.subr.bf16.mxu0 %v3668
  %4150 = vmatpush1.bf16.msra.mxu0 %v3667
  %4151 = vmatprep.subr.bf16.mxu0 %v3672
  %4152 = vmatpush1.bf16.msra.mxu0 %v3671
  %4153 = vmatprep.subr.bf16.mxu0 %v3676
  %4154 = vmatpush1.bf16.msra.mxu0 %v3675
  %4155 = vmatprep.subr.bf16.mxu0 %v3680
  %4156 = vmatpush1.bf16.msra.mxu0 %v3679
  %4157 = vmatprep.subr.bf16.mxu0 %v3684
  %4158 = vmatpush1.bf16.msra.mxu0 %v3683
  %4159 = vmatprep.subr.bf16.mxu0 %v3688
  %4160 = vmatpush1.bf16.msra.mxu0 %v3687
  %4161 = vmatprep.subr.bf16.mxu0 %v3692
  %4162 = vmatpush1.bf16.msra.mxu0 %v3691
  %4163 = vmatprep.subr.bf16.mxu0 0
  %4164 = vmatpush1.bf16.msra.mxu0 0
  %4165 = vmatprep.subr.bf16.mxu0 0
  %4166 = vmatpush1.bf16.msra.mxu0 0
  %4167 = vmatprep.subr.bf16.mxu0 0
  %4168 = vmatpush1.bf16.msra.mxu0 0
  %4169 = vmatprep.subr.bf16.mxu0 0
  %4170 = vmatpush1.bf16.msra.mxu0 0
  %4171 = vmatprep.subr.bf16.mxu0 0
  %4172 = vmatpush1.bf16.msra.mxu0 0
  %4173 = vmatprep.subr.bf16.mxu0 0
  %4174 = vmatpush1.bf16.msra.mxu0 0
  %4175 = vmatprep.subr.bf16.mxu0 0
  %4176 = vmatpush1.bf16.msra.mxu0 0
  %4177 = vmatprep.subr.bf16.mxu0 0
  %4178 = vmatpush1.bf16.msra.mxu0 0
  %4179 = vmatprep.mubr.bf16.mxu0 0
  %4180 = vmatmul.mubr.bf16.gmra.mrb[0].mxu0 %v4137
  %v4181 = vpop.f32.mrb[0].mxu0
  %v4182 = vadd.f32 0.0, %v4181
  %v4183 = vpop.f32.mrb[0].mxu0
  %v4184 = vadd.f32 0.0, %v4183
  %v4185 = vpop.f32.mrb[0].mxu0
  %v4186 = vadd.f32 0.0, %v4185
  %v4187 = vpop.f32.mrb[0].mxu0
  %v4188 = vadd.f32 0.0, %v4187
  %4189 = vdwg.mxu0
  %4190 = vmatprep.subr.bf16.mxu0 %v3666
  %4191 = vmatpush1.bf16.msra.mxu0 %v3665
  %4192 = vmatprep.subr.bf16.mxu0 %v3670
  %4193 = vmatpush1.bf16.msra.mxu0 %v3669
  %4194 = vmatprep.subr.bf16.mxu0 %v3674
  %4195 = vmatpush1.bf16.msra.mxu0 %v3673
  %4196 = vmatprep.subr.bf16.mxu0 %v3678
  %4197 = vmatpush1.bf16.msra.mxu0 %v3677
  %4198 = vmatprep.subr.bf16.mxu0 %v3682
  %4199 = vmatpush1.bf16.msra.mxu0 %v3681
  %4200 = vmatprep.subr.bf16.mxu0 %v3686
  %4201 = vmatpush1.bf16.msra.mxu0 %v3685
  %4202 = vmatprep.subr.bf16.mxu0 %v3690
  %4203 = vmatpush1.bf16.msra.mxu0 %v3689
  %4204 = vmatprep.subr.bf16.mxu0 %v3694
  %4205 = vmatpush1.bf16.msra.mxu0 %v3693
  %4206 = vmatprep.subr.bf16.mxu0 0
  %4207 = vmatpush1.bf16.msra.mxu0 0
  %4208 = vmatprep.subr.bf16.mxu0 0
  %4209 = vmatpush1.bf16.msra.mxu0 0
  %4210 = vmatprep.subr.bf16.mxu0 0
  %4211 = vmatpush1.bf16.msra.mxu0 0
  %4212 = vmatprep.subr.bf16.mxu0 0
  %4213 = vmatpush1.bf16.msra.mxu0 0
  %4214 = vmatprep.subr.bf16.mxu0 0
  %4215 = vmatpush1.bf16.msra.mxu0 0
  %4216 = vmatprep.subr.bf16.mxu0 0
  %4217 = vmatpush1.bf16.msra.mxu0 0
  %4218 = vmatprep.subr.bf16.mxu0 0
  %4219 = vmatpush1.bf16.msra.mxu0 0
  %4220 = vmatprep.subr.bf16.mxu0 0
  %4221 = vmatpush1.bf16.msra.mxu0 0
  %4222 = vmatprep.mubr.bf16.mxu0 0
  %4223 = vmatmul.mubr.bf16.gmra.mrb[0].mxu0 %v4137
  %v4224 = vpop.f32.mrb[0].mxu0
  %v4225 = vadd.f32 0.0, %v4224
  %v4226 = vpop.f32.mrb[0].mxu0
  %v4227 = vadd.f32 0.0, %v4226
  %v4228 = vpop.f32.mrb[0].mxu0
  %v4229 = vadd.f32 0.0, %v4228
  %v4230 = vpop.f32.mrb[0].mxu0
  %v4231 = vadd.f32 0.0, %v4230
  %4232 = vdwg.mxu0
  %v4233 = vadd.f32 %v4139, %v4182
  %v4234 = vadd.f32 %v4140, %v4184
  %v4235 = vadd.f32 %v4141, %v4225
  %v4236 = vadd.f32 %v4142, %v4227
  %v4237 = vadd.f32 %v4143, %v4186
  %v4238 = vadd.f32 %v4144, %v4188
  %v4239 = vadd.f32 %v4145, %v4229
  %v4240 = vadd.f32 %v4146, %v4231
  %v4241 = vmul.f32 %v4233, 0.5
  %v4242 = vmul.f32 %v4237, 0.5
  %v4243 = vtanh.pop %v4241
  %v4244 = vtanh.pop %v4242
  %v4245 = vmul.f32 %v4243, 0.5
  %v4246 = vmul.f32 %v4244, 0.5
  %v4247 = vadd.f32 %v4245, 0.5
  %v4248 = vadd.f32 %v4246, 0.5
  %v4249 = vmul.f32 %v4234, 0.5
  %v4250 = vmul.f32 %v4238, 0.5
  %v4251 = vtanh.pop %v4249
  %v4252 = vtanh.pop %v4250
  %v4253 = vmul.f32 %v4251, 0.5
  %v4254 = vmul.f32 %v4252, 0.5
  %v4255 = vadd.f32 %v4253, 0.5
  %v4256 = vadd.f32 %v4254, 0.5
  %v4257 = vtanh.pop %v4235
  %v4258 = vtanh.pop %v4239
  %v4259 = vmul.f32 %v4236, 0.5
  %v4260 = vmul.f32 %v4240, 0.5
  %v4261 = vtanh.pop %v4259
  %v4262 = vtanh.pop %v4260
  %v4263 = vmul.f32 %v4261, 0.5
  %v4264 = vmul.f32 %v4262, 0.5
  %v4265 = vadd.f32 %v4263, 0.5
  %v4266 = vadd.f32 %v4264, 0.5
  %v4267 = vmul.f32 %v4255, %v4131
  %v4268 = vmul.f32 %v4256, %v4132
  %v4269 = vmul.f32 %v4247, %v4257
  %v4270 = vmul.f32 %v4248, %v4258
  %v4271 = vadd.f32 %v4267, %v4269
  %v4272 = vadd.f32 %v4268, %v4270
  %v4273 = vtanh.pop %v4271
  %v4274 = vtanh.pop %v4272
  %v4275 = vmul.f32 %v4265, %v4273
  %v4276 = vmul.f32 %v4266, %v4274
  %v4277 = vpack.c.bf16 %v4276, %v4275
  %4278 = vst [vmem:[%s2424] sm:$0xff] %v4277
  %v4279 = vld [vmem:[%s2428] sm:$0xff]
  %v4280 = vld [vmem:[%s2428 + $0x8] sm:$0xff]
  %v4281 = vld [vmem:[%s2428 + $0x10] sm:$0xff]
  %v4282 = vld [vmem:[%s2428 + $0x18] sm:$0xff]
  %v4283 = vld [vmem:[%s2428 + $0x20] sm:$0xff]
  %v4284 = vld [vmem:[%s2428 + $0x28] sm:$0xff]
  %v4285 = vld [vmem:[%s2428 + $0x30] sm:$0xff]
  %v4286 = vld [vmem:[%s2428 + $0x38] sm:$0xff]
  %4287 = vmatprep.subr.bf16.mxu0 %v3664
  %4288 = vmatpush1.bf16.msra.mxu0 %v3663
  %4289 = vmatprep.subr.bf16.mxu0 %v3668
  %4290 = vmatpush1.bf16.msra.mxu0 %v3667
  %4291 = vmatprep.subr.bf16.mxu0 %v3672
  %4292 = vmatpush1.bf16.msra.mxu0 %v3671
  %4293 = vmatprep.subr.bf16.mxu0 %v3676
  %4294 = vmatpush1.bf16.msra.mxu0 %v3675
  %4295 = vmatprep.subr.bf16.mxu0 %v3680
  %4296 = vmatpush1.bf16.msra.mxu0 %v3679
  %4297 = vmatprep.subr.bf16.mxu0 %v3684
  %4298 = vmatpush1.bf16.msra.mxu0 %v3683
  %4299 = vmatprep.subr.bf16.mxu0 %v3688
  %4300 = vmatpush1.bf16.msra.mxu0 %v3687
  %4301 = vmatprep.subr.bf16.mxu0 %v3692
  %4302 = vmatpush1.bf16.msra.mxu0 %v3691
  %4303 = vmatprep.subr.bf16.mxu0 0
  %4304 = vmatpush1.bf16.msra.mxu0 0
  %4305 = vmatprep.subr.bf16.mxu0 0
  %4306 = vmatpush1.bf16.msra.mxu0 0
  %4307 = vmatprep.subr.bf16.mxu0 0
  %4308 = vmatpush1.bf16.msra.mxu0 0
  %4309 = vmatprep.subr.bf16.mxu0 0
  %4310 = vmatpush1.bf16.msra.mxu0 0
  %4311 = vmatprep.subr.bf16.mxu0 0
  %4312 = vmatpush1.bf16.msra.mxu0 0
  %4313 = vmatprep.subr.bf16.mxu0 0
  %4314 = vmatpush1.bf16.msra.mxu0 0
  %4315 = vmatprep.subr.bf16.mxu0 0
  %4316 = vmatpush1.bf16.msra.mxu0 0
  %4317 = vmatprep.subr.bf16.mxu0 0
  %4318 = vmatpush1.bf16.msra.mxu0 0
  %4319 = vmatprep.mubr.bf16.mxu0 0
  %4320 = vmatmul.mubr.bf16.gmra.mrb[0].mxu0 %v4277
  %v4321 = vpop.f32.mrb[0].mxu0
  %v4322 = vadd.f32 0.0, %v4321
  %v4323 = vpop.f32.mrb[0].mxu0
  %v4324 = vadd.f32 0.0, %v4323
  %v4325 = vpop.f32.mrb[0].mxu0
  %v4326 = vadd.f32 0.0, %v4325
  %v4327 = vpop.f32.mrb[0].mxu0
  %v4328 = vadd.f32 0.0, %v4327
  %4329 = vdwg.mxu0
  %4330 = vmatprep.subr.bf16.mxu0 %v3666
  %4331 = vmatpush1.bf16.msra.mxu0 %v3665
  %4332 = vmatprep.subr.bf16.mxu0 %v3670
  %4333 = vmatpush1.bf16.msra.mxu0 %v3669
  %4334 = vmatprep.subr.bf16.mxu0 %v3674
  %4335 = vmatpush1.bf16.msra.mxu0 %v3673
  %4336 = vmatprep.subr.bf16.mxu0 %v3678
  %4337 = vmatpush1.bf16.msra.mxu0 %v3677
  %4338 = vmatprep.subr.bf16.mxu0 %v3682
  %4339 = vmatpush1.bf16.msra.mxu0 %v3681
  %4340 = vmatprep.subr.bf16.mxu0 %v3686
  %4341 = vmatpush1.bf16.msra.mxu0 %v3685
  %4342 = vmatprep.subr.bf16.mxu0 %v3690
  %4343 = vmatpush1.bf16.msra.mxu0 %v3689
  %4344 = vmatprep.subr.bf16.mxu0 %v3694
  %4345 = vmatpush1.bf16.msra.mxu0 %v3693
  %4346 = vmatprep.subr.bf16.mxu0 0
  %4347 = vmatpush1.bf16.msra.mxu0 0
  %4348 = vmatprep.subr.bf16.mxu0 0
  %4349 = vmatpush1.bf16.msra.mxu0 0
  %4350 = vmatprep.subr.bf16.mxu0 0
  %4351 = vmatpush1.bf16.msra.mxu0 0
  %4352 = vmatprep.subr.bf16.mxu0 0
  %4353 = vmatpush1.bf16.msra.mxu0 0
  %4354 = vmatprep.subr.bf16.mxu0 0
  %4355 = vmatpush1.bf16.msra.mxu0 0
  %4356 = vmatprep.subr.bf16.mxu0 0
  %4357 = vmatpush1.bf16.msra.mxu0 0
  %4358 = vmatprep.subr.bf16.mxu0 0
  %4359 = vmatpush1.bf16.msra.mxu0 0
  %4360 = vmatprep.subr.bf16.mxu0 0
  %4361 = vmatpush1.bf16.msra.mxu0 0
  %4362 = vmatprep.mubr.bf16.mxu0 0
  %4363 = vmatmul.mubr.bf16.gmra.mrb[0].mxu0 %v4277
  %v4364 = vpop.f32.mrb[0].mxu0
  %v4365 = vadd.f32 0.0, %v4364
  %v4366 = vpop.f32.mrb[0].mxu0
  %v4367 = vadd.f32 0.0, %v4366
  %v4368 = vpop.f32.mrb[0].mxu0
  %v4369 = vadd.f32 0.0, %v4368
  %v4370 = vpop.f32.mrb[0].mxu0
  %v4371 = vadd.f32 0.0, %v4370
  %4372 = vdwg.mxu0
  %v4373 = vadd.f32 %v4279, %v4322
  %v4374 = vadd.f32 %v4280, %v4324
  %v4375 = vadd.f32 %v4281, %v4365
  %v4376 = vadd.f32 %v4282, %v4367
  %v4377 = vadd.f32 %v4283, %v4326
  %v4378 = vadd.f32 %v4284, %v4328
  %v4379 = vadd.f32 %v4285, %v4369
  %v4380 = vadd.f32 %v4286, %v4371
  %v4381 = vmul.f32 %v4373, 0.5
  %v4382 = vmul.f32 %v4377, 0.5
  %v4383 = vtanh.pop %v4381
  %v4384 = vtanh.pop %v4382
  %v4385 = vmul.f32 %v4383, 0.5
  %v4386 = vmul.f32 %v4384, 0.5
  %v4387 = vadd.f32 %v4385, 0.5
  %v4388 = vadd.f32 %v4386, 0.5
  %v4389 = vmul.f32 %v4374, 0.5
  %v4390 = vmul.f32 %v4378, 0.5
  %v4391 = vtanh.pop %v4389
  %v4392 = vtanh.pop %v4390
  %v4393 = vmul.f32 %v4391, 0.5
  %v4394 = vmul.f32 %v4392, 0.5
  %v4395 = vadd.f32 %v4393, 0.5
  %v4396 = vadd.f32 %v4394, 0.5
  %v4397 = vtanh.pop %v4375
  %v4398 = vtanh.pop %v4379
  %v4399 = vmul.f32 %v4376, 0.5
  %v4400 = vmul.f32 %v4380, 0.5
  %v4401 = vtanh.pop %v4399
  %v4402 = vtanh.pop %v4400
  %v4403 = vmul.f32 %v4401, 0.5
  %v4404 = vmul.f32 %v4402, 0.5
  %v4405 = vadd.f32 %v4403, 0.5
  %v4406 = vadd.f32 %v4404, 0.5
  %v4407 = vmul.f32 %v4395, %v4271
  %v4408 = vmul.f32 %v4396, %v4272
  %v4409 = vmul.f32 %v4387, %v4397
  %v4410 = vmul.f32 %v4388, %v4398
  %v4411 = vadd.f32 %v4407, %v4409
  %v4412 = vadd.f32 %v4408, %v4410
  %v4413 = vtanh.pop %v4411
  %v4414 = vtanh.pop %v4412
  %v4415 = vmul.f32 %v4405, %v4413
  %v4416 = vmul.f32 %v4406, %v4414
  %v4417 = vpack.c.bf16 %v4416, %v4415
  %4418 = vst [vmem:[%s2568] sm:$0xff] %v4417
  %v4419 = vld [vmem:[%s2572] sm:$0xff]
  %v4420 = vld [vmem:[%s2572 + $0x8] sm:$0xff]
  %v4421 = vld [vmem:[%s2572 + $0x10] sm:$0xff]
  %v4422 = vld [vmem:[%s2572 + $0x18] sm:$0xff]
  %v4423 = vld [vmem:[%s2572 + $0x20] sm:$0xff]
  %v4424 = vld [vmem:[%s2572 + $0x28] sm:$0xff]
  %v4425 = vld [vmem:[%s2572 + $0x30] sm:$0xff]
  %v4426 = vld [vmem:[%s2572 + $0x38] sm:$0xff]
  %4427 = vmatprep.subr.bf16.mxu0 %v3664
  %4428 = vmatpush1.bf16.msra.mxu0 %v3663
  %4429 = vmatprep.subr.bf16.mxu0 %v3668
  %4430 = vmatpush1.bf16.msra.mxu0 %v3667
  %4431 = vmatprep.subr.bf16.mxu0 %v3672
  %4432 = vmatpush1.bf16.msra.mxu0 %v3671
  %4433 = vmatprep.subr.bf16.mxu0 %v3676
  %4434 = vmatpush1.bf16.msra.mxu0 %v3675
  %4435 = vmatprep.subr.bf16.mxu0 %v3680
  %4436 = vmatpush1.bf16.msra.mxu0 %v3679
  %4437 = vmatprep.subr.bf16.mxu0 %v3684
  %4438 = vmatpush1.bf16.msra.mxu0 %v3683
  %4439 = vmatprep.subr.bf16.mxu0 %v3688
  %4440 = vmatpush1.bf16.msra.mxu0 %v3687
  %4441 = vmatprep.subr.bf16.mxu0 %v3692
  %4442 = vmatpush1.bf16.msra.mxu0 %v3691
  %4443 = vmatprep.subr.bf16.mxu0 0
  %4444 = vmatpush1.bf16.msra.mxu0 0
  %4445 = vmatprep.subr.bf16.mxu0 0
  %4446 = vmatpush1.bf16.msra.mxu0 0
  %4447 = vmatprep.subr.bf16.mxu0 0
  %4448 = vmatpush1.bf16.msra.mxu0 0
  %4449 = vmatprep.subr.bf16.mxu0 0
  %4450 = vmatpush1.bf16.msra.mxu0 0
  %4451 = vmatprep.subr.bf16.mxu0 0
  %4452 = vmatpush1.bf16.msra.mxu0 0
  %4453 = vmatprep.subr.bf16.mxu0 0
  %4454 = vmatpush1.bf16.msra.mxu0 0
  %4455 = vmatprep.subr.bf16.mxu0 0
  %4456 = vmatpush1.bf16.msra.mxu0 0
  %4457 = vmatprep.subr.bf16.mxu0 0
  %4458 = vmatpush1.bf16.msra.mxu0 0
  %4459 = vmatprep.mubr.bf16.mxu0 0
  %4460 = vmatmul.mubr.bf16.gmra.mrb[0].mxu0 %v4417
  %v4461 = vpop.f32.mrb[0].mxu0
  %v4462 = vadd.f32 0.0, %v4461
  %v4463 = vpop.f32.mrb[0].mxu0
  %v4464 = vadd.f32 0.0, %v4463
  %v4465 = vpop.f32.mrb[0].mxu0
  %v4466 = vadd.f32 0.0, %v4465
  %v4467 = vpop.f32.mrb[0].mxu0
  %v4468 = vadd.f32 0.0, %v4467
  %4469 = vdwg.mxu0
  %4470 = vmatprep.subr.bf16.mxu0 %v3666
  %4471 = vmatpush1.bf16.msra.mxu0 %v3665
  %4472 = vmatprep.subr.bf16.mxu0 %v3670
  %4473 = vmatpush1.bf16.msra.mxu0 %v3669
  %4474 = vmatprep.subr.bf16.mxu0 %v3674
  %4475 = vmatpush1.bf16.msra.mxu0 %v3673
  %4476 = vmatprep.subr.bf16.mxu0 %v3678
  %4477 = vmatpush1.bf16.msra.mxu0 %v3677
  %4478 = vmatprep.subr.bf16.mxu0 %v3682
  %4479 = vmatpush1.bf16.msra.mxu0 %v3681
  %4480 = vmatprep.subr.bf16.mxu0 %v3686
  %4481 = vmatpush1.bf16.msra.mxu0 %v3685
  %4482 = vmatprep.subr.bf16.mxu0 %v3690
  %4483 = vmatpush1.bf16.msra.mxu0 %v3689
  %4484 = vmatprep.subr.bf16.mxu0 %v3694
  %4485 = vmatpush1.bf16.msra.mxu0 %v3693
  %4486 = vmatprep.subr.bf16.mxu0 0
  %4487 = vmatpush1.bf16.msra.mxu0 0
  %4488 = vmatprep.subr.bf16.mxu0 0
  %4489 = vmatpush1.bf16.msra.mxu0 0
  %4490 = vmatprep.subr.bf16.mxu0 0
  %4491 = vmatpush1.bf16.msra.mxu0 0
  %4492 = vmatprep.subr.bf16.mxu0 0
  %4493 = vmatpush1.bf16.msra.mxu0 0
  %4494 = vmatprep.subr.bf16.mxu0 0
  %4495 = vmatpush1.bf16.msra.mxu0 0
  %4496 = vmatprep.subr.bf16.mxu0 0
  %4497 = vmatpush1.bf16.msra.mxu0 0
  %4498 = vmatprep.subr.bf16.mxu0 0
  %4499 = vmatpush1.bf16.msra.mxu0 0
  %4500 = vmatprep.subr.bf16.mxu0 0
  %4501 = vmatpush1.bf16.msra.mxu0 0
  %4502 = vmatprep.mubr.bf16.mxu0 0
  %4503 = vmatmul.mubr.bf16.gmra.mrb[0].mxu0 %v4417
  %v4504 = vpop.f32.mrb[0].mxu0
  %v4505 = vadd.f32 0.0, %v4504
  %v4506 = vpop.f32.mrb[0].mxu0
  %v4507 = vadd.f32 0.0, %v4506
  %v4508 = vpop.f32.mrb[0].mxu0
  %v4509 = vadd.f32 0.0, %v4508
  %v4510 = vpop.f32.mrb[0].mxu0
  %v4511 = vadd.f32 0.0, %v4510
  %4512 = vdwg.mxu0
  %v4513 = vadd.f32 %v4419, %v4462
  %v4514 = vadd.f32 %v4420, %v4464
  %v4515 = vadd.f32 %v4421, %v4505
  %v4516 = vadd.f32 %v4422, %v4507
  %v4517 = vadd.f32 %v4423, %v4466
  %v4518 = vadd.f32 %v4424, %v4468
  %v4519 = vadd.f32 %v4425, %v4509
  %v4520 = vadd.f32 %v4426, %v4511
  %v4521 = vmul.f32 %v4513, 0.5
  %v4522 = vmul.f32 %v4517, 0.5
  %v4523 = vtanh.pop %v4521
  %v4524 = vtanh.pop %v4522
  %v4525 = vmul.f32 %v4523, 0.5
  %v4526 = vmul.f32 %v4524, 0.5
  %v4527 = vadd.f32 %v4525, 0.5
  %v4528 = vadd.f32 %v4526, 0.5
  %v4529 = vmul.f32 %v4514, 0.5
  %v4530 = vmul.f32 %v4518, 0.5
  %v4531 = vtanh.pop %v4529
  %v4532 = vtanh.pop %v4530
  %v4533 = vmul.f32 %v4531, 0.5
  %v4534 = vmul.f32 %v4532, 0.5
  %v4535 = vadd.f32 %v4533, 0.5
  %v4536 = vadd.f32 %v4534, 0.5
  %v4537 = vtanh.pop %v4515
  %v4538 = vtanh.pop %v4519
  %v4539 = vmul.f32 %v4516, 0.5
  %v4540 = vmul.f32 %v4520, 0.5
  %v4541 = vtanh.pop %v4539
  %v4542 = vtanh.pop %v4540
  %v4543 = vmul.f32 %v4541, 0.5
  %v4544 = vmul.f32 %v4542, 0.5
  %v4545 = vadd.f32 %v4543, 0.5
  %v4546 = vadd.f32 %v4544, 0.5
  %v4547 = vmul.f32 %v4535, %v4411
  %v4548 = vmul.f32 %v4536, %v4412
  %v4549 = vmul.f32 %v4527, %v4537
  %v4550 = vmul.f32 %v4528, %v4538
  %v4551 = vadd.f32 %v4547, %v4549
  %v4552 = vadd.f32 %v4548, %v4550
  %v4553 = vtanh.pop %v4551
  %v4554 = vtanh.pop %v4552
  %v4555 = vmul.f32 %v4545, %v4553
  %v4556 = vmul.f32 %v4546, %v4554
  %v4557 = vpack.c.bf16 %v4556, %v4555
  %4558 = vst [vmem:[%s2712] sm:$0xff] %v4557
  %v4559 = vld [vmem:[%s2716] sm:$0xff]
  %v4560 = vld [vmem:[%s2716 + $0x8] sm:$0xff]
  %v4561 = vld [vmem:[%s2716 + $0x10] sm:$0xff]
  %v4562 = vld [vmem:[%s2716 + $0x18] sm:$0xff]
  %v4563 = vld [vmem:[%s2716 + $0x20] sm:$0xff]
  %v4564 = vld [vmem:[%s2716 + $0x28] sm:$0xff]
  %v4565 = vld [vmem:[%s2716 + $0x30] sm:$0xff]
  %v4566 = vld [vmem:[%s2716 + $0x38] sm:$0xff]
  %4567 = vmatprep.subr.bf16.mxu0 %v3664
  %4568 = vmatpush1.bf16.msra.mxu0 %v3663
  %4569 = vmatprep.subr.bf16.mxu0 %v3668
  %4570 = vmatpush1.bf16.msra.mxu0 %v3667
  %4571 = vmatprep.subr.bf16.mxu0 %v3672
  %4572 = vmatpush1.bf16.msra.mxu0 %v3671
  %4573 = vmatprep.subr.bf16.mxu0 %v3676
  %4574 = vmatpush1.bf16.msra.mxu0 %v3675
  %4575 = vmatprep.subr.bf16.mxu0 %v3680
  %4576 = vmatpush1.bf16.msra.mxu0 %v3679
  %4577 = vmatprep.subr.bf16.mxu0 %v3684
  %4578 = vmatpush1.bf16.msra.mxu0 %v3683
  %4579 = vmatprep.subr.bf16.mxu0 %v3688
  %4580 = vmatpush1.bf16.msra.mxu0 %v3687
  %4581 = vmatprep.subr.bf16.mxu0 %v3692
  %4582 = vmatpush1.bf16.msra.mxu0 %v3691
  %4583 = vmatprep.subr.bf16.mxu0 0
  %4584 = vmatpush1.bf16.msra.mxu0 0
  %4585 = vmatprep.subr.bf16.mxu0 0
  %4586 = vmatpush1.bf16.msra.mxu0 0
  %4587 = vmatprep.subr.bf16.mxu0 0
  %4588 = vmatpush1.bf16.msra.mxu0 0
  %4589 = vmatprep.subr.bf16.mxu0 0
  %4590 = vmatpush1.bf16.msra.mxu0 0
  %4591 = vmatprep.subr.bf16.mxu0 0
  %4592 = vmatpush1.bf16.msra.mxu0 0
  %4593 = vmatprep.subr.bf16.mxu0 0
  %4594 = vmatpush1.bf16.msra.mxu0 0
  %4595 = vmatprep.subr.bf16.mxu0 0
  %4596 = vmatpush1.bf16.msra.mxu0 0
  %4597 = vmatprep.subr.bf16.mxu0 0
  %4598 = vmatpush1.bf16.msra.mxu0 0
  %4599 = vmatprep.mubr.bf16.mxu0 0
  %4600 = vmatmul.mubr.bf16.gmra.mrb[0].mxu0 %v4557
  %v4601 = vpop.f32.mrb[0].mxu0
  %v4602 = vadd.f32 0.0, %v4601
  %v4603 = vpop.f32.mrb[0].mxu0
  %v4604 = vadd.f32 0.0, %v4603
  %v4605 = vpop.f32.mrb[0].mxu0
  %v4606 = vadd.f32 0.0, %v4605
  %v4607 = vpop.f32.mrb[0].mxu0
  %v4608 = vadd.f32 0.0, %v4607
  %4609 = vdwg.mxu0
  %4610 = vmatprep.subr.bf16.mxu0 %v3666
  %4611 = vmatpush1.bf16.msra.mxu0 %v3665
  %4612 = vmatprep.subr.bf16.mxu0 %v3670
  %4613 = vmatpush1.bf16.msra.mxu0 %v3669
  %4614 = vmatprep.subr.bf16.mxu0 %v3674
  %4615 = vmatpush1.bf16.msra.mxu0 %v3673
  %4616 = vmatprep.subr.bf16.mxu0 %v3678
  %4617 = vmatpush1.bf16.msra.mxu0 %v3677
  %4618 = vmatprep.subr.bf16.mxu0 %v3682
  %4619 = vmatpush1.bf16.msra.mxu0 %v3681
  %4620 = vmatprep.subr.bf16.mxu0 %v3686
  %4621 = vmatpush1.bf16.msra.mxu0 %v3685
  %4622 = vmatprep.subr.bf16.mxu0 %v3690
  %4623 = vmatpush1.bf16.msra.mxu0 %v3689
  %4624 = vmatprep.subr.bf16.mxu0 %v3694
  %4625 = vmatpush1.bf16.msra.mxu0 %v3693
  %4626 = vmatprep.subr.bf16.mxu0 0
  %4627 = vmatpush1.bf16.msra.mxu0 0
  %4628 = vmatprep.subr.bf16.mxu0 0
  %4629 = vmatpush1.bf16.msra.mxu0 0
  %4630 = vmatprep.subr.bf16.mxu0 0
  %4631 = vmatpush1.bf16.msra.mxu0 0
  %4632 = vmatprep.subr.bf16.mxu0 0
  %4633 = vmatpush1.bf16.msra.mxu0 0
  %4634 = vmatprep.subr.bf16.mxu0 0
  %4635 = vmatpush1.bf16.msra.mxu0 0
  %4636 = vmatprep.subr.bf16.mxu0 0
  %4637 = vmatpush1.bf16.msra.mxu0 0
  %4638 = vmatprep.subr.bf16.mxu0 0
  %4639 = vmatpush1.bf16.msra.mxu0 0
  %4640 = vmatprep.subr.bf16.mxu0 0
  %4641 = vmatpush1.bf16.msra.mxu0 0
  %4642 = vmatprep.mubr.bf16.mxu0 0
  %4643 = vmatmul.mubr.bf16.gmra.mrb[0].mxu0 %v4557
  %v4644 = vpop.f32.mrb[0].mxu0
  %v4645 = vadd.f32 0.0, %v4644
  %v4646 = vpop.f32.mrb[0].mxu0
  %v4647 = vadd.f32 0.0, %v4646
  %v4648 = vpop.f32.mrb[0].mxu0
  %v4649 = vadd.f32 0.0, %v4648
  %v4650 = vpop.f32.mrb[0].mxu0
  %v4651 = vadd.f32 0.0, %v4650
  %4652 = vdwg.mxu0
  %v4653 = vadd.f32 %v4559, %v4602
  %v4654 = vadd.f32 %v4560, %v4604
  %v4655 = vadd.f32 %v4561, %v4645
  %v4656 = vadd.f32 %v4562, %v4647
  %v4657 = vadd.f32 %v4563, %v4606
  %v4658 = vadd.f32 %v4564, %v4608
  %v4659 = vadd.f32 %v4565, %v4649
  %v4660 = vadd.f32 %v4566, %v4651
  %v4661 = vmul.f32 %v4653, 0.5
  %v4662 = vmul.f32 %v4657, 0.5
  %v4663 = vtanh.pop %v4661
  %v4664 = vtanh.pop %v4662
  %v4665 = vmul.f32 %v4663, 0.5
  %v4666 = vmul.f32 %v4664, 0.5
  %v4667 = vadd.f32 %v4665, 0.5
  %v4668 = vadd.f32 %v4666, 0.5
  %v4669 = vmul.f32 %v4654, 0.5
  %v4670 = vmul.f32 %v4658, 0.5
  %v4671 = vtanh.pop %v4669
  %v4672 = vtanh.pop %v4670
  %v4673 = vmul.f32 %v4671, 0.5
  %v4674 = vmul.f32 %v4672, 0.5
  %v4675 = vadd.f32 %v4673, 0.5
  %v4676 = vadd.f32 %v4674, 0.5
  %v4677 = vtanh.pop %v4655
  %v4678 = vtanh.pop %v4659
  %v4679 = vmul.f32 %v4656, 0.5
  %v4680 = vmul.f32 %v4660, 0.5
  %v4681 = vtanh.pop %v4679
  %v4682 = vtanh.pop %v4680
  %v4683 = vmul.f32 %v4681, 0.5
  %v4684 = vmul.f32 %v4682, 0.5
  %v4685 = vadd.f32 %v4683, 0.5
  %v4686 = vadd.f32 %v4684, 0.5
  %v4687 = vmul.f32 %v4675, %v4551
  %v4688 = vmul.f32 %v4676, %v4552
  %v4689 = vmul.f32 %v4667, %v4677
  %v4690 = vmul.f32 %v4668, %v4678
  %v4691 = vadd.f32 %v4687, %v4689
  %v4692 = vadd.f32 %v4688, %v4690
  %v4693 = vtanh.pop %v4691
  %v4694 = vtanh.pop %v4692
  %v4695 = vmul.f32 %v4685, %v4693
  %v4696 = vmul.f32 %v4686, %v4694
  %v4697 = vpack.c.bf16 %v4696, %v4695
  %4698 = vst [vmem:[%s2856] sm:$0xff] %v4697
  %v4699 = vld [vmem:[%s2860] sm:$0xff]
  %v4700 = vld [vmem:[%s2860 + $0x8] sm:$0xff]
  %v4701 = vld [vmem:[%s2860 + $0x10] sm:$0xff]
  %v4702 = vld [vmem:[%s2860 + $0x18] sm:$0xff]
  %v4703 = vld [vmem:[%s2860 + $0x20] sm:$0xff]
  %v4704 = vld [vmem:[%s2860 + $0x28] sm:$0xff]
  %v4705 = vld [vmem:[%s2860 + $0x30] sm:$0xff]
  %v4706 = vld [vmem:[%s2860 + $0x38] sm:$0xff]
  %4707 = vmatprep.subr.bf16.mxu0 %v3664
  %4708 = vmatpush1.bf16.msra.mxu0 %v3663
  %4709 = vmatprep.subr.bf16.mxu0 %v3668
  %4710 = vmatpush1.bf16.msra.mxu0 %v3667
  %4711 = vmatprep.subr.bf16.mxu0 %v3672
  %4712 = vmatpush1.bf16.msra.mxu0 %v3671
  %4713 = vmatprep.subr.bf16.mxu0 %v3676
  %4714 = vmatpush1.bf16.msra.mxu0 %v3675
  %4715 = vmatprep.subr.bf16.mxu0 %v3680
  %4716 = vmatpush1.bf16.msra.mxu0 %v3679
  %4717 = vmatprep.subr.bf16.mxu0 %v3684
  %4718 = vmatpush1.bf16.msra.mxu0 %v3683
  %4719 = vmatprep.subr.bf16.mxu0 %v3688
  %4720 = vmatpush1.bf16.msra.mxu0 %v3687
  %4721 = vmatprep.subr.bf16.mxu0 %v3692
  %4722 = vmatpush1.bf16.msra.mxu0 %v3691
  %4723 = vmatprep.subr.bf16.mxu0 0
  %4724 = vmatpush1.bf16.msra.mxu0 0
  %4725 = vmatprep.subr.bf16.mxu0 0
  %4726 = vmatpush1.bf16.msra.mxu0 0
  %4727 = vmatprep.subr.bf16.mxu0 0
  %4728 = vmatpush1.bf16.msra.mxu0 0
  %4729 = vmatprep.subr.bf16.mxu0 0
  %4730 = vmatpush1.bf16.msra.mxu0 0
  %4731 = vmatprep.subr.bf16.mxu0 0
  %4732 = vmatpush1.bf16.msra.mxu0 0
  %4733 = vmatprep.subr.bf16.mxu0 0
  %4734 = vmatpush1.bf16.msra.mxu0 0
  %4735 = vmatprep.subr.bf16.mxu0 0
  %4736 = vmatpush1.bf16.msra.mxu0 0
  %4737 = vmatprep.subr.bf16.mxu0 0
  %4738 = vmatpush1.bf16.msra.mxu0 0
  %4739 = vmatprep.mubr.bf16.mxu0 0
  %4740 = vmatmul.mubr.bf16.gmra.mrb[0].mxu0 %v4697
  %v4741 = vpop.f32.mrb[0].mxu0
  %v4742 = vadd.f32 0.0, %v4741
  %v4743 = vpop.f32.mrb[0].mxu0
  %v4744 = vadd.f32 0.0, %v4743
  %v4745 = vpop.f32.mrb[0].mxu0
  %v4746 = vadd.f32 0.0, %v4745
  %v4747 = vpop.f32.mrb[0].mxu0
  %v4748 = vadd.f32 0.0, %v4747
  %4749 = vdwg.mxu0
  %4750 = vmatprep.subr.bf16.mxu0 %v3666
  %4751 = vmatpush1.bf16.msra.mxu0 %v3665
  %4752 = vmatprep.subr.bf16.mxu0 %v3670
  %4753 = vmatpush1.bf16.msra.mxu0 %v3669
  %4754 = vmatprep.subr.bf16.mxu0 %v3674
  %4755 = vmatpush1.bf16.msra.mxu0 %v3673
  %4756 = vmatprep.subr.bf16.mxu0 %v3678
  %4757 = vmatpush1.bf16.msra.mxu0 %v3677
  %4758 = vmatprep.subr.bf16.mxu0 %v3682
  %4759 = vmatpush1.bf16.msra.mxu0 %v3681
  %4760 = vmatprep.subr.bf16.mxu0 %v3686
  %4761 = vmatpush1.bf16.msra.mxu0 %v3685
  %4762 = vmatprep.subr.bf16.mxu0 %v3690
  %4763 = vmatpush1.bf16.msra.mxu0 %v3689
  %4764 = vmatprep.subr.bf16.mxu0 %v3694
  %4765 = vmatpush1.bf16.msra.mxu0 %v3693
  %4766 = vmatprep.subr.bf16.mxu0 0
  %4767 = vmatpush1.bf16.msra.mxu0 0
  %4768 = vmatprep.subr.bf16.mxu0 0
  %4769 = vmatpush1.bf16.msra.mxu0 0
  %4770 = vmatprep.subr.bf16.mxu0 0
  %4771 = vmatpush1.bf16.msra.mxu0 0
  %4772 = vmatprep.subr.bf16.mxu0 0
  %4773 = vmatpush1.bf16.msra.mxu0 0
  %4774 = vmatprep.subr.bf16.mxu0 0
  %4775 = vmatpush1.bf16.msra.mxu0 0
  %4776 = vmatprep.subr.bf16.mxu0 0
  %4777 = vmatpush1.bf16.msra.mxu0 0
  %4778 = vmatprep.subr.bf16.mxu0 0
  %4779 = vmatpush1.bf16.msra.mxu0 0
  %4780 = vmatprep.subr.bf16.mxu0 0
  %4781 = vmatpush1.bf16.msra.mxu0 0
  %4782 = vmatprep.mubr.bf16.mxu0 0
  %4783 = vmatmul.mubr.bf16.gmra.mrb[0].mxu0 %v4697
  %v4784 = vpop.f32.mrb[0].mxu0
  %v4785 = vadd.f32 0.0, %v4784
  %v4786 = vpop.f32.mrb[0].mxu0
  %v4787 = vadd.f32 0.0, %v4786
  %v4788 = vpop.f32.mrb[0].mxu0
  %v4789 = vadd.f32 0.0, %v4788
  %v4790 = vpop.f32.mrb[0].mxu0
  %v4791 = vadd.f32 0.0, %v4790
  %4792 = vdwg.mxu0
  %v4793 = vadd.f32 %v4699, %v4742
  %v4794 = vadd.f32 %v4700, %v4744
  %v4795 = vadd.f32 %v4701, %v4785
  %v4796 = vadd.f32 %v4702, %v4787
  %v4797 = vadd.f32 %v4703, %v4746
  %v4798 = vadd.f32 %v4704, %v4748
  %v4799 = vadd.f32 %v4705, %v4789
  %v4800 = vadd.f32 %v4706, %v4791
  %v4801 = vmul.f32 %v4793, 0.5
  %v4802 = vmul.f32 %v4797, 0.5
  %v4803 = vtanh.pop %v4801
  %v4804 = vtanh.pop %v4802
  %v4805 = vmul.f32 %v4803, 0.5
  %v4806 = vmul.f32 %v4804, 0.5
  %v4807 = vadd.f32 %v4805, 0.5
  %v4808 = vadd.f32 %v4806, 0.5
  %v4809 = vmul.f32 %v4794, 0.5
  %v4810 = vmul.f32 %v4798, 0.5
  %v4811 = vtanh.pop %v4809
  %v4812 = vtanh.pop %v4810
  %v4813 = vmul.f32 %v4811, 0.5
  %v4814 = vmul.f32 %v4812, 0.5
  %v4815 = vadd.f32 %v4813, 0.5
  %v4816 = vadd.f32 %v4814, 0.5
  %v4817 = vtanh.pop %v4795
  %v4818 = vtanh.pop %v4799
  %v4819 = vmul.f32 %v4796, 0.5
  %v4820 = vmul.f32 %v4800, 0.5
  %v4821 = vtanh.pop %v4819
  %v4822 = vtanh.pop %v4820
  %v4823 = vmul.f32 %v4821, 0.5
  %v4824 = vmul.f32 %v4822, 0.5
  %v4825 = vadd.f32 %v4823, 0.5
  %v4826 = vadd.f32 %v4824, 0.5
  %v4827 = vmul.f32 %v4815, %v4691
  %v4828 = vmul.f32 %v4816, %v4692
  %v4829 = vmul.f32 %v4807, %v4817
  %v4830 = vmul.f32 %v4808, %v4818
  %v4831 = vadd.f32 %v4827, %v4829
  %v4832 = vadd.f32 %v4828, %v4830
  %v4833 = vtanh.pop %v4831
  %v4834 = vtanh.pop %v4832
  %v4835 = vmul.f32 %v4825, %v4833
  %v4836 = vmul.f32 %v4826, %v4834
  %v4837 = vpack.c.bf16 %v4836, %v4835
  %4838 = vst [vmem:[%s3000] sm:$0xff] %v4837
  %s4839 = scalar_lea.vmem %s14, 16
  %4840 = vst [vmem:[%s4839] sm:$0xff] %v4835
  %4841 = vst [vmem:[%s4839 + $0x8] sm:$0xff] %v4836
  %s4842 = scalar_lea.vmem %s15, 16
  %4843 = vst [vmem:[%s4842] sm:$0xff] %v4831
  %4844 = vst [vmem:[%s4842 + $0x8] sm:$0xff] %v4832
  %v4845 = vld [vmem:[#allocation2] sm:$0xff]
  %v4846 = vld [vmem:[#allocation2 + $0x8] sm:$0xff]
  %v4847 = vld [vmem:[#allocation2 + $0x10] sm:$0xff]
  %v4848 = vld [vmem:[#allocation2 + $0x18] sm:$0xff]
  %v4849 = vld [vmem:[#allocation2 + $0x20] sm:$0xff]
  %v4850 = vld [vmem:[#allocation2 + $0x28] sm:$0xff]
  %v4851 = vld [vmem:[#allocation2 + $0x30] sm:$0xff]
  %v4852 = vld [vmem:[#allocation2 + $0x38] sm:$0xff]
  %s4853 = scalar_lea.vmem %s2, 256
  %v4854 = vld [vmem:[%s4853] sm:$0xff]
  %v4855 = vld [vmem:[%s4853 + $0x8] sm:$0xff]
  %v4856 = vld [vmem:[%s4853 + $0x10] sm:$0xff]
  %v4857 = vld [vmem:[%s4853 + $0x18] sm:$0xff]
  %v4858 = vld [vmem:[%s4853 + $0x20] sm:$0xff]
  %v4859 = vld [vmem:[%s4853 + $0x28] sm:$0xff]
  %v4860 = vld [vmem:[%s4853 + $0x30] sm:$0xff]
  %v4861 = vld [vmem:[%s4853 + $0x38] sm:$0xff]
  %v4862 = vld [vmem:[%s4853 + $0x40] sm:$0xff]
  %v4863 = vld [vmem:[%s4853 + $0x48] sm:$0xff]
  %v4864 = vld [vmem:[%s4853 + $0x50] sm:$0xff]
  %v4865 = vld [vmem:[%s4853 + $0x58] sm:$0xff]
  %v4866 = vld [vmem:[%s4853 + $0x60] sm:$0xff]
  %v4867 = vld [vmem:[%s4853 + $0x68] sm:$0xff]
  %v4868 = vld [vmem:[%s4853 + $0x70] sm:$0xff]
  %v4869 = vld [vmem:[%s4853 + $0x78] sm:$0xff]
  %v4870 = vld [vmem:[%s4853 + $0x80] sm:$0xff]
  %v4871 = vld [vmem:[%s4853 + $0x88] sm:$0xff]
  %v4872 = vld [vmem:[%s4853 + $0x90] sm:$0xff]
  %v4873 = vld [vmem:[%s4853 + $0x98] sm:$0xff]
  %v4874 = vld [vmem:[%s4853 + $0xa0] sm:$0xff]
  %v4875 = vld [vmem:[%s4853 + $0xa8] sm:$0xff]
  %v4876 = vld [vmem:[%s4853 + $0xb0] sm:$0xff]
  %v4877 = vld [vmem:[%s4853 + $0xb8] sm:$0xff]
  %v4878 = vld [vmem:[%s4853 + $0xc0] sm:$0xff]
  %v4879 = vld [vmem:[%s4853 + $0xc8] sm:$0xff]
  %v4880 = vld [vmem:[%s4853 + $0xd0] sm:$0xff]
  %v4881 = vld [vmem:[%s4853 + $0xd8] sm:$0xff]
  %v4882 = vld [vmem:[%s4853 + $0xe0] sm:$0xff]
  %v4883 = vld [vmem:[%s4853 + $0xe8] sm:$0xff]
  %v4884 = vld [vmem:[%s4853 + $0xf0] sm:$0xff]
  %v4885 = vld [vmem:[%s4853 + $0xf8] sm:$0xff]
  %s4886 = scalar_lea.vmem %s4, 8
  %v4887 = vld [vmem:[%s4886] sm:$0xf]
  %v4889 = vlaneseq
  %v4890 = vshrl.u32 %v4889, 7
  %v4891 = vsub.s32 0, %v4890
  %v4892 = vrot.slane %v4887, %v4891
  %v4893 = vlaneseq
  %v4894 = vshrl.u32 %v4893, 7
  %v4895 = vsub.s32 1, %v4894
  %v4896 = vrot.slane %v4887, %v4895
  %v4897 = vlaneseq
  %v4898 = vshrl.u32 %v4897, 7
  %v4899 = vsub.s32 2, %v4898
  %v4900 = vrot.slane %v4887, %v4899
  %v4901 = vlaneseq
  %v4902 = vshrl.u32 %v4901, 7
  %v4903 = vsub.s32 3, %v4902
  %v4904 = vrot.slane %v4887, %v4903
  %v4941 = vunpack.c.l.b16 %v4854
  %v4942 = vunpack.c.h.b16 %v4854
  %v4943 = vunpack.c.l.b16 %v4855
  %v4944 = vunpack.c.h.b16 %v4855
  %v4945 = vunpack.c.l.b16 %v4856
  %v4946 = vunpack.c.h.b16 %v4856
  %v4947 = vunpack.c.l.b16 %v4857
  %v4948 = vunpack.c.h.b16 %v4857
  %v4949 = vunpack.c.l.b16 %v4858
  %v4950 = vunpack.c.h.b16 %v4858
  %v4951 = vunpack.c.l.b16 %v4859
  %v4952 = vunpack.c.h.b16 %v4859
  %v4953 = vunpack.c.l.b16 %v4860
  %v4954 = vunpack.c.h.b16 %v4860
  %v4955 = vunpack.c.l.b16 %v4861
  %v4956 = vunpack.c.h.b16 %v4861
  %v4957 = vunpack.c.l.b16 %v4862
  %v4958 = vunpack.c.h.b16 %v4862
  %v4959 = vunpack.c.l.b16 %v4863
  %v4960 = vunpack.c.h.b16 %v4863
  %v4961 = vunpack.c.l.b16 %v4864
  %v4962 = vunpack.c.h.b16 %v4864
  %v4963 = vunpack.c.l.b16 %v4865
  %v4964 = vunpack.c.h.b16 %v4865
  %v4965 = vunpack.c.l.b16 %v4866
  %v4966 = vunpack.c.h.b16 %v4866
  %v4967 = vunpack.c.l.b16 %v4867
  %v4968 = vunpack.c.h.b16 %v4867
  %v4969 = vunpack.c.l.b16 %v4868
  %v4970 = vunpack.c.h.b16 %v4868
  %v4971 = vunpack.c.l.b16 %v4869
  %v4972 = vunpack.c.h.b16 %v4869
  %v4973 = vunpack.c.l.b16 %v4870
  %v4974 = vunpack.c.h.b16 %v4870
  %v4975 = vunpack.c.l.b16 %v4871
  %v4976 = vunpack.c.h.b16 %v4871
  %v4977 = vunpack.c.l.b16 %v4872
  %v4978 = vunpack.c.h.b16 %v4872
  %v4979 = vunpack.c.l.b16 %v4873
  %v4980 = vunpack.c.h.b16 %v4873
  %v4981 = vunpack.c.l.b16 %v4874
  %v4982 = vunpack.c.h.b16 %v4874
  %v4983 = vunpack.c.l.b16 %v4875
  %v4984 = vunpack.c.h.b16 %v4875
  %v4985 = vunpack.c.l.b16 %v4876
  %v4986 = vunpack.c.h.b16 %v4876
  %v4987 = vunpack.c.l.b16 %v4877
  %v4988 = vunpack.c.h.b16 %v4877
  %v4989 = vunpack.c.l.b16 %v4878
  %v4990 = vunpack.c.h.b16 %v4878
  %v4991 = vunpack.c.l.b16 %v4879
  %v4992 = vunpack.c.h.b16 %v4879
  %v4993 = vunpack.c.l.b16 %v4880
  %v4994 = vunpack.c.h.b16 %v4880
  %v4995 = vunpack.c.l.b16 %v4881
  %v4996 = vunpack.c.h.b16 %v4881
  %v4997 = vunpack.c.l.b16 %v4882
  %v4998 = vunpack.c.h.b16 %v4882
  %v4999 = vunpack.c.l.b16 %v4883
  %v5000 = vunpack.c.h.b16 %v4883
  %v5001 = vunpack.c.l.b16 %v4884
  %v5002 = vunpack.c.h.b16 %v4884
  %v5003 = vunpack.c.l.b16 %v4885
  %v5004 = vunpack.c.h.b16 %v4885
  %v5005 = vpack.c.b16 %v4945, %v4941
  %v5006 = vpack.c.b16 %v4946, %v4942
  %v5007 = vpack.c.b16 %v4947, %v4943
  %v5008 = vpack.c.b16 %v4948, %v4944
  %v5009 = vpack.c.b16 %v4953, %v4949
  %v5010 = vpack.c.b16 %v4954, %v4950
  %v5011 = vpack.c.b16 %v4955, %v4951
  %v5012 = vpack.c.b16 %v4956, %v4952
  %v5013 = vpack.c.b16 %v4961, %v4957
  %v5014 = vpack.c.b16 %v4962, %v4958
  %v5015 = vpack.c.b16 %v4963, %v4959
  %v5016 = vpack.c.b16 %v4964, %v4960
  %v5017 = vpack.c.b16 %v4969, %v4965
  %v5018 = vpack.c.b16 %v4970, %v4966
  %v5019 = vpack.c.b16 %v4971, %v4967
  %v5020 = vpack.c.b16 %v4972, %v4968
  %v5021 = vpack.c.b16 %v4977, %v4973
  %v5022 = vpack.c.b16 %v4978, %v4974
  %v5023 = vpack.c.b16 %v4979, %v4975
  %v5024 = vpack.c.b16 %v4980, %v4976
  %v5025 = vpack.c.b16 %v4985, %v4981
  %v5026 = vpack.c.b16 %v4986, %v4982
  %v5027 = vpack.c.b16 %v4987, %v4983
  %v5028 = vpack.c.b16 %v4988, %v4984
  %v5029 = vpack.c.b16 %v4993, %v4989
  %v5030 = vpack.c.b16 %v4994, %v4990
  %v5031 = vpack.c.b16 %v4995, %v4991
  %v5032 = vpack.c.b16 %v4996, %v4992
  %v5033 = vpack.c.b16 %v5001, %v4997
  %v5034 = vpack.c.b16 %v5002, %v4998
  %v5035 = vpack.c.b16 %v5003, %v4999
  %v5036 = vpack.c.b16 %v5004, %v5000
  %5069 = vmatprep.subr.bf16.mxu0 %v5006
  %5070 = vmatpush1.bf16.msra.mxu0 %v5005
  %5071 = vmatprep.subr.bf16.mxu0 %v5010
  %5072 = vmatpush1.bf16.msra.mxu0 %v5009
  %5073 = vmatprep.subr.bf16.mxu0 %v5014
  %5074 = vmatpush1.bf16.msra.mxu0 %v5013
  %5075 = vmatprep.subr.bf16.mxu0 %v5018
  %5076 = vmatpush1.bf16.msra.mxu0 %v5017
  %5077 = vmatprep.subr.bf16.mxu0 %v5022
  %5078 = vmatpush1.bf16.msra.mxu0 %v5021
  %5079 = vmatprep.subr.bf16.mxu0 %v5026
  %5080 = vmatpush1.bf16.msra.mxu0 %v5025
  %5081 = vmatprep.subr.bf16.mxu0 %v5030
  %5082 = vmatpush1.bf16.msra.mxu0 %v5029
  %5083 = vmatprep.subr.bf16.mxu0 %v5034
  %5084 = vmatpush1.bf16.msra.mxu0 %v5033
  %5085 = vmatprep.subr.bf16.mxu0 0
  %5086 = vmatpush1.bf16.msra.mxu0 0
  %5087 = vmatprep.subr.bf16.mxu0 0
  %5088 = vmatpush1.bf16.msra.mxu0 0
  %5089 = vmatprep.subr.bf16.mxu0 0
  %5090 = vmatpush1.bf16.msra.mxu0 0
  %5091 = vmatprep.subr.bf16.mxu0 0
  %5092 = vmatpush1.bf16.msra.mxu0 0
  %5093 = vmatprep.subr.bf16.mxu0 0
  %5094 = vmatpush1.bf16.msra.mxu0 0
  %5095 = vmatprep.subr.bf16.mxu0 0
  %5096 = vmatpush1.bf16.msra.mxu0 0
  %5097 = vmatprep.subr.bf16.mxu0 0
  %5098 = vmatpush1.bf16.msra.mxu0 0
  %5099 = vmatprep.subr.bf16.mxu0 0
  %5100 = vmatpush1.bf16.msra.mxu0 0
  %5101 = vmatprep.mubr.bf16.mxu0 0
  %5102 = vmatmul.mubr.bf16.gmra.mrb[0].mxu0 %v4845
  %v5103 = vpop.f32.mrb[0].mxu0
  %v5104 = vadd.f32 %v4892, %v5103
  %v5105 = vpop.f32.mrb[0].mxu0
  %v5106 = vadd.f32 %v4896, %v5105
  %v5107 = vpop.f32.mrb[0].mxu0
  %v5108 = vadd.f32 %v4892, %v5107
  %v5109 = vpop.f32.mrb[0].mxu0
  %v5110 = vadd.f32 %v4896, %v5109
  %5111 = vmatprep.mubr.bf16.mxu0 0
  %5112 = vmatmul.mubr.bf16.gmra.mrb[0].mxu0 %v4846
  %v5113 = vpop.f32.mrb[0].mxu0
  %v5114 = vadd.f32 %v4892, %v5113
  %v5115 = vpop.f32.mrb[0].mxu0
  %v5116 = vadd.f32 %v4896, %v5115
  %v5117 = vpop.f32.mrb[0].mxu0
  %v5118 = vadd.f32 %v4892, %v5117
  %v5119 = vpop.f32.mrb[0].mxu0
  %v5120 = vadd.f32 %v4896, %v5119
  %5121 = vmatprep.mubr.bf16.mxu0 0
  %5122 = vmatmul.mubr.bf16.gmra.mrb[0].mxu0 %v4847
  %v5123 = vpop.f32.mrb[0].mxu0
  %v5124 = vadd.f32 %v4892, %v5123
  %v5125 = vpop.f32.mrb[0].mxu0
  %v5126 = vadd.f32 %v4896, %v5125
  %v5127 = vpop.f32.mrb[0].mxu0
  %v5128 = vadd.f32 %v4892, %v5127
  %v5129 = vpop.f32.mrb[0].mxu0
  %v5130 = vadd.f32 %v4896, %v5129
  %5131 = vmatprep.mubr.bf16.mxu0 0
  %5132 = vmatmul.mubr.bf16.gmra.mrb[0].mxu0 %v4848
  %v5133 = vpop.f32.mrb[0].mxu0
  %v5134 = vadd.f32 %v4892, %v5133
  %v5135 = vpop.f32.mrb[0].mxu0
  %v5136 = vadd.f32 %v4896, %v5135
  %v5137 = vpop.f32.mrb[0].mxu0
  %v5138 = vadd.f32 %v4892, %v5137
  %v5139 = vpop.f32.mrb[0].mxu0
  %v5140 = vadd.f32 %v4896, %v5139
  %5141 = vmatprep.mubr.bf16.mxu0 0
  %5142 = vmatmul.mubr.bf16.gmra.mrb[0].mxu0 %v4849
  %v5143 = vpop.f32.mrb[0].mxu0
  %v5144 = vadd.f32 %v4892, %v5143
  %v5145 = vpop.f32.mrb[0].mxu0
  %v5146 = vadd.f32 %v4896, %v5145
  %v5147 = vpop.f32.mrb[0].mxu0
  %v5148 = vadd.f32 %v4892, %v5147
  %v5149 = vpop.f32.mrb[0].mxu0
  %v5150 = vadd.f32 %v4896, %v5149
  %5151 = vmatprep.mubr.bf16.mxu0 0
  %5152 = vmatmul.mubr.bf16.gmra.mrb[0].mxu0 %v4850
  %v5153 = vpop.f32.mrb[0].mxu0
  %v5154 = vadd.f32 %v4892, %v5153
  %v5155 = vpop.f32.mrb[0].mxu0
  %v5156 = vadd.f32 %v4896, %v5155
  %v5157 = vpop.f32.mrb[0].mxu0
  %v5158 = vadd.f32 %v4892, %v5157
  %v5159 = vpop.f32.mrb[0].mxu0
  %v5160 = vadd.f32 %v4896, %v5159
  %5161 = vmatprep.mubr.bf16.mxu0 0
  %5162 = vmatmul.mubr.bf16.gmra.mrb[0].mxu0 %v4851
  %v5163 = vpop.f32.mrb[0].mxu0
  %v5164 = vadd.f32 %v4892, %v5163
  %v5165 = vpop.f32.mrb[0].mxu0
  %v5166 = vadd.f32 %v4896, %v5165
  %v5167 = vpop.f32.mrb[0].mxu0
  %v5168 = vadd.f32 %v4892, %v5167
  %v5169 = vpop.f32.mrb[0].mxu0
  %v5170 = vadd.f32 %v4896, %v5169
  %5171 = vmatprep.mubr.bf16.mxu0 0
  %5172 = vmatmul.mubr.bf16.gmra.mrb[0].mxu0 %v4852
  %v5173 = vpop.f32.mrb[0].mxu0
  %v5174 = vadd.f32 %v4892, %v5173
  %v5175 = vpop.f32.mrb[0].mxu0
  %v5176 = vadd.f32 %v4896, %v5175
  %v5177 = vpop.f32.mrb[0].mxu0
  %v5178 = vadd.f32 %v4892, %v5177
  %v5179 = vpop.f32.mrb[0].mxu0
  %v5180 = vadd.f32 %v4896, %v5179
  %5181 = vdwg.mxu0
  %5182 = vmatprep.subr.bf16.mxu0 %v5008
  %5183 = vmatpush1.bf16.msra.mxu0 %v5007
  %5184 = vmatprep.subr.bf16.mxu0 %v5012
  %5185 = vmatpush1.bf16.msra.mxu0 %v5011
  %5186 = vmatprep.subr.bf16.mxu0 %v5016
  %5187 = vmatpush1.bf16.msra.mxu0 %v5015
  %5188 = vmatprep.subr.bf16.mxu0 %v5020
  %5189 = vmatpush1.bf16.msra.mxu0 %v5019
  %5190 = vmatprep.subr.bf16.mxu0 %v5024
  %5191 = vmatpush1.bf16.msra.mxu0 %v5023
  %5192 = vmatprep.subr.bf16.mxu0 %v5028
  %5193 = vmatpush1.bf16.msra.mxu0 %v5027
  %5194 = vmatprep.subr.bf16.mxu0 %v5032
  %5195 = vmatpush1.bf16.msra.mxu0 %v5031
  %5196 = vmatprep.subr.bf16.mxu0 %v5036
  %5197 = vmatpush1.bf16.msra.mxu0 %v5035
  %5198 = vmatprep.subr.bf16.mxu0 0
  %5199 = vmatpush1.bf16.msra.mxu0 0
  %5200 = vmatprep.subr.bf16.mxu0 0
  %5201 = vmatpush1.bf16.msra.mxu0 0
  %5202 = vmatprep.subr.bf16.mxu0 0
  %5203 = vmatpush1.bf16.msra.mxu0 0
  %5204 = vmatprep.subr.bf16.mxu0 0
  %5205 = vmatpush1.bf16.msra.mxu0 0
  %5206 = vmatprep.subr.bf16.mxu0 0
  %5207 = vmatpush1.bf16.msra.mxu0 0
  %5208 = vmatprep.subr.bf16.mxu0 0
  %5209 = vmatpush1.bf16.msra.mxu0 0
  %5210 = vmatprep.subr.bf16.mxu0 0
  %5211 = vmatpush1.bf16.msra.mxu0 0
  %5212 = vmatprep.subr.bf16.mxu0 0
  %5213 = vmatpush1.bf16.msra.mxu0 0
  %5214 = vmatprep.mubr.bf16.mxu0 0
  %5215 = vmatmul.mubr.bf16.gmra.mrb[0].mxu0 %v4845
  %v5216 = vpop.f32.mrb[0].mxu0
  %v5217 = vadd.f32 %v4900, %v5216
  %v5218 = vpop.f32.mrb[0].mxu0
  %v5219 = vadd.f32 %v4904, %v5218
  %v5220 = vpop.f32.mrb[0].mxu0
  %v5221 = vadd.f32 %v4900, %v5220
  %v5222 = vpop.f32.mrb[0].mxu0
  %v5223 = vadd.f32 %v4904, %v5222
  %5224 = vmatprep.mubr.bf16.mxu0 0
  %5225 = vmatmul.mubr.bf16.gmra.mrb[0].mxu0 %v4846
  %v5226 = vpop.f32.mrb[0].mxu0
  %v5227 = vadd.f32 %v4900, %v5226
  %v5228 = vpop.f32.mrb[0].mxu0
  %v5229 = vadd.f32 %v4904, %v5228
  %v5230 = vpop.f32.mrb[0].mxu0
  %v5231 = vadd.f32 %v4900, %v5230
  %v5232 = vpop.f32.mrb[0].mxu0
  %v5233 = vadd.f32 %v4904, %v5232
  %5234 = vmatprep.mubr.bf16.mxu0 0
  %5235 = vmatmul.mubr.bf16.gmra.mrb[0].mxu0 %v4847
  %v5236 = vpop.f32.mrb[0].mxu0
  %v5237 = vadd.f32 %v4900, %v5236
  %v5238 = vpop.f32.mrb[0].mxu0
  %v5239 = vadd.f32 %v4904, %v5238
  %v5240 = vpop.f32.mrb[0].mxu0
  %v5241 = vadd.f32 %v4900, %v5240
  %v5242 = vpop.f32.mrb[0].mxu0
  %v5243 = vadd.f32 %v4904, %v5242
  %5244 = vmatprep.mubr.bf16.mxu0 0
  %5245 = vmatmul.mubr.bf16.gmra.mrb[0].mxu0 %v4848
  %v5246 = vpop.f32.mrb[0].mxu0
  %v5247 = vadd.f32 %v4900, %v5246
  %v5248 = vpop.f32.mrb[0].mxu0
  %v5249 = vadd.f32 %v4904, %v5248
  %v5250 = vpop.f32.mrb[0].mxu0
  %v5251 = vadd.f32 %v4900, %v5250
  %v5252 = vpop.f32.mrb[0].mxu0
  %v5253 = vadd.f32 %v4904, %v5252
  %5254 = vmatprep.mubr.bf16.mxu0 0
  %5255 = vmatmul.mubr.bf16.gmra.mrb[0].mxu0 %v4849
  %v5256 = vpop.f32.mrb[0].mxu0
  %v5257 = vadd.f32 %v4900, %v5256
  %v5258 = vpop.f32.mrb[0].mxu0
  %v5259 = vadd.f32 %v4904, %v5258
  %v5260 = vpop.f32.mrb[0].mxu0
  %v5261 = vadd.f32 %v4900, %v5260
  %v5262 = vpop.f32.mrb[0].mxu0
  %v5263 = vadd.f32 %v4904, %v5262
  %5264 = vmatprep.mubr.bf16.mxu0 0
  %5265 = vmatmul.mubr.bf16.gmra.mrb[0].mxu0 %v4850
  %v5266 = vpop.f32.mrb[0].mxu0
  %v5267 = vadd.f32 %v4900, %v5266
  %v5268 = vpop.f32.mrb[0].mxu0
  %v5269 = vadd.f32 %v4904, %v5268
  %v5270 = vpop.f32.mrb[0].mxu0
  %v5271 = vadd.f32 %v4900, %v5270
  %v5272 = vpop.f32.mrb[0].mxu0
  %v5273 = vadd.f32 %v4904, %v5272
  %5274 = vmatprep.mubr.bf16.mxu0 0
  %5275 = vmatmul.mubr.bf16.gmra.mrb[0].mxu0 %v4851
  %v5276 = vpop.f32.mrb[0].mxu0
  %v5277 = vadd.f32 %v4900, %v5276
  %v5278 = vpop.f32.mrb[0].mxu0
  %v5279 = vadd.f32 %v4904, %v5278
  %v5280 = vpop.f32.mrb[0].mxu0
  %v5281 = vadd.f32 %v4900, %v5280
  %v5282 = vpop.f32.mrb[0].mxu0
  %v5283 = vadd.f32 %v4904, %v5282
  %5284 = vmatprep.mubr.bf16.mxu0 0
  %5285 = vmatmul.mubr.bf16.gmra.mrb[0].mxu0 %v4852
  %v5286 = vpop.f32.mrb[0].mxu0
  %v5287 = vadd.f32 %v4900, %v5286
  %v5288 = vpop.f32.mrb[0].mxu0
  %v5289 = vadd.f32 %v4904, %v5288
  %v5290 = vpop.f32.mrb[0].mxu0
  %v5291 = vadd.f32 %v4900, %v5290
  %v5292 = vpop.f32.mrb[0].mxu0
  %v5293 = vadd.f32 %v4904, %v5292
  %5294 = vdwg.mxu0
  %5295 = vst [vmem:[#allocation3] sm:$0xff] %v5104
  %5296 = vst [vmem:[#allocation3 + $0x8] sm:$0xff] %v5106
  %5297 = vst [vmem:[#allocation3 + $0x10] sm:$0xff] %v5217
  %5298 = vst [vmem:[#allocation3 + $0x18] sm:$0xff] %v5219
  %5299 = vst [vmem:[#allocation3 + $0x20] sm:$0xff] %v5108
  %5300 = vst [vmem:[#allocation3 + $0x28] sm:$0xff] %v5110
  %5301 = vst [vmem:[#allocation3 + $0x30] sm:$0xff] %v5221
  %5302 = vst [vmem:[#allocation3 + $0x38] sm:$0xff] %v5223
  %5303 = vst [vmem:[#allocation3 + $0x40] sm:$0xff] %v5114
  %5304 = vst [vmem:[#allocation3 + $0x48] sm:$0xff] %v5116
  %5305 = vst [vmem:[#allocation3 + $0x50] sm:$0xff] %v5227
  %5306 = vst [vmem:[#allocation3 + $0x58] sm:$0xff] %v5229
  %5307 = vst [vmem:[#allocation3 + $0x60] sm:$0xff] %v5118
  %5308 = vst [vmem:[#allocation3 + $0x68] sm:$0xff] %v5120
  %5309 = vst [vmem:[#allocation3 + $0x70] sm:$0xff] %v5231
  %5310 = vst [vmem:[#allocation3 + $0x78] sm:$0xff] %v5233
  %5311 = vst [vmem:[#allocation3 + $0x80] sm:$0xff] %v5124
  %5312 = vst [vmem:[#allocation3 + $0x88] sm:$0xff] %v5126
  %5313 = vst [vmem:[#allocation3 + $0x90] sm:$0xff] %v5237
  %5314 = vst [vmem:[#allocation3 + $0x98] sm:$0xff] %v5239
  %5315 = vst [vmem:[#allocation3 + $0xa0] sm:$0xff] %v5128
  %5316 = vst [vmem:[#allocation3 + $0xa8] sm:$0xff] %v5130
  %5317 = vst [vmem:[#allocation3 + $0xb0] sm:$0xff] %v5241
  %5318 = vst [vmem:[#allocation3 + $0xb8] sm:$0xff] %v5243
  %5319 = vst [vmem:[#allocation3 + $0xc0] sm:$0xff] %v5134
  %5320 = vst [vmem:[#allocation3 + $0xc8] sm:$0xff] %v5136
  %5321 = vst [vmem:[#allocation3 + $0xd0] sm:$0xff] %v5247
  %5322 = vst [vmem:[#allocation3 + $0xd8] sm:$0xff] %v5249
  %5323 = vst [vmem:[#allocation3 + $0xe0] sm:$0xff] %v5138
  %5324 = vst [vmem:[#allocation3 + $0xe8] sm:$0xff] %v5140
  %5325 = vst [vmem:[#allocation3 + $0xf0] sm:$0xff] %v5251
  %5326 = vst [vmem:[#allocation3 + $0xf8] sm:$0xff] %v5253
  %5327 = vst [vmem:[#allocation3 + $0x100] sm:$0xff] %v5144
  %5328 = vst [vmem:[#allocation3 + $0x108] sm:$0xff] %v5146
  %5329 = vst [vmem:[#allocation3 + $0x110] sm:$0xff] %v5257
  %5330 = vst [vmem:[#allocation3 + $0x118] sm:$0xff] %v5259
  %5331 = vst [vmem:[#allocation3 + $0x120] sm:$0xff] %v5148
  %5332 = vst [vmem:[#allocation3 + $0x128] sm:$0xff] %v5150
  %5333 = vst [vmem:[#allocation3 + $0x130] sm:$0xff] %v5261
  %5334 = vst [vmem:[#allocation3 + $0x138] sm:$0xff] %v5263
  %5335 = vst [vmem:[#allocation3 + $0x140] sm:$0xff] %v5154
  %5336 = vst [vmem:[#allocation3 + $0x148] sm:$0xff] %v5156
  %5337 = vst [vmem:[#allocation3 + $0x150] sm:$0xff] %v5267
  %5338 = vst [vmem:[#allocation3 + $0x158] sm:$0xff] %v5269
  %5339 = vst [vmem:[#allocation3 + $0x160] sm:$0xff] %v5158
  %5340 = vst [vmem:[#allocation3 + $0x168] sm:$0xff] %v5160
  %5341 = vst [vmem:[#allocation3 + $0x170] sm:$0xff] %v5271
  %5342 = vst [vmem:[#allocation3 + $0x178] sm:$0xff] %v5273
  %5343 = vst [vmem:[#allocation3 + $0x180] sm:$0xff] %v5164
  %5344 = vst [vmem:[#allocation3 + $0x188] sm:$0xff] %v5166
  %5345 = vst [vmem:[#allocation3 + $0x190] sm:$0xff] %v5277
  %5346 = vst [vmem:[#allocation3 + $0x198] sm:$0xff] %v5279
  %5347 = vst [vmem:[#allocation3 + $0x1a0] sm:$0xff] %v5168
  %5348 = vst [vmem:[#allocation3 + $0x1a8] sm:$0xff] %v5170
  %5349 = vst [vmem:[#allocation3 + $0x1b0] sm:$0xff] %v5281
  %5350 = vst [vmem:[#allocation3 + $0x1b8] sm:$0xff] %v5283
  %5351 = vst [vmem:[#allocation3 + $0x1c0] sm:$0xff] %v5174
  %5352 = vst [vmem:[#allocation3 + $0x1c8] sm:$0xff] %v5176
  %5353 = vst [vmem:[#allocation3 + $0x1d0] sm:$0xff] %v5287
  %5354 = vst [vmem:[#allocation3 + $0x1d8] sm:$0xff] %v5289
  %5355 = vst [vmem:[#allocation3 + $0x1e0] sm:$0xff] %v5178
  %5356 = vst [vmem:[#allocation3 + $0x1e8] sm:$0xff] %v5180
  %5357 = vst [vmem:[#allocation3 + $0x1f0] sm:$0xff] %v5291
  %5358 = vst [vmem:[#allocation3 + $0x1f8] sm:$0xff] %v5293
  %s5359 = scalar_lea.vmem %s3, 512
  %v5360 = vld [vmem:[%s5359] sm:$0xff]
  %v5361 = vld [vmem:[%s5359 + $0x8] sm:$0xff]
  %v5362 = vld [vmem:[%s5359 + $0x10] sm:$0xff]
  %v5363 = vld [vmem:[%s5359 + $0x18] sm:$0xff]
  %v5364 = vld [vmem:[%s5359 + $0x20] sm:$0xff]
  %v5365 = vld [vmem:[%s5359 + $0x28] sm:$0xff]
  %v5366 = vld [vmem:[%s5359 + $0x30] sm:$0xff]
  %v5367 = vld [vmem:[%s5359 + $0x38] sm:$0xff]
  %v5368 = vld [vmem:[%s5359 + $0x40] sm:$0xff]
  %v5369 = vld [vmem:[%s5359 + $0x48] sm:$0xff]
  %v5370 = vld [vmem:[%s5359 + $0x50] sm:$0xff]
  %v5371 = vld [vmem:[%s5359 + $0x58] sm:$0xff]
  %v5372 = vld [vmem:[%s5359 + $0x60] sm:$0xff]
  %v5373 = vld [vmem:[%s5359 + $0x68] sm:$0xff]
  %v5374 = vld [vmem:[%s5359 + $0x70] sm:$0xff]
  %v5375 = vld [vmem:[%s5359 + $0x78] sm:$0xff]
  %v5376 = vld [vmem:[%s5359 + $0x80] sm:$0xff]
  %v5377 = vld [vmem:[%s5359 + $0x88] sm:$0xff]
  %v5378 = vld [vmem:[%s5359 + $0x90] sm:$0xff]
  %v5379 = vld [vmem:[%s5359 + $0x98] sm:$0xff]
  %v5380 = vld [vmem:[%s5359 + $0xa0] sm:$0xff]
  %v5381 = vld [vmem:[%s5359 + $0xa8] sm:$0xff]
  %v5382 = vld [vmem:[%s5359 + $0xb0] sm:$0xff]
  %v5383 = vld [vmem:[%s5359 + $0xb8] sm:$0xff]
  %v5384 = vld [vmem:[%s5359 + $0xc0] sm:$0xff]
  %v5385 = vld [vmem:[%s5359 + $0xc8] sm:$0xff]
  %v5386 = vld [vmem:[%s5359 + $0xd0] sm:$0xff]
  %v5387 = vld [vmem:[%s5359 + $0xd8] sm:$0xff]
  %v5388 = vld [vmem:[%s5359 + $0xe0] sm:$0xff]
  %v5389 = vld [vmem:[%s5359 + $0xe8] sm:$0xff]
  %v5390 = vld [vmem:[%s5359 + $0xf0] sm:$0xff]
  %v5391 = vld [vmem:[%s5359 + $0xf8] sm:$0xff]
  %s5392 = scalar_lea.vmem %s5, 32
  %v5393 = vld [vmem:[%s5392] sm:$0xff]
  %v5394 = vld [vmem:[%s5392 + $0x8] sm:$0xff]
  %s5395 = scalar_lea.vmem %s6, 32
  %v5396 = vld [vmem:[%s5395] sm:$0xff]
  %v5397 = vld [vmem:[%s5395 + $0x8] sm:$0xff]
  %v5398 = vld [vmem:[%s1692] sm:$0xff]
  %v5399 = vld [vmem:[%s1692 + $0x8] sm:$0xff]
  %v5400 = vld [vmem:[%s1692 + $0x10] sm:$0xff]
  %v5401 = vld [vmem:[%s1692 + $0x18] sm:$0xff]
  %v5402 = vld [vmem:[%s1692 + $0x20] sm:$0xff]
  %v5403 = vld [vmem:[%s1692 + $0x28] sm:$0xff]
  %v5404 = vld [vmem:[%s1692 + $0x30] sm:$0xff]
  %v5405 = vld [vmem:[%s1692 + $0x38] sm:$0xff]
  %v5406 = vpack.c.bf16 %v5394, %v5393
  %v5439 = vunpack.c.l.b16 %v5360
  %v5440 = vunpack.c.h.b16 %v5360
  %v5441 = vunpack.c.l.b16 %v5361
  %v5442 = vunpack.c.h.b16 %v5361
  %v5443 = vunpack.c.l.b16 %v5362
  %v5444 = vunpack.c.h.b16 %v5362
  %v5445 = vunpack.c.l.b16 %v5363
  %v5446 = vunpack.c.h.b16 %v5363
  %v5447 = vunpack.c.l.b16 %v5364
  %v5448 = vunpack.c.h.b16 %v5364
  %v5449 = vunpack.c.l.b16 %v5365
  %v5450 = vunpack.c.h.b16 %v5365
  %v5451 = vunpack.c.l.b16 %v5366
  %v5452 = vunpack.c.h.b16 %v5366
  %v5453 = vunpack.c.l.b16 %v5367
  %v5454 = vunpack.c.h.b16 %v5367
  %v5455 = vunpack.c.l.b16 %v5368
  %v5456 = vunpack.c.h.b16 %v5368
  %v5457 = vunpack.c.l.b16 %v5369
  %v5458 = vunpack.c.h.b16 %v5369
  %v5459 = vunpack.c.l.b16 %v5370
  %v5460 = vunpack.c.h.b16 %v5370
  %v5461 = vunpack.c.l.b16 %v5371
  %v5462 = vunpack.c.h.b16 %v5371
  %v5463 = vunpack.c.l.b16 %v5372
  %v5464 = vunpack.c.h.b16 %v5372
  %v5465 = vunpack.c.l.b16 %v5373
  %v5466 = vunpack.c.h.b16 %v5373
  %v5467 = vunpack.c.l.b16 %v5374
  %v5468 = vunpack.c.h.b16 %v5374
  %v5469 = vunpack.c.l.b16 %v5375
  %v5470 = vunpack.c.h.b16 %v5375
  %v5471 = vunpack.c.l.b16 %v5376
  %v5472 = vunpack.c.h.b16 %v5376
  %v5473 = vunpack.c.l.b16 %v5377
  %v5474 = vunpack.c.h.b16 %v5377
  %v5475 = vunpack.c.l.b16 %v5378
  %v5476 = vunpack.c.h.b16 %v5378
  %v5477 = vunpack.c.l.b16 %v5379
  %v5478 = vunpack.c.h.b16 %v5379
  %v5479 = vunpack.c.l.b16 %v5380
  %v5480 = vunpack.c.h.b16 %v5380
  %v5481 = vunpack.c.l.b16 %v5381
  %v5482 = vunpack.c.h.b16 %v5381
  %v5483 = vunpack.c.l.b16 %v5382
  %v5484 = vunpack.c.h.b16 %v5382
  %v5485 = vunpack.c.l.b16 %v5383
  %v5486 = vunpack.c.h.b16 %v5383
  %v5487 = vunpack.c.l.b16 %v5384
  %v5488 = vunpack.c.h.b16 %v5384
  %v5489 = vunpack.c.l.b16 %v5385
  %v5490 = vunpack.c.h.b16 %v5385
  %v5491 = vunpack.c.l.b16 %v5386
  %v5492 = vunpack.c.h.b16 %v5386
  %v5493 = vunpack.c.l.b16 %v5387
  %v5494 = vunpack.c.h.b16 %v5387
  %v5495 = vunpack.c.l.b16 %v5388
  %v5496 = vunpack.c.h.b16 %v5388
  %v5497 = vunpack.c.l.b16 %v5389
  %v5498 = vunpack.c.h.b16 %v5389
  %v5499 = vunpack.c.l.b16 %v5390
  %v5500 = vunpack.c.h.b16 %v5390
  %v5501 = vunpack.c.l.b16 %v5391
  %v5502 = vunpack.c.h.b16 %v5391
  %v5503 = vpack.c.b16 %v5443, %v5439
  %v5504 = vpack.c.b16 %v5444, %v5440
  %v5505 = vpack.c.b16 %v5445, %v5441
  %v5506 = vpack.c.b16 %v5446, %v5442
  %v5507 = vpack.c.b16 %v5451, %v5447
  %v5508 = vpack.c.b16 %v5452, %v5448
  %v5509 = vpack.c.b16 %v5453, %v5449
  %v5510 = vpack.c.b16 %v5454, %v5450
  %v5511 = vpack.c.b16 %v5459, %v5455
  %v5512 = vpack.c.b16 %v5460, %v5456
  %v5513 = vpack.c.b16 %v5461, %v5457
  %v5514 = vpack.c.b16 %v5462, %v5458
  %v5515 = vpack.c.b16 %v5467, %v5463
  %v5516 = vpack.c.b16 %v5468, %v5464
  %v5517 = vpack.c.b16 %v5469, %v5465
  %v5518 = vpack.c.b16 %v5470, %v5466
  %v5519 = vpack.c.b16 %v5475, %v5471
  %v5520 = vpack.c.b16 %v5476, %v5472
  %v5521 = vpack.c.b16 %v5477, %v5473
  %v5522 = vpack.c.b16 %v5478, %v5474
  %v5523 = vpack.c.b16 %v5483, %v5479
  %v5524 = vpack.c.b16 %v5484, %v5480
  %v5525 = vpack.c.b16 %v5485, %v5481
  %v5526 = vpack.c.b16 %v5486, %v5482
  %v5527 = vpack.c.b16 %v5491, %v5487
  %v5528 = vpack.c.b16 %v5492, %v5488
  %v5529 = vpack.c.b16 %v5493, %v5489
  %v5530 = vpack.c.b16 %v5494, %v5490
  %v5531 = vpack.c.b16 %v5499, %v5495
  %v5532 = vpack.c.b16 %v5500, %v5496
  %v5533 = vpack.c.b16 %v5501, %v5497
  %v5534 = vpack.c.b16 %v5502, %v5498
  %5567 = vmatprep.subr.bf16.mxu0 %v5504
  %5568 = vmatpush1.bf16.msra.mxu0 %v5503
  %5569 = vmatprep.subr.bf16.mxu0 %v5508
  %5570 = vmatpush1.bf16.msra.mxu0 %v5507
  %5571 = vmatprep.subr.bf16.mxu0 %v5512
  %5572 = vmatpush1.bf16.msra.mxu0 %v5511
  %5573 = vmatprep.subr.bf16.mxu0 %v5516
  %5574 = vmatpush1.bf16.msra.mxu0 %v5515
  %5575 = vmatprep.subr.bf16.mxu0 %v5520
  %5576 = vmatpush1.bf16.msra.mxu0 %v5519
  %5577 = vmatprep.subr.bf16.mxu0 %v5524
  %5578 = vmatpush1.bf16.msra.mxu0 %v5523
  %5579 = vmatprep.subr.bf16.mxu0 %v5528
  %5580 = vmatpush1.bf16.msra.mxu0 %v5527
  %5581 = vmatprep.subr.bf16.mxu0 %v5532
  %5582 = vmatpush1.bf16.msra.mxu0 %v5531
  %5583 = vmatprep.subr.bf16.mxu0 0
  %5584 = vmatpush1.bf16.msra.mxu0 0
  %5585 = vmatprep.subr.bf16.mxu0 0
  %5586 = vmatpush1.bf16.msra.mxu0 0
  %5587 = vmatprep.subr.bf16.mxu0 0
  %5588 = vmatpush1.bf16.msra.mxu0 0
  %5589 = vmatprep.subr.bf16.mxu0 0
  %5590 = vmatpush1.bf16.msra.mxu0 0
  %5591 = vmatprep.subr.bf16.mxu0 0
  %5592 = vmatpush1.bf16.msra.mxu0 0
  %5593 = vmatprep.subr.bf16.mxu0 0
  %5594 = vmatpush1.bf16.msra.mxu0 0
  %5595 = vmatprep.subr.bf16.mxu0 0
  %5596 = vmatpush1.bf16.msra.mxu0 0
  %5597 = vmatprep.subr.bf16.mxu0 0
  %5598 = vmatpush1.bf16.msra.mxu0 0
  %5599 = vmatprep.mubr.bf16.mxu0 0
  %5600 = vmatmul.mubr.bf16.gmra.mrb[0].mxu0 %v5406
  %v5601 = vpop.f32.mrb[0].mxu0
  %v5602 = vadd.f32 0.0, %v5601
  %v5603 = vpop.f32.mrb[0].mxu0
  %v5604 = vadd.f32 0.0, %v5603
  %v5605 = vpop.f32.mrb[0].mxu0
  %v5606 = vadd.f32 0.0, %v5605
  %v5607 = vpop.f32.mrb[0].mxu0
  %v5608 = vadd.f32 0.0, %v5607
  %5609 = vdwg.mxu0
  %5610 = vmatprep.subr.bf16.mxu0 %v5506
  %5611 = vmatpush1.bf16.msra.mxu0 %v5505
  %5612 = vmatprep.subr.bf16.mxu0 %v5510
  %5613 = vmatpush1.bf16.msra.mxu0 %v5509
  %5614 = vmatprep.subr.bf16.mxu0 %v5514
  %5615 = vmatpush1.bf16.msra.mxu0 %v5513
  %5616 = vmatprep.subr.bf16.mxu0 %v5518
  %5617 = vmatpush1.bf16.msra.mxu0 %v5517
  %5618 = vmatprep.subr.bf16.mxu0 %v5522
  %5619 = vmatpush1.bf16.msra.mxu0 %v5521
  %5620 = vmatprep.subr.bf16.mxu0 %v5526
  %5621 = vmatpush1.bf16.msra.mxu0 %v5525
  %5622 = vmatprep.subr.bf16.mxu0 %v5530
  %5623 = vmatpush1.bf16.msra.mxu0 %v5529
  %5624 = vmatprep.subr.bf16.mxu0 %v5534
  %5625 = vmatpush1.bf16.msra.mxu0 %v5533
  %5626 = vmatprep.subr.bf16.mxu0 0
  %5627 = vmatpush1.bf16.msra.mxu0 0
  %5628 = vmatprep.subr.bf16.mxu0 0
  %5629 = vmatpush1.bf16.msra.mxu0 0
  %5630 = vmatprep.subr.bf16.mxu0 0
  %5631 = vmatpush1.bf16.msra.mxu0 0
  %5632 = vmatprep.subr.bf16.mxu0 0
  %5633 = vmatpush1.bf16.msra.mxu0 0
  %5634 = vmatprep.subr.bf16.mxu0 0
  %5635 = vmatpush1.bf16.msra.mxu0 0
  %5636 = vmatprep.subr.bf16.mxu0 0
  %5637 = vmatpush1.bf16.msra.mxu0 0
  %5638 = vmatprep.subr.bf16.mxu0 0
  %5639 = vmatpush1.bf16.msra.mxu0 0
  %5640 = vmatprep.subr.bf16.mxu0 0
  %5641 = vmatpush1.bf16.msra.mxu0 0
  %5642 = vmatprep.mubr.bf16.mxu0 0
  %5643 = vmatmul.mubr.bf16.gmra.mrb[0].mxu0 %v5406
  %v5644 = vpop.f32.mrb[0].mxu0
  %v5645 = vadd.f32 0.0, %v5644
  %v5646 = vpop.f32.mrb[0].mxu0
  %v5647 = vadd.f32 0.0, %v5646
  %v5648 = vpop.f32.mrb[0].mxu0
  %v5649 = vadd.f32 0.0, %v5648
  %v5650 = vpop.f32.mrb[0].mxu0
  %v5651 = vadd.f32 0.0, %v5650
  %5652 = vdwg.mxu0
  %v5653 = vadd.f32 %v5398, %v5602
  %v5654 = vadd.f32 %v5399, %v5604
  %v5655 = vadd.f32 %v5400, %v5645
  %v5656 = vadd.f32 %v5401, %v5647
  %v5657 = vadd.f32 %v5402, %v5606
  %v5658 = vadd.f32 %v5403, %v5608
  %v5659 = vadd.f32 %v5404, %v5649
  %v5660 = vadd.f32 %v5405, %v5651
  %v5661 = vmul.f32 %v5653, 0.5
  %v5662 = vmul.f32 %v5657, 0.5
  %v5663 = vtanh.pop %v5661
  %v5664 = vtanh.pop %v5662
  %v5665 = vmul.f32 %v5663, 0.5
  %v5666 = vmul.f32 %v5664, 0.5
  %v5667 = vadd.f32 %v5665, 0.5
  %v5668 = vadd.f32 %v5666, 0.5
  %v5669 = vmul.f32 %v5654, 0.5
  %v5670 = vmul.f32 %v5658, 0.5
  %v5671 = vtanh.pop %v5669
  %v5672 = vtanh.pop %v5670
  %v5673 = vmul.f32 %v5671, 0.5
  %v5674 = vmul.f32 %v5672, 0.5
  %v5675 = vadd.f32 %v5673, 0.5
  %v5676 = vadd.f32 %v5674, 0.5
  %v5677 = vtanh.pop %v5655
  %v5678 = vtanh.pop %v5659
  %v5679 = vmul.f32 %v5656, 0.5
  %v5680 = vmul.f32 %v5660, 0.5
  %v5681 = vtanh.pop %v5679
  %v5682 = vtanh.pop %v5680
  %v5683 = vmul.f32 %v5681, 0.5
  %v5684 = vmul.f32 %v5682, 0.5
  %v5685 = vadd.f32 %v5683, 0.5
  %v5686 = vadd.f32 %v5684, 0.5
  %v5687 = vmul.f32 %v5675, %v5396
  %v5688 = vmul.f32 %v5676, %v5397
  %v5689 = vmul.f32 %v5667, %v5677
  %v5690 = vmul.f32 %v5668, %v5678
  %v5691 = vadd.f32 %v5687, %v5689
  %v5692 = vadd.f32 %v5688, %v5690
  %v5693 = vtanh.pop %v5691
  %v5694 = vtanh.pop %v5692
  %v5695 = vmul.f32 %v5685, %v5693
  %v5696 = vmul.f32 %v5686, %v5694
  %v5697 = vpack.c.bf16 %v5696, %v5695
  %5698 = vst [vmem:[#allocation2] sm:$0xff] %v5697
  %v5699 = vld [vmem:[%s1996] sm:$0xff]
  %v5700 = vld [vmem:[%s1996 + $0x8] sm:$0xff]
  %v5701 = vld [vmem:[%s1996 + $0x10] sm:$0xff]
  %v5702 = vld [vmem:[%s1996 + $0x18] sm:$0xff]
  %v5703 = vld [vmem:[%s1996 + $0x20] sm:$0xff]
  %v5704 = vld [vmem:[%s1996 + $0x28] sm:$0xff]
  %v5705 = vld [vmem:[%s1996 + $0x30] sm:$0xff]
  %v5706 = vld [vmem:[%s1996 + $0x38] sm:$0xff]
  %5707 = vmatprep.subr.bf16.mxu0 %v5504
  %5708 = vmatpush1.bf16.msra.mxu0 %v5503
  %5709 = vmatprep.subr.bf16.mxu0 %v5508
  %5710 = vmatpush1.bf16.msra.mxu0 %v5507
  %5711 = vmatprep.subr.bf16.mxu0 %v5512
  %5712 = vmatpush1.bf16.msra.mxu0 %v5511
  %5713 = vmatprep.subr.bf16.mxu0 %v5516
  %5714 = vmatpush1.bf16.msra.mxu0 %v5515
  %5715 = vmatprep.subr.bf16.mxu0 %v5520
  %5716 = vmatpush1.bf16.msra.mxu0 %v5519
  %5717 = vmatprep.subr.bf16.mxu0 %v5524
  %5718 = vmatpush1.bf16.msra.mxu0 %v5523
  %5719 = vmatprep.subr.bf16.mxu0 %v5528
  %5720 = vmatpush1.bf16.msra.mxu0 %v5527
  %5721 = vmatprep.subr.bf16.mxu0 %v5532
  %5722 = vmatpush1.bf16.msra.mxu0 %v5531
  %5723 = vmatprep.subr.bf16.mxu0 0
  %5724 = vmatpush1.bf16.msra.mxu0 0
  %5725 = vmatprep.subr.bf16.mxu0 0
  %5726 = vmatpush1.bf16.msra.mxu0 0
  %5727 = vmatprep.subr.bf16.mxu0 0
  %5728 = vmatpush1.bf16.msra.mxu0 0
  %5729 = vmatprep.subr.bf16.mxu0 0
  %5730 = vmatpush1.bf16.msra.mxu0 0
  %5731 = vmatprep.subr.bf16.mxu0 0
  %5732 = vmatpush1.bf16.msra.mxu0 0
  %5733 = vmatprep.subr.bf16.mxu0 0
  %5734 = vmatpush1.bf16.msra.mxu0 0
  %5735 = vmatprep.subr.bf16.mxu0 0
  %5736 = vmatpush1.bf16.msra.mxu0 0
  %5737 = vmatprep.subr.bf16.mxu0 0
  %5738 = vmatpush1.bf16.msra.mxu0 0
  %5739 = vmatprep.mubr.bf16.mxu0 0
  %5740 = vmatmul.mubr.bf16.gmra.mrb[0].mxu0 %v5697
  %v5741 = vpop.f32.mrb[0].mxu0
  %v5742 = vadd.f32 0.0, %v5741
  %v5743 = vpop.f32.mrb[0].mxu0
  %v5744 = vadd.f32 0.0, %v5743
  %v5745 = vpop.f32.mrb[0].mxu0
  %v5746 = vadd.f32 0.0, %v5745
  %v5747 = vpop.f32.mrb[0].mxu0
  %v5748 = vadd.f32 0.0, %v5747
  %5749 = vdwg.mxu0
  %5750 = vmatprep.subr.bf16.mxu0 %v5506
  %5751 = vmatpush1.bf16.msra.mxu0 %v5505
  %5752 = vmatprep.subr.bf16.mxu0 %v5510
  %5753 = vmatpush1.bf16.msra.mxu0 %v5509
  %5754 = vmatprep.subr.bf16.mxu0 %v5514
  %5755 = vmatpush1.bf16.msra.mxu0 %v5513
  %5756 = vmatprep.subr.bf16.mxu0 %v5518
  %5757 = vmatpush1.bf16.msra.mxu0 %v5517
  %5758 = vmatprep.subr.bf16.mxu0 %v5522
  %5759 = vmatpush1.bf16.msra.mxu0 %v5521
  %5760 = vmatprep.subr.bf16.mxu0 %v5526
  %5761 = vmatpush1.bf16.msra.mxu0 %v5525
  %5762 = vmatprep.subr.bf16.mxu0 %v5530
  %5763 = vmatpush1.bf16.msra.mxu0 %v5529
  %5764 = vmatprep.subr.bf16.mxu0 %v5534
  %5765 = vmatpush1.bf16.msra.mxu0 %v5533
  %5766 = vmatprep.subr.bf16.mxu0 0
  %5767 = vmatpush1.bf16.msra.mxu0 0
  %5768 = vmatprep.subr.bf16.mxu0 0
  %5769 = vmatpush1.bf16.msra.mxu0 0
  %5770 = vmatprep.subr.bf16.mxu0 0
  %5771 = vmatpush1.bf16.msra.mxu0 0
  %5772 = vmatprep.subr.bf16.mxu0 0
  %5773 = vmatpush1.bf16.msra.mxu0 0
  %5774 = vmatprep.subr.bf16.mxu0 0
  %5775 = vmatpush1.bf16.msra.mxu0 0
  %5776 = vmatprep.subr.bf16.mxu0 0
  %5777 = vmatpush1.bf16.msra.mxu0 0
  %5778 = vmatprep.subr.bf16.mxu0 0
  %5779 = vmatpush1.bf16.msra.mxu0 0
  %5780 = vmatprep.subr.bf16.mxu0 0
  %5781 = vmatpush1.bf16.msra.mxu0 0
  %5782 = vmatprep.mubr.bf16.mxu0 0
  %5783 = vmatmul.mubr.bf16.gmra.mrb[0].mxu0 %v5697
  %v5784 = vpop.f32.mrb[0].mxu0
  %v5785 = vadd.f32 0.0, %v5784
  %v5786 = vpop.f32.mrb[0].mxu0
  %v5787 = vadd.f32 0.0, %v5786
  %v5788 = vpop.f32.mrb[0].mxu0
  %v5789 = vadd.f32 0.0, %v5788
  %v5790 = vpop.f32.mrb[0].mxu0
  %v5791 = vadd.f32 0.0, %v5790
  %5792 = vdwg.mxu0
  %v5793 = vadd.f32 %v5699, %v5742
  %v5794 = vadd.f32 %v5700, %v5744
  %v5795 = vadd.f32 %v5701, %v5785
  %v5796 = vadd.f32 %v5702, %v5787
  %v5797 = vadd.f32 %v5703, %v5746
  %v5798 = vadd.f32 %v5704, %v5748
  %v5799 = vadd.f32 %v5705, %v5789
  %v5800 = vadd.f32 %v5706, %v5791
  %v5801 = vmul.f32 %v5793, 0.5
  %v5802 = vmul.f32 %v5797, 0.5
  %v5803 = vtanh.pop %v5801
  %v5804 = vtanh.pop %v5802
  %v5805 = vmul.f32 %v5803, 0.5
  %v5806 = vmul.f32 %v5804, 0.5
  %v5807 = vadd.f32 %v5805, 0.5
  %v5808 = vadd.f32 %v5806, 0.5
  %v5809 = vmul.f32 %v5794, 0.5
  %v5810 = vmul.f32 %v5798, 0.5
  %v5811 = vtanh.pop %v5809
  %v5812 = vtanh.pop %v5810
  %v5813 = vmul.f32 %v5811, 0.5
  %v5814 = vmul.f32 %v5812, 0.5
  %v5815 = vadd.f32 %v5813, 0.5
  %v5816 = vadd.f32 %v5814, 0.5
  %v5817 = vtanh.pop %v5795
  %v5818 = vtanh.pop %v5799
  %v5819 = vmul.f32 %v5796, 0.5
  %v5820 = vmul.f32 %v5800, 0.5
  %v5821 = vtanh.pop %v5819
  %v5822 = vtanh.pop %v5820
  %v5823 = vmul.f32 %v5821, 0.5
  %v5824 = vmul.f32 %v5822, 0.5
  %v5825 = vadd.f32 %v5823, 0.5
  %v5826 = vadd.f32 %v5824, 0.5
  %v5827 = vmul.f32 %v5815, %v5691
  %v5828 = vmul.f32 %v5816, %v5692
  %v5829 = vmul.f32 %v5807, %v5817
  %v5830 = vmul.f32 %v5808, %v5818
  %v5831 = vadd.f32 %v5827, %v5829
  %v5832 = vadd.f32 %v5828, %v5830
  %v5833 = vtanh.pop %v5831
  %v5834 = vtanh.pop %v5832
  %v5835 = vmul.f32 %v5825, %v5833
  %v5836 = vmul.f32 %v5826, %v5834
  %v5837 = vpack.c.bf16 %v5836, %v5835
  %5838 = vst [vmem:[%s2136] sm:$0xff] %v5837
  %v5839 = vld [vmem:[%s2140] sm:$0xff]
  %v5840 = vld [vmem:[%s2140 + $0x8] sm:$0xff]
  %v5841 = vld [vmem:[%s2140 + $0x10] sm:$0xff]
  %v5842 = vld [vmem:[%s2140 + $0x18] sm:$0xff]
  %v5843 = vld [vmem:[%s2140 + $0x20] sm:$0xff]
  %v5844 = vld [vmem:[%s2140 + $0x28] sm:$0xff]
  %v5845 = vld [vmem:[%s2140 + $0x30] sm:$0xff]
  %v5846 = vld [vmem:[%s2140 + $0x38] sm:$0xff]
  %5847 = vmatprep.subr.bf16.mxu0 %v5504
  %5848 = vmatpush1.bf16.msra.mxu0 %v5503
  %5849 = vmatprep.subr.bf16.mxu0 %v5508
  %5850 = vmatpush1.bf16.msra.mxu0 %v5507
  %5851 = vmatprep.subr.bf16.mxu0 %v5512
  %5852 = vmatpush1.bf16.msra.mxu0 %v5511
  %5853 = vmatprep.subr.bf16.mxu0 %v5516
  %5854 = vmatpush1.bf16.msra.mxu0 %v5515
  %5855 = vmatprep.subr.bf16.mxu0 %v5520
  %5856 = vmatpush1.bf16.msra.mxu0 %v5519
  %5857 = vmatprep.subr.bf16.mxu0 %v5524
  %5858 = vmatpush1.bf16.msra.mxu0 %v5523
  %5859 = vmatprep.subr.bf16.mxu0 %v5528
  %5860 = vmatpush1.bf16.msra.mxu0 %v5527
  %5861 = vmatprep.subr.bf16.mxu0 %v5532
  %5862 = vmatpush1.bf16.msra.mxu0 %v5531
  %5863 = vmatprep.subr.bf16.mxu0 0
  %5864 = vmatpush1.bf16.msra.mxu0 0
  %5865 = vmatprep.subr.bf16.mxu0 0
  %5866 = vmatpush1.bf16.msra.mxu0 0
  %5867 = vmatprep.subr.bf16.mxu0 0
  %5868 = vmatpush1.bf16.msra.mxu0 0
  %5869 = vmatprep.subr.bf16.mxu0 0
  %5870 = vmatpush1.bf16.msra.mxu0 0
  %5871 = vmatprep.subr.bf16.mxu0 0
  %5872 = vmatpush1.bf16.msra.mxu0 0
  %5873 = vmatprep.subr.bf16.mxu0 0
  %5874 = vmatpush1.bf16.msra.mxu0 0
  %5875 = vmatprep.subr.bf16.mxu0 0
  %5876 = vmatpush1.bf16.msra.mxu0 0
  %5877 = vmatprep.subr.bf16.mxu0 0
  %5878 = vmatpush1.bf16.msra.mxu0 0
  %5879 = vmatprep.mubr.bf16.mxu0 0
  %5880 = vmatmul.mubr.bf16.gmra.mrb[0].mxu0 %v5837
  %v5881 = vpop.f32.mrb[0].mxu0
  %v5882 = vadd.f32 0.0, %v5881
  %v5883 = vpop.f32.mrb[0].mxu0
  %v5884 = vadd.f32 0.0, %v5883
  %v5885 = vpop.f32.mrb[0].mxu0
  %v5886 = vadd.f32 0.0, %v5885
  %v5887 = vpop.f32.mrb[0].mxu0
  %v5888 = vadd.f32 0.0, %v5887
  %5889 = vdwg.mxu0
  %5890 = vmatprep.subr.bf16.mxu0 %v5506
  %5891 = vmatpush1.bf16.msra.mxu0 %v5505
  %5892 = vmatprep.subr.bf16.mxu0 %v5510
  %5893 = vmatpush1.bf16.msra.mxu0 %v5509
  %5894 = vmatprep.subr.bf16.mxu0 %v5514
  %5895 = vmatpush1.bf16.msra.mxu0 %v5513
  %5896 = vmatprep.subr.bf16.mxu0 %v5518
  %5897 = vmatpush1.bf16.msra.mxu0 %v5517
  %5898 = vmatprep.subr.bf16.mxu0 %v5522
  %5899 = vmatpush1.bf16.msra.mxu0 %v5521
  %5900 = vmatprep.subr.bf16.mxu0 %v5526
  %5901 = vmatpush1.bf16.msra.mxu0 %v5525
  %5902 = vmatprep.subr.bf16.mxu0 %v5530
  %5903 = vmatpush1.bf16.msra.mxu0 %v5529
  %5904 = vmatprep.subr.bf16.mxu0 %v5534
  %5905 = vmatpush1.bf16.msra.mxu0 %v5533
  %5906 = vmatprep.subr.bf16.mxu0 0
  %5907 = vmatpush1.bf16.msra.mxu0 0
  %5908 = vmatprep.subr.bf16.mxu0 0
  %5909 = vmatpush1.bf16.msra.mxu0 0
  %5910 = vmatprep.subr.bf16.mxu0 0
  %5911 = vmatpush1.bf16.msra.mxu0 0
  %5912 = vmatprep.subr.bf16.mxu0 0
  %5913 = vmatpush1.bf16.msra.mxu0 0
  %5914 = vmatprep.subr.bf16.mxu0 0
  %5915 = vmatpush1.bf16.msra.mxu0 0
  %5916 = vmatprep.subr.bf16.mxu0 0
  %5917 = vmatpush1.bf16.msra.mxu0 0
  %5918 = vmatprep.subr.bf16.mxu0 0
  %5919 = vmatpush1.bf16.msra.mxu0 0
  %5920 = vmatprep.subr.bf16.mxu0 0
  %5921 = vmatpush1.bf16.msra.mxu0 0
  %5922 = vmatprep.mubr.bf16.mxu0 0
  %5923 = vmatmul.mubr.bf16.gmra.mrb[0].mxu0 %v5837
  %v5924 = vpop.f32.mrb[0].mxu0
  %v5925 = vadd.f32 0.0, %v5924
  %v5926 = vpop.f32.mrb[0].mxu0
  %v5927 = vadd.f32 0.0, %v5926
  %v5928 = vpop.f32.mrb[0].mxu0
  %v5929 = vadd.f32 0.0, %v5928
  %v5930 = vpop.f32.mrb[0].mxu0
  %v5931 = vadd.f32 0.0, %v5930
  %5932 = vdwg.mxu0
  %v5933 = vadd.f32 %v5839, %v5882
  %v5934 = vadd.f32 %v5840, %v5884
  %v5935 = vadd.f32 %v5841, %v5925
  %v5936 = vadd.f32 %v5842, %v5927
  %v5937 = vadd.f32 %v5843, %v5886
  %v5938 = vadd.f32 %v5844, %v5888
  %v5939 = vadd.f32 %v5845, %v5929
  %v5940 = vadd.f32 %v5846, %v5931
  %v5941 = vmul.f32 %v5933, 0.5
  %v5942 = vmul.f32 %v5937, 0.5
  %v5943 = vtanh.pop %v5941
  %v5944 = vtanh.pop %v5942
  %v5945 = vmul.f32 %v5943, 0.5
  %v5946 = vmul.f32 %v5944, 0.5
  %v5947 = vadd.f32 %v5945, 0.5
  %v5948 = vadd.f32 %v5946, 0.5
  %v5949 = vmul.f32 %v5934, 0.5
  %v5950 = vmul.f32 %v5938, 0.5
  %v5951 = vtanh.pop %v5949
  %v5952 = vtanh.pop %v5950
  %v5953 = vmul.f32 %v5951, 0.5
  %v5954 = vmul.f32 %v5952, 0.5
  %v5955 = vadd.f32 %v5953, 0.5
  %v5956 = vadd.f32 %v5954, 0.5
  %v5957 = vtanh.pop %v5935
  %v5958 = vtanh.pop %v5939
  %v5959 = vmul.f32 %v5936, 0.5
  %v5960 = vmul.f32 %v5940, 0.5
  %v5961 = vtanh.pop %v5959
  %v5962 = vtanh.pop %v5960
  %v5963 = vmul.f32 %v5961, 0.5
  %v5964 = vmul.f32 %v5962, 0.5
  %v5965 = vadd.f32 %v5963, 0.5
  %v5966 = vadd.f32 %v5964, 0.5
  %v5967 = vmul.f32 %v5955, %v5831
  %v5968 = vmul.f32 %v5956, %v5832
  %v5969 = vmul.f32 %v5947, %v5957
  %v5970 = vmul.f32 %v5948, %v5958
  %v5971 = vadd.f32 %v5967, %v5969
  %v5972 = vadd.f32 %v5968, %v5970
  %v5973 = vtanh.pop %v5971
  %v5974 = vtanh.pop %v5972
  %v5975 = vmul.f32 %v5965, %v5973
  %v5976 = vmul.f32 %v5966, %v5974
  %v5977 = vpack.c.bf16 %v5976, %v5975
  %5978 = vst [vmem:[%s2280] sm:$0xff] %v5977
  %v5979 = vld [vmem:[%s2284] sm:$0xff]
  %v5980 = vld [vmem:[%s2284 + $0x8] sm:$0xff]
  %v5981 = vld [vmem:[%s2284 + $0x10] sm:$0xff]
  %v5982 = vld [vmem:[%s2284 + $0x18] sm:$0xff]
  %v5983 = vld [vmem:[%s2284 + $0x20] sm:$0xff]
  %v5984 = vld [vmem:[%s2284 + $0x28] sm:$0xff]
  %v5985 = vld [vmem:[%s2284 + $0x30] sm:$0xff]
  %v5986 = vld [vmem:[%s2284 + $0x38] sm:$0xff]
  %5987 = vmatprep.subr.bf16.mxu0 %v5504
  %5988 = vmatpush1.bf16.msra.mxu0 %v5503
  %5989 = vmatprep.subr.bf16.mxu0 %v5508
  %5990 = vmatpush1.bf16.msra.mxu0 %v5507
  %5991 = vmatprep.subr.bf16.mxu0 %v5512
  %5992 = vmatpush1.bf16.msra.mxu0 %v5511
  %5993 = vmatprep.subr.bf16.mxu0 %v5516
  %5994 = vmatpush1.bf16.msra.mxu0 %v5515
  %5995 = vmatprep.subr.bf16.mxu0 %v5520
  %5996 = vmatpush1.bf16.msra.mxu0 %v5519
  %5997 = vmatprep.subr.bf16.mxu0 %v5524
  %5998 = vmatpush1.bf16.msra.mxu0 %v5523
  %5999 = vmatprep.subr.bf16.mxu0 %v5528
  %6000 = vmatpush1.bf16.msra.mxu0 %v5527
  %6001 = vmatprep.subr.bf16.mxu0 %v5532
  %6002 = vmatpush1.bf16.msra.mxu0 %v5531
  %6003 = vmatprep.subr.bf16.mxu0 0
  %6004 = vmatpush1.bf16.msra.mxu0 0
  %6005 = vmatprep.subr.bf16.mxu0 0
  %6006 = vmatpush1.bf16.msra.mxu0 0
  %6007 = vmatprep.subr.bf16.mxu0 0
  %6008 = vmatpush1.bf16.msra.mxu0 0
  %6009 = vmatprep.subr.bf16.mxu0 0
  %6010 = vmatpush1.bf16.msra.mxu0 0
  %6011 = vmatprep.subr.bf16.mxu0 0
  %6012 = vmatpush1.bf16.msra.mxu0 0
  %6013 = vmatprep.subr.bf16.mxu0 0
  %6014 = vmatpush1.bf16.msra.mxu0 0
  %6015 = vmatprep.subr.bf16.mxu0 0
  %6016 = vmatpush1.bf16.msra.mxu0 0
  %6017 = vmatprep.subr.bf16.mxu0 0
  %6018 = vmatpush1.bf16.msra.mxu0 0
  %6019 = vmatprep.mubr.bf16.mxu0 0
  %6020 = vmatmul.mubr.bf16.gmra.mrb[0].mxu0 %v5977
  %v6021 = vpop.f32.mrb[0].mxu0
  %v6022 = vadd.f32 0.0, %v6021
  %v6023 = vpop.f32.mrb[0].mxu0
  %v6024 = vadd.f32 0.0, %v6023
  %v6025 = vpop.f32.mrb[0].mxu0
  %v6026 = vadd.f32 0.0, %v6025
  %v6027 = vpop.f32.mrb[0].mxu0
  %v6028 = vadd.f32 0.0, %v6027
  %6029 = vdwg.mxu0
  %6030 = vmatprep.subr.bf16.mxu0 %v5506
  %6031 = vmatpush1.bf16.msra.mxu0 %v5505
  %6032 = vmatprep.subr.bf16.mxu0 %v5510
  %6033 = vmatpush1.bf16.msra.mxu0 %v5509
  %6034 = vmatprep.subr.bf16.mxu0 %v5514
  %6035 = vmatpush1.bf16.msra.mxu0 %v5513
  %6036 = vmatprep.subr.bf16.mxu0 %v5518
  %6037 = vmatpush1.bf16.msra.mxu0 %v5517
  %6038 = vmatprep.subr.bf16.mxu0 %v5522
  %6039 = vmatpush1.bf16.msra.mxu0 %v5521
  %6040 = vmatprep.subr.bf16.mxu0 %v5526
  %6041 = vmatpush1.bf16.msra.mxu0 %v5525
  %6042 = vmatprep.subr.bf16.mxu0 %v5530
  %6043 = vmatpush1.bf16.msra.mxu0 %v5529
  %6044 = vmatprep.subr.bf16.mxu0 %v5534
  %6045 = vmatpush1.bf16.msra.mxu0 %v5533
  %6046 = vmatprep.subr.bf16.mxu0 0
  %6047 = vmatpush1.bf16.msra.mxu0 0
  %6048 = vmatprep.subr.bf16.mxu0 0
  %6049 = vmatpush1.bf16.msra.mxu0 0
  %6050 = vmatprep.subr.bf16.mxu0 0
  %6051 = vmatpush1.bf16.msra.mxu0 0
  %6052 = vmatprep.subr.bf16.mxu0 0
  %6053 = vmatpush1.bf16.msra.mxu0 0
  %6054 = vmatprep.subr.bf16.mxu0 0
  %6055 = vmatpush1.bf16.msra.mxu0 0
  %6056 = vmatprep.subr.bf16.mxu0 0
  %6057 = vmatpush1.bf16.msra.mxu0 0
  %6058 = vmatprep.subr.bf16.mxu0 0
  %6059 = vmatpush1.bf16.msra.mxu0 0
  %6060 = vmatprep.subr.bf16.mxu0 0
  %6061 = vmatpush1.bf16.msra.mxu0 0
  %6062 = vmatprep.mubr.bf16.mxu0 0
  %6063 = vmatmul.mubr.bf16.gmra.mrb[0].mxu0 %v5977
  %v6064 = vpop.f32.mrb[0].mxu0
  %v6065 = vadd.f32 0.0, %v6064
  %v6066 = vpop.f32.mrb[0].mxu0
  %v6067 = vadd.f32 0.0, %v6066
  %v6068 = vpop.f32.mrb[0].mxu0
  %v6069 = vadd.f32 0.0, %v6068
  %v6070 = vpop.f32.mrb[0].mxu0
  %v6071 = vadd.f32 0.0, %v6070
  %6072 = vdwg.mxu0
  %v6073 = vadd.f32 %v5979, %v6022
  %v6074 = vadd.f32 %v5980, %v6024
  %v6075 = vadd.f32 %v5981, %v6065
  %v6076 = vadd.f32 %v5982, %v6067
  %v6077 = vadd.f32 %v5983, %v6026
  %v6078 = vadd.f32 %v5984, %v6028
  %v6079 = vadd.f32 %v5985, %v6069
  %v6080 = vadd.f32 %v5986, %v6071
  %v6081 = vmul.f32 %v6073, 0.5
  %v6082 = vmul.f32 %v6077, 0.5
  %v6083 = vtanh.pop %v6081
  %v6084 = vtanh.pop %v6082
  %v6085 = vmul.f32 %v6083, 0.5
  %v6086 = vmul.f32 %v6084, 0.5
  %v6087 = vadd.f32 %v6085, 0.5
  %v6088 = vadd.f32 %v6086, 0.5
  %v6089 = vmul.f32 %v6074, 0.5
  %v6090 = vmul.f32 %v6078, 0.5
  %v6091 = vtanh.pop %v6089
  %v6092 = vtanh.pop %v6090
  %v6093 = vmul.f32 %v6091, 0.5
  %v6094 = vmul.f32 %v6092, 0.5
  %v6095 = vadd.f32 %v6093, 0.5
  %v6096 = vadd.f32 %v6094, 0.5
  %v6097 = vtanh.pop %v6075
  %v6098 = vtanh.pop %v6079
  %v6099 = vmul.f32 %v6076, 0.5
  %v6100 = vmul.f32 %v6080, 0.5
  %v6101 = vtanh.pop %v6099
  %v6102 = vtanh.pop %v6100
  %v6103 = vmul.f32 %v6101, 0.5
  %v6104 = vmul.f32 %v6102, 0.5
  %v6105 = vadd.f32 %v6103, 0.5
  %v6106 = vadd.f32 %v6104, 0.5
  %v6107 = vmul.f32 %v6095, %v5971
  %v6108 = vmul.f32 %v6096, %v5972
  %v6109 = vmul.f32 %v6087, %v6097
  %v6110 = vmul.f32 %v6088, %v6098
  %v6111 = vadd.f32 %v6107, %v6109
  %v6112 = vadd.f32 %v6108, %v6110
  %v6113 = vtanh.pop %v6111
  %v6114 = vtanh.pop %v6112
  %v6115 = vmul.f32 %v6105, %v6113
  %v6116 = vmul.f32 %v6106, %v6114
  %v6117 = vpack.c.bf16 %v6116, %v6115
  %6118 = vst [vmem:[%s2424] sm:$0xff] %v6117
  %v6119 = vld [vmem:[%s2428] sm:$0xff]
  %v6120 = vld [vmem:[%s2428 + $0x8] sm:$0xff]
  %v6121 = vld [vmem:[%s2428 + $0x10] sm:$0xff]
  %v6122 = vld [vmem:[%s2428 + $0x18] sm:$0xff]
  %v6123 = vld [vmem:[%s2428 + $0x20] sm:$0xff]
  %v6124 = vld [vmem:[%s2428 + $0x28] sm:$0xff]
  %v6125 = vld [vmem:[%s2428 + $0x30] sm:$0xff]
  %v6126 = vld [vmem:[%s2428 + $0x38] sm:$0xff]
  %6127 = vmatprep.subr.bf16.mxu0 %v5504
  %6128 = vmatpush1.bf16.msra.mxu0 %v5503
  %6129 = vmatprep.subr.bf16.mxu0 %v5508
  %6130 = vmatpush1.bf16.msra.mxu0 %v5507
  %6131 = vmatprep.subr.bf16.mxu0 %v5512
  %6132 = vmatpush1.bf16.msra.mxu0 %v5511
  %6133 = vmatprep.subr.bf16.mxu0 %v5516
  %6134 = vmatpush1.bf16.msra.mxu0 %v5515
  %6135 = vmatprep.subr.bf16.mxu0 %v5520
  %6136 = vmatpush1.bf16.msra.mxu0 %v5519
  %6137 = vmatprep.subr.bf16.mxu0 %v5524
  %6138 = vmatpush1.bf16.msra.mxu0 %v5523
  %6139 = vmatprep.subr.bf16.mxu0 %v5528
  %6140 = vmatpush1.bf16.msra.mxu0 %v5527
  %6141 = vmatprep.subr.bf16.mxu0 %v5532
  %6142 = vmatpush1.bf16.msra.mxu0 %v5531
  %6143 = vmatprep.subr.bf16.mxu0 0
  %6144 = vmatpush1.bf16.msra.mxu0 0
  %6145 = vmatprep.subr.bf16.mxu0 0
  %6146 = vmatpush1.bf16.msra.mxu0 0
  %6147 = vmatprep.subr.bf16.mxu0 0
  %6148 = vmatpush1.bf16.msra.mxu0 0
  %6149 = vmatprep.subr.bf16.mxu0 0
  %6150 = vmatpush1.bf16.msra.mxu0 0
  %6151 = vmatprep.subr.bf16.mxu0 0
  %6152 = vmatpush1.bf16.msra.mxu0 0
  %6153 = vmatprep.subr.bf16.mxu0 0
  %6154 = vmatpush1.bf16.msra.mxu0 0
  %6155 = vmatprep.subr.bf16.mxu0 0
  %6156 = vmatpush1.bf16.msra.mxu0 0
  %6157 = vmatprep.subr.bf16.mxu0 0
  %6158 = vmatpush1.bf16.msra.mxu0 0
  %6159 = vmatprep.mubr.bf16.mxu0 0
  %6160 = vmatmul.mubr.bf16.gmra.mrb[0].mxu0 %v6117
  %v6161 = vpop.f32.mrb[0].mxu0
  %v6162 = vadd.f32 0.0, %v6161
  %v6163 = vpop.f32.mrb[0].mxu0
  %v6164 = vadd.f32 0.0, %v6163
  %v6165 = vpop.f32.mrb[0].mxu0
  %v6166 = vadd.f32 0.0, %v6165
  %v6167 = vpop.f32.mrb[0].mxu0
  %v6168 = vadd.f32 0.0, %v6167
  %6169 = vdwg.mxu0
  %6170 = vmatprep.subr.bf16.mxu0 %v5506
  %6171 = vmatpush1.bf16.msra.mxu0 %v5505
  %6172 = vmatprep.subr.bf16.mxu0 %v5510
  %6173 = vmatpush1.bf16.msra.mxu0 %v5509
  %6174 = vmatprep.subr.bf16.mxu0 %v5514
  %6175 = vmatpush1.bf16.msra.mxu0 %v5513
  %6176 = vmatprep.subr.bf16.mxu0 %v5518
  %6177 = vmatpush1.bf16.msra.mxu0 %v5517
  %6178 = vmatprep.subr.bf16.mxu0 %v5522
  %6179 = vmatpush1.bf16.msra.mxu0 %v5521
  %6180 = vmatprep.subr.bf16.mxu0 %v5526
  %6181 = vmatpush1.bf16.msra.mxu0 %v5525
  %6182 = vmatprep.subr.bf16.mxu0 %v5530
  %6183 = vmatpush1.bf16.msra.mxu0 %v5529
  %6184 = vmatprep.subr.bf16.mxu0 %v5534
  %6185 = vmatpush1.bf16.msra.mxu0 %v5533
  %6186 = vmatprep.subr.bf16.mxu0 0
  %6187 = vmatpush1.bf16.msra.mxu0 0
  %6188 = vmatprep.subr.bf16.mxu0 0
  %6189 = vmatpush1.bf16.msra.mxu0 0
  %6190 = vmatprep.subr.bf16.mxu0 0
  %6191 = vmatpush1.bf16.msra.mxu0 0
  %6192 = vmatprep.subr.bf16.mxu0 0
  %6193 = vmatpush1.bf16.msra.mxu0 0
  %6194 = vmatprep.subr.bf16.mxu0 0
  %6195 = vmatpush1.bf16.msra.mxu0 0
  %6196 = vmatprep.subr.bf16.mxu0 0
  %6197 = vmatpush1.bf16.msra.mxu0 0
  %6198 = vmatprep.subr.bf16.mxu0 0
  %6199 = vmatpush1.bf16.msra.mxu0 0
  %6200 = vmatprep.subr.bf16.mxu0 0
  %6201 = vmatpush1.bf16.msra.mxu0 0
  %6202 = vmatprep.mubr.bf16.mxu0 0
  %6203 = vmatmul.mubr.bf16.gmra.mrb[0].mxu0 %v6117
  %v6204 = vpop.f32.mrb[0].mxu0
  %v6205 = vadd.f32 0.0, %v6204
  %v6206 = vpop.f32.mrb[0].mxu0
  %v6207 = vadd.f32 0.0, %v6206
  %v6208 = vpop.f32.mrb[0].mxu0
  %v6209 = vadd.f32 0.0, %v6208
  %v6210 = vpop.f32.mrb[0].mxu0
  %v6211 = vadd.f32 0.0, %v6210
  %6212 = vdwg.mxu0
  %v6213 = vadd.f32 %v6119, %v6162
  %v6214 = vadd.f32 %v6120, %v6164
  %v6215 = vadd.f32 %v6121, %v6205
  %v6216 = vadd.f32 %v6122, %v6207
  %v6217 = vadd.f32 %v6123, %v6166
  %v6218 = vadd.f32 %v6124, %v6168
  %v6219 = vadd.f32 %v6125, %v6209
  %v6220 = vadd.f32 %v6126, %v6211
  %v6221 = vmul.f32 %v6213, 0.5
  %v6222 = vmul.f32 %v6217, 0.5
  %v6223 = vtanh.pop %v6221
  %v6224 = vtanh.pop %v6222
  %v6225 = vmul.f32 %v6223, 0.5
  %v6226 = vmul.f32 %v6224, 0.5
  %v6227 = vadd.f32 %v6225, 0.5
  %v6228 = vadd.f32 %v6226, 0.5
  %v6229 = vmul.f32 %v6214, 0.5
  %v6230 = vmul.f32 %v6218, 0.5
  %v6231 = vtanh.pop %v6229
  %v6232 = vtanh.pop %v6230
  %v6233 = vmul.f32 %v6231, 0.5
  %v6234 = vmul.f32 %v6232, 0.5
  %v6235 = vadd.f32 %v6233, 0.5
  %v6236 = vadd.f32 %v6234, 0.5
  %v6237 = vtanh.pop %v6215
  %v6238 = vtanh.pop %v6219
  %v6239 = vmul.f32 %v6216, 0.5
  %v6240 = vmul.f32 %v6220, 0.5
  %v6241 = vtanh.pop %v6239
  %v6242 = vtanh.pop %v6240
  %v6243 = vmul.f32 %v6241, 0.5
  %v6244 = vmul.f32 %v6242, 0.5
  %v6245 = vadd.f32 %v6243, 0.5
  %v6246 = vadd.f32 %v6244, 0.5
  %v6247 = vmul.f32 %v6235, %v6111
  %v6248 = vmul.f32 %v6236, %v6112
  %v6249 = vmul.f32 %v6227, %v6237
  %v6250 = vmul.f32 %v6228, %v6238
  %v6251 = vadd.f32 %v6247, %v6249
  %v6252 = vadd.f32 %v6248, %v6250
  %v6253 = vtanh.pop %v6251
  %v6254 = vtanh.pop %v6252
  %v6255 = vmul.f32 %v6245, %v6253
  %v6256 = vmul.f32 %v6246, %v6254
  %v6257 = vpack.c.bf16 %v6256, %v6255
  %6258 = vst [vmem:[%s2568] sm:$0xff] %v6257
  %v6259 = vld [vmem:[%s2572] sm:$0xff]
  %v6260 = vld [vmem:[%s2572 + $0x8] sm:$0xff]
  %v6261 = vld [vmem:[%s2572 + $0x10] sm:$0xff]
  %v6262 = vld [vmem:[%s2572 + $0x18] sm:$0xff]
  %v6263 = vld [vmem:[%s2572 + $0x20] sm:$0xff]
  %v6264 = vld [vmem:[%s2572 + $0x28] sm:$0xff]
  %v6265 = vld [vmem:[%s2572 + $0x30] sm:$0xff]
  %v6266 = vld [vmem:[%s2572 + $0x38] sm:$0xff]
  %6267 = vmatprep.subr.bf16.mxu0 %v5504
  %6268 = vmatpush1.bf16.msra.mxu0 %v5503
  %6269 = vmatprep.subr.bf16.mxu0 %v5508
  %6270 = vmatpush1.bf16.msra.mxu0 %v5507
  %6271 = vmatprep.subr.bf16.mxu0 %v5512
  %6272 = vmatpush1.bf16.msra.mxu0 %v5511
  %6273 = vmatprep.subr.bf16.mxu0 %v5516
  %6274 = vmatpush1.bf16.msra.mxu0 %v5515
  %6275 = vmatprep.subr.bf16.mxu0 %v5520
  %6276 = vmatpush1.bf16.msra.mxu0 %v5519
  %6277 = vmatprep.subr.bf16.mxu0 %v5524
  %6278 = vmatpush1.bf16.msra.mxu0 %v5523
  %6279 = vmatprep.subr.bf16.mxu0 %v5528
  %6280 = vmatpush1.bf16.msra.mxu0 %v5527
  %6281 = vmatprep.subr.bf16.mxu0 %v5532
  %6282 = vmatpush1.bf16.msra.mxu0 %v5531
  %6283 = vmatprep.subr.bf16.mxu0 0
  %6284 = vmatpush1.bf16.msra.mxu0 0
  %6285 = vmatprep.subr.bf16.mxu0 0
  %6286 = vmatpush1.bf16.msra.mxu0 0
  %6287 = vmatprep.subr.bf16.mxu0 0
  %6288 = vmatpush1.bf16.msra.mxu0 0
  %6289 = vmatprep.subr.bf16.mxu0 0
  %6290 = vmatpush1.bf16.msra.mxu0 0
  %6291 = vmatprep.subr.bf16.mxu0 0
  %6292 = vmatpush1.bf16.msra.mxu0 0
  %6293 = vmatprep.subr.bf16.mxu0 0
  %6294 = vmatpush1.bf16.msra.mxu0 0
  %6295 = vmatprep.subr.bf16.mxu0 0
  %6296 = vmatpush1.bf16.msra.mxu0 0
  %6297 = vmatprep.subr.bf16.mxu0 0
  %6298 = vmatpush1.bf16.msra.mxu0 0
  %6299 = vmatprep.mubr.bf16.mxu0 0
  %6300 = vmatmul.mubr.bf16.gmra.mrb[0].mxu0 %v6257
  %v6301 = vpop.f32.mrb[0].mxu0
  %v6302 = vadd.f32 0.0, %v6301
  %v6303 = vpop.f32.mrb[0].mxu0
  %v6304 = vadd.f32 0.0, %v6303
  %v6305 = vpop.f32.mrb[0].mxu0
  %v6306 = vadd.f32 0.0, %v6305
  %v6307 = vpop.f32.mrb[0].mxu0
  %v6308 = vadd.f32 0.0, %v6307
  %6309 = vdwg.mxu0
  %6310 = vmatprep.subr.bf16.mxu0 %v5506
  %6311 = vmatpush1.bf16.msra.mxu0 %v5505
  %6312 = vmatprep.subr.bf16.mxu0 %v5510
  %6313 = vmatpush1.bf16.msra.mxu0 %v5509
  %6314 = vmatprep.subr.bf16.mxu0 %v5514
  %6315 = vmatpush1.bf16.msra.mxu0 %v5513
  %6316 = vmatprep.subr.bf16.mxu0 %v5518
  %6317 = vmatpush1.bf16.msra.mxu0 %v5517
  %6318 = vmatprep.subr.bf16.mxu0 %v5522
  %6319 = vmatpush1.bf16.msra.mxu0 %v5521
  %6320 = vmatprep.subr.bf16.mxu0 %v5526
  %6321 = vmatpush1.bf16.msra.mxu0 %v5525
  %6322 = vmatprep.subr.bf16.mxu0 %v5530
  %6323 = vmatpush1.bf16.msra.mxu0 %v5529
  %6324 = vmatprep.subr.bf16.mxu0 %v5534
  %6325 = vmatpush1.bf16.msra.mxu0 %v5533
  %6326 = vmatprep.subr.bf16.mxu0 0
  %6327 = vmatpush1.bf16.msra.mxu0 0
  %6328 = vmatprep.subr.bf16.mxu0 0
  %6329 = vmatpush1.bf16.msra.mxu0 0
  %6330 = vmatprep.subr.bf16.mxu0 0
  %6331 = vmatpush1.bf16.msra.mxu0 0
  %6332 = vmatprep.subr.bf16.mxu0 0
  %6333 = vmatpush1.bf16.msra.mxu0 0
  %6334 = vmatprep.subr.bf16.mxu0 0
  %6335 = vmatpush1.bf16.msra.mxu0 0
  %6336 = vmatprep.subr.bf16.mxu0 0
  %6337 = vmatpush1.bf16.msra.mxu0 0
  %6338 = vmatprep.subr.bf16.mxu0 0
  %6339 = vmatpush1.bf16.msra.mxu0 0
  %6340 = vmatprep.subr.bf16.mxu0 0
  %6341 = vmatpush1.bf16.msra.mxu0 0
  %6342 = vmatprep.mubr.bf16.mxu0 0
  %6343 = vmatmul.mubr.bf16.gmra.mrb[0].mxu0 %v6257
  %v6344 = vpop.f32.mrb[0].mxu0
  %v6345 = vadd.f32 0.0, %v6344
  %v6346 = vpop.f32.mrb[0].mxu0
  %v6347 = vadd.f32 0.0, %v6346
  %v6348 = vpop.f32.mrb[0].mxu0
  %v6349 = vadd.f32 0.0, %v6348
  %v6350 = vpop.f32.mrb[0].mxu0
  %v6351 = vadd.f32 0.0, %v6350
  %6352 = vdwg.mxu0
  %v6353 = vadd.f32 %v6259, %v6302
  %v6354 = vadd.f32 %v6260, %v6304
  %v6355 = vadd.f32 %v6261, %v6345
  %v6356 = vadd.f32 %v6262, %v6347
  %v6357 = vadd.f32 %v6263, %v6306
  %v6358 = vadd.f32 %v6264, %v6308
  %v6359 = vadd.f32 %v6265, %v6349
  %v6360 = vadd.f32 %v6266, %v6351
  %v6361 = vmul.f32 %v6353, 0.5
  %v6362 = vmul.f32 %v6357, 0.5
  %v6363 = vtanh.pop %v6361
  %v6364 = vtanh.pop %v6362
  %v6365 = vmul.f32 %v6363, 0.5
  %v6366 = vmul.f32 %v6364, 0.5
  %v6367 = vadd.f32 %v6365, 0.5
  %v6368 = vadd.f32 %v6366, 0.5
  %v6369 = vmul.f32 %v6354, 0.5
  %v6370 = vmul.f32 %v6358, 0.5
  %v6371 = vtanh.pop %v6369
  %v6372 = vtanh.pop %v6370
  %v6373 = vmul.f32 %v6371, 0.5
  %v6374 = vmul.f32 %v6372, 0.5
  %v6375 = vadd.f32 %v6373, 0.5
  %v6376 = vadd.f32 %v6374, 0.5
  %v6377 = vtanh.pop %v6355
  %v6378 = vtanh.pop %v6359
  %v6379 = vmul.f32 %v6356, 0.5
  %v6380 = vmul.f32 %v6360, 0.5
  %v6381 = vtanh.pop %v6379
  %v6382 = vtanh.pop %v6380
  %v6383 = vmul.f32 %v6381, 0.5
  %v6384 = vmul.f32 %v6382, 0.5
  %v6385 = vadd.f32 %v6383, 0.5
  %v6386 = vadd.f32 %v6384, 0.5
  %v6387 = vmul.f32 %v6375, %v6251
  %v6388 = vmul.f32 %v6376, %v6252
  %v6389 = vmul.f32 %v6367, %v6377
  %v6390 = vmul.f32 %v6368, %v6378
  %v6391 = vadd.f32 %v6387, %v6389
  %v6392 = vadd.f32 %v6388, %v6390
  %v6393 = vtanh.pop %v6391
  %v6394 = vtanh.pop %v6392
  %v6395 = vmul.f32 %v6385, %v6393
  %v6396 = vmul.f32 %v6386, %v6394
  %v6397 = vpack.c.bf16 %v6396, %v6395
  %6398 = vst [vmem:[%s2712] sm:$0xff] %v6397
  %v6399 = vld [vmem:[%s2716] sm:$0xff]
  %v6400 = vld [vmem:[%s2716 + $0x8] sm:$0xff]
  %v6401 = vld [vmem:[%s2716 + $0x10] sm:$0xff]
  %v6402 = vld [vmem:[%s2716 + $0x18] sm:$0xff]
  %v6403 = vld [vmem:[%s2716 + $0x20] sm:$0xff]
  %v6404 = vld [vmem:[%s2716 + $0x28] sm:$0xff]
  %v6405 = vld [vmem:[%s2716 + $0x30] sm:$0xff]
  %v6406 = vld [vmem:[%s2716 + $0x38] sm:$0xff]
  %6407 = vmatprep.subr.bf16.mxu0 %v5504
  %6408 = vmatpush1.bf16.msra.mxu0 %v5503
  %6409 = vmatprep.subr.bf16.mxu0 %v5508
  %6410 = vmatpush1.bf16.msra.mxu0 %v5507
  %6411 = vmatprep.subr.bf16.mxu0 %v5512
  %6412 = vmatpush1.bf16.msra.mxu0 %v5511
  %6413 = vmatprep.subr.bf16.mxu0 %v5516
  %6414 = vmatpush1.bf16.msra.mxu0 %v5515
  %6415 = vmatprep.subr.bf16.mxu0 %v5520
  %6416 = vmatpush1.bf16.msra.mxu0 %v5519
  %6417 = vmatprep.subr.bf16.mxu0 %v5524
  %6418 = vmatpush1.bf16.msra.mxu0 %v5523
  %6419 = vmatprep.subr.bf16.mxu0 %v5528
  %6420 = vmatpush1.bf16.msra.mxu0 %v5527
  %6421 = vmatprep.subr.bf16.mxu0 %v5532
  %6422 = vmatpush1.bf16.msra.mxu0 %v5531
  %6423 = vmatprep.subr.bf16.mxu0 0
  %6424 = vmatpush1.bf16.msra.mxu0 0
  %6425 = vmatprep.subr.bf16.mxu0 0
  %6426 = vmatpush1.bf16.msra.mxu0 0
  %6427 = vmatprep.subr.bf16.mxu0 0
  %6428 = vmatpush1.bf16.msra.mxu0 0
  %6429 = vmatprep.subr.bf16.mxu0 0
  %6430 = vmatpush1.bf16.msra.mxu0 0
  %6431 = vmatprep.subr.bf16.mxu0 0
  %6432 = vmatpush1.bf16.msra.mxu0 0
  %6433 = vmatprep.subr.bf16.mxu0 0
  %6434 = vmatpush1.bf16.msra.mxu0 0
  %6435 = vmatprep.subr.bf16.mxu0 0
  %6436 = vmatpush1.bf16.msra.mxu0 0
  %6437 = vmatprep.subr.bf16.mxu0 0
  %6438 = vmatpush1.bf16.msra.mxu0 0
  %6439 = vmatprep.mubr.bf16.mxu0 0
  %6440 = vmatmul.mubr.bf16.gmra.mrb[0].mxu0 %v6397
  %v6441 = vpop.f32.mrb[0].mxu0
  %v6442 = vadd.f32 0.0, %v6441
  %v6443 = vpop.f32.mrb[0].mxu0
  %v6444 = vadd.f32 0.0, %v6443
  %v6445 = vpop.f32.mrb[0].mxu0
  %v6446 = vadd.f32 0.0, %v6445
  %v6447 = vpop.f32.mrb[0].mxu0
  %v6448 = vadd.f32 0.0, %v6447
  %6449 = vdwg.mxu0
  %6450 = vmatprep.subr.bf16.mxu0 %v5506
  %6451 = vmatpush1.bf16.msra.mxu0 %v5505
  %6452 = vmatprep.subr.bf16.mxu0 %v5510
  %6453 = vmatpush1.bf16.msra.mxu0 %v5509
  %6454 = vmatprep.subr.bf16.mxu0 %v5514
  %6455 = vmatpush1.bf16.msra.mxu0 %v5513
  %6456 = vmatprep.subr.bf16.mxu0 %v5518
  %6457 = vmatpush1.bf16.msra.mxu0 %v5517
  %6458 = vmatprep.subr.bf16.mxu0 %v5522
  %6459 = vmatpush1.bf16.msra.mxu0 %v5521
  %6460 = vmatprep.subr.bf16.mxu0 %v5526
  %6461 = vmatpush1.bf16.msra.mxu0 %v5525
  %6462 = vmatprep.subr.bf16.mxu0 %v5530
  %6463 = vmatpush1.bf16.msra.mxu0 %v5529
  %6464 = vmatprep.subr.bf16.mxu0 %v5534
  %6465 = vmatpush1.bf16.msra.mxu0 %v5533
  %6466 = vmatprep.subr.bf16.mxu0 0
  %6467 = vmatpush1.bf16.msra.mxu0 0
  %6468 = vmatprep.subr.bf16.mxu0 0
  %6469 = vmatpush1.bf16.msra.mxu0 0
  %6470 = vmatprep.subr.bf16.mxu0 0
  %6471 = vmatpush1.bf16.msra.mxu0 0
  %6472 = vmatprep.subr.bf16.mxu0 0
  %6473 = vmatpush1.bf16.msra.mxu0 0
  %6474 = vmatprep.subr.bf16.mxu0 0
  %6475 = vmatpush1.bf16.msra.mxu0 0
  %6476 = vmatprep.subr.bf16.mxu0 0
  %6477 = vmatpush1.bf16.msra.mxu0 0
  %6478 = vmatprep.subr.bf16.mxu0 0
  %6479 = vmatpush1.bf16.msra.mxu0 0
  %6480 = vmatprep.subr.bf16.mxu0 0
  %6481 = vmatpush1.bf16.msra.mxu0 0
  %6482 = vmatprep.mubr.bf16.mxu0 0
  %6483 = vmatmul.mubr.bf16.gmra.mrb[0].mxu0 %v6397
  %v6484 = vpop.f32.mrb[0].mxu0
  %v6485 = vadd.f32 0.0, %v6484
  %v6486 = vpop.f32.mrb[0].mxu0
  %v6487 = vadd.f32 0.0, %v6486
  %v6488 = vpop.f32.mrb[0].mxu0
  %v6489 = vadd.f32 0.0, %v6488
  %v6490 = vpop.f32.mrb[0].mxu0
  %v6491 = vadd.f32 0.0, %v6490
  %6492 = vdwg.mxu0
  %v6493 = vadd.f32 %v6399, %v6442
  %v6494 = vadd.f32 %v6400, %v6444
  %v6495 = vadd.f32 %v6401, %v6485
  %v6496 = vadd.f32 %v6402, %v6487
  %v6497 = vadd.f32 %v6403, %v6446
  %v6498 = vadd.f32 %v6404, %v6448
  %v6499 = vadd.f32 %v6405, %v6489
  %v6500 = vadd.f32 %v6406, %v6491
  %v6501 = vmul.f32 %v6493, 0.5
  %v6502 = vmul.f32 %v6497, 0.5
  %v6503 = vtanh.pop %v6501
  %v6504 = vtanh.pop %v6502
  %v6505 = vmul.f32 %v6503, 0.5
  %v6506 = vmul.f32 %v6504, 0.5
  %v6507 = vadd.f32 %v6505, 0.5
  %v6508 = vadd.f32 %v6506, 0.5
  %v6509 = vmul.f32 %v6494, 0.5
  %v6510 = vmul.f32 %v6498, 0.5
  %v6511 = vtanh.pop %v6509
  %v6512 = vtanh.pop %v6510
  %v6513 = vmul.f32 %v6511, 0.5
  %v6514 = vmul.f32 %v6512, 0.5
  %v6515 = vadd.f32 %v6513, 0.5
  %v6516 = vadd.f32 %v6514, 0.5
  %v6517 = vtanh.pop %v6495
  %v6518 = vtanh.pop %v6499
  %v6519 = vmul.f32 %v6496, 0.5
  %v6520 = vmul.f32 %v6500, 0.5
  %v6521 = vtanh.pop %v6519
  %v6522 = vtanh.pop %v6520
  %v6523 = vmul.f32 %v6521, 0.5
  %v6524 = vmul.f32 %v6522, 0.5
  %v6525 = vadd.f32 %v6523, 0.5
  %v6526 = vadd.f32 %v6524, 0.5
  %v6527 = vmul.f32 %v6515, %v6391
  %v6528 = vmul.f32 %v6516, %v6392
  %v6529 = vmul.f32 %v6507, %v6517
  %v6530 = vmul.f32 %v6508, %v6518
  %v6531 = vadd.f32 %v6527, %v6529
  %v6532 = vadd.f32 %v6528, %v6530
  %v6533 = vtanh.pop %v6531
  %v6534 = vtanh.pop %v6532
  %v6535 = vmul.f32 %v6525, %v6533
  %v6536 = vmul.f32 %v6526, %v6534
  %v6537 = vpack.c.bf16 %v6536, %v6535
  %6538 = vst [vmem:[%s2856] sm:$0xff] %v6537
  %v6539 = vld [vmem:[%s2860] sm:$0xff]
  %v6540 = vld [vmem:[%s2860 + $0x8] sm:$0xff]
  %v6541 = vld [vmem:[%s2860 + $0x10] sm:$0xff]
  %v6542 = vld [vmem:[%s2860 + $0x18] sm:$0xff]
  %v6543 = vld [vmem:[%s2860 + $0x20] sm:$0xff]
  %v6544 = vld [vmem:[%s2860 + $0x28] sm:$0xff]
  %v6545 = vld [vmem:[%s2860 + $0x30] sm:$0xff]
  %v6546 = vld [vmem:[%s2860 + $0x38] sm:$0xff]
  %6547 = vmatprep.subr.bf16.mxu0 %v5504
  %6548 = vmatpush1.bf16.msra.mxu0 %v5503
  %6549 = vmatprep.subr.bf16.mxu0 %v5508
  %6550 = vmatpush1.bf16.msra.mxu0 %v5507
  %6551 = vmatprep.subr.bf16.mxu0 %v5512
  %6552 = vmatpush1.bf16.msra.mxu0 %v5511
  %6553 = vmatprep.subr.bf16.mxu0 %v5516
  %6554 = vmatpush1.bf16.msra.mxu0 %v5515
  %6555 = vmatprep.subr.bf16.mxu0 %v5520
  %6556 = vmatpush1.bf16.msra.mxu0 %v5519
  %6557 = vmatprep.subr.bf16.mxu0 %v5524
  %6558 = vmatpush1.bf16.msra.mxu0 %v5523
  %6559 = vmatprep.subr.bf16.mxu0 %v5528
  %6560 = vmatpush1.bf16.msra.mxu0 %v5527
  %6561 = vmatprep.subr.bf16.mxu0 %v5532
  %6562 = vmatpush1.bf16.msra.mxu0 %v5531
  %6563 = vmatprep.subr.bf16.mxu0 0
  %6564 = vmatpush1.bf16.msra.mxu0 0
  %6565 = vmatprep.subr.bf16.mxu0 0
  %6566 = vmatpush1.bf16.msra.mxu0 0
  %6567 = vmatprep.subr.bf16.mxu0 0
  %6568 = vmatpush1.bf16.msra.mxu0 0
  %6569 = vmatprep.subr.bf16.mxu0 0
  %6570 = vmatpush1.bf16.msra.mxu0 0
  %6571 = vmatprep.subr.bf16.mxu0 0
  %6572 = vmatpush1.bf16.msra.mxu0 0
  %6573 = vmatprep.subr.bf16.mxu0 0
  %6574 = vmatpush1.bf16.msra.mxu0 0
  %6575 = vmatprep.subr.bf16.mxu0 0
  %6576 = vmatpush1.bf16.msra.mxu0 0
  %6577 = vmatprep.subr.bf16.mxu0 0
  %6578 = vmatpush1.bf16.msra.mxu0 0
  %6579 = vmatprep.mubr.bf16.mxu0 0
  %6580 = vmatmul.mubr.bf16.gmra.mrb[0].mxu0 %v6537
  %v6581 = vpop.f32.mrb[0].mxu0
  %v6582 = vadd.f32 0.0, %v6581
  %v6583 = vpop.f32.mrb[0].mxu0
  %v6584 = vadd.f32 0.0, %v6583
  %v6585 = vpop.f32.mrb[0].mxu0
  %v6586 = vadd.f32 0.0, %v6585
  %v6587 = vpop.f32.mrb[0].mxu0
  %v6588 = vadd.f32 0.0, %v6587
  %6589 = vdwg.mxu0
  %6590 = vmatprep.subr.bf16.mxu0 %v5506
  %6591 = vmatpush1.bf16.msra.mxu0 %v5505
  %6592 = vmatprep.subr.bf16.mxu0 %v5510
  %6593 = vmatpush1.bf16.msra.mxu0 %v5509
  %6594 = vmatprep.subr.bf16.mxu0 %v5514
  %6595 = vmatpush1.bf16.msra.mxu0 %v5513
  %6596 = vmatprep.subr.bf16.mxu0 %v5518
  %6597 = vmatpush1.bf16.msra.mxu0 %v5517
  %6598 = vmatprep.subr.bf16.mxu0 %v5522
  %6599 = vmatpush1.bf16.msra.mxu0 %v5521
  %6600 = vmatprep.subr.bf16.mxu0 %v5526
  %6601 = vmatpush1.bf16.msra.mxu0 %v5525
  %6602 = vmatprep.subr.bf16.mxu0 %v5530
  %6603 = vmatpush1.bf16.msra.mxu0 %v5529
  %6604 = vmatprep.subr.bf16.mxu0 %v5534
  %6605 = vmatpush1.bf16.msra.mxu0 %v5533
  %6606 = vmatprep.subr.bf16.mxu0 0
  %6607 = vmatpush1.bf16.msra.mxu0 0
  %6608 = vmatprep.subr.bf16.mxu0 0
  %6609 = vmatpush1.bf16.msra.mxu0 0
  %6610 = vmatprep.subr.bf16.mxu0 0
  %6611 = vmatpush1.bf16.msra.mxu0 0
  %6612 = vmatprep.subr.bf16.mxu0 0
  %6613 = vmatpush1.bf16.msra.mxu0 0
  %6614 = vmatprep.subr.bf16.mxu0 0
  %6615 = vmatpush1.bf16.msra.mxu0 0
  %6616 = vmatprep.subr.bf16.mxu0 0
  %6617 = vmatpush1.bf16.msra.mxu0 0
  %6618 = vmatprep.subr.bf16.mxu0 0
  %6619 = vmatpush1.bf16.msra.mxu0 0
  %6620 = vmatprep.subr.bf16.mxu0 0
  %6621 = vmatpush1.bf16.msra.mxu0 0
  %6622 = vmatprep.mubr.bf16.mxu0 0
  %6623 = vmatmul.mubr.bf16.gmra.mrb[0].mxu0 %v6537
  %v6624 = vpop.f32.mrb[0].mxu0
  %v6625 = vadd.f32 0.0, %v6624
  %v6626 = vpop.f32.mrb[0].mxu0
  %v6627 = vadd.f32 0.0, %v6626
  %v6628 = vpop.f32.mrb[0].mxu0
  %v6629 = vadd.f32 0.0, %v6628
  %v6630 = vpop.f32.mrb[0].mxu0
  %v6631 = vadd.f32 0.0, %v6630
  %6632 = vdwg.mxu0
  %v6633 = vadd.f32 %v6539, %v6582
  %v6634 = vadd.f32 %v6540, %v6584
  %v6635 = vadd.f32 %v6541, %v6625
  %v6636 = vadd.f32 %v6542, %v6627
  %v6637 = vadd.f32 %v6543, %v6586
  %v6638 = vadd.f32 %v6544, %v6588
  %v6639 = vadd.f32 %v6545, %v6629
  %v6640 = vadd.f32 %v6546, %v6631
  %v6641 = vmul.f32 %v6633, 0.5
  %v6642 = vmul.f32 %v6637, 0.5
  %v6643 = vtanh.pop %v6641
  %v6644 = vtanh.pop %v6642
  %v6645 = vmul.f32 %v6643, 0.5
  %v6646 = vmul.f32 %v6644, 0.5
  %v6647 = vadd.f32 %v6645, 0.5
  %v6648 = vadd.f32 %v6646, 0.5
  %v6649 = vmul.f32 %v6634, 0.5
  %v6650 = vmul.f32 %v6638, 0.5
  %v6651 = vtanh.pop %v6649
  %v6652 = vtanh.pop %v6650
  %v6653 = vmul.f32 %v6651, 0.5
  %v6654 = vmul.f32 %v6652, 0.5
  %v6655 = vadd.f32 %v6653, 0.5
  %v6656 = vadd.f32 %v6654, 0.5
  %v6657 = vtanh.pop %v6635
  %v6658 = vtanh.pop %v6639
  %v6659 = vmul.f32 %v6636, 0.5
  %v6660 = vmul.f32 %v6640, 0.5
  %v6661 = vtanh.pop %v6659
  %v6662 = vtanh.pop %v6660
  %v6663 = vmul.f32 %v6661, 0.5
  %v6664 = vmul.f32 %v6662, 0.5
  %v6665 = vadd.f32 %v6663, 0.5
  %v6666 = vadd.f32 %v6664, 0.5
  %v6667 = vmul.f32 %v6655, %v6531
  %v6668 = vmul.f32 %v6656, %v6532
  %v6669 = vmul.f32 %v6647, %v6657
  %v6670 = vmul.f32 %v6648, %v6658
  %v6671 = vadd.f32 %v6667, %v6669
  %v6672 = vadd.f32 %v6668, %v6670
  %v6673 = vtanh.pop %v6671
  %v6674 = vtanh.pop %v6672
  %v6675 = vmul.f32 %v6665, %v6673
  %v6676 = vmul.f32 %v6666, %v6674
  %v6677 = vpack.c.bf16 %v6676, %v6675
  %6678 = vst [vmem:[%s3000] sm:$0xff] %v6677
  %s6679 = scalar_lea.vmem %s14, 32
  %6680 = vst [vmem:[%s6679] sm:$0xff] %v6675
  %6681 = vst [vmem:[%s6679 + $0x8] sm:$0xff] %v6676
  %s6682 = scalar_lea.vmem %s15, 32
  %6683 = vst [vmem:[%s6682] sm:$0xff] %v6671
  %6684 = vst [vmem:[%s6682 + $0x8] sm:$0xff] %v6672
  %v6685 = vld [vmem:[#allocation2] sm:$0xff]
  %v6686 = vld [vmem:[#allocation2 + $0x8] sm:$0xff]
  %v6687 = vld [vmem:[#allocation2 + $0x10] sm:$0xff]
  %v6688 = vld [vmem:[#allocation2 + $0x18] sm:$0xff]
  %v6689 = vld [vmem:[#allocation2 + $0x20] sm:$0xff]
  %v6690 = vld [vmem:[#allocation2 + $0x28] sm:$0xff]
  %v6691 = vld [vmem:[#allocation2 + $0x30] sm:$0xff]
  %v6692 = vld [vmem:[#allocation2 + $0x38] sm:$0xff]
  %v6693 = vld [vmem:[%s7] sm:$0xff]
  %v6694 = vld [vmem:[%s7 + $0x8] sm:$0xff]
  %v6695 = vld [vmem:[%s7 + $0x10] sm:$0xff]
  %v6696 = vld [vmem:[%s7 + $0x18] sm:$0xff]
  %v6697 = vld [vmem:[%s7 + $0x20] sm:$0xff]
  %v6698 = vld [vmem:[%s7 + $0x28] sm:$0xff]
  %v6699 = vld [vmem:[%s7 + $0x30] sm:$0xff]
  %v6700 = vld [vmem:[%s7 + $0x38] sm:$0xff]
  %v6701 = vld [vmem:[%s7 + $0x40] sm:$0xff]
  %v6702 = vld [vmem:[%s7 + $0x48] sm:$0xff]
  %v6703 = vld [vmem:[%s7 + $0x50] sm:$0xff]
  %v6704 = vld [vmem:[%s7 + $0x58] sm:$0xff]
  %v6705 = vld [vmem:[%s7 + $0x60] sm:$0xff]
  %v6706 = vld [vmem:[%s7 + $0x68] sm:$0xff]
  %v6707 = vld [vmem:[%s7 + $0x70] sm:$0xff]
  %v6708 = vld [vmem:[%s7 + $0x78] sm:$0xff]
  %v6709 = vld [vmem:[%s8] sm:$0x3]
  %v6711 = vlaneseq
  %v6712 = vshrl.u32 %v6711, 7
  %v6713 = vsub.s32 0, %v6712
  %v6714 = vrot.slane %v6709, %v6713
  %v6715 = vlaneseq
  %v6716 = vshrl.u32 %v6715, 7
  %v6717 = vsub.s32 1, %v6716
  %v6718 = vrot.slane %v6709, %v6717
  %v6737 = vunpack.c.l.b16 %v6693
  %v6738 = vunpack.c.h.b16 %v6693
  %v6739 = vunpack.c.l.b16 %v6694
  %v6740 = vunpack.c.h.b16 %v6694
  %v6741 = vunpack.c.l.b16 %v6695
  %v6742 = vunpack.c.h.b16 %v6695
  %v6743 = vunpack.c.l.b16 %v6696
  %v6744 = vunpack.c.h.b16 %v6696
  %v6745 = vunpack.c.l.b16 %v6697
  %v6746 = vunpack.c.h.b16 %v6697
  %v6747 = vunpack.c.l.b16 %v6698
  %v6748 = vunpack.c.h.b16 %v6698
  %v6749 = vunpack.c.l.b16 %v6699
  %v6750 = vunpack.c.h.b16 %v6699
  %v6751 = vunpack.c.l.b16 %v6700
  %v6752 = vunpack.c.h.b16 %v6700
  %v6753 = vunpack.c.l.b16 %v6701
  %v6754 = vunpack.c.h.b16 %v6701
  %v6755 = vunpack.c.l.b16 %v6702
  %v6756 = vunpack.c.h.b16 %v6702
  %v6757 = vunpack.c.l.b16 %v6703
  %v6758 = vunpack.c.h.b16 %v6703
  %v6759 = vunpack.c.l.b16 %v6704
  %v6760 = vunpack.c.h.b16 %v6704
  %v6761 = vunpack.c.l.b16 %v6705
  %v6762 = vunpack.c.h.b16 %v6705
  %v6763 = vunpack.c.l.b16 %v6706
  %v6764 = vunpack.c.h.b16 %v6706
  %v6765 = vunpack.c.l.b16 %v6707
  %v6766 = vunpack.c.h.b16 %v6707
  %v6767 = vunpack.c.l.b16 %v6708
  %v6768 = vunpack.c.h.b16 %v6708
  %v6769 = vpack.c.b16 %v6739, %v6737
  %v6770 = vpack.c.b16 %v6740, %v6738
  %v6771 = vpack.c.b16 %v6743, %v6741
  %v6772 = vpack.c.b16 %v6744, %v6742
  %v6773 = vpack.c.b16 %v6747, %v6745
  %v6774 = vpack.c.b16 %v6748, %v6746
  %v6775 = vpack.c.b16 %v6751, %v6749
  %v6776 = vpack.c.b16 %v6752, %v6750
  %v6777 = vpack.c.b16 %v6755, %v6753
  %v6778 = vpack.c.b16 %v6756, %v6754
  %v6779 = vpack.c.b16 %v6759, %v6757
  %v6780 = vpack.c.b16 %v6760, %v6758
  %v6781 = vpack.c.b16 %v6763, %v6761
  %v6782 = vpack.c.b16 %v6764, %v6762
  %v6783 = vpack.c.b16 %v6767, %v6765
  %v6784 = vpack.c.b16 %v6768, %v6766
  %6801 = vmatprep.subr.bf16.mxu0 %v6770
  %6802 = vmatpush1.bf16.msra.mxu0 %v6769
  %6803 = vmatprep.subr.bf16.mxu0 %v6772
  %6804 = vmatpush1.bf16.msra.mxu0 %v6771
  %6805 = vmatprep.subr.bf16.mxu0 %v6774
  %6806 = vmatpush1.bf16.msra.mxu0 %v6773
  %6807 = vmatprep.subr.bf16.mxu0 %v6776
  %6808 = vmatpush1.bf16.msra.mxu0 %v6775
  %6809 = vmatprep.subr.bf16.mxu0 %v6778
  %6810 = vmatpush1.bf16.msra.mxu0 %v6777
  %6811 = vmatprep.subr.bf16.mxu0 %v6780
  %6812 = vmatpush1.bf16.msra.mxu0 %v6779
  %6813 = vmatprep.subr.bf16.mxu0 %v6782
  %6814 = vmatpush1.bf16.msra.mxu0 %v6781
  %6815 = vmatprep.subr.bf16.mxu0 %v6784
  %6816 = vmatpush1.bf16.msra.mxu0 %v6783
  %6817 = vmatprep.subr.bf16.mxu0 0
  %6818 = vmatpush1.bf16.msra.mxu0 0
  %6819 = vmatprep.subr.bf16.mxu0 0
  %6820 = vmatpush1.bf16.msra.mxu0 0
  %6821 = vmatprep.subr.bf16.mxu0 0
  %6822 = vmatpush1.bf16.msra.mxu0 0
  %6823 = vmatprep.subr.bf16.mxu0 0
  %6824 = vmatpush1.bf16.msra.mxu0 0
  %6825 = vmatprep.subr.bf16.mxu0 0
  %6826 = vmatpush1.bf16.msra.mxu0 0
  %6827 = vmatprep.subr.bf16.mxu0 0
  %6828 = vmatpush1.bf16.msra.mxu0 0
  %6829 = vmatprep.subr.bf16.mxu0 0
  %6830 = vmatpush1.bf16.msra.mxu0 0
  %6831 = vmatprep.subr.bf16.mxu0 0
  %6832 = vmatpush1.bf16.msra.mxu0 0
  %6833 = vmatprep.mubr.bf16.mxu0 0
  %6834 = vmatmul.mubr.bf16.gmra.mrb[0].mxu0 %v6685
  %v6835 = vpop.f32.mrb[0].mxu0
  %v6836 = vadd.f32 %v6714, %v6835
  %v6837 = vpop.f32.mrb[0].mxu0
  %v6838 = vadd.f32 %v6718, %v6837
  %v6839 = vpop.f32.mrb[0].mxu0
  %v6840 = vadd.f32 %v6714, %v6839
  %v6841 = vpop.f32.mrb[0].mxu0
  %v6842 = vadd.f32 %v6718, %v6841
  %6843 = vmatprep.mubr.bf16.mxu0 0
  %6844 = vmatmul.mubr.bf16.gmra.mrb[0].mxu0 %v6686
  %v6845 = vpop.f32.mrb[0].mxu0
  %v6846 = vadd.f32 %v6714, %v6845
  %v6847 = vpop.f32.mrb[0].mxu0
  %v6848 = vadd.f32 %v6718, %v6847
  %v6849 = vpop.f32.mrb[0].mxu0
  %v6850 = vadd.f32 %v6714, %v6849
  %v6851 = vpop.f32.mrb[0].mxu0
  %v6852 = vadd.f32 %v6718, %v6851
  %6853 = vmatprep.mubr.bf16.mxu0 0
  %6854 = vmatmul.mubr.bf16.gmra.mrb[0].mxu0 %v6687
  %v6855 = vpop.f32.mrb[0].mxu0
  %v6856 = vadd.f32 %v6714, %v6855
  %v6857 = vpop.f32.mrb[0].mxu0
  %v6858 = vadd.f32 %v6718, %v6857
  %v6859 = vpop.f32.mrb[0].mxu0
  %v6860 = vadd.f32 %v6714, %v6859
  %v6861 = vpop.f32.mrb[0].mxu0
  %v6862 = vadd.f32 %v6718, %v6861
  %6863 = vmatprep.mubr.bf16.mxu0 0
  %6864 = vmatmul.mubr.bf16.gmra.mrb[0].mxu0 %v6688
  %v6865 = vpop.f32.mrb[0].mxu0
  %v6866 = vadd.f32 %v6714, %v6865
  %v6867 = vpop.f32.mrb[0].mxu0
  %v6868 = vadd.f32 %v6718, %v6867
  %v6869 = vpop.f32.mrb[0].mxu0
  %v6870 = vadd.f32 %v6714, %v6869
  %v6871 = vpop.f32.mrb[0].mxu0
  %v6872 = vadd.f32 %v6718, %v6871
  %6873 = vmatprep.mubr.bf16.mxu0 0
  %6874 = vmatmul.mubr.bf16.gmra.mrb[0].mxu0 %v6689
  %v6875 = vpop.f32.mrb[0].mxu0
  %v6876 = vadd.f32 %v6714, %v6875
  %v6877 = vpop.f32.mrb[0].mxu0
  %v6878 = vadd.f32 %v6718, %v6877
  %v6879 = vpop.f32.mrb[0].mxu0
  %v6880 = vadd.f32 %v6714, %v6879
  %v6881 = vpop.f32.mrb[0].mxu0
  %v6882 = vadd.f32 %v6718, %v6881
  %6883 = vmatprep.mubr.bf16.mxu0 0
  %6884 = vmatmul.mubr.bf16.gmra.mrb[0].mxu0 %v6690
  %v6885 = vpop.f32.mrb[0].mxu0
  %v6886 = vadd.f32 %v6714, %v6885
  %v6887 = vpop.f32.mrb[0].mxu0
  %v6888 = vadd.f32 %v6718, %v6887
  %v6889 = vpop.f32.mrb[0].mxu0
  %v6890 = vadd.f32 %v6714, %v6889
  %v6891 = vpop.f32.mrb[0].mxu0
  %v6892 = vadd.f32 %v6718, %v6891
  %6893 = vmatprep.mubr.bf16.mxu0 0
  %6894 = vmatmul.mubr.bf16.gmra.mrb[0].mxu0 %v6691
  %v6895 = vpop.f32.mrb[0].mxu0
  %v6896 = vadd.f32 %v6714, %v6895
  %v6897 = vpop.f32.mrb[0].mxu0
  %v6898 = vadd.f32 %v6718, %v6897
  %v6899 = vpop.f32.mrb[0].mxu0
  %v6900 = vadd.f32 %v6714, %v6899
  %v6901 = vpop.f32.mrb[0].mxu0
  %v6902 = vadd.f32 %v6718, %v6901
  %6903 = vmatprep.mubr.bf16.mxu0 0
  %6904 = vmatmul.mubr.bf16.gmra.mrb[0].mxu0 %v6692
  %v6905 = vpop.f32.mrb[0].mxu0
  %v6906 = vadd.f32 %v6714, %v6905
  %v6907 = vpop.f32.mrb[0].mxu0
  %v6908 = vadd.f32 %v6718, %v6907
  %v6909 = vpop.f32.mrb[0].mxu0
  %v6910 = vadd.f32 %v6714, %v6909
  %v6911 = vpop.f32.mrb[0].mxu0
  %v6912 = vadd.f32 %v6718, %v6911
  %6913 = vdwg.mxu0
  %v6914 = vtanh.pop %v6836
  %v6915 = vtanh.pop %v6838
  %v6916 = vtanh.pop %v6840
  %v6917 = vtanh.pop %v6842
  %v6918 = vtanh.pop %v6846
  %v6919 = vtanh.pop %v6848
  %v6920 = vtanh.pop %v6850
  %v6921 = vtanh.pop %v6852
  %v6922 = vtanh.pop %v6856
  %v6923 = vtanh.pop %v6858
  %v6924 = vtanh.pop %v6860
  %v6925 = vtanh.pop %v6862
  %v6926 = vtanh.pop %v6866
  %v6927 = vtanh.pop %v6868
  %v6928 = vtanh.pop %v6870
  %v6929 = vtanh.pop %v6872
  %v6930 = vtanh.pop %v6876
  %v6931 = vtanh.pop %v6878
  %v6932 = vtanh.pop %v6880
  %v6933 = vtanh.pop %v6882
  %v6934 = vtanh.pop %v6886
  %v6935 = vtanh.pop %v6888
  %v6936 = vtanh.pop %v6890
  %v6937 = vtanh.pop %v6892
  %v6938 = vtanh.pop %v6896
  %v6939 = vtanh.pop %v6898
  %v6940 = vtanh.pop %v6900
  %v6941 = vtanh.pop %v6902
  %v6942 = vtanh.pop %v6906
  %v6943 = vtanh.pop %v6908
  %v6944 = vtanh.pop %v6910
  %v6945 = vtanh.pop %v6912
  %s6946 = smul.u32 4, 32
  %s6947 = smul.u32 %s6946, 4
  %s6948 = sshll.u32 %s6947, 4
  %6949 = dma.done [#allocation6], %s6948
  %v6950 = vpack.c.bf16 %v6916, %v6914
  %v6951 = vpack.c.bf16 %v6917, %v6915
  %v6952 = vpack.c.bf16 %v6920, %v6918
  %v6953 = vpack.c.bf16 %v6921, %v6919
  %v6954 = vpack.c.bf16 %v6924, %v6922
  %v6955 = vpack.c.bf16 %v6925, %v6923
  %v6956 = vpack.c.bf16 %v6928, %v6926
  %v6957 = vpack.c.bf16 %v6929, %v6927
  %v6958 = vpack.c.bf16 %v6932, %v6930
  %v6959 = vpack.c.bf16 %v6933, %v6931
  %v6960 = vpack.c.bf16 %v6936, %v6934
  %v6961 = vpack.c.bf16 %v6937, %v6935
  %v6962 = vpack.c.bf16 %v6940, %v6938
  %v6963 = vpack.c.bf16 %v6941, %v6939
  %v6964 = vpack.c.bf16 %v6944, %v6942
  %v6965 = vpack.c.bf16 %v6945, %v6943
  %v6966 = vld [vmem:[#allocation4] sm:$0xff]
  %v6967 = vld [vmem:[#allocation4 + $0x8] sm:$0xff]
  %v6968 = vld [vmem:[#allocation4 + $0x10] sm:$0xff]
  %v6969 = vld [vmem:[#allocation4 + $0x18] sm:$0xff]
  %v6970 = vld [vmem:[#allocation4 + $0x20] sm:$0xff]
  %v6971 = vld [vmem:[#allocation4 + $0x28] sm:$0xff]
  %v6972 = vld [vmem:[#allocation4 + $0x30] sm:$0xff]
  %v6973 = vld [vmem:[#allocation4 + $0x38] sm:$0xff]
  %v6974 = vld [vmem:[#allocation4 + $0x40] sm:$0xff]
  %v6975 = vld [vmem:[#allocation4 + $0x48] sm:$0xff]
  %v6976 = vld [vmem:[#allocation4 + $0x50] sm:$0xff]
  %v6977 = vld [vmem:[#allocation4 + $0x58] sm:$0xff]
  %v6978 = vld [vmem:[#allocation4 + $0x60] sm:$0xff]
  %v6979 = vld [vmem:[#allocation4 + $0x68] sm:$0xff]
  %v6980 = vld [vmem:[#allocation4 + $0x70] sm:$0xff]
  %v6981 = vld [vmem:[#allocation4 + $0x78] sm:$0xff]
  %v6982 = vld [vmem:[#allocation4 + $0x80] sm:$0xff]
  %v6983 = vld [vmem:[#allocation4 + $0x88] sm:$0xff]
  %v6984 = vld [vmem:[#allocation4 + $0x90] sm:$0xff]
  %v6985 = vld [vmem:[#allocation4 + $0x98] sm:$0xff]
  %v6986 = vld [vmem:[#allocation4 + $0xa0] sm:$0xff]
  %v6987 = vld [vmem:[#allocation4 + $0xa8] sm:$0xff]
  %v6988 = vld [vmem:[#allocation4 + $0xb0] sm:$0xff]
  %v6989 = vld [vmem:[#allocation4 + $0xb8] sm:$0xff]
  %v6990 = vld [vmem:[#allocation4 + $0xc0] sm:$0xff]
  %v6991 = vld [vmem:[#allocation4 + $0xc8] sm:$0xff]
  %v6992 = vld [vmem:[#allocation4 + $0xd0] sm:$0xff]
  %v6993 = vld [vmem:[#allocation4 + $0xd8] sm:$0xff]
  %v6994 = vld [vmem:[#allocation4 + $0xe0] sm:$0xff]
  %v6995 = vld [vmem:[#allocation4 + $0xe8] sm:$0xff]
  %v6996 = vld [vmem:[#allocation4 + $0xf0] sm:$0xff]
  %v6997 = vld [vmem:[#allocation4 + $0xf8] sm:$0xff]
  %v6998 = vld [vmem:[#allocation4 + $0x100] sm:$0xff]
  %v6999 = vld [vmem:[#allocation4 + $0x108] sm:$0xff]
  %v7000 = vld [vmem:[#allocation4 + $0x110] sm:$0xff]
  %v7001 = vld [vmem:[#allocation4 + $0x118] sm:$0xff]
  %v7002 = vld [vmem:[#allocation4 + $0x120] sm:$0xff]
  %v7003 = vld [vmem:[#allocation4 + $0x128] sm:$0xff]
  %v7004 = vld [vmem:[#allocation4 + $0x130] sm:$0xff]
  %v7005 = vld [vmem:[#allocation4 + $0x138] sm:$0xff]
  %v7006 = vld [vmem:[#allocation4 + $0x140] sm:$0xff]
  %v7007 = vld [vmem:[#allocation4 + $0x148] sm:$0xff]
  %v7008 = vld [vmem:[#allocation4 + $0x150] sm:$0xff]
  %v7009 = vld [vmem:[#allocation4 + $0x158] sm:$0xff]
  %v7010 = vld [vmem:[#allocation4 + $0x160] sm:$0xff]
  %v7011 = vld [vmem:[#allocation4 + $0x168] sm:$0xff]
  %v7012 = vld [vmem:[#allocation4 + $0x170] sm:$0xff]
  %v7013 = vld [vmem:[#allocation4 + $0x178] sm:$0xff]
  %v7014 = vld [vmem:[#allocation4 + $0x180] sm:$0xff]
  %v7015 = vld [vmem:[#allocation4 + $0x188] sm:$0xff]
  %v7016 = vld [vmem:[#allocation4 + $0x190] sm:$0xff]
  %v7017 = vld [vmem:[#allocation4 + $0x198] sm:$0xff]
  %v7018 = vld [vmem:[#allocation4 + $0x1a0] sm:$0xff]
  %v7019 = vld [vmem:[#allocation4 + $0x1a8] sm:$0xff]
  %v7020 = vld [vmem:[#allocation4 + $0x1b0] sm:$0xff]
  %v7021 = vld [vmem:[#allocation4 + $0x1b8] sm:$0xff]
  %v7022 = vld [vmem:[#allocation4 + $0x1c0] sm:$0xff]
  %v7023 = vld [vmem:[#allocation4 + $0x1c8] sm:$0xff]
  %v7024 = vld [vmem:[#allocation4 + $0x1d0] sm:$0xff]
  %v7025 = vld [vmem:[#allocation4 + $0x1d8] sm:$0xff]
  %v7026 = vld [vmem:[#allocation4 + $0x1e0] sm:$0xff]
  %v7027 = vld [vmem:[#allocation4 + $0x1e8] sm:$0xff]
  %v7028 = vld [vmem:[#allocation4 + $0x1f0] sm:$0xff]
  %v7029 = vld [vmem:[#allocation4 + $0x1f8] sm:$0xff]
  %v7030 = vld [vmem:[%s9] sm:$0xf]
  %v7032 = vlaneseq
  %v7033 = vshrl.u32 %v7032, 7
  %v7034 = vsub.s32 0, %v7033
  %v7035 = vrot.slane %v7030, %v7034
  %v7036 = vlaneseq
  %v7037 = vshrl.u32 %v7036, 7
  %v7038 = vsub.s32 1, %v7037
  %v7039 = vrot.slane %v7030, %v7038
  %v7040 = vlaneseq
  %v7041 = vshrl.u32 %v7040, 7
  %v7042 = vsub.s32 2, %v7041
  %v7043 = vrot.slane %v7030, %v7042
  %v7044 = vlaneseq
  %v7045 = vshrl.u32 %v7044, 7
  %v7046 = vsub.s32 3, %v7045
  %v7047 = vrot.slane %v7030, %v7046
  %7052 = vmatprep.subr.bf16.mxu0 %v6967
  %7053 = vmatpush1.bf16.msra.mxu0 %v6966
  %7054 = vmatprep.subr.bf16.mxu0 %v6971
  %7055 = vmatpush1.bf16.msra.mxu0 %v6970
  %7056 = vmatprep.subr.bf16.mxu0 %v6975
  %7057 = vmatpush1.bf16.msra.mxu0 %v6974
  %7058 = vmatprep.subr.bf16.mxu0 %v6979
  %7059 = vmatpush1.bf16.msra.mxu0 %v6978
  %7060 = vmatprep.subr.bf16.mxu0 %v6983
  %7061 = vmatpush1.bf16.msra.mxu0 %v6982
  %7062 = vmatprep.subr.bf16.mxu0 %v6987
  %7063 = vmatpush1.bf16.msra.mxu0 %v6986
  %7064 = vmatprep.subr.bf16.mxu0 %v6991
  %7065 = vmatpush1.bf16.msra.mxu0 %v6990
  %7066 = vmatprep.subr.bf16.mxu0 %v6995
  %7067 = vmatpush1.bf16.msra.mxu0 %v6994
  %7068 = vmatprep.subr.bf16.mxu0 %v6999
  %7069 = vmatpush1.bf16.msra.mxu0 %v6998
  %7070 = vmatprep.subr.bf16.mxu0 %v7003
  %7071 = vmatpush1.bf16.msra.mxu0 %v7002
  %7072 = vmatprep.subr.bf16.mxu0 %v7007
  %7073 = vmatpush1.bf16.msra.mxu0 %v7006
  %7074 = vmatprep.subr.bf16.mxu0 %v7011
  %7075 = vmatpush1.bf16.msra.mxu0 %v7010
  %7076 = vmatprep.subr.bf16.mxu0 %v7015
  %7077 = vmatpush1.bf16.msra.mxu0 %v7014
  %7078 = vmatprep.subr.bf16.mxu0 %v7019
  %7079 = vmatpush1.bf16.msra.mxu0 %v7018
  %7080 = vmatprep.subr.bf16.mxu0 %v7023
  %7081 = vmatpush1.bf16.msra.mxu0 %v7022
  %7082 = vmatprep.subr.bf16.mxu0 %v7027
  %7083 = vmatpush1.bf16.msra.mxu0 %v7026
  %7084 = vmatprep.mubr.bf16.mxu0 %v6951
  %7085 = vmatmul.mubr.bf16.gmra.mrb[0].mxu0 %v6950
  %v7086 = vpop.f32.mrb[0].mxu0
  %v7087 = vadd.f32 %v7035, %v7086
  %v7088 = vpop.f32.mrb[0].mxu0
  %v7089 = vadd.f32 %v7039, %v7088
  %v7090 = vpop.f32.mrb[0].mxu0
  %v7091 = vadd.f32 %v7035, %v7090
  %v7092 = vpop.f32.mrb[0].mxu0
  %v7093 = vadd.f32 %v7039, %v7092
  %7094 = vmatprep.mubr.bf16.mxu0 %v6953
  %7095 = vmatmul.mubr.bf16.gmra.mrb[0].mxu0 %v6952
  %v7096 = vpop.f32.mrb[0].mxu0
  %v7097 = vadd.f32 %v7035, %v7096
  %v7098 = vpop.f32.mrb[0].mxu0
  %v7099 = vadd.f32 %v7039, %v7098
  %v7100 = vpop.f32.mrb[0].mxu0
  %v7101 = vadd.f32 %v7035, %v7100
  %v7102 = vpop.f32.mrb[0].mxu0
  %v7103 = vadd.f32 %v7039, %v7102
  %7104 = vmatprep.mubr.bf16.mxu0 %v6955
  %7105 = vmatmul.mubr.bf16.gmra.mrb[0].mxu0 %v6954
  %v7106 = vpop.f32.mrb[0].mxu0
  %v7107 = vadd.f32 %v7035, %v7106
  %v7108 = vpop.f32.mrb[0].mxu0
  %v7109 = vadd.f32 %v7039, %v7108
  %v7110 = vpop.f32.mrb[0].mxu0
  %v7111 = vadd.f32 %v7035, %v7110
  %v7112 = vpop.f32.mrb[0].mxu0
  %v7113 = vadd.f32 %v7039, %v7112
  %7114 = vmatprep.mubr.bf16.mxu0 %v6957
  %7115 = vmatmul.mubr.bf16.gmra.mrb[0].mxu0 %v6956
  %v7116 = vpop.f32.mrb[0].mxu0
  %v7117 = vadd.f32 %v7035, %v7116
  %v7118 = vpop.f32.mrb[0].mxu0
  %v7119 = vadd.f32 %v7039, %v7118
  %v7120 = vpop.f32.mrb[0].mxu0
  %v7121 = vadd.f32 %v7035, %v7120
  %v7122 = vpop.f32.mrb[0].mxu0
  %v7123 = vadd.f32 %v7039, %v7122
  %7124 = vmatprep.mubr.bf16.mxu0 %v6959
  %7125 = vmatmul.mubr.bf16.gmra.mrb[0].mxu0 %v6958
  %v7126 = vpop.f32.mrb[0].mxu0
  %v7127 = vadd.f32 %v7035, %v7126
  %v7128 = vpop.f32.mrb[0].mxu0
  %v7129 = vadd.f32 %v7039, %v7128
  %v7130 = vpop.f32.mrb[0].mxu0
  %v7131 = vadd.f32 %v7035, %v7130
  %v7132 = vpop.f32.mrb[0].mxu0
  %v7133 = vadd.f32 %v7039, %v7132
  %7134 = vmatprep.mubr.bf16.mxu0 %v6961
  %7135 = vmatmul.mubr.bf16.gmra.mrb[0].mxu0 %v6960
  %v7136 = vpop.f32.mrb[0].mxu0
  %v7137 = vadd.f32 %v7035, %v7136
  %v7138 = vpop.f32.mrb[0].mxu0
  %v7139 = vadd.f32 %v7039, %v7138
  %v7140 = vpop.f32.mrb[0].mxu0
  %v7141 = vadd.f32 %v7035, %v7140
  %v7142 = vpop.f32.mrb[0].mxu0
  %v7143 = vadd.f32 %v7039, %v7142
  %7144 = vmatprep.mubr.bf16.mxu0 %v6963
  %7145 = vmatmul.mubr.bf16.gmra.mrb[0].mxu0 %v6962
  %v7146 = vpop.f32.mrb[0].mxu0
  %v7147 = vadd.f32 %v7035, %v7146
  %v7148 = vpop.f32.mrb[0].mxu0
  %v7149 = vadd.f32 %v7039, %v7148
  %v7150 = vpop.f32.mrb[0].mxu0
  %v7151 = vadd.f32 %v7035, %v7150
  %v7152 = vpop.f32.mrb[0].mxu0
  %v7153 = vadd.f32 %v7039, %v7152
  %7154 = vmatprep.mubr.bf16.mxu0 %v6965
  %7155 = vmatmul.mubr.bf16.gmra.mrb[0].mxu0 %v6964
  %v7156 = vpop.f32.mrb[0].mxu0
  %v7157 = vadd.f32 %v7035, %v7156
  %v7158 = vpop.f32.mrb[0].mxu0
  %v7159 = vadd.f32 %v7039, %v7158
  %v7160 = vpop.f32.mrb[0].mxu0
  %v7161 = vadd.f32 %v7035, %v7160
  %v7162 = vpop.f32.mrb[0].mxu0
  %v7163 = vadd.f32 %v7039, %v7162
  %7164 = vdwg.mxu0
  %7165 = vmatprep.subr.bf16.mxu0 %v6969
  %7166 = vmatpush1.bf16.msra.mxu0 %v6968
  %7167 = vmatprep.subr.bf16.mxu0 %v6973
  %7168 = vmatpush1.bf16.msra.mxu0 %v6972
  %7169 = vmatprep.subr.bf16.mxu0 %v6977
  %7170 = vmatpush1.bf16.msra.mxu0 %v6976
  %7171 = vmatprep.subr.bf16.mxu0 %v6981
  %7172 = vmatpush1.bf16.msra.mxu0 %v6980
  %7173 = vmatprep.subr.bf16.mxu0 %v6985
  %7174 = vmatpush1.bf16.msra.mxu0 %v6984
  %7175 = vmatprep.subr.bf16.mxu0 %v6989
  %7176 = vmatpush1.bf16.msra.mxu0 %v6988
  %7177 = vmatprep.subr.bf16.mxu0 %v6993
  %7178 = vmatpush1.bf16.msra.mxu0 %v6992
  %7179 = vmatprep.subr.bf16.mxu0 %v6997
  %7180 = vmatpush1.bf16.msra.mxu0 %v6996
  %7181 = vmatprep.subr.bf16.mxu0 %v7001
  %7182 = vmatpush1.bf16.msra.mxu0 %v7000
  %7183 = vmatprep.subr.bf16.mxu0 %v7005
  %7184 = vmatpush1.bf16.msra.mxu0 %v7004
  %7185 = vmatprep.subr.bf16.mxu0 %v7009
  %7186 = vmatpush1.bf16.msra.mxu0 %v7008
  %7187 = vmatprep.subr.bf16.mxu0 %v7013
  %7188 = vmatpush1.bf16.msra.mxu0 %v7012
  %7189 = vmatprep.subr.bf16.mxu0 %v7017
  %7190 = vmatpush1.bf16.msra.mxu0 %v7016
  %7191 = vmatprep.subr.bf16.mxu0 %v7021
  %7192 = vmatpush1.bf16.msra.mxu0 %v7020
  %7193 = vmatprep.subr.bf16.mxu0 %v7025
  %7194 = vmatpush1.bf16.msra.mxu0 %v7024
  %7195 = vmatprep.subr.bf16.mxu0 %v7029
  %7196 = vmatpush1.bf16.msra.mxu0 %v7028
  %7197 = vmatprep.mubr.bf16.mxu0 %v6951
  %7198 = vmatmul.mubr.bf16.gmra.mrb[0].mxu0 %v6950
  %v7199 = vpop.f32.mrb[0].mxu0
  %v7200 = vadd.f32 %v7043, %v7199
  %v7201 = vpop.f32.mrb[0].mxu0
  %v7202 = vadd.f32 %v7047, %v7201
  %v7203 = vpop.f32.mrb[0].mxu0
  %v7204 = vadd.f32 %v7043, %v7203
  %v7205 = vpop.f32.mrb[0].mxu0
  %v7206 = vadd.f32 %v7047, %v7205
  %7207 = vmatprep.mubr.bf16.mxu0 %v6953
  %7208 = vmatmul.mubr.bf16.gmra.mrb[0].mxu0 %v6952
  %v7209 = vpop.f32.mrb[0].mxu0
  %v7210 = vadd.f32 %v7043, %v7209
  %v7211 = vpop.f32.mrb[0].mxu0
  %v7212 = vadd.f32 %v7047, %v7211
  %v7213 = vpop.f32.mrb[0].mxu0
  %v7214 = vadd.f32 %v7043, %v7213
  %v7215 = vpop.f32.mrb[0].mxu0
  %v7216 = vadd.f32 %v7047, %v7215
  %7217 = vmatprep.mubr.bf16.mxu0 %v6955
  %7218 = vmatmul.mubr.bf16.gmra.mrb[0].mxu0 %v6954
  %v7219 = vpop.f32.mrb[0].mxu0
  %v7220 = vadd.f32 %v7043, %v7219
  %v7221 = vpop.f32.mrb[0].mxu0
  %v7222 = vadd.f32 %v7047, %v7221
  %v7223 = vpop.f32.mrb[0].mxu0
  %v7224 = vadd.f32 %v7043, %v7223
  %v7225 = vpop.f32.mrb[0].mxu0
  %v7226 = vadd.f32 %v7047, %v7225
  %7227 = vmatprep.mubr.bf16.mxu0 %v6957
  %7228 = vmatmul.mubr.bf16.gmra.mrb[0].mxu0 %v6956
  %v7229 = vpop.f32.mrb[0].mxu0
  %v7230 = vadd.f32 %v7043, %v7229
  %v7231 = vpop.f32.mrb[0].mxu0
  %v7232 = vadd.f32 %v7047, %v7231
  %v7233 = vpop.f32.mrb[0].mxu0
  %v7234 = vadd.f32 %v7043, %v7233
  %v7235 = vpop.f32.mrb[0].mxu0
  %v7236 = vadd.f32 %v7047, %v7235
  %7237 = vmatprep.mubr.bf16.mxu0 %v6959
  %7238 = vmatmul.mubr.bf16.gmra.mrb[0].mxu0 %v6958
  %v7239 = vpop.f32.mrb[0].mxu0
  %v7240 = vadd.f32 %v7043, %v7239
  %v7241 = vpop.f32.mrb[0].mxu0
  %v7242 = vadd.f32 %v7047, %v7241
  %v7243 = vpop.f32.mrb[0].mxu0
  %v7244 = vadd.f32 %v7043, %v7243
  %v7245 = vpop.f32.mrb[0].mxu0
  %v7246 = vadd.f32 %v7047, %v7245
  %7247 = vmatprep.mubr.bf16.mxu0 %v6961
  %7248 = vmatmul.mubr.bf16.gmra.mrb[0].mxu0 %v6960
  %v7249 = vpop.f32.mrb[0].mxu0
  %v7250 = vadd.f32 %v7043, %v7249
  %v7251 = vpop.f32.mrb[0].mxu0
  %v7252 = vadd.f32 %v7047, %v7251
  %v7253 = vpop.f32.mrb[0].mxu0
  %v7254 = vadd.f32 %v7043, %v7253
  %v7255 = vpop.f32.mrb[0].mxu0
  %v7256 = vadd.f32 %v7047, %v7255
  %7257 = vmatprep.mubr.bf16.mxu0 %v6963
  %7258 = vmatmul.mubr.bf16.gmra.mrb[0].mxu0 %v6962
  %v7259 = vpop.f32.mrb[0].mxu0
  %v7260 = vadd.f32 %v7043, %v7259
  %v7261 = vpop.f32.mrb[0].mxu0
  %v7262 = vadd.f32 %v7047, %v7261
  %v7263 = vpop.f32.mrb[0].mxu0
  %v7264 = vadd.f32 %v7043, %v7263
  %v7265 = vpop.f32.mrb[0].mxu0
  %v7266 = vadd.f32 %v7047, %v7265
  %7267 = vmatprep.mubr.bf16.mxu0 %v6965
  %7268 = vmatmul.mubr.bf16.gmra.mrb[0].mxu0 %v6964
  %v7269 = vpop.f32.mrb[0].mxu0
  %v7270 = vadd.f32 %v7043, %v7269
  %v7271 = vpop.f32.mrb[0].mxu0
  %v7272 = vadd.f32 %v7047, %v7271
  %v7273 = vpop.f32.mrb[0].mxu0
  %v7274 = vadd.f32 %v7043, %v7273
  %v7275 = vpop.f32.mrb[0].mxu0
  %v7276 = vadd.f32 %v7047, %v7275
  %7277 = vdwg.mxu0
  %v7278 = vtanh.pop %v7087
  %v7279 = vtanh.pop %v7089
  %v7280 = vtanh.pop %v7200
  %v7281 = vtanh.pop %v7202
  %v7282 = vtanh.pop %v7091
  %v7283 = vtanh.pop %v7093
  %v7284 = vtanh.pop %v7204
  %v7285 = vtanh.pop %v7206
  %v7286 = vtanh.pop %v7097
  %v7287 = vtanh.pop %v7099
  %v7288 = vtanh.pop %v7210
  %v7289 = vtanh.pop %v7212
  %v7290 = vtanh.pop %v7101
  %v7291 = vtanh.pop %v7103
  %v7292 = vtanh.pop %v7214
  %v7293 = vtanh.pop %v7216
  %v7294 = vtanh.pop %v7107
  %v7295 = vtanh.pop %v7109
  %v7296 = vtanh.pop %v7220
  %v7297 = vtanh.pop %v7222
  %v7298 = vtanh.pop %v7111
  %v7299 = vtanh.pop %v7113
  %v7300 = vtanh.pop %v7224
  %v7301 = vtanh.pop %v7226
  %v7302 = vtanh.pop %v7117
  %v7303 = vtanh.pop %v7119
  %v7304 = vtanh.pop %v7230
  %v7305 = vtanh.pop %v7232
  %v7306 = vtanh.pop %v7121
  %v7307 = vtanh.pop %v7123
  %v7308 = vtanh.pop %v7234
  %v7309 = vtanh.pop %v7236
  %v7310 = vtanh.pop %v7127
  %v7311 = vtanh.pop %v7129
  %v7312 = vtanh.pop %v7240
  %v7313 = vtanh.pop %v7242
  %v7314 = vtanh.pop %v7131
  %v7315 = vtanh.pop %v7133
  %v7316 = vtanh.pop %v7244
  %v7317 = vtanh.pop %v7246
  %v7318 = vtanh.pop %v7137
  %v7319 = vtanh.pop %v7139
  %v7320 = vtanh.pop %v7250
  %v7321 = vtanh.pop %v7252
  %v7322 = vtanh.pop %v7141
  %v7323 = vtanh.pop %v7143
  %v7324 = vtanh.pop %v7254
  %v7325 = vtanh.pop %v7256
  %v7326 = vtanh.pop %v7147
  %v7327 = vtanh.pop %v7149
  %v7328 = vtanh.pop %v7260
  %v7329 = vtanh.pop %v7262
  %v7330 = vtanh.pop %v7151
  %v7331 = vtanh.pop %v7153
  %v7332 = vtanh.pop %v7264
  %v7333 = vtanh.pop %v7266
  %v7334 = vtanh.pop %v7157
  %v7335 = vtanh.pop %v7159
  %v7336 = vtanh.pop %v7270
  %v7337 = vtanh.pop %v7272
  %v7338 = vtanh.pop %v7161
  %v7339 = vtanh.pop %v7163
  %v7340 = vtanh.pop %v7274
  %v7341 = vtanh.pop %v7276
  %s7342 = smul.u32 4, 64
  %s7343 = smul.u32 %s7342, 2
  %s7344 = sshll.u32 %s7343, 4
  %7345 = dma.done %s604, %s7344
  %v7346 = vpack.c.bf16 %v7282, %v7278
  %v7347 = vpack.c.bf16 %v7283, %v7279
  %v7348 = vpack.c.bf16 %v7284, %v7280
  %v7349 = vpack.c.bf16 %v7285, %v7281
  %v7350 = vpack.c.bf16 %v7290, %v7286
  %v7351 = vpack.c.bf16 %v7291, %v7287
  %v7352 = vpack.c.bf16 %v7292, %v7288
  %v7353 = vpack.c.bf16 %v7293, %v7289
  %v7354 = vpack.c.bf16 %v7298, %v7294
  %v7355 = vpack.c.bf16 %v7299, %v7295
  %v7356 = vpack.c.bf16 %v7300, %v7296
  %v7357 = vpack.c.bf16 %v7301, %v7297
  %v7358 = vpack.c.bf16 %v7306, %v7302
  %v7359 = vpack.c.bf16 %v7307, %v7303
  %v7360 = vpack.c.bf16 %v7308, %v7304
  %v7361 = vpack.c.bf16 %v7309, %v7305
  %v7362 = vpack.c.bf16 %v7314, %v7310
  %v7363 = vpack.c.bf16 %v7315, %v7311
  %v7364 = vpack.c.bf16 %v7316, %v7312
  %v7365 = vpack.c.bf16 %v7317, %v7313
  %v7366 = vpack.c.bf16 %v7322, %v7318
  %v7367 = vpack.c.bf16 %v7323, %v7319
  %v7368 = vpack.c.bf16 %v7324, %v7320
  %v7369 = vpack.c.bf16 %v7325, %v7321
  %v7370 = vpack.c.bf16 %v7330, %v7326
  %v7371 = vpack.c.bf16 %v7331, %v7327
  %v7372 = vpack.c.bf16 %v7332, %v7328
  %v7373 = vpack.c.bf16 %v7333, %v7329
  %v7374 = vpack.c.bf16 %v7338, %v7334
  %v7375 = vpack.c.bf16 %v7339, %v7335
  %v7376 = vpack.c.bf16 %v7340, %v7336
  %v7377 = vpack.c.bf16 %v7341, %v7337
  %v7378 = vld [vmem:[#allocation5] sm:$0xff]
  %v7379 = vld [vmem:[#allocation5 + $0x8] sm:$0xff]
  %v7380 = vld [vmem:[#allocation5 + $0x10] sm:$0xff]
  %v7381 = vld [vmem:[#allocation5 + $0x18] sm:$0xff]
  %v7382 = vld [vmem:[#allocation5 + $0x20] sm:$0xff]
  %v7383 = vld [vmem:[#allocation5 + $0x28] sm:$0xff]
  %v7384 = vld [vmem:[#allocation5 + $0x30] sm:$0xff]
  %v7385 = vld [vmem:[#allocation5 + $0x38] sm:$0xff]
  %v7386 = vld [vmem:[#allocation5 + $0x40] sm:$0xff]
  %v7387 = vld [vmem:[#allocation5 + $0x48] sm:$0xff]
  %v7388 = vld [vmem:[#allocation5 + $0x50] sm:$0xff]
  %v7389 = vld [vmem:[#allocation5 + $0x58] sm:$0xff]
  %v7390 = vld [vmem:[#allocation5 + $0x60] sm:$0xff]
  %v7391 = vld [vmem:[#allocation5 + $0x68] sm:$0xff]
  %v7392 = vld [vmem:[#allocation5 + $0x70] sm:$0xff]
  %v7393 = vld [vmem:[#allocation5 + $0x78] sm:$0xff]
  %v7394 = vld [vmem:[#allocation5 + $0x80] sm:$0xff]
  %v7395 = vld [vmem:[#allocation5 + $0x88] sm:$0xff]
  %v7396 = vld [vmem:[#allocation5 + $0x90] sm:$0xff]
  %v7397 = vld [vmem:[#allocation5 + $0x98] sm:$0xff]
  %v7398 = vld [vmem:[#allocation5 + $0xa0] sm:$0xff]
  %v7399 = vld [vmem:[#allocation5 + $0xa8] sm:$0xff]
  %v7400 = vld [vmem:[#allocation5 + $0xb0] sm:$0xff]
  %v7401 = vld [vmem:[#allocation5 + $0xb8] sm:$0xff]
  %v7402 = vld [vmem:[#allocation5 + $0xc0] sm:$0xff]
  %v7403 = vld [vmem:[#allocation5 + $0xc8] sm:$0xff]
  %v7404 = vld [vmem:[#allocation5 + $0xd0] sm:$0xff]
  %v7405 = vld [vmem:[#allocation5 + $0xd8] sm:$0xff]
  %v7406 = vld [vmem:[#allocation5 + $0xe0] sm:$0xff]
  %v7407 = vld [vmem:[#allocation5 + $0xe8] sm:$0xff]
  %v7408 = vld [vmem:[#allocation5 + $0xf0] sm:$0xff]
  %v7409 = vld [vmem:[#allocation5 + $0xf8] sm:$0xff]
  %v7410 = vld [vmem:[#allocation5 + $0x100] sm:$0xff]
  %v7411 = vld [vmem:[#allocation5 + $0x108] sm:$0xff]
  %v7412 = vld [vmem:[#allocation5 + $0x110] sm:$0xff]
  %v7413 = vld [vmem:[#allocation5 + $0x118] sm:$0xff]
  %v7414 = vld [vmem:[#allocation5 + $0x120] sm:$0xff]
  %v7415 = vld [vmem:[#allocation5 + $0x128] sm:$0xff]
  %v7416 = vld [vmem:[#allocation5 + $0x130] sm:$0xff]
  %v7417 = vld [vmem:[#allocation5 + $0x138] sm:$0xff]
  %v7418 = vld [vmem:[#allocation5 + $0x140] sm:$0xff]
  %v7419 = vld [vmem:[#allocation5 + $0x148] sm:$0xff]
  %v7420 = vld [vmem:[#allocation5 + $0x150] sm:$0xff]
  %v7421 = vld [vmem:[#allocation5 + $0x158] sm:$0xff]
  %v7422 = vld [vmem:[#allocation5 + $0x160] sm:$0xff]
  %v7423 = vld [vmem:[#allocation5 + $0x168] sm:$0xff]
  %v7424 = vld [vmem:[#allocation5 + $0x170] sm:$0xff]
  %v7425 = vld [vmem:[#allocation5 + $0x178] sm:$0xff]
  %v7426 = vld [vmem:[#allocation5 + $0x180] sm:$0xff]
  %v7427 = vld [vmem:[#allocation5 + $0x188] sm:$0xff]
  %v7428 = vld [vmem:[#allocation5 + $0x190] sm:$0xff]
  %v7429 = vld [vmem:[#allocation5 + $0x198] sm:$0xff]
  %v7430 = vld [vmem:[#allocation5 + $0x1a0] sm:$0xff]
  %v7431 = vld [vmem:[#allocation5 + $0x1a8] sm:$0xff]
  %v7432 = vld [vmem:[#allocation5 + $0x1b0] sm:$0xff]
  %v7433 = vld [vmem:[#allocation5 + $0x1b8] sm:$0xff]
  %v7434 = vld [vmem:[#allocation5 + $0x1c0] sm:$0xff]
  %v7435 = vld [vmem:[#allocation5 + $0x1c8] sm:$0xff]
  %v7436 = vld [vmem:[#allocation5 + $0x1d0] sm:$0xff]
  %v7437 = vld [vmem:[#allocation5 + $0x1d8] sm:$0xff]
  %v7438 = vld [vmem:[#allocation5 + $0x1e0] sm:$0xff]
  %v7439 = vld [vmem:[#allocation5 + $0x1e8] sm:$0xff]
  %v7440 = vld [vmem:[#allocation5 + $0x1f0] sm:$0xff]
  %v7441 = vld [vmem:[#allocation5 + $0x1f8] sm:$0xff]
  %v7442 = vld [vmem:[%s10] sm:$0x3]
  %v7444 = vlaneseq
  %v7445 = vshrl.u32 %v7444, 7
  %v7446 = vsub.s32 0, %v7445
  %v7447 = vrot.slane %v7442, %v7446
  %v7448 = vlaneseq
  %v7449 = vshrl.u32 %v7448, 7
  %v7450 = vsub.s32 1, %v7449
  %v7451 = vrot.slane %v7442, %v7450
  %7454 = vmatprep.subr.bf16.mxu0 %v7379
  %7455 = vmatpush1.bf16.msra.mxu0 %v7378
  %7456 = vmatprep.subr.bf16.mxu0 %v7381
  %7457 = vmatpush1.bf16.msra.mxu0 %v7380
  %7458 = vmatprep.subr.bf16.mxu0 %v7383
  %7459 = vmatpush1.bf16.msra.mxu0 %v7382
  %7460 = vmatprep.subr.bf16.mxu0 %v7385
  %7461 = vmatpush1.bf16.msra.mxu0 %v7384
  %7462 = vmatprep.subr.bf16.mxu0 %v7387
  %7463 = vmatpush1.bf16.msra.mxu0 %v7386
  %7464 = vmatprep.subr.bf16.mxu0 %v7389
  %7465 = vmatpush1.bf16.msra.mxu0 %v7388
  %7466 = vmatprep.subr.bf16.mxu0 %v7391
  %7467 = vmatpush1.bf16.msra.mxu0 %v7390
  %7468 = vmatprep.subr.bf16.mxu0 %v7393
  %7469 = vmatpush1.bf16.msra.mxu0 %v7392
  %7470 = vmatprep.subr.bf16.mxu0 %v7395
  %7471 = vmatpush1.bf16.msra.mxu0 %v7394
  %7472 = vmatprep.subr.bf16.mxu0 %v7397
  %7473 = vmatpush1.bf16.msra.mxu0 %v7396
  %7474 = vmatprep.subr.bf16.mxu0 %v7399
  %7475 = vmatpush1.bf16.msra.mxu0 %v7398
  %7476 = vmatprep.subr.bf16.mxu0 %v7401
  %7477 = vmatpush1.bf16.msra.mxu0 %v7400
  %7478 = vmatprep.subr.bf16.mxu0 %v7403
  %7479 = vmatpush1.bf16.msra.mxu0 %v7402
  %7480 = vmatprep.subr.bf16.mxu0 %v7405
  %7481 = vmatpush1.bf16.msra.mxu0 %v7404
  %7482 = vmatprep.subr.bf16.mxu0 %v7407
  %7483 = vmatpush1.bf16.msra.mxu0 %v7406
  %7484 = vmatprep.subr.bf16.mxu0 %v7409
  %7485 = vmatpush1.bf16.msra.mxu0 %v7408
  %7486 = vmatprep.mubr.bf16.mxu0 %v7347
  %7487 = vmatmul.mubr.bf16.gmra.mrb[0].mxu0 %v7346
  %v7488 = vpop.f32.mrb[0].mxu0
  %v7489 = vadd.f32 %v7447, %v7488
  %v7490 = vpop.f32.mrb[0].mxu0
  %v7491 = vadd.f32 %v7451, %v7490
  %v7492 = vpop.f32.mrb[0].mxu0
  %v7493 = vadd.f32 %v7447, %v7492
  %v7494 = vpop.f32.mrb[0].mxu0
  %v7495 = vadd.f32 %v7451, %v7494
  %7496 = vmatprep.mubr.bf16.mxu0 %v7351
  %7497 = vmatmul.mubr.bf16.gmra.mrb[0].mxu0 %v7350
  %v7498 = vpop.f32.mrb[0].mxu0
  %v7499 = vadd.f32 %v7447, %v7498
  %v7500 = vpop.f32.mrb[0].mxu0
  %v7501 = vadd.f32 %v7451, %v7500
  %v7502 = vpop.f32.mrb[0].mxu0
  %v7503 = vadd.f32 %v7447, %v7502
  %v7504 = vpop.f32.mrb[0].mxu0
  %v7505 = vadd.f32 %v7451, %v7504
  %7506 = vmatprep.mubr.bf16.mxu0 %v7355
  %7507 = vmatmul.mubr.bf16.gmra.mrb[0].mxu0 %v7354
  %v7508 = vpop.f32.mrb[0].mxu0
  %v7509 = vadd.f32 %v7447, %v7508
  %v7510 = vpop.f32.mrb[0].mxu0
  %v7511 = vadd.f32 %v7451, %v7510
  %v7512 = vpop.f32.mrb[0].mxu0
  %v7513 = vadd.f32 %v7447, %v7512
  %v7514 = vpop.f32.mrb[0].mxu0
  %v7515 = vadd.f32 %v7451, %v7514
  %7516 = vmatprep.mubr.bf16.mxu0 %v7359
  %7517 = vmatmul.mubr.bf16.gmra.mrb[0].mxu0 %v7358
  %v7518 = vpop.f32.mrb[0].mxu0
  %v7519 = vadd.f32 %v7447, %v7518
  %v7520 = vpop.f32.mrb[0].mxu0
  %v7521 = vadd.f32 %v7451, %v7520
  %v7522 = vpop.f32.mrb[0].mxu0
  %v7523 = vadd.f32 %v7447, %v7522
  %v7524 = vpop.f32.mrb[0].mxu0
  %v7525 = vadd.f32 %v7451, %v7524
  %7526 = vmatprep.mubr.bf16.mxu0 %v7363
  %7527 = vmatmul.mubr.bf16.gmra.mrb[0].mxu0 %v7362
  %v7528 = vpop.f32.mrb[0].mxu0
  %v7529 = vadd.f32 %v7447, %v7528
  %v7530 = vpop.f32.mrb[0].mxu0
  %v7531 = vadd.f32 %v7451, %v7530
  %v7532 = vpop.f32.mrb[0].mxu0
  %v7533 = vadd.f32 %v7447, %v7532
  %v7534 = vpop.f32.mrb[0].mxu0
  %v7535 = vadd.f32 %v7451, %v7534
  %7536 = vmatprep.mubr.bf16.mxu0 %v7367
  %7537 = vmatmul.mubr.bf16.gmra.mrb[0].mxu0 %v7366
  %v7538 = vpop.f32.mrb[0].mxu0
  %v7539 = vadd.f32 %v7447, %v7538
  %v7540 = vpop.f32.mrb[0].mxu0
  %v7541 = vadd.f32 %v7451, %v7540
  %v7542 = vpop.f32.mrb[0].mxu0
  %v7543 = vadd.f32 %v7447, %v7542
  %v7544 = vpop.f32.mrb[0].mxu0
  %v7545 = vadd.f32 %v7451, %v7544
  %7546 = vmatprep.mubr.bf16.mxu0 %v7371
  %7547 = vmatmul.mubr.bf16.gmra.mrb[0].mxu0 %v7370
  %v7548 = vpop.f32.mrb[0].mxu0
  %v7549 = vadd.f32 %v7447, %v7548
  %v7550 = vpop.f32.mrb[0].mxu0
  %v7551 = vadd.f32 %v7451, %v7550
  %v7552 = vpop.f32.mrb[0].mxu0
  %v7553 = vadd.f32 %v7447, %v7552
  %v7554 = vpop.f32.mrb[0].mxu0
  %v7555 = vadd.f32 %v7451, %v7554
  %7556 = vmatprep.mubr.bf16.mxu0 %v7375
  %7557 = vmatmul.mubr.bf16.gmra.mrb[0].mxu0 %v7374
  %v7558 = vpop.f32.mrb[0].mxu0
  %v7559 = vadd.f32 %v7447, %v7558
  %v7560 = vpop.f32.mrb[0].mxu0
  %v7561 = vadd.f32 %v7451, %v7560
  %v7562 = vpop.f32.mrb[0].mxu0
  %v7563 = vadd.f32 %v7447, %v7562
  %v7564 = vpop.f32.mrb[0].mxu0
  %v7565 = vadd.f32 %v7451, %v7564
  %7566 = vdwg.mxu0
  %7567 = vmatprep.subr.bf16.mxu0 %v7411
  %7568 = vmatpush1.bf16.msra.mxu0 %v7410
  %7569 = vmatprep.subr.bf16.mxu0 %v7413
  %7570 = vmatpush1.bf16.msra.mxu0 %v7412
  %7571 = vmatprep.subr.bf16.mxu0 %v7415
  %7572 = vmatpush1.bf16.msra.mxu0 %v7414
  %7573 = vmatprep.subr.bf16.mxu0 %v7417
  %7574 = vmatpush1.bf16.msra.mxu0 %v7416
  %7575 = vmatprep.subr.bf16.mxu0 %v7419
  %7576 = vmatpush1.bf16.msra.mxu0 %v7418
  %7577 = vmatprep.subr.bf16.mxu0 %v7421
  %7578 = vmatpush1.bf16.msra.mxu0 %v7420
  %7579 = vmatprep.subr.bf16.mxu0 %v7423
  %7580 = vmatpush1.bf16.msra.mxu0 %v7422
  %7581 = vmatprep.subr.bf16.mxu0 %v7425
  %7582 = vmatpush1.bf16.msra.mxu0 %v7424
  %7583 = vmatprep.subr.bf16.mxu0 %v7427
  %7584 = vmatpush1.bf16.msra.mxu0 %v7426
  %7585 = vmatprep.subr.bf16.mxu0 %v7429
  %7586 = vmatpush1.bf16.msra.mxu0 %v7428
  %7587 = vmatprep.subr.bf16.mxu0 %v7431
  %7588 = vmatpush1.bf16.msra.mxu0 %v7430
  %7589 = vmatprep.subr.bf16.mxu0 %v7433
  %7590 = vmatpush1.bf16.msra.mxu0 %v7432
  %7591 = vmatprep.subr.bf16.mxu0 %v7435
  %7592 = vmatpush1.bf16.msra.mxu0 %v7434
  %7593 = vmatprep.subr.bf16.mxu0 %v7437
  %7594 = vmatpush1.bf16.msra.mxu0 %v7436
  %7595 = vmatprep.subr.bf16.mxu0 %v7439
  %7596 = vmatpush1.bf16.msra.mxu0 %v7438
  %7597 = vmatprep.subr.bf16.mxu0 %v7441
  %7598 = vmatpush1.bf16.msra.mxu0 %v7440
  %7599 = vmatprep.mubr.bf16.mxu0 %v7349
  %7600 = vmatmul.mubr.bf16.gmra.mrb[0].mxu0 %v7348
  %v7601 = vpop.f32.mrb[0].mxu0
  %v7602 = vadd.f32 %v7489, %v7601
  %v7603 = vpop.f32.mrb[0].mxu0
  %v7604 = vadd.f32 %v7491, %v7603
  %v7605 = vpop.f32.mrb[0].mxu0
  %v7606 = vadd.f32 %v7493, %v7605
  %v7607 = vpop.f32.mrb[0].mxu0
  %v7608 = vadd.f32 %v7495, %v7607
  %7609 = vmatprep.mubr.bf16.mxu0 %v7353
  %7610 = vmatmul.mubr.bf16.gmra.mrb[0].mxu0 %v7352
  %v7611 = vpop.f32.mrb[0].mxu0
  %v7612 = vadd.f32 %v7499, %v7611
  %v7613 = vpop.f32.mrb[0].mxu0
  %v7614 = vadd.f32 %v7501, %v7613
  %v7615 = vpop.f32.mrb[0].mxu0
  %v7616 = vadd.f32 %v7503, %v7615
  %v7617 = vpop.f32.mrb[0].mxu0
  %v7618 = vadd.f32 %v7505, %v7617
  %7619 = vmatprep.mubr.bf16.mxu0 %v7357
  %7620 = vmatmul.mubr.bf16.gmra.mrb[0].mxu0 %v7356
  %v7621 = vpop.f32.mrb[0].mxu0
  %v7622 = vadd.f32 %v7509, %v7621
  %v7623 = vpop.f32.mrb[0].mxu0
  %v7624 = vadd.f32 %v7511, %v7623
  %v7625 = vpop.f32.mrb[0].mxu0
  %v7626 = vadd.f32 %v7513, %v7625
  %v7627 = vpop.f32.mrb[0].mxu0
  %v7628 = vadd.f32 %v7515, %v7627
  %7629 = vmatprep.mubr.bf16.mxu0 %v7361
  %7630 = vmatmul.mubr.bf16.gmra.mrb[0].mxu0 %v7360
  %v7631 = vpop.f32.mrb[0].mxu0
  %v7632 = vadd.f32 %v7519, %v7631
  %v7633 = vpop.f32.mrb[0].mxu0
  %v7634 = vadd.f32 %v7521, %v7633
  %v7635 = vpop.f32.mrb[0].mxu0
  %v7636 = vadd.f32 %v7523, %v7635
  %v7637 = vpop.f32.mrb[0].mxu0
  %v7638 = vadd.f32 %v7525, %v7637
  %7639 = vmatprep.mubr.bf16.mxu0 %v7365
  %7640 = vmatmul.mubr.bf16.gmra.mrb[0].mxu0 %v7364
  %v7641 = vpop.f32.mrb[0].mxu0
  %v7642 = vadd.f32 %v7529, %v7641
  %v7643 = vpop.f32.mrb[0].mxu0
  %v7644 = vadd.f32 %v7531, %v7643
  %v7645 = vpop.f32.mrb[0].mxu0
  %v7646 = vadd.f32 %v7533, %v7645
  %v7647 = vpop.f32.mrb[0].mxu0
  %v7648 = vadd.f32 %v7535, %v7647
  %7649 = vmatprep.mubr.bf16.mxu0 %v7369
  %7650 = vmatmul.mubr.bf16.gmra.mrb[0].mxu0 %v7368
  %v7651 = vpop.f32.mrb[0].mxu0
  %v7652 = vadd.f32 %v7539, %v7651
  %v7653 = vpop.f32.mrb[0].mxu0
  %v7654 = vadd.f32 %v7541, %v7653
  %v7655 = vpop.f32.mrb[0].mxu0
  %v7656 = vadd.f32 %v7543, %v7655
  %v7657 = vpop.f32.mrb[0].mxu0
  %v7658 = vadd.f32 %v7545, %v7657
  %7659 = vmatprep.mubr.bf16.mxu0 %v7373
  %7660 = vmatmul.mubr.bf16.gmra.mrb[0].mxu0 %v7372
  %v7661 = vpop.f32.mrb[0].mxu0
  %v7662 = vadd.f32 %v7549, %v7661
  %v7663 = vpop.f32.mrb[0].mxu0
  %v7664 = vadd.f32 %v7551, %v7663
  %v7665 = vpop.f32.mrb[0].mxu0
  %v7666 = vadd.f32 %v7553, %v7665
  %v7667 = vpop.f32.mrb[0].mxu0
  %v7668 = vadd.f32 %v7555, %v7667
  %7669 = vmatprep.mubr.bf16.mxu0 %v7377
  %7670 = vmatmul.mubr.bf16.gmra.mrb[0].mxu0 %v7376
  %v7671 = vpop.f32.mrb[0].mxu0
  %v7672 = vadd.f32 %v7559, %v7671
  %v7673 = vpop.f32.mrb[0].mxu0
  %v7674 = vadd.f32 %v7561, %v7673
  %v7675 = vpop.f32.mrb[0].mxu0
  %v7676 = vadd.f32 %v7563, %v7675
  %v7677 = vpop.f32.mrb[0].mxu0
  %v7678 = vadd.f32 %v7565, %v7677
  %7679 = vdwg.mxu0
  %7680 = vst [vmem:[%s13] sm:$0xff] %v7602
  %7681 = vst [vmem:[%s13 + $0x8] sm:$0xff] %v7604
  %7682 = vst [vmem:[%s13 + $0x10] sm:$0xff] %v7606
  %7683 = vst [vmem:[%s13 + $0x18] sm:$0xff] %v7608
  %7684 = vst [vmem:[%s13 + $0x20] sm:$0xff] %v7612
  %7685 = vst [vmem:[%s13 + $0x28] sm:$0xff] %v7614
  %7686 = vst [vmem:[%s13 + $0x30] sm:$0xff] %v7616
  %7687 = vst [vmem:[%s13 + $0x38] sm:$0xff] %v7618
  %7688 = vst [vmem:[%s13 + $0x40] sm:$0xff] %v7622
  %7689 = vst [vmem:[%s13 + $0x48] sm:$0xff] %v7624
  %7690 = vst [vmem:[%s13 + $0x50] sm:$0xff] %v7626
  %7691 = vst [vmem:[%s13 + $0x58] sm:$0xff] %v7628
  %7692 = vst [vmem:[%s13 + $0x60] sm:$0xff] %v7632
  %7693 = vst [vmem:[%s13 + $0x68] sm:$0xff] %v7634
  %7694 = vst [vmem:[%s13 + $0x70] sm:$0xff] %v7636
  %7695 = vst [vmem:[%s13 + $0x78] sm:$0xff] %v7638
  %7696 = vst [vmem:[%s13 + $0x80] sm:$0xff] %v7642
  %7697 = vst [vmem:[%s13 + $0x88] sm:$0xff] %v7644
  %7698 = vst [vmem:[%s13 + $0x90] sm:$0xff] %v7646
  %7699 = vst [vmem:[%s13 + $0x98] sm:$0xff] %v7648
  %7700 = vst [vmem:[%s13 + $0xa0] sm:$0xff] %v7652
  %7701 = vst [vmem:[%s13 + $0xa8] sm:$0xff] %v7654
  %7702 = vst [vmem:[%s13 + $0xb0] sm:$0xff] %v7656
  %7703 = vst [vmem:[%s13 + $0xb8] sm:$0xff] %v7658
  %7704 = vst [vmem:[%s13 + $0xc0] sm:$0xff] %v7662
  %7705 = vst [vmem:[%s13 + $0xc8] sm:$0xff] %v7664
  %7706 = vst [vmem:[%s13 + $0xd0] sm:$0xff] %v7666
  %7707 = vst [vmem:[%s13 + $0xd8] sm:$0xff] %v7668
  %7708 = vst [vmem:[%s13 + $0xe0] sm:$0xff] %v7672
  %7709 = vst [vmem:[%s13 + $0xe8] sm:$0xff] %v7674
  %7710 = vst [vmem:[%s13 + $0xf0] sm:$0xff] %v7676
  %7711 = vst [vmem:[%s13 + $0xf8] sm:$0xff] %v7678
  // Predicated region
  $region120: #{forward.1} parent=0 // pred_check
    _
  $region121: #{forward.1} parent=0 // pred_check_branch
    %7713 = sbr.rel (0) target = $region123
  $region122: #{forward.1} parent=0 // pred_region
    _
  $region123: #{forward.1} parent=0 // pred_fallthru
    _
  // Predicated region
  $region124: #{forward.1} parent=0 // pred_check
    _
  $region125: #{forward.1} parent=0 // pred_check_branch
    %7715 = sbr.rel (0) target = $region127
  $region126: #{forward.1} parent=0 // pred_region
    _
  $region127: #{forward.1} parent=0 // pred_fallthru
    _
  // Predicated region
  $region128: #{forward.1} parent=0 // pred_check
    _
  $region129: #{forward.1} parent=0 // pred_check_branch
    %7717 = sbr.rel (0) target = $region131
  $region130: #{forward.1} parent=0 // pred_region
    _
  $region131: #{forward.1} parent=0 // pred_fallthru
    _
  // Predicated region
  $region132: #{forward.1} parent=0 // pred_check
    _
  $region133: #{forward.1} parent=0 // pred_check_branch
    %7719 = sbr.rel (0) target = $region135
  $region134: #{forward.1} parent=0 // pred_region
    _
  $region135: #{forward.1} parent=0 // pred_fallthru
    _
  // Predicated region
  $region136: #{forward.1} parent=0 // pred_check
    _
  $region137: #{forward.1} parent=0 // pred_check_branch
    %7721 = sbr.rel (0) target = $region139
  $region138: #{forward.1} parent=0 // pred_region
    _
  $region139: #{forward.1} parent=0 // pred_fallthru
    _
  // Predicated region
  $region140: #{forward.1} parent=0 // pred_check
    _
  $region141: #{forward.1} parent=0 // pred_check_branch
    %7723 = sbr.rel (0) target = $region143
  $region142: #{forward.1} parent=0 // pred_region
    _
  $region143: #{forward.1} parent=0 // pred_fallthru
    _
  %7724 = vsyncmov [#allocation6]
  %s7725 = vpop.sfrf %7724
  %p7726 = scmp.eq.s32.totalorder %s7725, 0
  %p7727 = pneg %p7726
  %7729 = shalt.err (%p7727)
  %s7730 = scalar_lea.sflag [#allocation6], 1
  %7731 = vsyncmov %s7730
  %s7732 = vpop.sfrf %7731
  %p7733 = scmp.eq.s32.totalorder %s7732, 0
  %p7734 = pneg %p7733
  %7736 = shalt.err (%p7734)

</llo_original>
